<compile_context>
chip_gen: v6e
topology: v6e:2x2x1
jax: 0.10.0
libtpu: 0.0.40
codegen_flags: <defaults>
</compile_context>

<pallas_src>
import functools

import jax
import jax.numpy as jnp
from jax.experimental import pallas as pl
from jax.experimental.pallas import tpu as pltpu

# ---------------- synthetic "ONNX graph" hyper-parameters ----------------
C_IN = 1          # cellseg3d models take single-channel 3D volumes
HID = 8           # hidden channels of conv1
C_OUT = 2         # segmentation classes (background / foreground)
KVOL = 27         # 3*3*3 kernel volume


# ------- Pallas kernel: fused 3x3x3 conv -> ReLU -> 1x1x1 conv (one batch) -------
def _conv3d_relu_proj_kernel(D, Wp, L,
                             x_ref, w1_ref, b1_ref, w2_ref, b2_ref, o_ref):
    # One grid step == one batch element, all depths at once.
    #   x_ref : (1, D+2, Fp) zero-padded volume, each depth plane flattened to
    #           Fp lanes in (Hp, Wp) row-major order (Fp multiple of 128).
    #   w1_ref: SMEM (KVOL*HID,)  flattened conv1 weights, idx = tap*HID + c
    #   b1_ref: SMEM (HID,)
    #   w2_ref: SMEM (HID*C_OUT,) flattened 1x1x1 weights, idx = c*C_OUT + k
    #   b2_ref: SMEM (C_OUT,)
    #   o_ref : (1, C_OUT, D, L) logits in padded-plane coordinates
    #           (valid voxel (i, j) lives at lane i*Wp + j).
    taps = [(dz, dy * Wp + dx)
            for dz in range(3) for dy in range(3) for dx in range(3)]

    # Hidden-channel accumulators: (D, L) planes, bias-initialized (f32).
    h = [jnp.zeros((D, L), jnp.float32) + b1_ref[c] for c in range(HID)]

    # 27 shifted multiply-accumulates on the VPU.  Each tap is one contiguous
    # (D, L) window of the flat padded volume (static offsets), loaded once
    # and reused across all hidden channels.
    for t, (dz, s) in enumerate(taps):
        xs = x_ref[0, dz:dz + D, s:s + L]      # (D, L) shifted window
        base = t * HID
        for c in range(HID):
            h[c] = h[c] + xs * w1_ref[base + c]

    # ReLU
    h = [jnp.maximum(hc, 0.0) for hc in h]

    # 1x1x1 projection (HID -> C_OUT) as VPU FMAs; lane-dense full-block store.
    for k in range(C_OUT):
        o = jnp.zeros((D, L), jnp.float32) + b2_ref[k]
        for c in range(HID):
            o = o + h[c] * w2_ref[c * C_OUT + k]
        o_ref[0, k] = o.astype(o_ref.dtype)


def _fused_seg_forward(x, w1f, b1, w2f, b2):
    # x: [N, C_IN, D, H, W] float32 (NCDHW, as the ONNX 'input' tensor)
    N, C, D, H, W = x.shape
    assert C == C_IN
    Dp, Hp, Wp = D + 2, H + 2, W + 2

    # Lane-dense flat-plane geometry.
    L = 128 * pl.cdiv(H * Wp, 128)          # output lane width (covers all valid voxels)
    smax = 2 * Wp + 2                       # largest in-plane tap shift
    Fp = 128 * pl.cdiv(smax + L, 128)       # flat input width (every tap slice in-bounds)

    # Zero-pad spatially, flatten each depth plane, pad the flat axis to Fp.
    xp = jnp.pad(x[:, 0], ((0, 0), (1, 1), (1, 1), (1, 1)))   # (N, Dp, Hp, Wp)
    xflat = xp.reshape(N, Dp, Hp * Wp)
    xflat = jnp.pad(xflat, ((0, 0), (0, 0), (0, Fp - Hp * Wp)))   # (N, Dp, Fp)

    kern = functools.partial(_conv3d_relu_proj_kernel, D, Wp, L)

    flops = 2 * N * D * H * W * (KVOL * HID + HID * C_OUT)
    bytes_accessed = (N * Dp * Fp * 4                 # single halo'd input read
                      + N * C_OUT * D * L * 4         # output write
                      + 4 * (w1f.size + b1.size + w2f.size + b2.size))

    smem = pl.BlockSpec(memory_space=pltpu.MemorySpace.SMEM)

    out_flat = pl.pallas_call(
        kern,
        out_shape=jax.ShapeDtypeStruct((N, C_OUT, D, L), jnp.float32),
        grid=(N,),
        in_specs=[
            pl.BlockSpec((1, Dp, Fp), lambda n: (n, 0, 0)),
            smem, smem, smem, smem,
        ],
        out_specs=pl.BlockSpec((1, C_OUT, D, L), lambda n: (n, 0, 0, 0)),
        compiler_params=pltpu.CompilerParams(
            dimension_semantics=("parallel",)),
        cost_estimate=pl.CostEstimate(flops=flops, transcendentals=0,
                                      bytes_accessed=bytes_accessed),
    )(xflat, w1f, b1, w2f, b2)

    # Drop padded-plane garbage lanes and restore NCDHW (cheap XLA glue).
    out = out_flat[..., :H * Wp].reshape(N, C_OUT, D, H, Wp)[..., :W]
    return out


class ONNXModelWrapperPallas:
    """Pallas stand-in for ONNXModelWrapper: holds deterministic params for a
    synthetic 3D segmentation graph and runs it fused on TPU via pallas_call."""

    def __init__(self, seed=0):
        key = jax.random.PRNGKey(seed)
        k1, k2, k3, k4 = jax.random.split(key, 4)
        w1 = jax.random.normal(k1, (KVOL, HID), jnp.float32) * 0.1     # 3x3x3 conv
        b1 = jax.random.normal(k2, (HID,), jnp.float32) * 0.05
        w2 = jax.random.normal(k3, (HID, C_OUT), jnp.float32) * 0.1    # 1x1x1 conv
        b2 = jax.random.normal(k4, (C_OUT,), jnp.float32) * 0.05
        self.params = (w1, b1, w2, b2)
        # flattened copies for scalar (SMEM) access inside the kernel
        self._flat = (w1.reshape(-1), b1, w2.reshape(-1), b2)
        self._forward = jax.jit(_fused_seg_forward)

    def eval(self):
        pass  # parity with the torch wrapper

    def to(self, device):
        pass  # parity with the torch wrapper

    def __call__(self, model_input):
        # model_input: [N, C_IN, D, H, W] float32 -> [N, C_OUT, D, H, W] logits
        w1f, b1, w2f, b2 = self._flat
        return self._forward(model_input, w1f, b1, w2f, b2)


def _reference(model, x):
    """Pure-jnp reference (same math, no Pallas) for correctness checking."""
    w1, b1, w2, b2 = model.params
    N, C, D, H, W = x.shape
    xp = jnp.pad(x[:, 0], ((0, 0), (1, 1), (1, 1), (1, 1)))
    h = jnp.zeros((N, D, H, W, HID), jnp.float32)
    t = 0
    for dz in range(3):
        for dy in range(3):
            for dx in range(3):
                h = h + xp[:, dz:dz + D, dy:dy + H, dx:dx + W][..., None] * w1[t]
                t += 1
    h = jnp.maximum(h + b1, 0.0)
    out = h @ w2 + b2                                  # [N, D, H, W, C_OUT]
    return jnp.transpose(out, (0, 4, 1, 2, 3))         # NCDHW


if __name__ == "__main__":
    key = jax.random.PRNGKey(0)
    # small 3D volume: batch=2, 1 channel, 8x16x16 voxels
    x = jax.random.normal(key, (2, C_IN, 8, 16, 16), jnp.float32)

    model = ONNXModelWrapperPallas(seed=0)
    model.eval()
    model.to("tpu")

    out = jax.block_until_ready(model(x))

    ref = _reference(model, x)
    assert out.shape == (2, C_OUT, 8, 16, 16)
    assert jnp.allclose(out, ref, atol=1e-4, rtol=1e-4)

    print("KERNEL_OK")
</pallas_src>

<mosaic_0001>
module attributes {stable_mosaic.version = 11 : i64} {
  func.func @_conv3d_relu_proj_kernel(%arg0: i32, %arg1: memref<1x10x512xf32, #tpu.memory_space<vmem>>, %arg2: memref<216xf32, #tpu.memory_space<smem>>, %arg3: memref<8xf32, #tpu.memory_space<smem>>, %arg4: memref<16xf32, #tpu.memory_space<smem>>, %arg5: memref<2xf32, #tpu.memory_space<smem>>, %arg6: memref<1x2x8x384xf32, #tpu.memory_space<vmem>>) attributes {dimension_semantics = [#tpu.dimension_semantics<parallel>], iteration_bounds = array<i64: 2>, scalar_prefetch = 0 : i64, scratch_operands = 0 : i64, tpu.core_type = #tpu.core_type<tc>, window_params = [{transform_indices = @transform_0, window_bounds = array<i64: 1, 10, 512>}, {transform_indices = @transform_1, window_bounds = array<i64: 216>}, {transform_indices = @transform_2, window_bounds = array<i64: 8>}, {transform_indices = @transform_3, window_bounds = array<i64: 16>}, {transform_indices = @transform_4, window_bounds = array<i64: 2>}, {transform_indices = @transform_5, window_bounds = array<i64: 1, 2, 8, 384>}]} {
    %cst = arith.constant 0.000000e+00 : f32
    %0 = vector.broadcast %cst : f32 to vector<8x384xf32>
    %c0 = arith.constant 0 : index
    %1 = memref.load %arg3[%c0] : memref<8xf32, #tpu.memory_space<smem>>
    %2 = vector.broadcast %1 : f32 to vector<8x384xf32>
    %3 = arith.addf %0, %2 : vector<8x384xf32>
    %cst_0 = arith.constant 0.000000e+00 : f32
    %4 = vector.broadcast %cst_0 : f32 to vector<8x384xf32>
    %c1 = arith.constant 1 : index
    %5 = memref.load %arg3[%c1] : memref<8xf32, #tpu.memory_space<smem>>
    %6 = vector.broadcast %5 : f32 to vector<8x384xf32>
    %7 = arith.addf %4, %6 : vector<8x384xf32>
    %cst_1 = arith.constant 0.000000e+00 : f32
    %8 = vector.broadcast %cst_1 : f32 to vector<8x384xf32>
    %c2 = arith.constant 2 : index
    %9 = memref.load %arg3[%c2] : memref<8xf32, #tpu.memory_space<smem>>
    %10 = vector.broadcast %9 : f32 to vector<8x384xf32>
    %11 = arith.addf %8, %10 : vector<8x384xf32>
    %cst_2 = arith.constant 0.000000e+00 : f32
    %12 = vector.broadcast %cst_2 : f32 to vector<8x384xf32>
    %c3 = arith.constant 3 : index
    %13 = memref.load %arg3[%c3] : memref<8xf32, #tpu.memory_space<smem>>
    %14 = vector.broadcast %13 : f32 to vector<8x384xf32>
    %15 = arith.addf %12, %14 : vector<8x384xf32>
    %cst_3 = arith.constant 0.000000e+00 : f32
    %16 = vector.broadcast %cst_3 : f32 to vector<8x384xf32>
    %c4 = arith.constant 4 : index
    %17 = memref.load %arg3[%c4] : memref<8xf32, #tpu.memory_space<smem>>
    %18 = vector.broadcast %17 : f32 to vector<8x384xf32>
    %19 = arith.addf %16, %18 : vector<8x384xf32>
    %cst_4 = arith.constant 0.000000e+00 : f32
    %20 = vector.broadcast %cst_4 : f32 to vector<8x384xf32>
    %c5 = arith.constant 5 : index
    %21 = memref.load %arg3[%c5] : memref<8xf32, #tpu.memory_space<smem>>
    %22 = vector.broadcast %21 : f32 to vector<8x384xf32>
    %23 = arith.addf %20, %22 : vector<8x384xf32>
    %cst_5 = arith.constant 0.000000e+00 : f32
    %24 = vector.broadcast %cst_5 : f32 to vector<8x384xf32>
    %c6 = arith.constant 6 : index
    %25 = memref.load %arg3[%c6] : memref<8xf32, #tpu.memory_space<smem>>
    %26 = vector.broadcast %25 : f32 to vector<8x384xf32>
    %27 = arith.addf %24, %26 : vector<8x384xf32>
    %cst_6 = arith.constant 0.000000e+00 : f32
    %28 = vector.broadcast %cst_6 : f32 to vector<8x384xf32>
    %c7 = arith.constant 7 : index
    %29 = memref.load %arg3[%c7] : memref<8xf32, #tpu.memory_space<smem>>
    %30 = vector.broadcast %29 : f32 to vector<8x384xf32>
    %31 = arith.addf %28, %30 : vector<8x384xf32>
    %c0_7 = arith.constant 0 : index
    %c0_8 = arith.constant 0 : index
    %c0_9 = arith.constant 0 : index
    %32 = vector.load %arg1[%c0_7, %c0_8, %c0_9] : memref<1x10x512xf32, #tpu.memory_space<vmem>>, vector<1x8x384xf32>
    %33 = vector.shape_cast %32 : vector<1x8x384xf32> to vector<8x384xf32>
    %c0_10 = arith.constant 0 : index
    %34 = memref.load %arg2[%c0_10] : memref<216xf32, #tpu.memory_space<smem>>
    %35 = vector.broadcast %34 : f32 to vector<8x384xf32>
    %36 = arith.mulf %33, %35 : vector<8x384xf32>
    %37 = arith.addf %3, %36 : vector<8x384xf32>
    %c1_11 = arith.constant 1 : index
    %38 = memref.load %arg2[%c1_11] : memref<216xf32, #tpu.memory_space<smem>>
    %39 = vector.broadcast %38 : f32 to vector<8x384xf32>
    %40 = arith.mulf %33, %39 : vector<8x384xf32>
    %41 = arith.addf %7, %40 : vector<8x384xf32>
    %c2_12 = arith.constant 2 : index
    %42 = memref.load %arg2[%c2_12] : memref<216xf32, #tpu.memory_space<smem>>
    %43 = vector.broadcast %42 : f32 to vector<8x384xf32>
    %44 = arith.mulf %33, %43 : vector<8x384xf32>
    %45 = arith.addf %11, %44 : vector<8x384xf32>
    %c3_13 = arith.constant 3 : index
    %46 = memref.load %arg2[%c3_13] : memref<216xf32, #tpu.memory_space<smem>>
    %47 = vector.broadcast %46 : f32 to vector<8x384xf32>
    %48 = arith.mulf %33, %47 : vector<8x384xf32>
    %49 = arith.addf %15, %48 : vector<8x384xf32>
    %c4_14 = arith.constant 4 : index
    %50 = memref.load %arg2[%c4_14] : memref<216xf32, #tpu.memory_space<smem>>
    %51 = vector.broadcast %50 : f32 to vector<8x384xf32>
    %52 = arith.mulf %33, %51 : vector<8x384xf32>
    %53 = arith.addf %19, %52 : vector<8x384xf32>
    %c5_15 = arith.constant 5 : index
    %54 = memref.load %arg2[%c5_15] : memref<216xf32, #tpu.memory_space<smem>>
    %55 = vector.broadcast %54 : f32 to vector<8x384xf32>
    %56 = arith.mulf %33, %55 : vector<8x384xf32>
    %57 = arith.addf %23, %56 : vector<8x384xf32>
    %c6_16 = arith.constant 6 : index
    %58 = memref.load %arg2[%c6_16] : memref<216xf32, #tpu.memory_space<smem>>
    %59 = vector.broadcast %58 : f32 to vector<8x384xf32>
    %60 = arith.mulf %33, %59 : vector<8x384xf32>
    %61 = arith.addf %27, %60 : vector<8x384xf32>
    %c7_17 = arith.constant 7 : index
    %62 = memref.load %arg2[%c7_17] : memref<216xf32, #tpu.memory_space<smem>>
    %63 = vector.broadcast %62 : f32 to vector<8x384xf32>
    %64 = arith.mulf %33, %63 : vector<8x384xf32>
    %65 = arith.addf %31, %64 : vector<8x384xf32>
    %c0_18 = arith.constant 0 : index
    %c0_19 = arith.constant 0 : index
    %c1_20 = arith.constant 1 : index
    %66 = vector.load %arg1[%c0_18, %c0_19, %c1_20] : memref<1x10x512xf32, #tpu.memory_space<vmem>>, vector<1x8x384xf32>
    %67 = vector.shape_cast %66 : vector<1x8x384xf32> to vector<8x384xf32>
    %c8 = arith.constant 8 : index
    %68 = memref.load %arg2[%c8] : memref<216xf32, #tpu.memory_space<smem>>
    %69 = vector.broadcast %68 : f32 to vector<8x384xf32>
    %70 = arith.mulf %67, %69 : vector<8x384xf32>
    %71 = arith.addf %37, %70 : vector<8x384xf32>
    %c9 = arith.constant 9 : index
    %72 = memref.load %arg2[%c9] : memref<216xf32, #tpu.memory_space<smem>>
    %73 = vector.broadcast %72 : f32 to vector<8x384xf32>
    %74 = arith.mulf %67, %73 : vector<8x384xf32>
    %75 = arith.addf %41, %74 : vector<8x384xf32>
    %c10 = arith.constant 10 : index
    %76 = memref.load %arg2[%c10] : memref<216xf32, #tpu.memory_space<smem>>
    %77 = vector.broadcast %76 : f32 to vector<8x384xf32>
    %78 = arith.mulf %67, %77 : vector<8x384xf32>
    %79 = arith.addf %45, %78 : vector<8x384xf32>
    %c11 = arith.constant 11 : index
    %80 = memref.load %arg2[%c11] : memref<216xf32, #tpu.memory_space<smem>>
    %81 = vector.broadcast %80 : f32 to vector<8x384xf32>
    %82 = arith.mulf %67, %81 : vector<8x384xf32>
    %83 = arith.addf %49, %82 : vector<8x384xf32>
    %c12 = arith.constant 12 : index
    %84 = memref.load %arg2[%c12] : memref<216xf32, #tpu.memory_space<smem>>
    %85 = vector.broadcast %84 : f32 to vector<8x384xf32>
    %86 = arith.mulf %67, %85 : vector<8x384xf32>
    %87 = arith.addf %53, %86 : vector<8x384xf32>
    %c13 = arith.constant 13 : index
    %88 = memref.load %arg2[%c13] : memref<216xf32, #tpu.memory_space<smem>>
    %89 = vector.broadcast %88 : f32 to vector<8x384xf32>
    %90 = arith.mulf %67, %89 : vector<8x384xf32>
    %91 = arith.addf %57, %90 : vector<8x384xf32>
    %c14 = arith.constant 14 : index
    %92 = memref.load %arg2[%c14] : memref<216xf32, #tpu.memory_space<smem>>
    %93 = vector.broadcast %92 : f32 to vector<8x384xf32>
    %94 = arith.mulf %67, %93 : vector<8x384xf32>
    %95 = arith.addf %61, %94 : vector<8x384xf32>
    %c15 = arith.constant 15 : index
    %96 = memref.load %arg2[%c15] : memref<216xf32, #tpu.memory_space<smem>>
    %97 = vector.broadcast %96 : f32 to vector<8x384xf32>
    %98 = arith.mulf %67, %97 : vector<8x384xf32>
    %99 = arith.addf %65, %98 : vector<8x384xf32>
    %c0_21 = arith.constant 0 : index
    %c0_22 = arith.constant 0 : index
    %c2_23 = arith.constant 2 : index
    %100 = vector.load %arg1[%c0_21, %c0_22, %c2_23] : memref<1x10x512xf32, #tpu.memory_space<vmem>>, vector<1x8x384xf32>
    %101 = vector.shape_cast %100 : vector<1x8x384xf32> to vector<8x384xf32>
    %c16 = arith.constant 16 : index
    %102 = memref.load %arg2[%c16] : memref<216xf32, #tpu.memory_space<smem>>
    %103 = vector.broadcast %102 : f32 to vector<8x384xf32>
    %104 = arith.mulf %101, %103 : vector<8x384xf32>
    %105 = arith.addf %71, %104 : vector<8x384xf32>
    %c17 = arith.constant 17 : index
    %106 = memref.load %arg2[%c17] : memref<216xf32, #tpu.memory_space<smem>>
    %107 = vector.broadcast %106 : f32 to vector<8x384xf32>
    %108 = arith.mulf %101, %107 : vector<8x384xf32>
    %109 = arith.addf %75, %108 : vector<8x384xf32>
    %c18 = arith.constant 18 : index
    %110 = memref.load %arg2[%c18] : memref<216xf32, #tpu.memory_space<smem>>
    %111 = vector.broadcast %110 : f32 to vector<8x384xf32>
    %112 = arith.mulf %101, %111 : vector<8x384xf32>
    %113 = arith.addf %79, %112 : vector<8x384xf32>
    %c19 = arith.constant 19 : index
    %114 = memref.load %arg2[%c19] : memref<216xf32, #tpu.memory_space<smem>>
    %115 = vector.broadcast %114 : f32 to vector<8x384xf32>
    %116 = arith.mulf %101, %115 : vector<8x384xf32>
    %117 = arith.addf %83, %116 : vector<8x384xf32>
    %c20 = arith.constant 20 : index
    %118 = memref.load %arg2[%c20] : memref<216xf32, #tpu.memory_space<smem>>
    %119 = vector.broadcast %118 : f32 to vector<8x384xf32>
    %120 = arith.mulf %101, %119 : vector<8x384xf32>
    %121 = arith.addf %87, %120 : vector<8x384xf32>
    %c21 = arith.constant 21 : index
    %122 = memref.load %arg2[%c21] : memref<216xf32, #tpu.memory_space<smem>>
    %123 = vector.broadcast %122 : f32 to vector<8x384xf32>
    %124 = arith.mulf %101, %123 : vector<8x384xf32>
    %125 = arith.addf %91, %124 : vector<8x384xf32>
    %c22 = arith.constant 22 : index
    %126 = memref.load %arg2[%c22] : memref<216xf32, #tpu.memory_space<smem>>
    %127 = vector.broadcast %126 : f32 to vector<8x384xf32>
    %128 = arith.mulf %101, %127 : vector<8x384xf32>
    %129 = arith.addf %95, %128 : vector<8x384xf32>
    %c23 = arith.constant 23 : index
    %130 = memref.load %arg2[%c23] : memref<216xf32, #tpu.memory_space<smem>>
    %131 = vector.broadcast %130 : f32 to vector<8x384xf32>
    %132 = arith.mulf %101, %131 : vector<8x384xf32>
    %133 = arith.addf %99, %132 : vector<8x384xf32>
    %c0_24 = arith.constant 0 : index
    %c0_25 = arith.constant 0 : index
    %c18_26 = arith.constant 18 : index
    %134 = vector.load %arg1[%c0_24, %c0_25, %c18_26] : memref<1x10x512xf32, #tpu.memory_space<vmem>>, vector<1x8x384xf32>
    %135 = vector.shape_cast %134 : vector<1x8x384xf32> to vector<8x384xf32>
    %c24 = arith.constant 24 : index
    %136 = memref.load %arg2[%c24] : memref<216xf32, #tpu.memory_space<smem>>
    %137 = vector.broadcast %136 : f32 to vector<8x384xf32>
    %138 = arith.mulf %135, %137 : vector<8x384xf32>
    %139 = arith.addf %105, %138 : vector<8x384xf32>
    %c25 = arith.constant 25 : index
    %140 = memref.load %arg2[%c25] : memref<216xf32, #tpu.memory_space<smem>>
    %141 = vector.broadcast %140 : f32 to vector<8x384xf32>
    %142 = arith.mulf %135, %141 : vector<8x384xf32>
    %143 = arith.addf %109, %142 : vector<8x384xf32>
    %c26 = arith.constant 26 : index
    %144 = memref.load %arg2[%c26] : memref<216xf32, #tpu.memory_space<smem>>
    %145 = vector.broadcast %144 : f32 to vector<8x384xf32>
    %146 = arith.mulf %135, %145 : vector<8x384xf32>
    %147 = arith.addf %113, %146 : vector<8x384xf32>
    %c27 = arith.constant 27 : index
    %148 = memref.load %arg2[%c27] : memref<216xf32, #tpu.memory_space<smem>>
    %149 = vector.broadcast %148 : f32 to vector<8x384xf32>
    %150 = arith.mulf %135, %149 : vector<8x384xf32>
    %151 = arith.addf %117, %150 : vector<8x384xf32>
    %c28 = arith.constant 28 : index
    %152 = memref.load %arg2[%c28] : memref<216xf32, #tpu.memory_space<smem>>
    %153 = vector.broadcast %152 : f32 to vector<8x384xf32>
    %154 = arith.mulf %135, %153 : vector<8x384xf32>
    %155 = arith.addf %121, %154 : vector<8x384xf32>
    %c29 = arith.constant 29 : index
    %156 = memref.load %arg2[%c29] : memref<216xf32, #tpu.memory_space<smem>>
    %157 = vector.broadcast %156 : f32 to vector<8x384xf32>
    %158 = arith.mulf %135, %157 : vector<8x384xf32>
    %159 = arith.addf %125, %158 : vector<8x384xf32>
    %c30 = arith.constant 30 : index
    %160 = memref.load %arg2[%c30] : memref<216xf32, #tpu.memory_space<smem>>
    %161 = vector.broadcast %160 : f32 to vector<8x384xf32>
    %162 = arith.mulf %135, %161 : vector<8x384xf32>
    %163 = arith.addf %129, %162 : vector<8x384xf32>
    %c31 = arith.constant 31 : index
    %164 = memref.load %arg2[%c31] : memref<216xf32, #tpu.memory_space<smem>>
    %165 = vector.broadcast %164 : f32 to vector<8x384xf32>
    %166 = arith.mulf %135, %165 : vector<8x384xf32>
    %167 = arith.addf %133, %166 : vector<8x384xf32>
    %c0_27 = arith.constant 0 : index
    %c0_28 = arith.constant 0 : index
    %c19_29 = arith.constant 19 : index
    %168 = vector.load %arg1[%c0_27, %c0_28, %c19_29] : memref<1x10x512xf32, #tpu.memory_space<vmem>>, vector<1x8x384xf32>
    %169 = vector.shape_cast %168 : vector<1x8x384xf32> to vector<8x384xf32>
    %c32 = arith.constant 32 : index
    %170 = memref.load %arg2[%c32] : memref<216xf32, #tpu.memory_space<smem>>
    %171 = vector.broadcast %170 : f32 to vector<8x384xf32>
    %172 = arith.mulf %169, %171 : vector<8x384xf32>
    %173 = arith.addf %139, %172 : vector<8x384xf32>
    %c33 = arith.constant 33 : index
    %174 = memref.load %arg2[%c33] : memref<216xf32, #tpu.memory_space<smem>>
    %175 = vector.broadcast %174 : f32 to vector<8x384xf32>
    %176 = arith.mulf %169, %175 : vector<8x384xf32>
    %177 = arith.addf %143, %176 : vector<8x384xf32>
    %c34 = arith.constant 34 : index
    %178 = memref.load %arg2[%c34] : memref<216xf32, #tpu.memory_space<smem>>
    %179 = vector.broadcast %178 : f32 to vector<8x384xf32>
    %180 = arith.mulf %169, %179 : vector<8x384xf32>
    %181 = arith.addf %147, %180 : vector<8x384xf32>
    %c35 = arith.constant 35 : index
    %182 = memref.load %arg2[%c35] : memref<216xf32, #tpu.memory_space<smem>>
    %183 = vector.broadcast %182 : f32 to vector<8x384xf32>
    %184 = arith.mulf %169, %183 : vector<8x384xf32>
    %185 = arith.addf %151, %184 : vector<8x384xf32>
    %c36 = arith.constant 36 : index
    %186 = memref.load %arg2[%c36] : memref<216xf32, #tpu.memory_space<smem>>
    %187 = vector.broadcast %186 : f32 to vector<8x384xf32>
    %188 = arith.mulf %169, %187 : vector<8x384xf32>
    %189 = arith.addf %155, %188 : vector<8x384xf32>
    %c37 = arith.constant 37 : index
    %190 = memref.load %arg2[%c37] : memref<216xf32, #tpu.memory_space<smem>>
    %191 = vector.broadcast %190 : f32 to vector<8x384xf32>
    %192 = arith.mulf %169, %191 : vector<8x384xf32>
    %193 = arith.addf %159, %192 : vector<8x384xf32>
    %c38 = arith.constant 38 : index
    %194 = memref.load %arg2[%c38] : memref<216xf32, #tpu.memory_space<smem>>
    %195 = vector.broadcast %194 : f32 to vector<8x384xf32>
    %196 = arith.mulf %169, %195 : vector<8x384xf32>
    %197 = arith.addf %163, %196 : vector<8x384xf32>
    %c39 = arith.constant 39 : index
    %198 = memref.load %arg2[%c39] : memref<216xf32, #tpu.memory_space<smem>>
    %199 = vector.broadcast %198 : f32 to vector<8x384xf32>
    %200 = arith.mulf %169, %199 : vector<8x384xf32>
    %201 = arith.addf %167, %200 : vector<8x384xf32>
    %c0_30 = arith.constant 0 : index
    %c0_31 = arith.constant 0 : index
    %c20_32 = arith.constant 20 : index
    %202 = vector.load %arg1[%c0_30, %c0_31, %c20_32] : memref<1x10x512xf32, #tpu.memory_space<vmem>>, vector<1x8x384xf32>
    %203 = vector.shape_cast %202 : vector<1x8x384xf32> to vector<8x384xf32>
    %c40 = arith.constant 40 : index
    %204 = memref.load %arg2[%c40] : memref<216xf32, #tpu.memory_space<smem>>
    %205 = vector.broadcast %204 : f32 to vector<8x384xf32>
    %206 = arith.mulf %203, %205 : vector<8x384xf32>
    %207 = arith.addf %173, %206 : vector<8x384xf32>
    %c41 = arith.constant 41 : index
    %208 = memref.load %arg2[%c41] : memref<216xf32, #tpu.memory_space<smem>>
    %209 = vector.broadcast %208 : f32 to vector<8x384xf32>
    %210 = arith.mulf %203, %209 : vector<8x384xf32>
    %211 = arith.addf %177, %210 : vector<8x384xf32>
    %c42 = arith.constant 42 : index
    %212 = memref.load %arg2[%c42] : memref<216xf32, #tpu.memory_space<smem>>
    %213 = vector.broadcast %212 : f32 to vector<8x384xf32>
    %214 = arith.mulf %203, %213 : vector<8x384xf32>
    %215 = arith.addf %181, %214 : vector<8x384xf32>
    %c43 = arith.constant 43 : index
    %216 = memref.load %arg2[%c43] : memref<216xf32, #tpu.memory_space<smem>>
    %217 = vector.broadcast %216 : f32 to vector<8x384xf32>
    %218 = arith.mulf %203, %217 : vector<8x384xf32>
    %219 = arith.addf %185, %218 : vector<8x384xf32>
    %c44 = arith.constant 44 : index
    %220 = memref.load %arg2[%c44] : memref<216xf32, #tpu.memory_space<smem>>
    %221 = vector.broadcast %220 : f32 to vector<8x384xf32>
    %222 = arith.mulf %203, %221 : vector<8x384xf32>
    %223 = arith.addf %189, %222 : vector<8x384xf32>
    %c45 = arith.constant 45 : index
    %224 = memref.load %arg2[%c45] : memref<216xf32, #tpu.memory_space<smem>>
    %225 = vector.broadcast %224 : f32 to vector<8x384xf32>
    %226 = arith.mulf %203, %225 : vector<8x384xf32>
    %227 = arith.addf %193, %226 : vector<8x384xf32>
    %c46 = arith.constant 46 : index
    %228 = memref.load %arg2[%c46] : memref<216xf32, #tpu.memory_space<smem>>
    %229 = vector.broadcast %228 : f32 to vector<8x384xf32>
    %230 = arith.mulf %203, %229 : vector<8x384xf32>
    %231 = arith.addf %197, %230 : vector<8x384xf32>
    %c47 = arith.constant 47 : index
    %232 = memref.load %arg2[%c47] : memref<216xf32, #tpu.memory_space<smem>>
    %233 = vector.broadcast %232 : f32 to vector<8x384xf32>
    %234 = arith.mulf %203, %233 : vector<8x384xf32>
    %235 = arith.addf %201, %234 : vector<8x384xf32>
    %c0_33 = arith.constant 0 : index
    %c0_34 = arith.constant 0 : index
    %c36_35 = arith.constant 36 : index
    %236 = vector.load %arg1[%c0_33, %c0_34, %c36_35] : memref<1x10x512xf32, #tpu.memory_space<vmem>>, vector<1x8x384xf32>
    %237 = vector.shape_cast %236 : vector<1x8x384xf32> to vector<8x384xf32>
    %c48 = arith.constant 48 : index
    %238 = memref.load %arg2[%c48] : memref<216xf32, #tpu.memory_space<smem>>
    %239 = vector.broadcast %238 : f32 to vector<8x384xf32>
    %240 = arith.mulf %237, %239 : vector<8x384xf32>
    %241 = arith.addf %207, %240 : vector<8x384xf32>
    %c49 = arith.constant 49 : index
    %242 = memref.load %arg2[%c49] : memref<216xf32, #tpu.memory_space<smem>>
    %243 = vector.broadcast %242 : f32 to vector<8x384xf32>
    %244 = arith.mulf %237, %243 : vector<8x384xf32>
    %245 = arith.addf %211, %244 : vector<8x384xf32>
    %c50 = arith.constant 50 : index
    %246 = memref.load %arg2[%c50] : memref<216xf32, #tpu.memory_space<smem>>
    %247 = vector.broadcast %246 : f32 to vector<8x384xf32>
    %248 = arith.mulf %237, %247 : vector<8x384xf32>
    %249 = arith.addf %215, %248 : vector<8x384xf32>
    %c51 = arith.constant 51 : index
    %250 = memref.load %arg2[%c51] : memref<216xf32, #tpu.memory_space<smem>>
    %251 = vector.broadcast %250 : f32 to vector<8x384xf32>
    %252 = arith.mulf %237, %251 : vector<8x384xf32>
    %253 = arith.addf %219, %252 : vector<8x384xf32>
    %c52 = arith.constant 52 : index
    %254 = memref.load %arg2[%c52] : memref<216xf32, #tpu.memory_space<smem>>
    %255 = vector.broadcast %254 : f32 to vector<8x384xf32>
    %256 = arith.mulf %237, %255 : vector<8x384xf32>
    %257 = arith.addf %223, %256 : vector<8x384xf32>
    %c53 = arith.constant 53 : index
    %258 = memref.load %arg2[%c53] : memref<216xf32, #tpu.memory_space<smem>>
    %259 = vector.broadcast %258 : f32 to vector<8x384xf32>
    %260 = arith.mulf %237, %259 : vector<8x384xf32>
    %261 = arith.addf %227, %260 : vector<8x384xf32>
    %c54 = arith.constant 54 : index
    %262 = memref.load %arg2[%c54] : memref<216xf32, #tpu.memory_space<smem>>
    %263 = vector.broadcast %262 : f32 to vector<8x384xf32>
    %264 = arith.mulf %237, %263 : vector<8x384xf32>
    %265 = arith.addf %231, %264 : vector<8x384xf32>
    %c55 = arith.constant 55 : index
    %266 = memref.load %arg2[%c55] : memref<216xf32, #tpu.memory_space<smem>>
    %267 = vector.broadcast %266 : f32 to vector<8x384xf32>
    %268 = arith.mulf %237, %267 : vector<8x384xf32>
    %269 = arith.addf %235, %268 : vector<8x384xf32>
    %c0_36 = arith.constant 0 : index
    %c0_37 = arith.constant 0 : index
    %c37_38 = arith.constant 37 : index
    %270 = vector.load %arg1[%c0_36, %c0_37, %c37_38] : memref<1x10x512xf32, #tpu.memory_space<vmem>>, vector<1x8x384xf32>
    %271 = vector.shape_cast %270 : vector<1x8x384xf32> to vector<8x384xf32>
    %c56 = arith.constant 56 : index
    %272 = memref.load %arg2[%c56] : memref<216xf32, #tpu.memory_space<smem>>
    %273 = vector.broadcast %272 : f32 to vector<8x384xf32>
    %274 = arith.mulf %271, %273 : vector<8x384xf32>
    %275 = arith.addf %241, %274 : vector<8x384xf32>
    %c57 = arith.constant 57 : index
    %276 = memref.load %arg2[%c57] : memref<216xf32, #tpu.memory_space<smem>>
    %277 = vector.broadcast %276 : f32 to vector<8x384xf32>
    %278 = arith.mulf %271, %277 : vector<8x384xf32>
    %279 = arith.addf %245, %278 : vector<8x384xf32>
    %c58 = arith.constant 58 : index
    %280 = memref.load %arg2[%c58] : memref<216xf32, #tpu.memory_space<smem>>
    %281 = vector.broadcast %280 : f32 to vector<8x384xf32>
    %282 = arith.mulf %271, %281 : vector<8x384xf32>
    %283 = arith.addf %249, %282 : vector<8x384xf32>
    %c59 = arith.constant 59 : index
    %284 = memref.load %arg2[%c59] : memref<216xf32, #tpu.memory_space<smem>>
    %285 = vector.broadcast %284 : f32 to vector<8x384xf32>
    %286 = arith.mulf %271, %285 : vector<8x384xf32>
    %287 = arith.addf %253, %286 : vector<8x384xf32>
    %c60 = arith.constant 60 : index
    %288 = memref.load %arg2[%c60] : memref<216xf32, #tpu.memory_space<smem>>
    %289 = vector.broadcast %288 : f32 to vector<8x384xf32>
    %290 = arith.mulf %271, %289 : vector<8x384xf32>
    %291 = arith.addf %257, %290 : vector<8x384xf32>
    %c61 = arith.constant 61 : index
    %292 = memref.load %arg2[%c61] : memref<216xf32, #tpu.memory_space<smem>>
    %293 = vector.broadcast %292 : f32 to vector<8x384xf32>
    %294 = arith.mulf %271, %293 : vector<8x384xf32>
    %295 = arith.addf %261, %294 : vector<8x384xf32>
    %c62 = arith.constant 62 : index
    %296 = memref.load %arg2[%c62] : memref<216xf32, #tpu.memory_space<smem>>
    %297 = vector.broadcast %296 : f32 to vector<8x384xf32>
    %298 = arith.mulf %271, %297 : vector<8x384xf32>
    %299 = arith.addf %265, %298 : vector<8x384xf32>
    %c63 = arith.constant 63 : index
    %300 = memref.load %arg2[%c63] : memref<216xf32, #tpu.memory_space<smem>>
    %301 = vector.broadcast %300 : f32 to vector<8x384xf32>
    %302 = arith.mulf %271, %301 : vector<8x384xf32>
    %303 = arith.addf %269, %302 : vector<8x384xf32>
    %c0_39 = arith.constant 0 : index
    %c0_40 = arith.constant 0 : index
    %c38_41 = arith.constant 38 : index
    %304 = vector.load %arg1[%c0_39, %c0_40, %c38_41] : memref<1x10x512xf32, #tpu.memory_space<vmem>>, vector<1x8x384xf32>
    %305 = vector.shape_cast %304 : vector<1x8x384xf32> to vector<8x384xf32>
    %c64 = arith.constant 64 : index
    %306 = memref.load %arg2[%c64] : memref<216xf32, #tpu.memory_space<smem>>
    %307 = vector.broadcast %306 : f32 to vector<8x384xf32>
    %308 = arith.mulf %305, %307 : vector<8x384xf32>
    %309 = arith.addf %275, %308 : vector<8x384xf32>
    %c65 = arith.constant 65 : index
    %310 = memref.load %arg2[%c65] : memref<216xf32, #tpu.memory_space<smem>>
    %311 = vector.broadcast %310 : f32 to vector<8x384xf32>
    %312 = arith.mulf %305, %311 : vector<8x384xf32>
    %313 = arith.addf %279, %312 : vector<8x384xf32>
    %c66 = arith.constant 66 : index
    %314 = memref.load %arg2[%c66] : memref<216xf32, #tpu.memory_space<smem>>
    %315 = vector.broadcast %314 : f32 to vector<8x384xf32>
    %316 = arith.mulf %305, %315 : vector<8x384xf32>
    %317 = arith.addf %283, %316 : vector<8x384xf32>
    %c67 = arith.constant 67 : index
    %318 = memref.load %arg2[%c67] : memref<216xf32, #tpu.memory_space<smem>>
    %319 = vector.broadcast %318 : f32 to vector<8x384xf32>
    %320 = arith.mulf %305, %319 : vector<8x384xf32>
    %321 = arith.addf %287, %320 : vector<8x384xf32>
    %c68 = arith.constant 68 : index
    %322 = memref.load %arg2[%c68] : memref<216xf32, #tpu.memory_space<smem>>
    %323 = vector.broadcast %322 : f32 to vector<8x384xf32>
    %324 = arith.mulf %305, %323 : vector<8x384xf32>
    %325 = arith.addf %291, %324 : vector<8x384xf32>
    %c69 = arith.constant 69 : index
    %326 = memref.load %arg2[%c69] : memref<216xf32, #tpu.memory_space<smem>>
    %327 = vector.broadcast %326 : f32 to vector<8x384xf32>
    %328 = arith.mulf %305, %327 : vector<8x384xf32>
    %329 = arith.addf %295, %328 : vector<8x384xf32>
    %c70 = arith.constant 70 : index
    %330 = memref.load %arg2[%c70] : memref<216xf32, #tpu.memory_space<smem>>
    %331 = vector.broadcast %330 : f32 to vector<8x384xf32>
    %332 = arith.mulf %305, %331 : vector<8x384xf32>
    %333 = arith.addf %299, %332 : vector<8x384xf32>
    %c71 = arith.constant 71 : index
    %334 = memref.load %arg2[%c71] : memref<216xf32, #tpu.memory_space<smem>>
    %335 = vector.broadcast %334 : f32 to vector<8x384xf32>
    %336 = arith.mulf %305, %335 : vector<8x384xf32>
    %337 = arith.addf %303, %336 : vector<8x384xf32>
    %c0_42 = arith.constant 0 : index
    %c1_43 = arith.constant 1 : index
    %c0_44 = arith.constant 0 : index
    %338 = vector.load %arg1[%c0_42, %c1_43, %c0_44] : memref<1x10x512xf32, #tpu.memory_space<vmem>>, vector<1x8x384xf32>
    %339 = vector.shape_cast %338 : vector<1x8x384xf32> to vector<8x384xf32>
    %c72 = arith.constant 72 : index
    %340 = memref.load %arg2[%c72] : memref<216xf32, #tpu.memory_space<smem>>
    %341 = vector.broadcast %340 : f32 to vector<8x384xf32>
    %342 = arith.mulf %339, %341 : vector<8x384xf32>
    %343 = arith.addf %309, %342 : vector<8x384xf32>
    %c73 = arith.constant 73 : index
    %344 = memref.load %arg2[%c73] : memref<216xf32, #tpu.memory_space<smem>>
    %345 = vector.broadcast %344 : f32 to vector<8x384xf32>
    %346 = arith.mulf %339, %345 : vector<8x384xf32>
    %347 = arith.addf %313, %346 : vector<8x384xf32>
    %c74 = arith.constant 74 : index
    %348 = memref.load %arg2[%c74] : memref<216xf32, #tpu.memory_space<smem>>
    %349 = vector.broadcast %348 : f32 to vector<8x384xf32>
    %350 = arith.mulf %339, %349 : vector<8x384xf32>
    %351 = arith.addf %317, %350 : vector<8x384xf32>
    %c75 = arith.constant 75 : index
    %352 = memref.load %arg2[%c75] : memref<216xf32, #tpu.memory_space<smem>>
    %353 = vector.broadcast %352 : f32 to vector<8x384xf32>
    %354 = arith.mulf %339, %353 : vector<8x384xf32>
    %355 = arith.addf %321, %354 : vector<8x384xf32>
    %c76 = arith.constant 76 : index
    %356 = memref.load %arg2[%c76] : memref<216xf32, #tpu.memory_space<smem>>
    %357 = vector.broadcast %356 : f32 to vector<8x384xf32>
    %358 = arith.mulf %339, %357 : vector<8x384xf32>
    %359 = arith.addf %325, %358 : vector<8x384xf32>
    %c77 = arith.constant 77 : index
    %360 = memref.load %arg2[%c77] : memref<216xf32, #tpu.memory_space<smem>>
    %361 = vector.broadcast %360 : f32 to vector<8x384xf32>
    %362 = arith.mulf %339, %361 : vector<8x384xf32>
    %363 = arith.addf %329, %362 : vector<8x384xf32>
    %c78 = arith.constant 78 : index
    %364 = memref.load %arg2[%c78] : memref<216xf32, #tpu.memory_space<smem>>
    %365 = vector.broadcast %364 : f32 to vector<8x384xf32>
    %366 = arith.mulf %339, %365 : vector<8x384xf32>
    %367 = arith.addf %333, %366 : vector<8x384xf32>
    %c79 = arith.constant 79 : index
    %368 = memref.load %arg2[%c79] : memref<216xf32, #tpu.memory_space<smem>>
    %369 = vector.broadcast %368 : f32 to vector<8x384xf32>
    %370 = arith.mulf %339, %369 : vector<8x384xf32>
    %371 = arith.addf %337, %370 : vector<8x384xf32>
    %c0_45 = arith.constant 0 : index
    %c1_46 = arith.constant 1 : index
    %c1_47 = arith.constant 1 : index
    %372 = vector.load %arg1[%c0_45, %c1_46, %c1_47] : memref<1x10x512xf32, #tpu.memory_space<vmem>>, vector<1x8x384xf32>
    %373 = vector.shape_cast %372 : vector<1x8x384xf32> to vector<8x384xf32>
    %c80 = arith.constant 80 : index
    %374 = memref.load %arg2[%c80] : memref<216xf32, #tpu.memory_space<smem>>
    %375 = vector.broadcast %374 : f32 to vector<8x384xf32>
    %376 = arith.mulf %373, %375 : vector<8x384xf32>
    %377 = arith.addf %343, %376 : vector<8x384xf32>
    %c81 = arith.constant 81 : index
    %378 = memref.load %arg2[%c81] : memref<216xf32, #tpu.memory_space<smem>>
    %379 = vector.broadcast %378 : f32 to vector<8x384xf32>
    %380 = arith.mulf %373, %379 : vector<8x384xf32>
    %381 = arith.addf %347, %380 : vector<8x384xf32>
    %c82 = arith.constant 82 : index
    %382 = memref.load %arg2[%c82] : memref<216xf32, #tpu.memory_space<smem>>
    %383 = vector.broadcast %382 : f32 to vector<8x384xf32>
    %384 = arith.mulf %373, %383 : vector<8x384xf32>
    %385 = arith.addf %351, %384 : vector<8x384xf32>
    %c83 = arith.constant 83 : index
    %386 = memref.load %arg2[%c83] : memref<216xf32, #tpu.memory_space<smem>>
    %387 = vector.broadcast %386 : f32 to vector<8x384xf32>
    %388 = arith.mulf %373, %387 : vector<8x384xf32>
    %389 = arith.addf %355, %388 : vector<8x384xf32>
    %c84 = arith.constant 84 : index
    %390 = memref.load %arg2[%c84] : memref<216xf32, #tpu.memory_space<smem>>
    %391 = vector.broadcast %390 : f32 to vector<8x384xf32>
    %392 = arith.mulf %373, %391 : vector<8x384xf32>
    %393 = arith.addf %359, %392 : vector<8x384xf32>
    %c85 = arith.constant 85 : index
    %394 = memref.load %arg2[%c85] : memref<216xf32, #tpu.memory_space<smem>>
    %395 = vector.broadcast %394 : f32 to vector<8x384xf32>
    %396 = arith.mulf %373, %395 : vector<8x384xf32>
    %397 = arith.addf %363, %396 : vector<8x384xf32>
    %c86 = arith.constant 86 : index
    %398 = memref.load %arg2[%c86] : memref<216xf32, #tpu.memory_space<smem>>
    %399 = vector.broadcast %398 : f32 to vector<8x384xf32>
    %400 = arith.mulf %373, %399 : vector<8x384xf32>
    %401 = arith.addf %367, %400 : vector<8x384xf32>
    %c87 = arith.constant 87 : index
    %402 = memref.load %arg2[%c87] : memref<216xf32, #tpu.memory_space<smem>>
    %403 = vector.broadcast %402 : f32 to vector<8x384xf32>
    %404 = arith.mulf %373, %403 : vector<8x384xf32>
    %405 = arith.addf %371, %404 : vector<8x384xf32>
    %c0_48 = arith.constant 0 : index
    %c1_49 = arith.constant 1 : index
    %c2_50 = arith.constant 2 : index
    %406 = vector.load %arg1[%c0_48, %c1_49, %c2_50] : memref<1x10x512xf32, #tpu.memory_space<vmem>>, vector<1x8x384xf32>
    %407 = vector.shape_cast %406 : vector<1x8x384xf32> to vector<8x384xf32>
    %c88 = arith.constant 88 : index
    %408 = memref.load %arg2[%c88] : memref<216xf32, #tpu.memory_space<smem>>
    %409 = vector.broadcast %408 : f32 to vector<8x384xf32>
    %410 = arith.mulf %407, %409 : vector<8x384xf32>
    %411 = arith.addf %377, %410 : vector<8x384xf32>
    %c89 = arith.constant 89 : index
    %412 = memref.load %arg2[%c89] : memref<216xf32, #tpu.memory_space<smem>>
    %413 = vector.broadcast %412 : f32 to vector<8x384xf32>
    %414 = arith.mulf %407, %413 : vector<8x384xf32>
    %415 = arith.addf %381, %414 : vector<8x384xf32>
    %c90 = arith.constant 90 : index
    %416 = memref.load %arg2[%c90] : memref<216xf32, #tpu.memory_space<smem>>
    %417 = vector.broadcast %416 : f32 to vector<8x384xf32>
    %418 = arith.mulf %407, %417 : vector<8x384xf32>
    %419 = arith.addf %385, %418 : vector<8x384xf32>
    %c91 = arith.constant 91 : index
    %420 = memref.load %arg2[%c91] : memref<216xf32, #tpu.memory_space<smem>>
    %421 = vector.broadcast %420 : f32 to vector<8x384xf32>
    %422 = arith.mulf %407, %421 : vector<8x384xf32>
    %423 = arith.addf %389, %422 : vector<8x384xf32>
    %c92 = arith.constant 92 : index
    %424 = memref.load %arg2[%c92] : memref<216xf32, #tpu.memory_space<smem>>
    %425 = vector.broadcast %424 : f32 to vector<8x384xf32>
    %426 = arith.mulf %407, %425 : vector<8x384xf32>
    %427 = arith.addf %393, %426 : vector<8x384xf32>
    %c93 = arith.constant 93 : index
    %428 = memref.load %arg2[%c93] : memref<216xf32, #tpu.memory_space<smem>>
    %429 = vector.broadcast %428 : f32 to vector<8x384xf32>
    %430 = arith.mulf %407, %429 : vector<8x384xf32>
    %431 = arith.addf %397, %430 : vector<8x384xf32>
    %c94 = arith.constant 94 : index
    %432 = memref.load %arg2[%c94] : memref<216xf32, #tpu.memory_space<smem>>
    %433 = vector.broadcast %432 : f32 to vector<8x384xf32>
    %434 = arith.mulf %407, %433 : vector<8x384xf32>
    %435 = arith.addf %401, %434 : vector<8x384xf32>
    %c95 = arith.constant 95 : index
    %436 = memref.load %arg2[%c95] : memref<216xf32, #tpu.memory_space<smem>>
    %437 = vector.broadcast %436 : f32 to vector<8x384xf32>
    %438 = arith.mulf %407, %437 : vector<8x384xf32>
    %439 = arith.addf %405, %438 : vector<8x384xf32>
    %c0_51 = arith.constant 0 : index
    %c1_52 = arith.constant 1 : index
    %c18_53 = arith.constant 18 : index
    %440 = vector.load %arg1[%c0_51, %c1_52, %c18_53] : memref<1x10x512xf32, #tpu.memory_space<vmem>>, vector<1x8x384xf32>
    %441 = vector.shape_cast %440 : vector<1x8x384xf32> to vector<8x384xf32>
    %c96 = arith.constant 96 : index
    %442 = memref.load %arg2[%c96] : memref<216xf32, #tpu.memory_space<smem>>
    %443 = vector.broadcast %442 : f32 to vector<8x384xf32>
    %444 = arith.mulf %441, %443 : vector<8x384xf32>
    %445 = arith.addf %411, %444 : vector<8x384xf32>
    %c97 = arith.constant 97 : index
    %446 = memref.load %arg2[%c97] : memref<216xf32, #tpu.memory_space<smem>>
    %447 = vector.broadcast %446 : f32 to vector<8x384xf32>
    %448 = arith.mulf %441, %447 : vector<8x384xf32>
    %449 = arith.addf %415, %448 : vector<8x384xf32>
    %c98 = arith.constant 98 : index
    %450 = memref.load %arg2[%c98] : memref<216xf32, #tpu.memory_space<smem>>
    %451 = vector.broadcast %450 : f32 to vector<8x384xf32>
    %452 = arith.mulf %441, %451 : vector<8x384xf32>
    %453 = arith.addf %419, %452 : vector<8x384xf32>
    %c99 = arith.constant 99 : index
    %454 = memref.load %arg2[%c99] : memref<216xf32, #tpu.memory_space<smem>>
    %455 = vector.broadcast %454 : f32 to vector<8x384xf32>
    %456 = arith.mulf %441, %455 : vector<8x384xf32>
    %457 = arith.addf %423, %456 : vector<8x384xf32>
    %c100 = arith.constant 100 : index
    %458 = memref.load %arg2[%c100] : memref<216xf32, #tpu.memory_space<smem>>
    %459 = vector.broadcast %458 : f32 to vector<8x384xf32>
    %460 = arith.mulf %441, %459 : vector<8x384xf32>
    %461 = arith.addf %427, %460 : vector<8x384xf32>
    %c101 = arith.constant 101 : index
    %462 = memref.load %arg2[%c101] : memref<216xf32, #tpu.memory_space<smem>>
    %463 = vector.broadcast %462 : f32 to vector<8x384xf32>
    %464 = arith.mulf %441, %463 : vector<8x384xf32>
    %465 = arith.addf %431, %464 : vector<8x384xf32>
    %c102 = arith.constant 102 : index
    %466 = memref.load %arg2[%c102] : memref<216xf32, #tpu.memory_space<smem>>
    %467 = vector.broadcast %466 : f32 to vector<8x384xf32>
    %468 = arith.mulf %441, %467 : vector<8x384xf32>
    %469 = arith.addf %435, %468 : vector<8x384xf32>
    %c103 = arith.constant 103 : index
    %470 = memref.load %arg2[%c103] : memref<216xf32, #tpu.memory_space<smem>>
    %471 = vector.broadcast %470 : f32 to vector<8x384xf32>
    %472 = arith.mulf %441, %471 : vector<8x384xf32>
    %473 = arith.addf %439, %472 : vector<8x384xf32>
    %c0_54 = arith.constant 0 : index
    %c1_55 = arith.constant 1 : index
    %c19_56 = arith.constant 19 : index
    %474 = vector.load %arg1[%c0_54, %c1_55, %c19_56] : memref<1x10x512xf32, #tpu.memory_space<vmem>>, vector<1x8x384xf32>
    %475 = vector.shape_cast %474 : vector<1x8x384xf32> to vector<8x384xf32>
    %c104 = arith.constant 104 : index
    %476 = memref.load %arg2[%c104] : memref<216xf32, #tpu.memory_space<smem>>
    %477 = vector.broadcast %476 : f32 to vector<8x384xf32>
    %478 = arith.mulf %475, %477 : vector<8x384xf32>
    %479 = arith.addf %445, %478 : vector<8x384xf32>
    %c105 = arith.constant 105 : index
    %480 = memref.load %arg2[%c105] : memref<216xf32, #tpu.memory_space<smem>>
    %481 = vector.broadcast %480 : f32 to vector<8x384xf32>
    %482 = arith.mulf %475, %481 : vector<8x384xf32>
    %483 = arith.addf %449, %482 : vector<8x384xf32>
    %c106 = arith.constant 106 : index
    %484 = memref.load %arg2[%c106] : memref<216xf32, #tpu.memory_space<smem>>
    %485 = vector.broadcast %484 : f32 to vector<8x384xf32>
    %486 = arith.mulf %475, %485 : vector<8x384xf32>
    %487 = arith.addf %453, %486 : vector<8x384xf32>
    %c107 = arith.constant 107 : index
    %488 = memref.load %arg2[%c107] : memref<216xf32, #tpu.memory_space<smem>>
    %489 = vector.broadcast %488 : f32 to vector<8x384xf32>
    %490 = arith.mulf %475, %489 : vector<8x384xf32>
    %491 = arith.addf %457, %490 : vector<8x384xf32>
    %c108 = arith.constant 108 : index
    %492 = memref.load %arg2[%c108] : memref<216xf32, #tpu.memory_space<smem>>
    %493 = vector.broadcast %492 : f32 to vector<8x384xf32>
    %494 = arith.mulf %475, %493 : vector<8x384xf32>
    %495 = arith.addf %461, %494 : vector<8x384xf32>
    %c109 = arith.constant 109 : index
    %496 = memref.load %arg2[%c109] : memref<216xf32, #tpu.memory_space<smem>>
    %497 = vector.broadcast %496 : f32 to vector<8x384xf32>
    %498 = arith.mulf %475, %497 : vector<8x384xf32>
    %499 = arith.addf %465, %498 : vector<8x384xf32>
    %c110 = arith.constant 110 : index
    %500 = memref.load %arg2[%c110] : memref<216xf32, #tpu.memory_space<smem>>
    %501 = vector.broadcast %500 : f32 to vector<8x384xf32>
    %502 = arith.mulf %475, %501 : vector<8x384xf32>
    %503 = arith.addf %469, %502 : vector<8x384xf32>
    %c111 = arith.constant 111 : index
    %504 = memref.load %arg2[%c111] : memref<216xf32, #tpu.memory_space<smem>>
    %505 = vector.broadcast %504 : f32 to vector<8x384xf32>
    %506 = arith.mulf %475, %505 : vector<8x384xf32>
    %507 = arith.addf %473, %506 : vector<8x384xf32>
    %c0_57 = arith.constant 0 : index
    %c1_58 = arith.constant 1 : index
    %c20_59 = arith.constant 20 : index
    %508 = vector.load %arg1[%c0_57, %c1_58, %c20_59] : memref<1x10x512xf32, #tpu.memory_space<vmem>>, vector<1x8x384xf32>
    %509 = vector.shape_cast %508 : vector<1x8x384xf32> to vector<8x384xf32>
    %c112 = arith.constant 112 : index
    %510 = memref.load %arg2[%c112] : memref<216xf32, #tpu.memory_space<smem>>
    %511 = vector.broadcast %510 : f32 to vector<8x384xf32>
    %512 = arith.mulf %509, %511 : vector<8x384xf32>
    %513 = arith.addf %479, %512 : vector<8x384xf32>
    %c113 = arith.constant 113 : index
    %514 = memref.load %arg2[%c113] : memref<216xf32, #tpu.memory_space<smem>>
    %515 = vector.broadcast %514 : f32 to vector<8x384xf32>
    %516 = arith.mulf %509, %515 : vector<8x384xf32>
    %517 = arith.addf %483, %516 : vector<8x384xf32>
    %c114 = arith.constant 114 : index
    %518 = memref.load %arg2[%c114] : memref<216xf32, #tpu.memory_space<smem>>
    %519 = vector.broadcast %518 : f32 to vector<8x384xf32>
    %520 = arith.mulf %509, %519 : vector<8x384xf32>
    %521 = arith.addf %487, %520 : vector<8x384xf32>
    %c115 = arith.constant 115 : index
    %522 = memref.load %arg2[%c115] : memref<216xf32, #tpu.memory_space<smem>>
    %523 = vector.broadcast %522 : f32 to vector<8x384xf32>
    %524 = arith.mulf %509, %523 : vector<8x384xf32>
    %525 = arith.addf %491, %524 : vector<8x384xf32>
    %c116 = arith.constant 116 : index
    %526 = memref.load %arg2[%c116] : memref<216xf32, #tpu.memory_space<smem>>
    %527 = vector.broadcast %526 : f32 to vector<8x384xf32>
    %528 = arith.mulf %509, %527 : vector<8x384xf32>
    %529 = arith.addf %495, %528 : vector<8x384xf32>
    %c117 = arith.constant 117 : index
    %530 = memref.load %arg2[%c117] : memref<216xf32, #tpu.memory_space<smem>>
    %531 = vector.broadcast %530 : f32 to vector<8x384xf32>
    %532 = arith.mulf %509, %531 : vector<8x384xf32>
    %533 = arith.addf %499, %532 : vector<8x384xf32>
    %c118 = arith.constant 118 : index
    %534 = memref.load %arg2[%c118] : memref<216xf32, #tpu.memory_space<smem>>
    %535 = vector.broadcast %534 : f32 to vector<8x384xf32>
    %536 = arith.mulf %509, %535 : vector<8x384xf32>
    %537 = arith.addf %503, %536 : vector<8x384xf32>
    %c119 = arith.constant 119 : index
    %538 = memref.load %arg2[%c119] : memref<216xf32, #tpu.memory_space<smem>>
    %539 = vector.broadcast %538 : f32 to vector<8x384xf32>
    %540 = arith.mulf %509, %539 : vector<8x384xf32>
    %541 = arith.addf %507, %540 : vector<8x384xf32>
    %c0_60 = arith.constant 0 : index
    %c1_61 = arith.constant 1 : index
    %c36_62 = arith.constant 36 : index
    %542 = vector.load %arg1[%c0_60, %c1_61, %c36_62] : memref<1x10x512xf32, #tpu.memory_space<vmem>>, vector<1x8x384xf32>
    %543 = vector.shape_cast %542 : vector<1x8x384xf32> to vector<8x384xf32>
    %c120 = arith.constant 120 : index
    %544 = memref.load %arg2[%c120] : memref<216xf32, #tpu.memory_space<smem>>
    %545 = vector.broadcast %544 : f32 to vector<8x384xf32>
    %546 = arith.mulf %543, %545 : vector<8x384xf32>
    %547 = arith.addf %513, %546 : vector<8x384xf32>
    %c121 = arith.constant 121 : index
    %548 = memref.load %arg2[%c121] : memref<216xf32, #tpu.memory_space<smem>>
    %549 = vector.broadcast %548 : f32 to vector<8x384xf32>
    %550 = arith.mulf %543, %549 : vector<8x384xf32>
    %551 = arith.addf %517, %550 : vector<8x384xf32>
    %c122 = arith.constant 122 : index
    %552 = memref.load %arg2[%c122] : memref<216xf32, #tpu.memory_space<smem>>
    %553 = vector.broadcast %552 : f32 to vector<8x384xf32>
    %554 = arith.mulf %543, %553 : vector<8x384xf32>
    %555 = arith.addf %521, %554 : vector<8x384xf32>
    %c123 = arith.constant 123 : index
    %556 = memref.load %arg2[%c123] : memref<216xf32, #tpu.memory_space<smem>>
    %557 = vector.broadcast %556 : f32 to vector<8x384xf32>
    %558 = arith.mulf %543, %557 : vector<8x384xf32>
    %559 = arith.addf %525, %558 : vector<8x384xf32>
    %c124 = arith.constant 124 : index
    %560 = memref.load %arg2[%c124] : memref<216xf32, #tpu.memory_space<smem>>
    %561 = vector.broadcast %560 : f32 to vector<8x384xf32>
    %562 = arith.mulf %543, %561 : vector<8x384xf32>
    %563 = arith.addf %529, %562 : vector<8x384xf32>
    %c125 = arith.constant 125 : index
    %564 = memref.load %arg2[%c125] : memref<216xf32, #tpu.memory_space<smem>>
    %565 = vector.broadcast %564 : f32 to vector<8x384xf32>
    %566 = arith.mulf %543, %565 : vector<8x384xf32>
    %567 = arith.addf %533, %566 : vector<8x384xf32>
    %c126 = arith.constant 126 : index
    %568 = memref.load %arg2[%c126] : memref<216xf32, #tpu.memory_space<smem>>
    %569 = vector.broadcast %568 : f32 to vector<8x384xf32>
    %570 = arith.mulf %543, %569 : vector<8x384xf32>
    %571 = arith.addf %537, %570 : vector<8x384xf32>
    %c127 = arith.constant 127 : index
    %572 = memref.load %arg2[%c127] : memref<216xf32, #tpu.memory_space<smem>>
    %573 = vector.broadcast %572 : f32 to vector<8x384xf32>
    %574 = arith.mulf %543, %573 : vector<8x384xf32>
    %575 = arith.addf %541, %574 : vector<8x384xf32>
    %c0_63 = arith.constant 0 : index
    %c1_64 = arith.constant 1 : index
    %c37_65 = arith.constant 37 : index
    %576 = vector.load %arg1[%c0_63, %c1_64, %c37_65] : memref<1x10x512xf32, #tpu.memory_space<vmem>>, vector<1x8x384xf32>
    %577 = vector.shape_cast %576 : vector<1x8x384xf32> to vector<8x384xf32>
    %c128 = arith.constant 128 : index
    %578 = memref.load %arg2[%c128] : memref<216xf32, #tpu.memory_space<smem>>
    %579 = vector.broadcast %578 : f32 to vector<8x384xf32>
    %580 = arith.mulf %577, %579 : vector<8x384xf32>
    %581 = arith.addf %547, %580 : vector<8x384xf32>
    %c129 = arith.constant 129 : index
    %582 = memref.load %arg2[%c129] : memref<216xf32, #tpu.memory_space<smem>>
    %583 = vector.broadcast %582 : f32 to vector<8x384xf32>
    %584 = arith.mulf %577, %583 : vector<8x384xf32>
    %585 = arith.addf %551, %584 : vector<8x384xf32>
    %c130 = arith.constant 130 : index
    %586 = memref.load %arg2[%c130] : memref<216xf32, #tpu.memory_space<smem>>
    %587 = vector.broadcast %586 : f32 to vector<8x384xf32>
    %588 = arith.mulf %577, %587 : vector<8x384xf32>
    %589 = arith.addf %555, %588 : vector<8x384xf32>
    %c131 = arith.constant 131 : index
    %590 = memref.load %arg2[%c131] : memref<216xf32, #tpu.memory_space<smem>>
    %591 = vector.broadcast %590 : f32 to vector<8x384xf32>
    %592 = arith.mulf %577, %591 : vector<8x384xf32>
    %593 = arith.addf %559, %592 : vector<8x384xf32>
    %c132 = arith.constant 132 : index
    %594 = memref.load %arg2[%c132] : memref<216xf32, #tpu.memory_space<smem>>
    %595 = vector.broadcast %594 : f32 to vector<8x384xf32>
    %596 = arith.mulf %577, %595 : vector<8x384xf32>
    %597 = arith.addf %563, %596 : vector<8x384xf32>
    %c133 = arith.constant 133 : index
    %598 = memref.load %arg2[%c133] : memref<216xf32, #tpu.memory_space<smem>>
    %599 = vector.broadcast %598 : f32 to vector<8x384xf32>
    %600 = arith.mulf %577, %599 : vector<8x384xf32>
    %601 = arith.addf %567, %600 : vector<8x384xf32>
    %c134 = arith.constant 134 : index
    %602 = memref.load %arg2[%c134] : memref<216xf32, #tpu.memory_space<smem>>
    %603 = vector.broadcast %602 : f32 to vector<8x384xf32>
    %604 = arith.mulf %577, %603 : vector<8x384xf32>
    %605 = arith.addf %571, %604 : vector<8x384xf32>
    %c135 = arith.constant 135 : index
    %606 = memref.load %arg2[%c135] : memref<216xf32, #tpu.memory_space<smem>>
    %607 = vector.broadcast %606 : f32 to vector<8x384xf32>
    %608 = arith.mulf %577, %607 : vector<8x384xf32>
    %609 = arith.addf %575, %608 : vector<8x384xf32>
    %c0_66 = arith.constant 0 : index
    %c1_67 = arith.constant 1 : index
    %c38_68 = arith.constant 38 : index
    %610 = vector.load %arg1[%c0_66, %c1_67, %c38_68] : memref<1x10x512xf32, #tpu.memory_space<vmem>>, vector<1x8x384xf32>
    %611 = vector.shape_cast %610 : vector<1x8x384xf32> to vector<8x384xf32>
    %c136 = arith.constant 136 : index
    %612 = memref.load %arg2[%c136] : memref<216xf32, #tpu.memory_space<smem>>
    %613 = vector.broadcast %612 : f32 to vector<8x384xf32>
    %614 = arith.mulf %611, %613 : vector<8x384xf32>
    %615 = arith.addf %581, %614 : vector<8x384xf32>
    %c137 = arith.constant 137 : index
    %616 = memref.load %arg2[%c137] : memref<216xf32, #tpu.memory_space<smem>>
    %617 = vector.broadcast %616 : f32 to vector<8x384xf32>
    %618 = arith.mulf %611, %617 : vector<8x384xf32>
    %619 = arith.addf %585, %618 : vector<8x384xf32>
    %c138 = arith.constant 138 : index
    %620 = memref.load %arg2[%c138] : memref<216xf32, #tpu.memory_space<smem>>
    %621 = vector.broadcast %620 : f32 to vector<8x384xf32>
    %622 = arith.mulf %611, %621 : vector<8x384xf32>
    %623 = arith.addf %589, %622 : vector<8x384xf32>
    %c139 = arith.constant 139 : index
    %624 = memref.load %arg2[%c139] : memref<216xf32, #tpu.memory_space<smem>>
    %625 = vector.broadcast %624 : f32 to vector<8x384xf32>
    %626 = arith.mulf %611, %625 : vector<8x384xf32>
    %627 = arith.addf %593, %626 : vector<8x384xf32>
    %c140 = arith.constant 140 : index
    %628 = memref.load %arg2[%c140] : memref<216xf32, #tpu.memory_space<smem>>
    %629 = vector.broadcast %628 : f32 to vector<8x384xf32>
    %630 = arith.mulf %611, %629 : vector<8x384xf32>
    %631 = arith.addf %597, %630 : vector<8x384xf32>
    %c141 = arith.constant 141 : index
    %632 = memref.load %arg2[%c141] : memref<216xf32, #tpu.memory_space<smem>>
    %633 = vector.broadcast %632 : f32 to vector<8x384xf32>
    %634 = arith.mulf %611, %633 : vector<8x384xf32>
    %635 = arith.addf %601, %634 : vector<8x384xf32>
    %c142 = arith.constant 142 : index
    %636 = memref.load %arg2[%c142] : memref<216xf32, #tpu.memory_space<smem>>
    %637 = vector.broadcast %636 : f32 to vector<8x384xf32>
    %638 = arith.mulf %611, %637 : vector<8x384xf32>
    %639 = arith.addf %605, %638 : vector<8x384xf32>
    %c143 = arith.constant 143 : index
    %640 = memref.load %arg2[%c143] : memref<216xf32, #tpu.memory_space<smem>>
    %641 = vector.broadcast %640 : f32 to vector<8x384xf32>
    %642 = arith.mulf %611, %641 : vector<8x384xf32>
    %643 = arith.addf %609, %642 : vector<8x384xf32>
    %c0_69 = arith.constant 0 : index
    %c2_70 = arith.constant 2 : index
    %c0_71 = arith.constant 0 : index
    %644 = vector.load %arg1[%c0_69, %c2_70, %c0_71] : memref<1x10x512xf32, #tpu.memory_space<vmem>>, vector<1x8x384xf32>
    %645 = vector.shape_cast %644 : vector<1x8x384xf32> to vector<8x384xf32>
    %c144 = arith.constant 144 : index
    %646 = memref.load %arg2[%c144] : memref<216xf32, #tpu.memory_space<smem>>
    %647 = vector.broadcast %646 : f32 to vector<8x384xf32>
    %648 = arith.mulf %645, %647 : vector<8x384xf32>
    %649 = arith.addf %615, %648 : vector<8x384xf32>
    %c145 = arith.constant 145 : index
    %650 = memref.load %arg2[%c145] : memref<216xf32, #tpu.memory_space<smem>>
    %651 = vector.broadcast %650 : f32 to vector<8x384xf32>
    %652 = arith.mulf %645, %651 : vector<8x384xf32>
    %653 = arith.addf %619, %652 : vector<8x384xf32>
    %c146 = arith.constant 146 : index
    %654 = memref.load %arg2[%c146] : memref<216xf32, #tpu.memory_space<smem>>
    %655 = vector.broadcast %654 : f32 to vector<8x384xf32>
    %656 = arith.mulf %645, %655 : vector<8x384xf32>
    %657 = arith.addf %623, %656 : vector<8x384xf32>
    %c147 = arith.constant 147 : index
    %658 = memref.load %arg2[%c147] : memref<216xf32, #tpu.memory_space<smem>>
    %659 = vector.broadcast %658 : f32 to vector<8x384xf32>
    %660 = arith.mulf %645, %659 : vector<8x384xf32>
    %661 = arith.addf %627, %660 : vector<8x384xf32>
    %c148 = arith.constant 148 : index
    %662 = memref.load %arg2[%c148] : memref<216xf32, #tpu.memory_space<smem>>
    %663 = vector.broadcast %662 : f32 to vector<8x384xf32>
    %664 = arith.mulf %645, %663 : vector<8x384xf32>
    %665 = arith.addf %631, %664 : vector<8x384xf32>
    %c149 = arith.constant 149 : index
    %666 = memref.load %arg2[%c149] : memref<216xf32, #tpu.memory_space<smem>>
    %667 = vector.broadcast %666 : f32 to vector<8x384xf32>
    %668 = arith.mulf %645, %667 : vector<8x384xf32>
    %669 = arith.addf %635, %668 : vector<8x384xf32>
    %c150 = arith.constant 150 : index
    %670 = memref.load %arg2[%c150] : memref<216xf32, #tpu.memory_space<smem>>
    %671 = vector.broadcast %670 : f32 to vector<8x384xf32>
    %672 = arith.mulf %645, %671 : vector<8x384xf32>
    %673 = arith.addf %639, %672 : vector<8x384xf32>
    %c151 = arith.constant 151 : index
    %674 = memref.load %arg2[%c151] : memref<216xf32, #tpu.memory_space<smem>>
    %675 = vector.broadcast %674 : f32 to vector<8x384xf32>
    %676 = arith.mulf %645, %675 : vector<8x384xf32>
    %677 = arith.addf %643, %676 : vector<8x384xf32>
    %c0_72 = arith.constant 0 : index
    %c2_73 = arith.constant 2 : index
    %c1_74 = arith.constant 1 : index
    %678 = vector.load %arg1[%c0_72, %c2_73, %c1_74] : memref<1x10x512xf32, #tpu.memory_space<vmem>>, vector<1x8x384xf32>
    %679 = vector.shape_cast %678 : vector<1x8x384xf32> to vector<8x384xf32>
    %c152 = arith.constant 152 : index
    %680 = memref.load %arg2[%c152] : memref<216xf32, #tpu.memory_space<smem>>
    %681 = vector.broadcast %680 : f32 to vector<8x384xf32>
    %682 = arith.mulf %679, %681 : vector<8x384xf32>
    %683 = arith.addf %649, %682 : vector<8x384xf32>
    %c153 = arith.constant 153 : index
    %684 = memref.load %arg2[%c153] : memref<216xf32, #tpu.memory_space<smem>>
    %685 = vector.broadcast %684 : f32 to vector<8x384xf32>
    %686 = arith.mulf %679, %685 : vector<8x384xf32>
    %687 = arith.addf %653, %686 : vector<8x384xf32>
    %c154 = arith.constant 154 : index
    %688 = memref.load %arg2[%c154] : memref<216xf32, #tpu.memory_space<smem>>
    %689 = vector.broadcast %688 : f32 to vector<8x384xf32>
    %690 = arith.mulf %679, %689 : vector<8x384xf32>
    %691 = arith.addf %657, %690 : vector<8x384xf32>
    %c155 = arith.constant 155 : index
    %692 = memref.load %arg2[%c155] : memref<216xf32, #tpu.memory_space<smem>>
    %693 = vector.broadcast %692 : f32 to vector<8x384xf32>
    %694 = arith.mulf %679, %693 : vector<8x384xf32>
    %695 = arith.addf %661, %694 : vector<8x384xf32>
    %c156 = arith.constant 156 : index
    %696 = memref.load %arg2[%c156] : memref<216xf32, #tpu.memory_space<smem>>
    %697 = vector.broadcast %696 : f32 to vector<8x384xf32>
    %698 = arith.mulf %679, %697 : vector<8x384xf32>
    %699 = arith.addf %665, %698 : vector<8x384xf32>
    %c157 = arith.constant 157 : index
    %700 = memref.load %arg2[%c157] : memref<216xf32, #tpu.memory_space<smem>>
    %701 = vector.broadcast %700 : f32 to vector<8x384xf32>
    %702 = arith.mulf %679, %701 : vector<8x384xf32>
    %703 = arith.addf %669, %702 : vector<8x384xf32>
    %c158 = arith.constant 158 : index
    %704 = memref.load %arg2[%c158] : memref<216xf32, #tpu.memory_space<smem>>
    %705 = vector.broadcast %704 : f32 to vector<8x384xf32>
    %706 = arith.mulf %679, %705 : vector<8x384xf32>
    %707 = arith.addf %673, %706 : vector<8x384xf32>
    %c159 = arith.constant 159 : index
    %708 = memref.load %arg2[%c159] : memref<216xf32, #tpu.memory_space<smem>>
    %709 = vector.broadcast %708 : f32 to vector<8x384xf32>
    %710 = arith.mulf %679, %709 : vector<8x384xf32>
    %711 = arith.addf %677, %710 : vector<8x384xf32>
    %c0_75 = arith.constant 0 : index
    %c2_76 = arith.constant 2 : index
    %c2_77 = arith.constant 2 : index
    %712 = vector.load %arg1[%c0_75, %c2_76, %c2_77] : memref<1x10x512xf32, #tpu.memory_space<vmem>>, vector<1x8x384xf32>
    %713 = vector.shape_cast %712 : vector<1x8x384xf32> to vector<8x384xf32>
    %c160 = arith.constant 160 : index
    %714 = memref.load %arg2[%c160] : memref<216xf32, #tpu.memory_space<smem>>
    %715 = vector.broadcast %714 : f32 to vector<8x384xf32>
    %716 = arith.mulf %713, %715 : vector<8x384xf32>
    %717 = arith.addf %683, %716 : vector<8x384xf32>
    %c161 = arith.constant 161 : index
    %718 = memref.load %arg2[%c161] : memref<216xf32, #tpu.memory_space<smem>>
    %719 = vector.broadcast %718 : f32 to vector<8x384xf32>
    %720 = arith.mulf %713, %719 : vector<8x384xf32>
    %721 = arith.addf %687, %720 : vector<8x384xf32>
    %c162 = arith.constant 162 : index
    %722 = memref.load %arg2[%c162] : memref<216xf32, #tpu.memory_space<smem>>
    %723 = vector.broadcast %722 : f32 to vector<8x384xf32>
    %724 = arith.mulf %713, %723 : vector<8x384xf32>
    %725 = arith.addf %691, %724 : vector<8x384xf32>
    %c163 = arith.constant 163 : index
    %726 = memref.load %arg2[%c163] : memref<216xf32, #tpu.memory_space<smem>>
    %727 = vector.broadcast %726 : f32 to vector<8x384xf32>
    %728 = arith.mulf %713, %727 : vector<8x384xf32>
    %729 = arith.addf %695, %728 : vector<8x384xf32>
    %c164 = arith.constant 164 : index
    %730 = memref.load %arg2[%c164] : memref<216xf32, #tpu.memory_space<smem>>
    %731 = vector.broadcast %730 : f32 to vector<8x384xf32>
    %732 = arith.mulf %713, %731 : vector<8x384xf32>
    %733 = arith.addf %699, %732 : vector<8x384xf32>
    %c165 = arith.constant 165 : index
    %734 = memref.load %arg2[%c165] : memref<216xf32, #tpu.memory_space<smem>>
    %735 = vector.broadcast %734 : f32 to vector<8x384xf32>
    %736 = arith.mulf %713, %735 : vector<8x384xf32>
    %737 = arith.addf %703, %736 : vector<8x384xf32>
    %c166 = arith.constant 166 : index
    %738 = memref.load %arg2[%c166] : memref<216xf32, #tpu.memory_space<smem>>
    %739 = vector.broadcast %738 : f32 to vector<8x384xf32>
    %740 = arith.mulf %713, %739 : vector<8x384xf32>
    %741 = arith.addf %707, %740 : vector<8x384xf32>
    %c167 = arith.constant 167 : index
    %742 = memref.load %arg2[%c167] : memref<216xf32, #tpu.memory_space<smem>>
    %743 = vector.broadcast %742 : f32 to vector<8x384xf32>
    %744 = arith.mulf %713, %743 : vector<8x384xf32>
    %745 = arith.addf %711, %744 : vector<8x384xf32>
    %c0_78 = arith.constant 0 : index
    %c2_79 = arith.constant 2 : index
    %c18_80 = arith.constant 18 : index
    %746 = vector.load %arg1[%c0_78, %c2_79, %c18_80] : memref<1x10x512xf32, #tpu.memory_space<vmem>>, vector<1x8x384xf32>
    %747 = vector.shape_cast %746 : vector<1x8x384xf32> to vector<8x384xf32>
    %c168 = arith.constant 168 : index
    %748 = memref.load %arg2[%c168] : memref<216xf32, #tpu.memory_space<smem>>
    %749 = vector.broadcast %748 : f32 to vector<8x384xf32>
    %750 = arith.mulf %747, %749 : vector<8x384xf32>
    %751 = arith.addf %717, %750 : vector<8x384xf32>
    %c169 = arith.constant 169 : index
    %752 = memref.load %arg2[%c169] : memref<216xf32, #tpu.memory_space<smem>>
    %753 = vector.broadcast %752 : f32 to vector<8x384xf32>
    %754 = arith.mulf %747, %753 : vector<8x384xf32>
    %755 = arith.addf %721, %754 : vector<8x384xf32>
    %c170 = arith.constant 170 : index
    %756 = memref.load %arg2[%c170] : memref<216xf32, #tpu.memory_space<smem>>
    %757 = vector.broadcast %756 : f32 to vector<8x384xf32>
    %758 = arith.mulf %747, %757 : vector<8x384xf32>
    %759 = arith.addf %725, %758 : vector<8x384xf32>
    %c171 = arith.constant 171 : index
    %760 = memref.load %arg2[%c171] : memref<216xf32, #tpu.memory_space<smem>>
    %761 = vector.broadcast %760 : f32 to vector<8x384xf32>
    %762 = arith.mulf %747, %761 : vector<8x384xf32>
    %763 = arith.addf %729, %762 : vector<8x384xf32>
    %c172 = arith.constant 172 : index
    %764 = memref.load %arg2[%c172] : memref<216xf32, #tpu.memory_space<smem>>
    %765 = vector.broadcast %764 : f32 to vector<8x384xf32>
    %766 = arith.mulf %747, %765 : vector<8x384xf32>
    %767 = arith.addf %733, %766 : vector<8x384xf32>
    %c173 = arith.constant 173 : index
    %768 = memref.load %arg2[%c173] : memref<216xf32, #tpu.memory_space<smem>>
    %769 = vector.broadcast %768 : f32 to vector<8x384xf32>
    %770 = arith.mulf %747, %769 : vector<8x384xf32>
    %771 = arith.addf %737, %770 : vector<8x384xf32>
    %c174 = arith.constant 174 : index
    %772 = memref.load %arg2[%c174] : memref<216xf32, #tpu.memory_space<smem>>
    %773 = vector.broadcast %772 : f32 to vector<8x384xf32>
    %774 = arith.mulf %747, %773 : vector<8x384xf32>
    %775 = arith.addf %741, %774 : vector<8x384xf32>
    %c175 = arith.constant 175 : index
    %776 = memref.load %arg2[%c175] : memref<216xf32, #tpu.memory_space<smem>>
    %777 = vector.broadcast %776 : f32 to vector<8x384xf32>
    %778 = arith.mulf %747, %777 : vector<8x384xf32>
    %779 = arith.addf %745, %778 : vector<8x384xf32>
    %c0_81 = arith.constant 0 : index
    %c2_82 = arith.constant 2 : index
    %c19_83 = arith.constant 19 : index
    %780 = vector.load %arg1[%c0_81, %c2_82, %c19_83] : memref<1x10x512xf32, #tpu.memory_space<vmem>>, vector<1x8x384xf32>
    %781 = vector.shape_cast %780 : vector<1x8x384xf32> to vector<8x384xf32>
    %c176 = arith.constant 176 : index
    %782 = memref.load %arg2[%c176] : memref<216xf32, #tpu.memory_space<smem>>
    %783 = vector.broadcast %782 : f32 to vector<8x384xf32>
    %784 = arith.mulf %781, %783 : vector<8x384xf32>
    %785 = arith.addf %751, %784 : vector<8x384xf32>
    %c177 = arith.constant 177 : index
    %786 = memref.load %arg2[%c177] : memref<216xf32, #tpu.memory_space<smem>>
    %787 = vector.broadcast %786 : f32 to vector<8x384xf32>
    %788 = arith.mulf %781, %787 : vector<8x384xf32>
    %789 = arith.addf %755, %788 : vector<8x384xf32>
    %c178 = arith.constant 178 : index
    %790 = memref.load %arg2[%c178] : memref<216xf32, #tpu.memory_space<smem>>
    %791 = vector.broadcast %790 : f32 to vector<8x384xf32>
    %792 = arith.mulf %781, %791 : vector<8x384xf32>
    %793 = arith.addf %759, %792 : vector<8x384xf32>
    %c179 = arith.constant 179 : index
    %794 = memref.load %arg2[%c179] : memref<216xf32, #tpu.memory_space<smem>>
    %795 = vector.broadcast %794 : f32 to vector<8x384xf32>
    %796 = arith.mulf %781, %795 : vector<8x384xf32>
    %797 = arith.addf %763, %796 : vector<8x384xf32>
    %c180 = arith.constant 180 : index
    %798 = memref.load %arg2[%c180] : memref<216xf32, #tpu.memory_space<smem>>
    %799 = vector.broadcast %798 : f32 to vector<8x384xf32>
    %800 = arith.mulf %781, %799 : vector<8x384xf32>
    %801 = arith.addf %767, %800 : vector<8x384xf32>
    %c181 = arith.constant 181 : index
    %802 = memref.load %arg2[%c181] : memref<216xf32, #tpu.memory_space<smem>>
    %803 = vector.broadcast %802 : f32 to vector<8x384xf32>
    %804 = arith.mulf %781, %803 : vector<8x384xf32>
    %805 = arith.addf %771, %804 : vector<8x384xf32>
    %c182 = arith.constant 182 : index
    %806 = memref.load %arg2[%c182] : memref<216xf32, #tpu.memory_space<smem>>
    %807 = vector.broadcast %806 : f32 to vector<8x384xf32>
    %808 = arith.mulf %781, %807 : vector<8x384xf32>
    %809 = arith.addf %775, %808 : vector<8x384xf32>
    %c183 = arith.constant 183 : index
    %810 = memref.load %arg2[%c183] : memref<216xf32, #tpu.memory_space<smem>>
    %811 = vector.broadcast %810 : f32 to vector<8x384xf32>
    %812 = arith.mulf %781, %811 : vector<8x384xf32>
    %813 = arith.addf %779, %812 : vector<8x384xf32>
    %c0_84 = arith.constant 0 : index
    %c2_85 = arith.constant 2 : index
    %c20_86 = arith.constant 20 : index
    %814 = vector.load %arg1[%c0_84, %c2_85, %c20_86] : memref<1x10x512xf32, #tpu.memory_space<vmem>>, vector<1x8x384xf32>
    %815 = vector.shape_cast %814 : vector<1x8x384xf32> to vector<8x384xf32>
    %c184 = arith.constant 184 : index
    %816 = memref.load %arg2[%c184] : memref<216xf32, #tpu.memory_space<smem>>
    %817 = vector.broadcast %816 : f32 to vector<8x384xf32>
    %818 = arith.mulf %815, %817 : vector<8x384xf32>
    %819 = arith.addf %785, %818 : vector<8x384xf32>
    %c185 = arith.constant 185 : index
    %820 = memref.load %arg2[%c185] : memref<216xf32, #tpu.memory_space<smem>>
    %821 = vector.broadcast %820 : f32 to vector<8x384xf32>
    %822 = arith.mulf %815, %821 : vector<8x384xf32>
    %823 = arith.addf %789, %822 : vector<8x384xf32>
    %c186 = arith.constant 186 : index
    %824 = memref.load %arg2[%c186] : memref<216xf32, #tpu.memory_space<smem>>
    %825 = vector.broadcast %824 : f32 to vector<8x384xf32>
    %826 = arith.mulf %815, %825 : vector<8x384xf32>
    %827 = arith.addf %793, %826 : vector<8x384xf32>
    %c187 = arith.constant 187 : index
    %828 = memref.load %arg2[%c187] : memref<216xf32, #tpu.memory_space<smem>>
    %829 = vector.broadcast %828 : f32 to vector<8x384xf32>
    %830 = arith.mulf %815, %829 : vector<8x384xf32>
    %831 = arith.addf %797, %830 : vector<8x384xf32>
    %c188 = arith.constant 188 : index
    %832 = memref.load %arg2[%c188] : memref<216xf32, #tpu.memory_space<smem>>
    %833 = vector.broadcast %832 : f32 to vector<8x384xf32>
    %834 = arith.mulf %815, %833 : vector<8x384xf32>
    %835 = arith.addf %801, %834 : vector<8x384xf32>
    %c189 = arith.constant 189 : index
    %836 = memref.load %arg2[%c189] : memref<216xf32, #tpu.memory_space<smem>>
    %837 = vector.broadcast %836 : f32 to vector<8x384xf32>
    %838 = arith.mulf %815, %837 : vector<8x384xf32>
    %839 = arith.addf %805, %838 : vector<8x384xf32>
    %c190 = arith.constant 190 : index
    %840 = memref.load %arg2[%c190] : memref<216xf32, #tpu.memory_space<smem>>
    %841 = vector.broadcast %840 : f32 to vector<8x384xf32>
    %842 = arith.mulf %815, %841 : vector<8x384xf32>
    %843 = arith.addf %809, %842 : vector<8x384xf32>
    %c191 = arith.constant 191 : index
    %844 = memref.load %arg2[%c191] : memref<216xf32, #tpu.memory_space<smem>>
    %845 = vector.broadcast %844 : f32 to vector<8x384xf32>
    %846 = arith.mulf %815, %845 : vector<8x384xf32>
    %847 = arith.addf %813, %846 : vector<8x384xf32>
    %c0_87 = arith.constant 0 : index
    %c2_88 = arith.constant 2 : index
    %c36_89 = arith.constant 36 : index
    %848 = vector.load %arg1[%c0_87, %c2_88, %c36_89] : memref<1x10x512xf32, #tpu.memory_space<vmem>>, vector<1x8x384xf32>
    %849 = vector.shape_cast %848 : vector<1x8x384xf32> to vector<8x384xf32>
    %c192 = arith.constant 192 : index
    %850 = memref.load %arg2[%c192] : memref<216xf32, #tpu.memory_space<smem>>
    %851 = vector.broadcast %850 : f32 to vector<8x384xf32>
    %852 = arith.mulf %849, %851 : vector<8x384xf32>
    %853 = arith.addf %819, %852 : vector<8x384xf32>
    %c193 = arith.constant 193 : index
    %854 = memref.load %arg2[%c193] : memref<216xf32, #tpu.memory_space<smem>>
    %855 = vector.broadcast %854 : f32 to vector<8x384xf32>
    %856 = arith.mulf %849, %855 : vector<8x384xf32>
    %857 = arith.addf %823, %856 : vector<8x384xf32>
    %c194 = arith.constant 194 : index
    %858 = memref.load %arg2[%c194] : memref<216xf32, #tpu.memory_space<smem>>
    %859 = vector.broadcast %858 : f32 to vector<8x384xf32>
    %860 = arith.mulf %849, %859 : vector<8x384xf32>
    %861 = arith.addf %827, %860 : vector<8x384xf32>
    %c195 = arith.constant 195 : index
    %862 = memref.load %arg2[%c195] : memref<216xf32, #tpu.memory_space<smem>>
    %863 = vector.broadcast %862 : f32 to vector<8x384xf32>
    %864 = arith.mulf %849, %863 : vector<8x384xf32>
    %865 = arith.addf %831, %864 : vector<8x384xf32>
    %c196 = arith.constant 196 : index
    %866 = memref.load %arg2[%c196] : memref<216xf32, #tpu.memory_space<smem>>
    %867 = vector.broadcast %866 : f32 to vector<8x384xf32>
    %868 = arith.mulf %849, %867 : vector<8x384xf32>
    %869 = arith.addf %835, %868 : vector<8x384xf32>
    %c197 = arith.constant 197 : index
    %870 = memref.load %arg2[%c197] : memref<216xf32, #tpu.memory_space<smem>>
    %871 = vector.broadcast %870 : f32 to vector<8x384xf32>
    %872 = arith.mulf %849, %871 : vector<8x384xf32>
    %873 = arith.addf %839, %872 : vector<8x384xf32>
    %c198 = arith.constant 198 : index
    %874 = memref.load %arg2[%c198] : memref<216xf32, #tpu.memory_space<smem>>
    %875 = vector.broadcast %874 : f32 to vector<8x384xf32>
    %876 = arith.mulf %849, %875 : vector<8x384xf32>
    %877 = arith.addf %843, %876 : vector<8x384xf32>
    %c199 = arith.constant 199 : index
    %878 = memref.load %arg2[%c199] : memref<216xf32, #tpu.memory_space<smem>>
    %879 = vector.broadcast %878 : f32 to vector<8x384xf32>
    %880 = arith.mulf %849, %879 : vector<8x384xf32>
    %881 = arith.addf %847, %880 : vector<8x384xf32>
    %c0_90 = arith.constant 0 : index
    %c2_91 = arith.constant 2 : index
    %c37_92 = arith.constant 37 : index
    %882 = vector.load %arg1[%c0_90, %c2_91, %c37_92] : memref<1x10x512xf32, #tpu.memory_space<vmem>>, vector<1x8x384xf32>
    %883 = vector.shape_cast %882 : vector<1x8x384xf32> to vector<8x384xf32>
    %c200 = arith.constant 200 : index
    %884 = memref.load %arg2[%c200] : memref<216xf32, #tpu.memory_space<smem>>
    %885 = vector.broadcast %884 : f32 to vector<8x384xf32>
    %886 = arith.mulf %883, %885 : vector<8x384xf32>
    %887 = arith.addf %853, %886 : vector<8x384xf32>
    %c201 = arith.constant 201 : index
    %888 = memref.load %arg2[%c201] : memref<216xf32, #tpu.memory_space<smem>>
    %889 = vector.broadcast %888 : f32 to vector<8x384xf32>
    %890 = arith.mulf %883, %889 : vector<8x384xf32>
    %891 = arith.addf %857, %890 : vector<8x384xf32>
    %c202 = arith.constant 202 : index
    %892 = memref.load %arg2[%c202] : memref<216xf32, #tpu.memory_space<smem>>
    %893 = vector.broadcast %892 : f32 to vector<8x384xf32>
    %894 = arith.mulf %883, %893 : vector<8x384xf32>
    %895 = arith.addf %861, %894 : vector<8x384xf32>
    %c203 = arith.constant 203 : index
    %896 = memref.load %arg2[%c203] : memref<216xf32, #tpu.memory_space<smem>>
    %897 = vector.broadcast %896 : f32 to vector<8x384xf32>
    %898 = arith.mulf %883, %897 : vector<8x384xf32>
    %899 = arith.addf %865, %898 : vector<8x384xf32>
    %c204 = arith.constant 204 : index
    %900 = memref.load %arg2[%c204] : memref<216xf32, #tpu.memory_space<smem>>
    %901 = vector.broadcast %900 : f32 to vector<8x384xf32>
    %902 = arith.mulf %883, %901 : vector<8x384xf32>
    %903 = arith.addf %869, %902 : vector<8x384xf32>
    %c205 = arith.constant 205 : index
    %904 = memref.load %arg2[%c205] : memref<216xf32, #tpu.memory_space<smem>>
    %905 = vector.broadcast %904 : f32 to vector<8x384xf32>
    %906 = arith.mulf %883, %905 : vector<8x384xf32>
    %907 = arith.addf %873, %906 : vector<8x384xf32>
    %c206 = arith.constant 206 : index
    %908 = memref.load %arg2[%c206] : memref<216xf32, #tpu.memory_space<smem>>
    %909 = vector.broadcast %908 : f32 to vector<8x384xf32>
    %910 = arith.mulf %883, %909 : vector<8x384xf32>
    %911 = arith.addf %877, %910 : vector<8x384xf32>
    %c207 = arith.constant 207 : index
    %912 = memref.load %arg2[%c207] : memref<216xf32, #tpu.memory_space<smem>>
    %913 = vector.broadcast %912 : f32 to vector<8x384xf32>
    %914 = arith.mulf %883, %913 : vector<8x384xf32>
    %915 = arith.addf %881, %914 : vector<8x384xf32>
    %c0_93 = arith.constant 0 : index
    %c2_94 = arith.constant 2 : index
    %c38_95 = arith.constant 38 : index
    %916 = vector.load %arg1[%c0_93, %c2_94, %c38_95] : memref<1x10x512xf32, #tpu.memory_space<vmem>>, vector<1x8x384xf32>
    %917 = vector.shape_cast %916 : vector<1x8x384xf32> to vector<8x384xf32>
    %c208 = arith.constant 208 : index
    %918 = memref.load %arg2[%c208] : memref<216xf32, #tpu.memory_space<smem>>
    %919 = vector.broadcast %918 : f32 to vector<8x384xf32>
    %920 = arith.mulf %917, %919 : vector<8x384xf32>
    %921 = arith.addf %887, %920 : vector<8x384xf32>
    %c209 = arith.constant 209 : index
    %922 = memref.load %arg2[%c209] : memref<216xf32, #tpu.memory_space<smem>>
    %923 = vector.broadcast %922 : f32 to vector<8x384xf32>
    %924 = arith.mulf %917, %923 : vector<8x384xf32>
    %925 = arith.addf %891, %924 : vector<8x384xf32>
    %c210 = arith.constant 210 : index
    %926 = memref.load %arg2[%c210] : memref<216xf32, #tpu.memory_space<smem>>
    %927 = vector.broadcast %926 : f32 to vector<8x384xf32>
    %928 = arith.mulf %917, %927 : vector<8x384xf32>
    %929 = arith.addf %895, %928 : vector<8x384xf32>
    %c211 = arith.constant 211 : index
    %930 = memref.load %arg2[%c211] : memref<216xf32, #tpu.memory_space<smem>>
    %931 = vector.broadcast %930 : f32 to vector<8x384xf32>
    %932 = arith.mulf %917, %931 : vector<8x384xf32>
    %933 = arith.addf %899, %932 : vector<8x384xf32>
    %c212 = arith.constant 212 : index
    %934 = memref.load %arg2[%c212] : memref<216xf32, #tpu.memory_space<smem>>
    %935 = vector.broadcast %934 : f32 to vector<8x384xf32>
    %936 = arith.mulf %917, %935 : vector<8x384xf32>
    %937 = arith.addf %903, %936 : vector<8x384xf32>
    %c213 = arith.constant 213 : index
    %938 = memref.load %arg2[%c213] : memref<216xf32, #tpu.memory_space<smem>>
    %939 = vector.broadcast %938 : f32 to vector<8x384xf32>
    %940 = arith.mulf %917, %939 : vector<8x384xf32>
    %941 = arith.addf %907, %940 : vector<8x384xf32>
    %c214 = arith.constant 214 : index
    %942 = memref.load %arg2[%c214] : memref<216xf32, #tpu.memory_space<smem>>
    %943 = vector.broadcast %942 : f32 to vector<8x384xf32>
    %944 = arith.mulf %917, %943 : vector<8x384xf32>
    %945 = arith.addf %911, %944 : vector<8x384xf32>
    %c215 = arith.constant 215 : index
    %946 = memref.load %arg2[%c215] : memref<216xf32, #tpu.memory_space<smem>>
    %947 = vector.broadcast %946 : f32 to vector<8x384xf32>
    %948 = arith.mulf %917, %947 : vector<8x384xf32>
    %949 = arith.addf %915, %948 : vector<8x384xf32>
    %cst_96 = arith.constant 0.000000e+00 : f32
    %950 = vector.broadcast %cst_96 : f32 to vector<8x384xf32>
    %951 = arith.maximumf %921, %950 : vector<8x384xf32>
    %cst_97 = arith.constant 0.000000e+00 : f32
    %952 = vector.broadcast %cst_97 : f32 to vector<8x384xf32>
    %953 = arith.maximumf %925, %952 : vector<8x384xf32>
    %cst_98 = arith.constant 0.000000e+00 : f32
    %954 = vector.broadcast %cst_98 : f32 to vector<8x384xf32>
    %955 = arith.maximumf %929, %954 : vector<8x384xf32>
    %cst_99 = arith.constant 0.000000e+00 : f32
    %956 = vector.broadcast %cst_99 : f32 to vector<8x384xf32>
    %957 = arith.maximumf %933, %956 : vector<8x384xf32>
    %cst_100 = arith.constant 0.000000e+00 : f32
    %958 = vector.broadcast %cst_100 : f32 to vector<8x384xf32>
    %959 = arith.maximumf %937, %958 : vector<8x384xf32>
    %cst_101 = arith.constant 0.000000e+00 : f32
    %960 = vector.broadcast %cst_101 : f32 to vector<8x384xf32>
    %961 = arith.maximumf %941, %960 : vector<8x384xf32>
    %cst_102 = arith.constant 0.000000e+00 : f32
    %962 = vector.broadcast %cst_102 : f32 to vector<8x384xf32>
    %963 = arith.maximumf %945, %962 : vector<8x384xf32>
    %cst_103 = arith.constant 0.000000e+00 : f32
    %964 = vector.broadcast %cst_103 : f32 to vector<8x384xf32>
    %965 = arith.maximumf %949, %964 : vector<8x384xf32>
    %cst_104 = arith.constant 0.000000e+00 : f32
    %966 = vector.broadcast %cst_104 : f32 to vector<8x384xf32>
    %c0_105 = arith.constant 0 : index
    %967 = memref.load %arg5[%c0_105] : memref<2xf32, #tpu.memory_space<smem>>
    %968 = vector.broadcast %967 : f32 to vector<8x384xf32>
    %969 = arith.addf %966, %968 : vector<8x384xf32>
    %c0_106 = arith.constant 0 : index
    %970 = memref.load %arg4[%c0_106] : memref<16xf32, #tpu.memory_space<smem>>
    %971 = vector.broadcast %970 : f32 to vector<8x384xf32>
    %972 = arith.mulf %951, %971 : vector<8x384xf32>
    %973 = arith.addf %969, %972 : vector<8x384xf32>
    %c2_107 = arith.constant 2 : index
    %974 = memref.load %arg4[%c2_107] : memref<16xf32, #tpu.memory_space<smem>>
    %975 = vector.broadcast %974 : f32 to vector<8x384xf32>
    %976 = arith.mulf %953, %975 : vector<8x384xf32>
    %977 = arith.addf %973, %976 : vector<8x384xf32>
    %c4_108 = arith.constant 4 : index
    %978 = memref.load %arg4[%c4_108] : memref<16xf32, #tpu.memory_space<smem>>
    %979 = vector.broadcast %978 : f32 to vector<8x384xf32>
    %980 = arith.mulf %955, %979 : vector<8x384xf32>
    %981 = arith.addf %977, %980 : vector<8x384xf32>
    %c6_109 = arith.constant 6 : index
    %982 = memref.load %arg4[%c6_109] : memref<16xf32, #tpu.memory_space<smem>>
    %983 = vector.broadcast %982 : f32 to vector<8x384xf32>
    %984 = arith.mulf %957, %983 : vector<8x384xf32>
    %985 = arith.addf %981, %984 : vector<8x384xf32>
    %c8_110 = arith.constant 8 : index
    %986 = memref.load %arg4[%c8_110] : memref<16xf32, #tpu.memory_space<smem>>
    %987 = vector.broadcast %986 : f32 to vector<8x384xf32>
    %988 = arith.mulf %959, %987 : vector<8x384xf32>
    %989 = arith.addf %985, %988 : vector<8x384xf32>
    %c10_111 = arith.constant 10 : index
    %990 = memref.load %arg4[%c10_111] : memref<16xf32, #tpu.memory_space<smem>>
    %991 = vector.broadcast %990 : f32 to vector<8x384xf32>
    %992 = arith.mulf %961, %991 : vector<8x384xf32>
    %993 = arith.addf %989, %992 : vector<8x384xf32>
    %c12_112 = arith.constant 12 : index
    %994 = memref.load %arg4[%c12_112] : memref<16xf32, #tpu.memory_space<smem>>
    %995 = vector.broadcast %994 : f32 to vector<8x384xf32>
    %996 = arith.mulf %963, %995 : vector<8x384xf32>
    %997 = arith.addf %993, %996 : vector<8x384xf32>
    %c14_113 = arith.constant 14 : index
    %998 = memref.load %arg4[%c14_113] : memref<16xf32, #tpu.memory_space<smem>>
    %999 = vector.broadcast %998 : f32 to vector<8x384xf32>
    %1000 = arith.mulf %965, %999 : vector<8x384xf32>
    %1001 = arith.addf %997, %1000 : vector<8x384xf32>
    %c0_114 = arith.constant 0 : index
    %c0_115 = arith.constant 0 : index
    %c0_116 = arith.constant 0 : index
    %c0_117 = arith.constant 0 : index
    %1002 = vector.load %arg6[%c0_114, %c0_115, %c0_116, %c0_117] : memref<1x2x8x384xf32, #tpu.memory_space<vmem>>, vector<1x1x8x384xf32>
    %1003 = vector.shape_cast %1002 : vector<1x1x8x384xf32> to vector<8x384xf32>
    %1004 = vector.shape_cast %1001 : vector<8x384xf32> to vector<1x1x8x384xf32>
    tpu.vector_store %arg6[%c0_114, %c0_115, %c0_116, %c0_117], %1004 {strides = array<i32>} : memref<1x2x8x384xf32, #tpu.memory_space<vmem>>, vector<1x1x8x384xf32>,
    %cst_118 = arith.constant 0.000000e+00 : f32
    %1005 = vector.broadcast %cst_118 : f32 to vector<8x384xf32>
    %c1_119 = arith.constant 1 : index
    %1006 = memref.load %arg5[%c1_119] : memref<2xf32, #tpu.memory_space<smem>>
    %1007 = vector.broadcast %1006 : f32 to vector<8x384xf32>
    %1008 = arith.addf %1005, %1007 : vector<8x384xf32>
    %c1_120 = arith.constant 1 : index
    %1009 = memref.load %arg4[%c1_120] : memref<16xf32, #tpu.memory_space<smem>>
    %1010 = vector.broadcast %1009 : f32 to vector<8x384xf32>
    %1011 = arith.mulf %951, %1010 : vector<8x384xf32>
    %1012 = arith.addf %1008, %1011 : vector<8x384xf32>
    %c3_121 = arith.constant 3 : index
    %1013 = memref.load %arg4[%c3_121] : memref<16xf32, #tpu.memory_space<smem>>
    %1014 = vector.broadcast %1013 : f32 to vector<8x384xf32>
    %1015 = arith.mulf %953, %1014 : vector<8x384xf32>
    %1016 = arith.addf %1012, %1015 : vector<8x384xf32>
    %c5_122 = arith.constant 5 : index
    %1017 = memref.load %arg4[%c5_122] : memref<16xf32, #tpu.memory_space<smem>>
    %1018 = vector.broadcast %1017 : f32 to vector<8x384xf32>
    %1019 = arith.mulf %955, %1018 : vector<8x384xf32>
    %1020 = arith.addf %1016, %1019 : vector<8x384xf32>
    %c7_123 = arith.constant 7 : index
    %1021 = memref.load %arg4[%c7_123] : memref<16xf32, #tpu.memory_space<smem>>
    %1022 = vector.broadcast %1021 : f32 to vector<8x384xf32>
    %1023 = arith.mulf %957, %1022 : vector<8x384xf32>
    %1024 = arith.addf %1020, %1023 : vector<8x384xf32>
    %c9_124 = arith.constant 9 : index
    %1025 = memref.load %arg4[%c9_124] : memref<16xf32, #tpu.memory_space<smem>>
    %1026 = vector.broadcast %1025 : f32 to vector<8x384xf32>
    %1027 = arith.mulf %959, %1026 : vector<8x384xf32>
    %1028 = arith.addf %1024, %1027 : vector<8x384xf32>
    %c11_125 = arith.constant 11 : index
    %1029 = memref.load %arg4[%c11_125] : memref<16xf32, #tpu.memory_space<smem>>
    %1030 = vector.broadcast %1029 : f32 to vector<8x384xf32>
    %1031 = arith.mulf %961, %1030 : vector<8x384xf32>
    %1032 = arith.addf %1028, %1031 : vector<8x384xf32>
    %c13_126 = arith.constant 13 : index
    %1033 = memref.load %arg4[%c13_126] : memref<16xf32, #tpu.memory_space<smem>>
    %1034 = vector.broadcast %1033 : f32 to vector<8x384xf32>
    %1035 = arith.mulf %963, %1034 : vector<8x384xf32>
    %1036 = arith.addf %1032, %1035 : vector<8x384xf32>
    %c15_127 = arith.constant 15 : index
    %1037 = memref.load %arg4[%c15_127] : memref<16xf32, #tpu.memory_space<smem>>
    %1038 = vector.broadcast %1037 : f32 to vector<8x384xf32>
    %1039 = arith.mulf %965, %1038 : vector<8x384xf32>
    %1040 = arith.addf %1036, %1039 : vector<8x384xf32>
    %c0_128 = arith.constant 0 : index
    %c1_129 = arith.constant 1 : index
    %c0_130 = arith.constant 0 : index
    %c0_131 = arith.constant 0 : index
    %1041 = vector.load %arg6[%c0_128, %c1_129, %c0_130, %c0_131] : memref<1x2x8x384xf32, #tpu.memory_space<vmem>>, vector<1x1x8x384xf32>
    %1042 = vector.shape_cast %1041 : vector<1x1x8x384xf32> to vector<8x384xf32>
    %1043 = vector.shape_cast %1040 : vector<8x384xf32> to vector<1x1x8x384xf32>
    tpu.vector_store %arg6[%c0_128, %c1_129, %c0_130, %c0_131], %1043 {strides = array<i32>} : memref<1x2x8x384xf32, #tpu.memory_space<vmem>>, vector<1x1x8x384xf32>,
    return
  }
  func.func @transform_0(%arg0: i32) -> (i32, i32, i32) {
    %c0_i32 = arith.constant 0 : i32
    %c0_i32_0 = arith.constant 0 : i32
    %c0_i32_1 = arith.constant 0 : i32
    return %arg0, %c0_i32, %c0_i32_0 : i32, i32, i32
  }
  func.func @transform_1(%arg0: i32) -> i32 {
    %c0_i32 = arith.constant 0 : i32
    %c0_i32_0 = arith.constant 0 : i32
    return %c0_i32 : i32
  }
  func.func @transform_2(%arg0: i32) -> i32 {
    %c0_i32 = arith.constant 0 : i32
    %c0_i32_0 = arith.constant 0 : i32
    return %c0_i32 : i32
  }
  func.func @transform_3(%arg0: i32) -> i32 {
    %c0_i32 = arith.constant 0 : i32
    %c0_i32_0 = arith.constant 0 : i32
    return %c0_i32 : i32
  }
  func.func @transform_4(%arg0: i32) -> i32 {
    %c0_i32 = arith.constant 0 : i32
    %c0_i32_0 = arith.constant 0 : i32
    return %c0_i32 : i32
  }
  func.func @transform_5(%arg0: i32) -> (i32, i32, i32, i32) {
    %c0_i32 = arith.constant 0 : i32
    %c0_i32_0 = arith.constant 0 : i32
    %c0_i32_1 = arith.constant 0 : i32
    %c0_i32_2 = arith.constant 0 : i32
    return %arg0, %c0_i32, %c0_i32_0, %c0_i32_1 : i32, i32, i32, i32
  }
}

</mosaic_0001>

<llo_original>
// kernel: _fused_seg_forward.1
$region0: #{_fused_seg_forward.1}
  #allocation0 [shape = 'u32[]', space=smem, size = 0x4, offset = 0x4, fixed_abs, tag = 'smem constant byte address 0x4 - core index']
  #allocation1 [shape = 'u32[144,128]{1,0:T(1,128)}', space=vmem, size = 0x12000, scoped, tag = 'internal scratch']
  %s0 = inlined_call_operand.vmem [shape: f32[2,10,512], index: 0, kind: input, shape index: {}]
  %s1 = inlined_call_operand.vmem [shape: f32[216], index: 1, kind: input, shape index: {}]
  %s2 = inlined_call_operand.vmem [shape: f32[8], index: 2, kind: input, shape index: {}]
  %s3 = inlined_call_operand.vmem [shape: f32[16], index: 3, kind: input, shape index: {}]
  %s4 = inlined_call_operand.vmem [shape: f32[2], index: 4, kind: input, shape index: {}]
  %s5 = inlined_call_operand.vmem [shape: f32[2,2,8,384], index: 5, kind: output, shape index: {}]
  %s6 = sld [smem:[#allocation0]]
  $region69: #{_fused_seg_forward.1} parent=0
    _
  %s8 = ssub.s32 1, %s6
  %s9 = scalar_select 0, %s8, %s6
  $region1: #{_fused_seg_forward.1} parent=0
    #allocation2 [shape = 'u8[1024]{0}', space=smem, size = 0x400, scoped, tag = 'input window, operand 1, single buffered']
    #allocation3 [shape = 's32[2]{0}', space=sflag, size = 0x8, scoped, tag = 'scoped memory for _fused_seg_forward.1']
    #allocation4 [shape = 'u8[512]{0}', space=smem, size = 0x200, scoped, tag = 'input window, operand 2, single buffered']
    #allocation5 [shape = 's32[1]{0}', space=sflag, size = 0x4, scoped, tag = 'scoped memory for _fused_seg_forward.1']
    #allocation6 [shape = 'u8[512]{0}', space=smem, size = 0x200, scoped, tag = 'input window, operand 3, single buffered']
    #allocation7 [shape = 'u8[512]{0}', space=smem, size = 0x200, scoped, tag = 'input window, operand 4, single buffered']
    #allocation8 [shape = 's32[1]{0}', space=sflag, size = 0x4, scoped, tag = 'scoped memory for _fused_seg_forward.1']
    %10 = vsyncpa [#allocation3], 0
    %11 = vsyncpa [#allocation5], 0
    %12 = vsyncpa [#allocation8], 0
    loop: start=0, step=1, limit=4
    $region2: #{_fused_seg_forward.1} parent=1 // loop_pre_header
      _
    $region3: #{_fused_seg_forward.1} parent=1 // loop_header
      %s14 = sphi 0, %s18
      %p15 = scmp.ge.s32.totalorder %s14, 4
      %s24 = sphi 0, %s26
      %s27 = sphi 0, %s24
      %s28 = sphi 0, %s27
      %s44 = sphi 0, %s28
      %s48 = sphi 0, %s48
      %s50 = sphi 0, %s48
      %s51 = sphi 0, %s50
      %s65 = sphi 0, %s51
      %s69 = sphi 0, %s69
      %s71 = sphi 0, %s69
      %s72 = sphi 0, %s71
      %s86 = sphi 0, %s72
      %s90 = sphi 0, %s90
      %s92 = sphi 0, %s90
      %s93 = sphi 0, %s92
      %s107 = sphi 0, %s93
      %s111 = sphi 0, %s111
      %s113 = sphi 0, %s111
      %s114 = sphi 0, %s113
      %s128 = sphi 0, %s114
      %s134 = sphi 0, %s136
      %s137 = sphi 0, %s134
      %s138 = sphi 0, %s137
      %s154 = sphi 0, %s138
    $region4: #{_fused_seg_forward.1} parent=1 // loop_header_branch
      %17 = sbr.rel (%p15) target = $region8
    $region5: #{_fused_seg_forward.1} parent=1 // loop_body
      %s19 = ssub.s32 %s14, 1
      %s20 = ssub.s32 %s14, 2
      %s21 = sadd.s32 %s14, 1
      %s22 = ssub.s32 %s14, %s21
      %p23 = scmp.eq.s32.totalorder %s22, 0
      %s25 = sadd.s32 %s24, 1
      %s26 = scalar_select %p23, %s24, %s25
      %p29 = pneg %p23
      %p30 = scmp.eq.s32.totalorder %s14, 1
      %p31 = por %p29, %p30
      %p32 = scmp.ne.s32.totalorder %s24, %s27
      %p33 = scmp.eq.s32.totalorder %s14, 0
      %p34 = por %p32, %p33
      %p35 = scmp.ne.s32.totalorder %s24, %s27
      %p36 = scmp.eq.s32.totalorder %s19, 1
      %p37 = por %p35, %p36
      %p38 = scmp.ne.s32.totalorder %s27, %s28
      %p39 = scmp.eq.s32.totalorder %s19, 0
      %p40 = por %p38, %p39
      %p41 = scmp.ne.s32.totalorder %s27, %s28
      %p42 = scmp.eq.s32.totalorder %s20, 1
      %p43 = por %p41, %p42
      %p45 = scmp.ne.s32.totalorder %s28, %s44
      %p46 = scmp.eq.s32.totalorder %s20, 0
      %p47 = por %p45, %p46
      %s49 = sadd.s32 %s48, 1
      %p52 = scmp.eq.s32.totalorder %s14, 1
      %p53 = scmp.ne.s32.totalorder %s48, %s50
      %p54 = scmp.eq.s32.totalorder %s14, 0
      %p55 = por %p53, %p54
      %p56 = scmp.ne.s32.totalorder %s48, %s50
      %p57 = scmp.eq.s32.totalorder %s19, 1
      %p58 = por %p56, %p57
      %p59 = scmp.ne.s32.totalorder %s50, %s51
      %p60 = scmp.eq.s32.totalorder %s19, 0
      %p61 = por %p59, %p60
      %p62 = scmp.ne.s32.totalorder %s50, %s51
      %p63 = scmp.eq.s32.totalorder %s20, 1
      %p64 = por %p62, %p63
      %p66 = scmp.ne.s32.totalorder %s51, %s65
      %p67 = scmp.eq.s32.totalorder %s20, 0
      %p68 = por %p66, %p67
      %s70 = sadd.s32 %s69, 1
      %p73 = scmp.eq.s32.totalorder %s14, 1
      %p74 = scmp.ne.s32.totalorder %s69, %s71
      %p75 = scmp.eq.s32.totalorder %s14, 0
      %p76 = por %p74, %p75
      %p77 = scmp.ne.s32.totalorder %s69, %s71
      %p78 = scmp.eq.s32.totalorder %s19, 1
      %p79 = por %p77, %p78
      %p80 = scmp.ne.s32.totalorder %s71, %s72
      %p81 = scmp.eq.s32.totalorder %s19, 0
      %p82 = por %p80, %p81
      %p83 = scmp.ne.s32.totalorder %s71, %s72
      %p84 = scmp.eq.s32.totalorder %s20, 1
      %p85 = por %p83, %p84
      %p87 = scmp.ne.s32.totalorder %s72, %s86
      %p88 = scmp.eq.s32.totalorder %s20, 0
      %p89 = por %p87, %p88
      %s91 = sadd.s32 %s90, 1
      %p94 = scmp.eq.s32.totalorder %s14, 1
      %p95 = scmp.ne.s32.totalorder %s90, %s92
      %p96 = scmp.eq.s32.totalorder %s14, 0
      %p97 = por %p95, %p96
      %p98 = scmp.ne.s32.totalorder %s90, %s92
      %p99 = scmp.eq.s32.totalorder %s19, 1
      %p100 = por %p98, %p99
      %p101 = scmp.ne.s32.totalorder %s92, %s93
      %p102 = scmp.eq.s32.totalorder %s19, 0
      %p103 = por %p101, %p102
      %p104 = scmp.ne.s32.totalorder %s92, %s93
      %p105 = scmp.eq.s32.totalorder %s20, 1
      %p106 = por %p104, %p105
      %p108 = scmp.ne.s32.totalorder %s93, %s107
      %p109 = scmp.eq.s32.totalorder %s20, 0
      %p110 = por %p108, %p109
      %s112 = sadd.s32 %s111, 1
      %p115 = scmp.eq.s32.totalorder %s14, 1
      %p116 = scmp.ne.s32.totalorder %s111, %s113
      %p117 = scmp.eq.s32.totalorder %s14, 0
      %p118 = por %p116, %p117
      %p119 = scmp.ne.s32.totalorder %s111, %s113
      %p120 = scmp.eq.s32.totalorder %s19, 1
      %p121 = por %p119, %p120
      %p122 = scmp.ne.s32.totalorder %s113, %s114
      %p123 = scmp.eq.s32.totalorder %s19, 0
      %p124 = por %p122, %p123
      %p125 = scmp.ne.s32.totalorder %s113, %s114
      %p126 = scmp.eq.s32.totalorder %s20, 1
      %p127 = por %p125, %p126
      %p129 = scmp.ne.s32.totalorder %s114, %s128
      %p130 = scmp.eq.s32.totalorder %s20, 0
      %p131 = por %p129, %p130
      %s132 = ssub.s32 %s14, %s21
      %p133 = scmp.eq.s32.totalorder %s132, 0
      %s135 = sadd.s32 %s134, 1
      %s136 = scalar_select %p133, %s134, %s135
      %p139 = pneg %p133
      %p140 = scmp.eq.s32.totalorder %s14, 1
      %p141 = por %p139, %p140
      %p142 = scmp.ne.s32.totalorder %s134, %s137
      %p143 = scmp.eq.s32.totalorder %s14, 0
      %p144 = por %p142, %p143
      %p145 = scmp.ne.s32.totalorder %s134, %s137
      %p146 = scmp.eq.s32.totalorder %s19, 1
      %p147 = por %p145, %p146
      %p148 = scmp.ne.s32.totalorder %s137, %s138
      %p149 = scmp.eq.s32.totalorder %s19, 0
      %p150 = por %p148, %p149
      %p151 = scmp.ne.s32.totalorder %s137, %s138
      %p152 = scmp.eq.s32.totalorder %s20, 1
      %p153 = por %p151, %p152
      %p155 = scmp.ne.s32.totalorder %s138, %s154
      %p156 = scmp.eq.s32.totalorder %s20, 0
      %p157 = por %p155, %p156
      %p158 = scmp.le.s32.totalorder 1, %s14
      %p159 = scmp.lt.s32.totalorder %s14, 3
      %p160 = pnand %p158, %p159
      %p161 = pneg %p160
      // Predicated region
      $region9: #{_fused_seg_forward.1} parent=5 // pred_check
        _
      $region10: #{_fused_seg_forward.1} parent=5 // pred_check_branch
        %163 = sbr.rel (%p160) target = $region12
      $region11: #{_fused_seg_forward.1} parent=5 // pred_region
        %s164 = ssub.s32 %s14, 1
        // Predicated region
        $region13: #{_fused_seg_forward.1} parent=11 // pred_check
          %p165 = pneg %p61
        $region14: #{_fused_seg_forward.1} parent=11 // pred_check_branch
          %167 = sbr.rel (%p165) target = $region16
        $region15: #{_fused_seg_forward.1} parent=11 // pred_region
          %s169 = ssub.s32 32, 32
          %170 = vsyncadd [#allocation3], %s169
          %s172 = sshll.u32 %s1, 4
          %s173 = int_to_ptr.vmem [resolvable:$true] %s172
          %175 = dma.vmem_to_smem %s173, 32, [#allocation2], [#allocation3]
        $region16: #{_fused_seg_forward.1} parent=11 // pred_fallthru
          _
        // Predicated region
        $region17: #{_fused_seg_forward.1} parent=11 // pred_check
          %p176 = pneg %p82
        $region18: #{_fused_seg_forward.1} parent=11 // pred_check_branch
          %178 = sbr.rel (%p176) target = $region20
        $region19: #{_fused_seg_forward.1} parent=11 // pred_region
          %s180 = ssub.s32 16, 16
          %181 = vsyncadd [#allocation5], %s180
          %s183 = sshll.u32 %s2, 4
          %s184 = int_to_ptr.vmem [resolvable:$true] %s183
          %186 = dma.vmem_to_smem %s184, 16, [#allocation4], [#allocation5]
        $region20: #{_fused_seg_forward.1} parent=11 // pred_fallthru
          _
        // Predicated region
        $region21: #{_fused_seg_forward.1} parent=11 // pred_check
          %p187 = pneg %p103
        $region22: #{_fused_seg_forward.1} parent=11 // pred_check_branch
          %189 = sbr.rel (%p187) target = $region24
        $region23: #{_fused_seg_forward.1} parent=11 // pred_region
          %s191 = ssub.s32 16, 16
          %192 = vsyncadd [#allocation5], %s191
          %s194 = sshll.u32 %s3, 4
          %s195 = int_to_ptr.vmem [resolvable:$true] %s194
          %197 = dma.vmem_to_smem %s195, 16, [#allocation6], [#allocation5]
        $region24: #{_fused_seg_forward.1} parent=11 // pred_fallthru
          _
        // Predicated region
        $region25: #{_fused_seg_forward.1} parent=11 // pred_check
          %p198 = pneg %p124
        $region26: #{_fused_seg_forward.1} parent=11 // pred_check_branch
          %200 = sbr.rel (%p198) target = $region28
        $region27: #{_fused_seg_forward.1} parent=11 // pred_region
          %s202 = ssub.s32 16, 16
          %203 = vsyncadd [#allocation8], %s202
          %s205 = sshll.u32 %s4, 4
          %s206 = int_to_ptr.vmem [resolvable:$true] %s205
          %208 = dma.vmem_to_smem %s206, 16, [#allocation7], [#allocation8]
        $region28: #{_fused_seg_forward.1} parent=11 // pred_fallthru
          _
      $region12: #{_fused_seg_forward.1} parent=5 // pred_fallthru
        _
      %p209 = scmp.lt.s32.totalorder %s14, 2
      // Predicated region
      $region29: #{_fused_seg_forward.1} parent=5 // pred_check
        %p210 = pneg %p209
      $region30: #{_fused_seg_forward.1} parent=5 // pred_check_branch
        %212 = sbr.rel (%p210) target = $region32
      $region31: #{_fused_seg_forward.1} parent=5 // pred_region
        // Predicated region
        $region33: #{_fused_seg_forward.1} parent=31 // pred_check
          %p213 = pneg %p34
        $region34: #{_fused_seg_forward.1} parent=31 // pred_check_branch
          %215 = sbr.rel (%p213) target = $region36
        $region35: #{_fused_seg_forward.1} parent=31 // pred_region
          %p216 = scmp.lt.s32.totalorder %s14, 1
          %s217 = scalar_select %p216, %s14, 1
          %s218 = smul.addr %s217, 8
          %s219 = smul.addr %s218, 8
          %s220 = scalar_lea.vmem %s0, %s219
        $region36: #{_fused_seg_forward.1} parent=31 // pred_fallthru
          _
      $region32: #{_fused_seg_forward.1} parent=5 // pred_fallthru
        _
      %p221 = scmp.le.s32.totalorder 1, %s14
      %p222 = scmp.lt.s32.totalorder %s14, 3
      %p223 = pnand %p221, %p222
      %p224 = pneg %p223
      // Predicated region
      $region37: #{_fused_seg_forward.1} parent=5 // pred_check
        _
      $region38: #{_fused_seg_forward.1} parent=5 // pred_check_branch
        %226 = sbr.rel (%p223) target = $region40
      $region39: #{_fused_seg_forward.1} parent=5 // pred_region
        %s227 = ssub.s32 %s14, 1
        // Predicated region
        $region41: #{_fused_seg_forward.1} parent=39 // pred_check
          %p228 = pneg %p61
        $region42: #{_fused_seg_forward.1} parent=39 // pred_check_branch
          %230 = sbr.rel (%p228) target = $region44
        $region43: #{_fused_seg_forward.1} parent=39 // pred_region
          %231 = dma.done [#allocation3], 32
        $region44: #{_fused_seg_forward.1} parent=39 // pred_fallthru
          _
        // Predicated region
        $region45: #{_fused_seg_forward.1} parent=39 // pred_check
          %p232 = pneg %p82
        $region46: #{_fused_seg_forward.1} parent=39 // pred_check_branch
          %234 = sbr.rel (%p232) target = $region48
        $region47: #{_fused_seg_forward.1} parent=39 // pred_region
          %235 = dma.done [#allocation5], 16
        $region48: #{_fused_seg_forward.1} parent=39 // pred_fallthru
          _
        // Predicated region
        $region49: #{_fused_seg_forward.1} parent=39 // pred_check
          %p236 = pneg %p103
        $region50: #{_fused_seg_forward.1} parent=39 // pred_check_branch
          %238 = sbr.rel (%p236) target = $region52
        $region51: #{_fused_seg_forward.1} parent=39 // pred_region
          %239 = dma.done [#allocation5], 16
        $region52: #{_fused_seg_forward.1} parent=39 // pred_fallthru
          _
        // Predicated region
        $region53: #{_fused_seg_forward.1} parent=39 // pred_check
          %p240 = pneg %p124
        $region54: #{_fused_seg_forward.1} parent=39 // pred_check_branch
          %242 = sbr.rel (%p240) target = $region56
        $region55: #{_fused_seg_forward.1} parent=39 // pred_region
          %243 = dma.done [#allocation8], 16
        $region56: #{_fused_seg_forward.1} parent=39 // pred_fallthru
          _
        %244 = sfence
        %p245 = scmp.lt.s32.totalorder %s19, 1
        %s246 = scalar_select %p245, %s19, 1
        %s247 = smul.addr %s246, 8
        %s248 = smul.addr %s247, 8
        %s249 = scalar_lea.vmem %s0, %s248
        %p250 = pneg %p40
        %p251 = pneg %p37
        %p252 = pneg %p61
        %p253 = pneg %p58
        %p254 = pneg %p82
        %p255 = pneg %p79
        %p256 = pneg %p103
        %p257 = pneg %p100
        %p258 = pneg %p124
        %p259 = pneg %p121
        %p260 = pneg %p150
        %p261 = pneg %p147
        %p262 = scmp.lt.s32.totalorder %s19, 1
        %s263 = scalar_select %p262, %s19, 1
        %s264 = smul.addr %s263, 6
        %s265 = smul.addr %s264, 8
        %s266 = scalar_lea.vmem %s5, %s265
        %p267 = scmp.lt.s32.totalorder %s19, 1
        %s268 = scalar_select %p267, %s19, 1
        %s269 = smul.addr %s268, 8
        %s270 = smul.addr %s269, 8
        %s271 = scalar_lea.vmem %s0, %s270
        %p272 = scmp.lt.s32.totalorder %s19, 1
        %s273 = scalar_select %p272, %s19, 1
        %s274 = smul.addr %s273, 6
        %s275 = smul.addr %s274, 8
        %s276 = scalar_lea.vmem %s5, %s275
        %s277 = sld [smem:[#allocation4]]
        %v278 = vstv %s277
        %v279 = vadd.f32 %v278, 0.0
        %s280 = sld [smem:[#allocation4 + $0x1]]
        %v281 = vstv %s280
        %v282 = vadd.f32 %v281, 0.0
        %s283 = sld [smem:[#allocation4 + $0x2]]
        %v284 = vstv %s283
        %v285 = vadd.f32 %v284, 0.0
        %s286 = sld [smem:[#allocation4 + $0x3]]
        %v287 = vstv %s286
        %v288 = vadd.f32 %v287, 0.0
        %s289 = sld [smem:[#allocation4 + $0x4]]
        %v290 = vstv %s289
        %v291 = vadd.f32 %v290, 0.0
        %s292 = sld [smem:[#allocation4 + $0x5]]
        %v293 = vstv %s292
        %v294 = vadd.f32 %v293, 0.0
        %s295 = sld [smem:[#allocation4 + $0x6]]
        %v296 = vstv %s295
        %v297 = vadd.f32 %v296, 0.0
        %s298 = sld [smem:[#allocation4 + $0x7]]
        %v299 = vstv %s298
        %v300 = vadd.f32 %v299, 0.0
        %v301 = vld [vmem:[%s271] sm:$0xff]
        %v302 = vld [vmem:[%s271 + $0x8] sm:$0xff]
        %v303 = vld [vmem:[%s271 + $0x10] sm:$0xff]
        %s304 = sld [smem:[#allocation2]]
        %v305 = vstv %s304
        %v306 = vmul.f32 %v301, %v305
        %v307 = vmul.f32 %v302, %v305
        %v308 = vmul.f32 %v303, %v305
        %v309 = vadd.f32 %v279, %v306
        %v310 = vadd.f32 %v279, %v307
        %v311 = vadd.f32 %v279, %v308
        %s312 = sld [smem:[#allocation2 + $0x1]]
        %v313 = vstv %s312
        %v314 = vmul.f32 %v301, %v313
        %v315 = vmul.f32 %v302, %v313
        %v316 = vmul.f32 %v303, %v313
        %v317 = vadd.f32 %v282, %v314
        %v318 = vadd.f32 %v282, %v315
        %v319 = vadd.f32 %v282, %v316
        %s320 = sld [smem:[#allocation2 + $0x2]]
        %v321 = vstv %s320
        %v322 = vmul.f32 %v301, %v321
        %v323 = vmul.f32 %v302, %v321
        %v324 = vmul.f32 %v303, %v321
        %v325 = vadd.f32 %v285, %v322
        %v326 = vadd.f32 %v285, %v323
        %v327 = vadd.f32 %v285, %v324
        %s328 = sld [smem:[#allocation2 + $0x3]]
        %v329 = vstv %s328
        %v330 = vmul.f32 %v301, %v329
        %v331 = vmul.f32 %v302, %v329
        %v332 = vmul.f32 %v303, %v329
        %v333 = vadd.f32 %v288, %v330
        %v334 = vadd.f32 %v288, %v331
        %v335 = vadd.f32 %v288, %v332
        %s336 = sld [smem:[#allocation2 + $0x4]]
        %v337 = vstv %s336
        %v338 = vmul.f32 %v301, %v337
        %v339 = vmul.f32 %v302, %v337
        %v340 = vmul.f32 %v303, %v337
        %v341 = vadd.f32 %v291, %v338
        %v342 = vadd.f32 %v291, %v339
        %v343 = vadd.f32 %v291, %v340
        %s344 = sld [smem:[#allocation2 + $0x5]]
        %v345 = vstv %s344
        %v346 = vmul.f32 %v301, %v345
        %v347 = vmul.f32 %v302, %v345
        %v348 = vmul.f32 %v303, %v345
        %v349 = vadd.f32 %v294, %v346
        %v350 = vadd.f32 %v294, %v347
        %v351 = vadd.f32 %v294, %v348
        %s352 = sld [smem:[#allocation2 + $0x6]]
        %v353 = vstv %s352
        %v354 = vmul.f32 %v301, %v353
        %v355 = vmul.f32 %v302, %v353
        %v356 = vmul.f32 %v303, %v353
        %v357 = vadd.f32 %v297, %v354
        %v358 = vadd.f32 %v297, %v355
        %v359 = vadd.f32 %v297, %v356
        %s360 = sld [smem:[#allocation2 + $0x7]]
        %v361 = vstv %s360
        %v362 = vmul.f32 %v301, %v361
        %v363 = vmul.f32 %v302, %v361
        %v364 = vmul.f32 %v303, %v361
        %v365 = vadd.f32 %v300, %v362
        %v366 = vadd.f32 %v300, %v363
        %v367 = vadd.f32 %v300, %v364
        %v368 = vld [vmem:[%s271] sm:$0xff]
        %v369 = vld [vmem:[%s271 + $0x8] sm:$0xff]
        %v370 = vld [vmem:[%s271 + $0x10] sm:$0xff]
        %v371 = vld [vmem:[%s271 + $0x18] sm:$0xff]
        %s372 = sld [smem:[#allocation2 + $0x8]]
        %v373 = vstv %s372
        %v374 = vmul.f32 %v368, %v373
        %v375 = vmul.f32 %v369, %v373
        %v376 = vmul.f32 %v370, %v373
        %v377 = vmul.f32 %v371, %v373
        %382 = vrot.lane.b32.xlu0 %v374, 127
        %v383 = vpop.permute.xlu0 %382
        %384 = vrot.lane.b32.xlu0 %v375, 127
        %v385 = vpop.permute.xlu0 %384
        %386 = vrot.lane.b32.xlu0 %v376, 127
        %v387 = vpop.permute.xlu0 %386
        %388 = vrot.lane.b32.xlu0 %v377, 127
        %v389 = vpop.permute.xlu0 %388
        %vm390 = vcmask 1039360
        %v391 = vsel %vm390, %v383, %v385
        %v392 = vsel %vm390, %v385, %v387
        %v393 = vsel %vm390, %v387, %v389
        %v397 = vadd.f32 %v309, %v391
        %v398 = vadd.f32 %v310, %v392
        %v399 = vadd.f32 %v311, %v393
        %s400 = sld [smem:[#allocation2 + $0x9]]
        %v401 = vstv %s400
        %v402 = vmul.f32 %v368, %v401
        %v403 = vmul.f32 %v369, %v401
        %v404 = vmul.f32 %v370, %v401
        %v405 = vmul.f32 %v371, %v401
        %410 = vrot.lane.b32.xlu0 %v402, 127
        %v411 = vpop.permute.xlu0 %410
        %412 = vrot.lane.b32.xlu0 %v403, 127
        %v413 = vpop.permute.xlu0 %412
        %414 = vrot.lane.b32.xlu0 %v404, 127
        %v415 = vpop.permute.xlu0 %414
        %416 = vrot.lane.b32.xlu0 %v405, 127
        %v417 = vpop.permute.xlu0 %416
        %v418 = vsel %vm390, %v411, %v413
        %v419 = vsel %vm390, %v413, %v415
        %v420 = vsel %vm390, %v415, %v417
        %v424 = vadd.f32 %v317, %v418
        %v425 = vadd.f32 %v318, %v419
        %v426 = vadd.f32 %v319, %v420
        %s427 = sld [smem:[#allocation2 + $0xa]]
        %v428 = vstv %s427
        %v429 = vmul.f32 %v368, %v428
        %v430 = vmul.f32 %v369, %v428
        %v431 = vmul.f32 %v370, %v428
        %v432 = vmul.f32 %v371, %v428
        %437 = vrot.lane.b32.xlu0 %v429, 127
        %v438 = vpop.permute.xlu0 %437
        %439 = vrot.lane.b32.xlu0 %v430, 127
        %v440 = vpop.permute.xlu0 %439
        %441 = vrot.lane.b32.xlu0 %v431, 127
        %v442 = vpop.permute.xlu0 %441
        %443 = vrot.lane.b32.xlu0 %v432, 127
        %v444 = vpop.permute.xlu0 %443
        %v445 = vsel %vm390, %v438, %v440
        %v446 = vsel %vm390, %v440, %v442
        %v447 = vsel %vm390, %v442, %v444
        %v451 = vadd.f32 %v325, %v445
        %v452 = vadd.f32 %v326, %v446
        %v453 = vadd.f32 %v327, %v447
        %s454 = sld [smem:[#allocation2 + $0xb]]
        %v455 = vstv %s454
        %v456 = vmul.f32 %v368, %v455
        %v457 = vmul.f32 %v369, %v455
        %v458 = vmul.f32 %v370, %v455
        %v459 = vmul.f32 %v371, %v455
        %464 = vrot.lane.b32.xlu0 %v456, 127
        %v465 = vpop.permute.xlu0 %464
        %466 = vrot.lane.b32.xlu0 %v457, 127
        %v467 = vpop.permute.xlu0 %466
        %468 = vrot.lane.b32.xlu0 %v458, 127
        %v469 = vpop.permute.xlu0 %468
        %470 = vrot.lane.b32.xlu0 %v459, 127
        %v471 = vpop.permute.xlu0 %470
        %v472 = vsel %vm390, %v465, %v467
        %v473 = vsel %vm390, %v467, %v469
        %v474 = vsel %vm390, %v469, %v471
        %v478 = vadd.f32 %v333, %v472
        %v479 = vadd.f32 %v334, %v473
        %v480 = vadd.f32 %v335, %v474
        %s481 = sld [smem:[#allocation2 + $0xc]]
        %v482 = vstv %s481
        %v483 = vmul.f32 %v368, %v482
        %v484 = vmul.f32 %v369, %v482
        %v485 = vmul.f32 %v370, %v482
        %v486 = vmul.f32 %v371, %v482
        %491 = vrot.lane.b32.xlu0 %v483, 127
        %v492 = vpop.permute.xlu0 %491
        %493 = vrot.lane.b32.xlu0 %v484, 127
        %v494 = vpop.permute.xlu0 %493
        %495 = vrot.lane.b32.xlu0 %v485, 127
        %v496 = vpop.permute.xlu0 %495
        %497 = vrot.lane.b32.xlu0 %v486, 127
        %v498 = vpop.permute.xlu0 %497
        %v499 = vsel %vm390, %v492, %v494
        %v500 = vsel %vm390, %v494, %v496
        %v501 = vsel %vm390, %v496, %v498
        %v505 = vadd.f32 %v341, %v499
        %v506 = vadd.f32 %v342, %v500
        %v507 = vadd.f32 %v343, %v501
        %s508 = sld [smem:[#allocation2 + $0xd]]
        %v509 = vstv %s508
        %v510 = vmul.f32 %v368, %v509
        %v511 = vmul.f32 %v369, %v509
        %v512 = vmul.f32 %v370, %v509
        %v513 = vmul.f32 %v371, %v509
        %518 = vrot.lane.b32.xlu0 %v510, 127
        %v519 = vpop.permute.xlu0 %518
        %520 = vrot.lane.b32.xlu0 %v511, 127
        %v521 = vpop.permute.xlu0 %520
        %522 = vrot.lane.b32.xlu0 %v512, 127
        %v523 = vpop.permute.xlu0 %522
        %524 = vrot.lane.b32.xlu0 %v513, 127
        %v525 = vpop.permute.xlu0 %524
        %v526 = vsel %vm390, %v519, %v521
        %v527 = vsel %vm390, %v521, %v523
        %v528 = vsel %vm390, %v523, %v525
        %v532 = vadd.f32 %v349, %v526
        %v533 = vadd.f32 %v350, %v527
        %v534 = vadd.f32 %v351, %v528
        %s535 = sld [smem:[#allocation2 + $0xe]]
        %v536 = vstv %s535
        %v537 = vmul.f32 %v368, %v536
        %v538 = vmul.f32 %v369, %v536
        %v539 = vmul.f32 %v370, %v536
        %v540 = vmul.f32 %v371, %v536
        %545 = vrot.lane.b32.xlu0 %v537, 127
        %v546 = vpop.permute.xlu0 %545
        %547 = vrot.lane.b32.xlu0 %v538, 127
        %v548 = vpop.permute.xlu0 %547
        %549 = vrot.lane.b32.xlu0 %v539, 127
        %v550 = vpop.permute.xlu0 %549
        %551 = vrot.lane.b32.xlu0 %v540, 127
        %v552 = vpop.permute.xlu0 %551
        %v553 = vsel %vm390, %v546, %v548
        %v554 = vsel %vm390, %v548, %v550
        %v555 = vsel %vm390, %v550, %v552
        %v559 = vadd.f32 %v357, %v553
        %v560 = vadd.f32 %v358, %v554
        %v561 = vadd.f32 %v359, %v555
        %s562 = sld [smem:[#allocation2 + $0xf]]
        %v563 = vstv %s562
        %v564 = vmul.f32 %v368, %v563
        %v565 = vmul.f32 %v369, %v563
        %v566 = vmul.f32 %v370, %v563
        %v567 = vmul.f32 %v371, %v563
        %572 = vrot.lane.b32.xlu0 %v564, 127
        %v573 = vpop.permute.xlu0 %572
        %574 = vrot.lane.b32.xlu0 %v565, 127
        %v575 = vpop.permute.xlu0 %574
        %576 = vrot.lane.b32.xlu0 %v566, 127
        %v577 = vpop.permute.xlu0 %576
        %578 = vrot.lane.b32.xlu0 %v567, 127
        %v579 = vpop.permute.xlu0 %578
        %v580 = vsel %vm390, %v573, %v575
        %v581 = vsel %vm390, %v575, %v577
        %v582 = vsel %vm390, %v577, %v579
        %v586 = vadd.f32 %v365, %v580
        %v587 = vadd.f32 %v366, %v581
        %v588 = vadd.f32 %v367, %v582
        %s589 = sld [smem:[#allocation2 + $0x10]]
        %v590 = vstv %s589
        %v591 = vmul.f32 %v368, %v590
        %v592 = vmul.f32 %v369, %v590
        %v593 = vmul.f32 %v370, %v590
        %v594 = vmul.f32 %v371, %v590
        %599 = vrot.lane.b32.xlu0 %v591, 126
        %v600 = vpop.permute.xlu0 %599
        %601 = vrot.lane.b32.xlu0 %v592, 126
        %v602 = vpop.permute.xlu0 %601
        %603 = vrot.lane.b32.xlu0 %v593, 126
        %v604 = vpop.permute.xlu0 %603
        %605 = vrot.lane.b32.xlu0 %v594, 126
        %v606 = vpop.permute.xlu0 %605
        %vm607 = vcmask 1031168
        %v608 = vsel %vm607, %v600, %v602
        %v609 = vsel %vm607, %v602, %v604
        %v610 = vsel %vm607, %v604, %v606
        %v614 = vadd.f32 %v397, %v608
        %v615 = vadd.f32 %v398, %v609
        %v616 = vadd.f32 %v399, %v610
        %s617 = sld [smem:[#allocation2 + $0x11]]
        %v618 = vstv %s617
        %v619 = vmul.f32 %v368, %v618
        %v620 = vmul.f32 %v369, %v618
        %v621 = vmul.f32 %v370, %v618
        %v622 = vmul.f32 %v371, %v618
        %627 = vrot.lane.b32.xlu0 %v619, 126
        %v628 = vpop.permute.xlu0 %627
        %629 = vrot.lane.b32.xlu0 %v620, 126
        %v630 = vpop.permute.xlu0 %629
        %631 = vrot.lane.b32.xlu0 %v621, 126
        %v632 = vpop.permute.xlu0 %631
        %633 = vrot.lane.b32.xlu0 %v622, 126
        %v634 = vpop.permute.xlu0 %633
        %v635 = vsel %vm607, %v628, %v630
        %v636 = vsel %vm607, %v630, %v632
        %v637 = vsel %vm607, %v632, %v634
        %v641 = vadd.f32 %v424, %v635
        %v642 = vadd.f32 %v425, %v636
        %v643 = vadd.f32 %v426, %v637
        %s644 = sld [smem:[#allocation2 + $0x12]]
        %v645 = vstv %s644
        %v646 = vmul.f32 %v368, %v645
        %v647 = vmul.f32 %v369, %v645
        %v648 = vmul.f32 %v370, %v645
        %v649 = vmul.f32 %v371, %v645
        %654 = vrot.lane.b32.xlu0 %v646, 126
        %v655 = vpop.permute.xlu0 %654
        %656 = vrot.lane.b32.xlu0 %v647, 126
        %v657 = vpop.permute.xlu0 %656
        %658 = vrot.lane.b32.xlu0 %v648, 126
        %v659 = vpop.permute.xlu0 %658
        %660 = vrot.lane.b32.xlu0 %v649, 126
        %v661 = vpop.permute.xlu0 %660
        %v662 = vsel %vm607, %v655, %v657
        %v663 = vsel %vm607, %v657, %v659
        %v664 = vsel %vm607, %v659, %v661
        %v668 = vadd.f32 %v451, %v662
        %v669 = vadd.f32 %v452, %v663
        %v670 = vadd.f32 %v453, %v664
        %s671 = sld [smem:[#allocation2 + $0x13]]
        %v672 = vstv %s671
        %v673 = vmul.f32 %v368, %v672
        %v674 = vmul.f32 %v369, %v672
        %v675 = vmul.f32 %v370, %v672
        %v676 = vmul.f32 %v371, %v672
        %681 = vrot.lane.b32.xlu0 %v673, 126
        %v682 = vpop.permute.xlu0 %681
        %683 = vrot.lane.b32.xlu0 %v674, 126
        %v684 = vpop.permute.xlu0 %683
        %685 = vrot.lane.b32.xlu0 %v675, 126
        %v686 = vpop.permute.xlu0 %685
        %687 = vrot.lane.b32.xlu0 %v676, 126
        %v688 = vpop.permute.xlu0 %687
        %v689 = vsel %vm607, %v682, %v684
        %v690 = vsel %vm607, %v684, %v686
        %v691 = vsel %vm607, %v686, %v688
        %v695 = vadd.f32 %v478, %v689
        %v696 = vadd.f32 %v479, %v690
        %v697 = vadd.f32 %v480, %v691
        %s698 = sld [smem:[#allocation2 + $0x14]]
        %v699 = vstv %s698
        %v700 = vmul.f32 %v368, %v699
        %v701 = vmul.f32 %v369, %v699
        %v702 = vmul.f32 %v370, %v699
        %v703 = vmul.f32 %v371, %v699
        %708 = vrot.lane.b32.xlu0 %v700, 126
        %v709 = vpop.permute.xlu0 %708
        %710 = vrot.lane.b32.xlu0 %v701, 126
        %v711 = vpop.permute.xlu0 %710
        %712 = vrot.lane.b32.xlu0 %v702, 126
        %v713 = vpop.permute.xlu0 %712
        %714 = vrot.lane.b32.xlu0 %v703, 126
        %v715 = vpop.permute.xlu0 %714
        %v716 = vsel %vm607, %v709, %v711
        %v717 = vsel %vm607, %v711, %v713
        %v718 = vsel %vm607, %v713, %v715
        %v722 = vadd.f32 %v505, %v716
        %v723 = vadd.f32 %v506, %v717
        %v724 = vadd.f32 %v507, %v718
        %s725 = sld [smem:[#allocation2 + $0x15]]
        %v726 = vstv %s725
        %v727 = vmul.f32 %v368, %v726
        %v728 = vmul.f32 %v369, %v726
        %v729 = vmul.f32 %v370, %v726
        %v730 = vmul.f32 %v371, %v726
        %735 = vrot.lane.b32.xlu0 %v727, 126
        %v736 = vpop.permute.xlu0 %735
        %737 = vrot.lane.b32.xlu0 %v728, 126
        %v738 = vpop.permute.xlu0 %737
        %739 = vrot.lane.b32.xlu0 %v729, 126
        %v740 = vpop.permute.xlu0 %739
        %741 = vrot.lane.b32.xlu0 %v730, 126
        %v742 = vpop.permute.xlu0 %741
        %v743 = vsel %vm607, %v736, %v738
        %v744 = vsel %vm607, %v738, %v740
        %v745 = vsel %vm607, %v740, %v742
        %v749 = vadd.f32 %v532, %v743
        %v750 = vadd.f32 %v533, %v744
        %v751 = vadd.f32 %v534, %v745
        %s752 = sld [smem:[#allocation2 + $0x16]]
        %v753 = vstv %s752
        %v754 = vmul.f32 %v368, %v753
        %v755 = vmul.f32 %v369, %v753
        %v756 = vmul.f32 %v370, %v753
        %v757 = vmul.f32 %v371, %v753
        %762 = vrot.lane.b32.xlu0 %v754, 126
        %v763 = vpop.permute.xlu0 %762
        %764 = vrot.lane.b32.xlu0 %v755, 126
        %v765 = vpop.permute.xlu0 %764
        %766 = vrot.lane.b32.xlu0 %v756, 126
        %v767 = vpop.permute.xlu0 %766
        %768 = vrot.lane.b32.xlu0 %v757, 126
        %v769 = vpop.permute.xlu0 %768
        %v770 = vsel %vm607, %v763, %v765
        %v771 = vsel %vm607, %v765, %v767
        %v772 = vsel %vm607, %v767, %v769
        %v776 = vadd.f32 %v559, %v770
        %v777 = vadd.f32 %v560, %v771
        %v778 = vadd.f32 %v561, %v772
        %s779 = sld [smem:[#allocation2 + $0x17]]
        %v780 = vstv %s779
        %v781 = vmul.f32 %v368, %v780
        %v782 = vmul.f32 %v369, %v780
        %v783 = vmul.f32 %v370, %v780
        %v784 = vmul.f32 %v371, %v780
        %789 = vrot.lane.b32.xlu0 %v781, 126
        %v790 = vpop.permute.xlu0 %789
        %791 = vrot.lane.b32.xlu0 %v782, 126
        %v792 = vpop.permute.xlu0 %791
        %793 = vrot.lane.b32.xlu0 %v783, 126
        %v794 = vpop.permute.xlu0 %793
        %795 = vrot.lane.b32.xlu0 %v784, 126
        %v796 = vpop.permute.xlu0 %795
        %v797 = vsel %vm607, %v790, %v792
        %v798 = vsel %vm607, %v792, %v794
        %v799 = vsel %vm607, %v794, %v796
        %v803 = vadd.f32 %v586, %v797
        %v804 = vadd.f32 %v587, %v798
        %v805 = vadd.f32 %v588, %v799
        %s806 = sld [smem:[#allocation2 + $0x18]]
        %v807 = vstv %s806
        %v808 = vmul.f32 %v368, %v807
        %v809 = vmul.f32 %v369, %v807
        %v810 = vmul.f32 %v370, %v807
        %v811 = vmul.f32 %v371, %v807
        %816 = vrot.lane.b32.xlu0 %v808, 110
        %v817 = vpop.permute.xlu0 %816
        %818 = vrot.lane.b32.xlu0 %v809, 110
        %v819 = vpop.permute.xlu0 %818
        %820 = vrot.lane.b32.xlu0 %v810, 110
        %v821 = vpop.permute.xlu0 %820
        %822 = vrot.lane.b32.xlu0 %v811, 110
        %v823 = vpop.permute.xlu0 %822
        %vm824 = vcmask 900096
        %v825 = vsel %vm824, %v817, %v819
        %v826 = vsel %vm824, %v819, %v821
        %v827 = vsel %vm824, %v821, %v823
        %v831 = vadd.f32 %v614, %v825
        %v832 = vadd.f32 %v615, %v826
        %v833 = vadd.f32 %v616, %v827
        %s834 = sld [smem:[#allocation2 + $0x19]]
        %v835 = vstv %s834
        %v836 = vmul.f32 %v368, %v835
        %v837 = vmul.f32 %v369, %v835
        %v838 = vmul.f32 %v370, %v835
        %v839 = vmul.f32 %v371, %v835
        %844 = vrot.lane.b32.xlu0 %v836, 110
        %v845 = vpop.permute.xlu0 %844
        %846 = vrot.lane.b32.xlu0 %v837, 110
        %v847 = vpop.permute.xlu0 %846
        %848 = vrot.lane.b32.xlu0 %v838, 110
        %v849 = vpop.permute.xlu0 %848
        %850 = vrot.lane.b32.xlu0 %v839, 110
        %v851 = vpop.permute.xlu0 %850
        %v852 = vsel %vm824, %v845, %v847
        %v853 = vsel %vm824, %v847, %v849
        %v854 = vsel %vm824, %v849, %v851
        %v858 = vadd.f32 %v641, %v852
        %v859 = vadd.f32 %v642, %v853
        %v860 = vadd.f32 %v643, %v854
        %s861 = sld [smem:[#allocation2 + $0x1a]]
        %v862 = vstv %s861
        %v863 = vmul.f32 %v368, %v862
        %v864 = vmul.f32 %v369, %v862
        %v865 = vmul.f32 %v370, %v862
        %v866 = vmul.f32 %v371, %v862
        %871 = vrot.lane.b32.xlu0 %v863, 110
        %v872 = vpop.permute.xlu0 %871
        %873 = vrot.lane.b32.xlu0 %v864, 110
        %v874 = vpop.permute.xlu0 %873
        %875 = vrot.lane.b32.xlu0 %v865, 110
        %v876 = vpop.permute.xlu0 %875
        %877 = vrot.lane.b32.xlu0 %v866, 110
        %v878 = vpop.permute.xlu0 %877
        %v879 = vsel %vm824, %v872, %v874
        %v880 = vsel %vm824, %v874, %v876
        %v881 = vsel %vm824, %v876, %v878
        %v885 = vadd.f32 %v668, %v879
        %v886 = vadd.f32 %v669, %v880
        %v887 = vadd.f32 %v670, %v881
        %s888 = sld [smem:[#allocation2 + $0x1b]]
        %v889 = vstv %s888
        %v890 = vmul.f32 %v368, %v889
        %v891 = vmul.f32 %v369, %v889
        %v892 = vmul.f32 %v370, %v889
        %v893 = vmul.f32 %v371, %v889
        %898 = vrot.lane.b32.xlu0 %v890, 110
        %v899 = vpop.permute.xlu0 %898
        %900 = vrot.lane.b32.xlu0 %v891, 110
        %v901 = vpop.permute.xlu0 %900
        %902 = vrot.lane.b32.xlu0 %v892, 110
        %v903 = vpop.permute.xlu0 %902
        %904 = vrot.lane.b32.xlu0 %v893, 110
        %v905 = vpop.permute.xlu0 %904
        %v906 = vsel %vm824, %v899, %v901
        %v907 = vsel %vm824, %v901, %v903
        %v908 = vsel %vm824, %v903, %v905
        %v912 = vadd.f32 %v695, %v906
        %v913 = vadd.f32 %v696, %v907
        %v914 = vadd.f32 %v697, %v908
        %s915 = sld [smem:[#allocation2 + $0x1c]]
        %v916 = vstv %s915
        %v917 = vmul.f32 %v368, %v916
        %v918 = vmul.f32 %v369, %v916
        %v919 = vmul.f32 %v370, %v916
        %v920 = vmul.f32 %v371, %v916
        %925 = vrot.lane.b32.xlu0 %v917, 110
        %v926 = vpop.permute.xlu0 %925
        %927 = vrot.lane.b32.xlu0 %v918, 110
        %v928 = vpop.permute.xlu0 %927
        %929 = vrot.lane.b32.xlu0 %v919, 110
        %v930 = vpop.permute.xlu0 %929
        %931 = vrot.lane.b32.xlu0 %v920, 110
        %v932 = vpop.permute.xlu0 %931
        %v933 = vsel %vm824, %v926, %v928
        %v934 = vsel %vm824, %v928, %v930
        %v935 = vsel %vm824, %v930, %v932
        %v939 = vadd.f32 %v722, %v933
        %v940 = vadd.f32 %v723, %v934
        %v941 = vadd.f32 %v724, %v935
        %s942 = sld [smem:[#allocation2 + $0x1d]]
        %v943 = vstv %s942
        %v944 = vmul.f32 %v368, %v943
        %v945 = vmul.f32 %v369, %v943
        %v946 = vmul.f32 %v370, %v943
        %v947 = vmul.f32 %v371, %v943
        %952 = vrot.lane.b32.xlu0 %v944, 110
        %v953 = vpop.permute.xlu0 %952
        %954 = vrot.lane.b32.xlu0 %v945, 110
        %v955 = vpop.permute.xlu0 %954
        %956 = vrot.lane.b32.xlu0 %v946, 110
        %v957 = vpop.permute.xlu0 %956
        %958 = vrot.lane.b32.xlu0 %v947, 110
        %v959 = vpop.permute.xlu0 %958
        %v960 = vsel %vm824, %v953, %v955
        %v961 = vsel %vm824, %v955, %v957
        %v962 = vsel %vm824, %v957, %v959
        %v966 = vadd.f32 %v749, %v960
        %v967 = vadd.f32 %v750, %v961
        %v968 = vadd.f32 %v751, %v962
        %s969 = sld [smem:[#allocation2 + $0x1e]]
        %v970 = vstv %s969
        %v971 = vmul.f32 %v368, %v970
        %v972 = vmul.f32 %v369, %v970
        %v973 = vmul.f32 %v370, %v970
        %v974 = vmul.f32 %v371, %v970
        %979 = vrot.lane.b32.xlu0 %v971, 110
        %v980 = vpop.permute.xlu0 %979
        %981 = vrot.lane.b32.xlu0 %v972, 110
        %v982 = vpop.permute.xlu0 %981
        %983 = vrot.lane.b32.xlu0 %v973, 110
        %v984 = vpop.permute.xlu0 %983
        %985 = vrot.lane.b32.xlu0 %v974, 110
        %v986 = vpop.permute.xlu0 %985
        %v987 = vsel %vm824, %v980, %v982
        %v988 = vsel %vm824, %v982, %v984
        %v989 = vsel %vm824, %v984, %v986
        %v993 = vadd.f32 %v776, %v987
        %v994 = vadd.f32 %v777, %v988
        %v995 = vadd.f32 %v778, %v989
        %s996 = sld [smem:[#allocation2 + $0x1f]]
        %v997 = vstv %s996
        %v998 = vmul.f32 %v368, %v997
        %v999 = vmul.f32 %v369, %v997
        %v1000 = vmul.f32 %v370, %v997
        %v1001 = vmul.f32 %v371, %v997
        %1006 = vrot.lane.b32.xlu0 %v998, 110
        %v1007 = vpop.permute.xlu0 %1006
        %1008 = vrot.lane.b32.xlu0 %v999, 110
        %v1009 = vpop.permute.xlu0 %1008
        %1010 = vrot.lane.b32.xlu0 %v1000, 110
        %v1011 = vpop.permute.xlu0 %1010
        %1012 = vrot.lane.b32.xlu0 %v1001, 110
        %v1013 = vpop.permute.xlu0 %1012
        %v1014 = vsel %vm824, %v1007, %v1009
        %v1015 = vsel %vm824, %v1009, %v1011
        %v1016 = vsel %vm824, %v1011, %v1013
        %v1020 = vadd.f32 %v803, %v1014
        %v1021 = vadd.f32 %v804, %v1015
        %v1022 = vadd.f32 %v805, %v1016
        %s1023 = sld [smem:[#allocation2 + $0x20]]
        %v1024 = vstv %s1023
        %v1025 = vmul.f32 %v368, %v1024
        %v1026 = vmul.f32 %v369, %v1024
        %v1027 = vmul.f32 %v370, %v1024
        %v1028 = vmul.f32 %v371, %v1024
        %1033 = vrot.lane.b32.xlu0 %v1025, 109
        %v1034 = vpop.permute.xlu0 %1033
        %1035 = vrot.lane.b32.xlu0 %v1026, 109
        %v1036 = vpop.permute.xlu0 %1035
        %1037 = vrot.lane.b32.xlu0 %v1027, 109
        %v1038 = vpop.permute.xlu0 %1037
        %1039 = vrot.lane.b32.xlu0 %v1028, 109
        %v1040 = vpop.permute.xlu0 %1039
        %vm1041 = vcmask 891904
        %v1042 = vsel %vm1041, %v1034, %v1036
        %v1043 = vsel %vm1041, %v1036, %v1038
        %v1044 = vsel %vm1041, %v1038, %v1040
        %v1048 = vadd.f32 %v831, %v1042
        %v1049 = vadd.f32 %v832, %v1043
        %v1050 = vadd.f32 %v833, %v1044
        %s1051 = sld [smem:[#allocation2 + $0x21]]
        %v1052 = vstv %s1051
        %v1053 = vmul.f32 %v368, %v1052
        %v1054 = vmul.f32 %v369, %v1052
        %v1055 = vmul.f32 %v370, %v1052
        %v1056 = vmul.f32 %v371, %v1052
        %1061 = vrot.lane.b32.xlu0 %v1053, 109
        %v1062 = vpop.permute.xlu0 %1061
        %1063 = vrot.lane.b32.xlu0 %v1054, 109
        %v1064 = vpop.permute.xlu0 %1063
        %1065 = vrot.lane.b32.xlu0 %v1055, 109
        %v1066 = vpop.permute.xlu0 %1065
        %1067 = vrot.lane.b32.xlu0 %v1056, 109
        %v1068 = vpop.permute.xlu0 %1067
        %v1069 = vsel %vm1041, %v1062, %v1064
        %v1070 = vsel %vm1041, %v1064, %v1066
        %v1071 = vsel %vm1041, %v1066, %v1068
        %v1075 = vadd.f32 %v858, %v1069
        %v1076 = vadd.f32 %v859, %v1070
        %v1077 = vadd.f32 %v860, %v1071
        %s1078 = sld [smem:[#allocation2 + $0x22]]
        %v1079 = vstv %s1078
        %v1080 = vmul.f32 %v368, %v1079
        %v1081 = vmul.f32 %v369, %v1079
        %v1082 = vmul.f32 %v370, %v1079
        %v1083 = vmul.f32 %v371, %v1079
        %1088 = vrot.lane.b32.xlu0 %v1080, 109
        %v1089 = vpop.permute.xlu0 %1088
        %1090 = vrot.lane.b32.xlu0 %v1081, 109
        %v1091 = vpop.permute.xlu0 %1090
        %1092 = vrot.lane.b32.xlu0 %v1082, 109
        %v1093 = vpop.permute.xlu0 %1092
        %1094 = vrot.lane.b32.xlu0 %v1083, 109
        %v1095 = vpop.permute.xlu0 %1094
        %v1096 = vsel %vm1041, %v1089, %v1091
        %v1097 = vsel %vm1041, %v1091, %v1093
        %v1098 = vsel %vm1041, %v1093, %v1095
        %v1102 = vadd.f32 %v885, %v1096
        %v1103 = vadd.f32 %v886, %v1097
        %v1104 = vadd.f32 %v887, %v1098
        %s1105 = sld [smem:[#allocation2 + $0x23]]
        %v1106 = vstv %s1105
        %v1107 = vmul.f32 %v368, %v1106
        %v1108 = vmul.f32 %v369, %v1106
        %v1109 = vmul.f32 %v370, %v1106
        %v1110 = vmul.f32 %v371, %v1106
        %1115 = vrot.lane.b32.xlu0 %v1107, 109
        %v1116 = vpop.permute.xlu0 %1115
        %1117 = vrot.lane.b32.xlu0 %v1108, 109
        %v1118 = vpop.permute.xlu0 %1117
        %1119 = vrot.lane.b32.xlu0 %v1109, 109
        %v1120 = vpop.permute.xlu0 %1119
        %1121 = vrot.lane.b32.xlu0 %v1110, 109
        %v1122 = vpop.permute.xlu0 %1121
        %v1123 = vsel %vm1041, %v1116, %v1118
        %v1124 = vsel %vm1041, %v1118, %v1120
        %v1125 = vsel %vm1041, %v1120, %v1122
        %v1129 = vadd.f32 %v912, %v1123
        %v1130 = vadd.f32 %v913, %v1124
        %v1131 = vadd.f32 %v914, %v1125
        %s1132 = sld [smem:[#allocation2 + $0x24]]
        %v1133 = vstv %s1132
        %v1134 = vmul.f32 %v368, %v1133
        %v1135 = vmul.f32 %v369, %v1133
        %v1136 = vmul.f32 %v370, %v1133
        %v1137 = vmul.f32 %v371, %v1133
        %1142 = vrot.lane.b32.xlu0 %v1134, 109
        %v1143 = vpop.permute.xlu0 %1142
        %1144 = vrot.lane.b32.xlu0 %v1135, 109
        %v1145 = vpop.permute.xlu0 %1144
        %1146 = vrot.lane.b32.xlu0 %v1136, 109
        %v1147 = vpop.permute.xlu0 %1146
        %1148 = vrot.lane.b32.xlu0 %v1137, 109
        %v1149 = vpop.permute.xlu0 %1148
        %v1150 = vsel %vm1041, %v1143, %v1145
        %v1151 = vsel %vm1041, %v1145, %v1147
        %v1152 = vsel %vm1041, %v1147, %v1149
        %v1156 = vadd.f32 %v939, %v1150
        %v1157 = vadd.f32 %v940, %v1151
        %v1158 = vadd.f32 %v941, %v1152
        %s1159 = sld [smem:[#allocation2 + $0x25]]
        %v1160 = vstv %s1159
        %v1161 = vmul.f32 %v368, %v1160
        %v1162 = vmul.f32 %v369, %v1160
        %v1163 = vmul.f32 %v370, %v1160
        %v1164 = vmul.f32 %v371, %v1160
        %1169 = vrot.lane.b32.xlu0 %v1161, 109
        %v1170 = vpop.permute.xlu0 %1169
        %1171 = vrot.lane.b32.xlu0 %v1162, 109
        %v1172 = vpop.permute.xlu0 %1171
        %1173 = vrot.lane.b32.xlu0 %v1163, 109
        %v1174 = vpop.permute.xlu0 %1173
        %1175 = vrot.lane.b32.xlu0 %v1164, 109
        %v1176 = vpop.permute.xlu0 %1175
        %v1177 = vsel %vm1041, %v1170, %v1172
        %v1178 = vsel %vm1041, %v1172, %v1174
        %v1179 = vsel %vm1041, %v1174, %v1176
        %v1183 = vadd.f32 %v966, %v1177
        %v1184 = vadd.f32 %v967, %v1178
        %v1185 = vadd.f32 %v968, %v1179
        %s1186 = sld [smem:[#allocation2 + $0x26]]
        %v1187 = vstv %s1186
        %v1188 = vmul.f32 %v368, %v1187
        %v1189 = vmul.f32 %v369, %v1187
        %v1190 = vmul.f32 %v370, %v1187
        %v1191 = vmul.f32 %v371, %v1187
        %1196 = vrot.lane.b32.xlu0 %v1188, 109
        %v1197 = vpop.permute.xlu0 %1196
        %1198 = vrot.lane.b32.xlu0 %v1189, 109
        %v1199 = vpop.permute.xlu0 %1198
        %1200 = vrot.lane.b32.xlu0 %v1190, 109
        %v1201 = vpop.permute.xlu0 %1200
        %1202 = vrot.lane.b32.xlu0 %v1191, 109
        %v1203 = vpop.permute.xlu0 %1202
        %v1204 = vsel %vm1041, %v1197, %v1199
        %v1205 = vsel %vm1041, %v1199, %v1201
        %v1206 = vsel %vm1041, %v1201, %v1203
        %v1210 = vadd.f32 %v993, %v1204
        %v1211 = vadd.f32 %v994, %v1205
        %v1212 = vadd.f32 %v995, %v1206
        %s1213 = sld [smem:[#allocation2 + $0x27]]
        %v1214 = vstv %s1213
        %v1215 = vmul.f32 %v368, %v1214
        %v1216 = vmul.f32 %v369, %v1214
        %v1217 = vmul.f32 %v370, %v1214
        %v1218 = vmul.f32 %v371, %v1214
        %1223 = vrot.lane.b32.xlu0 %v1215, 109
        %v1224 = vpop.permute.xlu0 %1223
        %1225 = vrot.lane.b32.xlu0 %v1216, 109
        %v1226 = vpop.permute.xlu0 %1225
        %1227 = vrot.lane.b32.xlu0 %v1217, 109
        %v1228 = vpop.permute.xlu0 %1227
        %1229 = vrot.lane.b32.xlu0 %v1218, 109
        %v1230 = vpop.permute.xlu0 %1229
        %v1231 = vsel %vm1041, %v1224, %v1226
        %v1232 = vsel %vm1041, %v1226, %v1228
        %v1233 = vsel %vm1041, %v1228, %v1230
        %v1237 = vadd.f32 %v1020, %v1231
        %v1238 = vadd.f32 %v1021, %v1232
        %v1239 = vadd.f32 %v1022, %v1233
        %s1240 = sld [smem:[#allocation2 + $0x28]]
        %v1241 = vstv %s1240
        %v1242 = vmul.f32 %v368, %v1241
        %v1243 = vmul.f32 %v369, %v1241
        %v1244 = vmul.f32 %v370, %v1241
        %v1245 = vmul.f32 %v371, %v1241
        %1250 = vrot.lane.b32.xlu0 %v1242, 108
        %v1251 = vpop.permute.xlu0 %1250
        %1252 = vrot.lane.b32.xlu0 %v1243, 108
        %v1253 = vpop.permute.xlu0 %1252
        %1254 = vrot.lane.b32.xlu0 %v1244, 108
        %v1255 = vpop.permute.xlu0 %1254
        %1256 = vrot.lane.b32.xlu0 %v1245, 108
        %v1257 = vpop.permute.xlu0 %1256
        %vm1258 = vcmask 883712
        %v1259 = vsel %vm1258, %v1251, %v1253
        %v1260 = vsel %vm1258, %v1253, %v1255
        %v1261 = vsel %vm1258, %v1255, %v1257
        %v1265 = vadd.f32 %v1048, %v1259
        %v1266 = vadd.f32 %v1049, %v1260
        %v1267 = vadd.f32 %v1050, %v1261
        %s1268 = sld [smem:[#allocation2 + $0x29]]
        %v1269 = vstv %s1268
        %v1270 = vmul.f32 %v368, %v1269
        %v1271 = vmul.f32 %v369, %v1269
        %v1272 = vmul.f32 %v370, %v1269
        %v1273 = vmul.f32 %v371, %v1269
        %1278 = vrot.lane.b32.xlu0 %v1270, 108
        %v1279 = vpop.permute.xlu0 %1278
        %1280 = vrot.lane.b32.xlu0 %v1271, 108
        %v1281 = vpop.permute.xlu0 %1280
        %1282 = vrot.lane.b32.xlu0 %v1272, 108
        %v1283 = vpop.permute.xlu0 %1282
        %1284 = vrot.lane.b32.xlu0 %v1273, 108
        %v1285 = vpop.permute.xlu0 %1284
        %v1286 = vsel %vm1258, %v1279, %v1281
        %v1287 = vsel %vm1258, %v1281, %v1283
        %v1288 = vsel %vm1258, %v1283, %v1285
        %v1292 = vadd.f32 %v1075, %v1286
        %v1293 = vadd.f32 %v1076, %v1287
        %v1294 = vadd.f32 %v1077, %v1288
        %s1295 = sld [smem:[#allocation2 + $0x2a]]
        %v1296 = vstv %s1295
        %v1297 = vmul.f32 %v368, %v1296
        %v1298 = vmul.f32 %v369, %v1296
        %v1299 = vmul.f32 %v370, %v1296
        %v1300 = vmul.f32 %v371, %v1296
        %1305 = vrot.lane.b32.xlu0 %v1297, 108
        %v1306 = vpop.permute.xlu0 %1305
        %1307 = vrot.lane.b32.xlu0 %v1298, 108
        %v1308 = vpop.permute.xlu0 %1307
        %1309 = vrot.lane.b32.xlu0 %v1299, 108
        %v1310 = vpop.permute.xlu0 %1309
        %1311 = vrot.lane.b32.xlu0 %v1300, 108
        %v1312 = vpop.permute.xlu0 %1311
        %v1313 = vsel %vm1258, %v1306, %v1308
        %v1314 = vsel %vm1258, %v1308, %v1310
        %v1315 = vsel %vm1258, %v1310, %v1312
        %v1319 = vadd.f32 %v1102, %v1313
        %v1320 = vadd.f32 %v1103, %v1314
        %v1321 = vadd.f32 %v1104, %v1315
        %s1322 = sld [smem:[#allocation2 + $0x2b]]
        %v1323 = vstv %s1322
        %v1324 = vmul.f32 %v368, %v1323
        %v1325 = vmul.f32 %v369, %v1323
        %v1326 = vmul.f32 %v370, %v1323
        %v1327 = vmul.f32 %v371, %v1323
        %1332 = vrot.lane.b32.xlu0 %v1324, 108
        %v1333 = vpop.permute.xlu0 %1332
        %1334 = vrot.lane.b32.xlu0 %v1325, 108
        %v1335 = vpop.permute.xlu0 %1334
        %1336 = vrot.lane.b32.xlu0 %v1326, 108
        %v1337 = vpop.permute.xlu0 %1336
        %1338 = vrot.lane.b32.xlu0 %v1327, 108
        %v1339 = vpop.permute.xlu0 %1338
        %v1340 = vsel %vm1258, %v1333, %v1335
        %v1341 = vsel %vm1258, %v1335, %v1337
        %v1342 = vsel %vm1258, %v1337, %v1339
        %v1346 = vadd.f32 %v1129, %v1340
        %v1347 = vadd.f32 %v1130, %v1341
        %v1348 = vadd.f32 %v1131, %v1342
        %s1349 = sld [smem:[#allocation2 + $0x2c]]
        %v1350 = vstv %s1349
        %v1351 = vmul.f32 %v368, %v1350
        %v1352 = vmul.f32 %v369, %v1350
        %v1353 = vmul.f32 %v370, %v1350
        %v1354 = vmul.f32 %v371, %v1350
        %1359 = vrot.lane.b32.xlu0 %v1351, 108
        %v1360 = vpop.permute.xlu0 %1359
        %1361 = vrot.lane.b32.xlu0 %v1352, 108
        %v1362 = vpop.permute.xlu0 %1361
        %1363 = vrot.lane.b32.xlu0 %v1353, 108
        %v1364 = vpop.permute.xlu0 %1363
        %1365 = vrot.lane.b32.xlu0 %v1354, 108
        %v1366 = vpop.permute.xlu0 %1365
        %v1367 = vsel %vm1258, %v1360, %v1362
        %v1368 = vsel %vm1258, %v1362, %v1364
        %v1369 = vsel %vm1258, %v1364, %v1366
        %v1373 = vadd.f32 %v1156, %v1367
        %v1374 = vadd.f32 %v1157, %v1368
        %v1375 = vadd.f32 %v1158, %v1369
        %s1376 = sld [smem:[#allocation2 + $0x2d]]
        %v1377 = vstv %s1376
        %v1378 = vmul.f32 %v368, %v1377
        %v1379 = vmul.f32 %v369, %v1377
        %v1380 = vmul.f32 %v370, %v1377
        %v1381 = vmul.f32 %v371, %v1377
        %1386 = vrot.lane.b32.xlu0 %v1378, 108
        %v1387 = vpop.permute.xlu0 %1386
        %1388 = vrot.lane.b32.xlu0 %v1379, 108
        %v1389 = vpop.permute.xlu0 %1388
        %1390 = vrot.lane.b32.xlu0 %v1380, 108
        %v1391 = vpop.permute.xlu0 %1390
        %1392 = vrot.lane.b32.xlu0 %v1381, 108
        %v1393 = vpop.permute.xlu0 %1392
        %v1394 = vsel %vm1258, %v1387, %v1389
        %v1395 = vsel %vm1258, %v1389, %v1391
        %v1396 = vsel %vm1258, %v1391, %v1393
        %v1400 = vadd.f32 %v1183, %v1394
        %v1401 = vadd.f32 %v1184, %v1395
        %v1402 = vadd.f32 %v1185, %v1396
        %s1403 = sld [smem:[#allocation2 + $0x2e]]
        %v1404 = vstv %s1403
        %v1405 = vmul.f32 %v368, %v1404
        %v1406 = vmul.f32 %v369, %v1404
        %v1407 = vmul.f32 %v370, %v1404
        %v1408 = vmul.f32 %v371, %v1404
        %1413 = vrot.lane.b32.xlu0 %v1405, 108
        %v1414 = vpop.permute.xlu0 %1413
        %1415 = vrot.lane.b32.xlu0 %v1406, 108
        %v1416 = vpop.permute.xlu0 %1415
        %1417 = vrot.lane.b32.xlu0 %v1407, 108
        %v1418 = vpop.permute.xlu0 %1417
        %1419 = vrot.lane.b32.xlu0 %v1408, 108
        %v1420 = vpop.permute.xlu0 %1419
        %v1421 = vsel %vm1258, %v1414, %v1416
        %v1422 = vsel %vm1258, %v1416, %v1418
        %v1423 = vsel %vm1258, %v1418, %v1420
        %v1427 = vadd.f32 %v1210, %v1421
        %v1428 = vadd.f32 %v1211, %v1422
        %v1429 = vadd.f32 %v1212, %v1423
        %s1430 = sld [smem:[#allocation2 + $0x2f]]
        %v1431 = vstv %s1430
        %v1432 = vmul.f32 %v368, %v1431
        %v1433 = vmul.f32 %v369, %v1431
        %v1434 = vmul.f32 %v370, %v1431
        %v1435 = vmul.f32 %v371, %v1431
        %1440 = vrot.lane.b32.xlu0 %v1432, 108
        %v1441 = vpop.permute.xlu0 %1440
        %1442 = vrot.lane.b32.xlu0 %v1433, 108
        %v1443 = vpop.permute.xlu0 %1442
        %1444 = vrot.lane.b32.xlu0 %v1434, 108
        %v1445 = vpop.permute.xlu0 %1444
        %1446 = vrot.lane.b32.xlu0 %v1435, 108
        %v1447 = vpop.permute.xlu0 %1446
        %v1448 = vsel %vm1258, %v1441, %v1443
        %v1449 = vsel %vm1258, %v1443, %v1445
        %v1450 = vsel %vm1258, %v1445, %v1447
        %v1454 = vadd.f32 %v1237, %v1448
        %v1455 = vadd.f32 %v1238, %v1449
        %v1456 = vadd.f32 %v1239, %v1450
        %s1457 = sld [smem:[#allocation2 + $0x30]]
        %v1458 = vstv %s1457
        %v1459 = vmul.f32 %v368, %v1458
        %v1460 = vmul.f32 %v369, %v1458
        %v1461 = vmul.f32 %v370, %v1458
        %v1462 = vmul.f32 %v371, %v1458
        %1467 = vrot.lane.b32.xlu0 %v1459, 92
        %v1468 = vpop.permute.xlu0 %1467
        %1469 = vrot.lane.b32.xlu0 %v1460, 92
        %v1470 = vpop.permute.xlu0 %1469
        %1471 = vrot.lane.b32.xlu0 %v1461, 92
        %v1472 = vpop.permute.xlu0 %1471
        %1473 = vrot.lane.b32.xlu0 %v1462, 92
        %v1474 = vpop.permute.xlu0 %1473
        %vm1475 = vcmask 752640
        %v1476 = vsel %vm1475, %v1468, %v1470
        %v1477 = vsel %vm1475, %v1470, %v1472
        %v1478 = vsel %vm1475, %v1472, %v1474
        %v1482 = vadd.f32 %v1265, %v1476
        %v1483 = vadd.f32 %v1266, %v1477
        %v1484 = vadd.f32 %v1267, %v1478
        %s1485 = sld [smem:[#allocation2 + $0x31]]
        %v1486 = vstv %s1485
        %v1487 = vmul.f32 %v368, %v1486
        %v1488 = vmul.f32 %v369, %v1486
        %v1489 = vmul.f32 %v370, %v1486
        %v1490 = vmul.f32 %v371, %v1486
        %1495 = vrot.lane.b32.xlu0 %v1487, 92
        %v1496 = vpop.permute.xlu0 %1495
        %1497 = vrot.lane.b32.xlu0 %v1488, 92
        %v1498 = vpop.permute.xlu0 %1497
        %1499 = vrot.lane.b32.xlu0 %v1489, 92
        %v1500 = vpop.permute.xlu0 %1499
        %1501 = vrot.lane.b32.xlu0 %v1490, 92
        %v1502 = vpop.permute.xlu0 %1501
        %v1503 = vsel %vm1475, %v1496, %v1498
        %v1504 = vsel %vm1475, %v1498, %v1500
        %v1505 = vsel %vm1475, %v1500, %v1502
        %v1509 = vadd.f32 %v1292, %v1503
        %v1510 = vadd.f32 %v1293, %v1504
        %v1511 = vadd.f32 %v1294, %v1505
        %s1512 = sld [smem:[#allocation2 + $0x32]]
        %v1513 = vstv %s1512
        %v1514 = vmul.f32 %v368, %v1513
        %v1515 = vmul.f32 %v369, %v1513
        %v1516 = vmul.f32 %v370, %v1513
        %v1517 = vmul.f32 %v371, %v1513
        %1522 = vrot.lane.b32.xlu0 %v1514, 92
        %v1523 = vpop.permute.xlu0 %1522
        %1524 = vrot.lane.b32.xlu0 %v1515, 92
        %v1525 = vpop.permute.xlu0 %1524
        %1526 = vrot.lane.b32.xlu0 %v1516, 92
        %v1527 = vpop.permute.xlu0 %1526
        %1528 = vrot.lane.b32.xlu0 %v1517, 92
        %v1529 = vpop.permute.xlu0 %1528
        %v1530 = vsel %vm1475, %v1523, %v1525
        %v1531 = vsel %vm1475, %v1525, %v1527
        %v1532 = vsel %vm1475, %v1527, %v1529
        %v1536 = vadd.f32 %v1319, %v1530
        %v1537 = vadd.f32 %v1320, %v1531
        %v1538 = vadd.f32 %v1321, %v1532
        %s1539 = sld [smem:[#allocation2 + $0x33]]
        %v1540 = vstv %s1539
        %v1541 = vmul.f32 %v368, %v1540
        %v1542 = vmul.f32 %v369, %v1540
        %v1543 = vmul.f32 %v370, %v1540
        %v1544 = vmul.f32 %v371, %v1540
        %1549 = vrot.lane.b32.xlu0 %v1541, 92
        %v1550 = vpop.permute.xlu0 %1549
        %1551 = vrot.lane.b32.xlu0 %v1542, 92
        %v1552 = vpop.permute.xlu0 %1551
        %1553 = vrot.lane.b32.xlu0 %v1543, 92
        %v1554 = vpop.permute.xlu0 %1553
        %1555 = vrot.lane.b32.xlu0 %v1544, 92
        %v1556 = vpop.permute.xlu0 %1555
        %v1557 = vsel %vm1475, %v1550, %v1552
        %v1558 = vsel %vm1475, %v1552, %v1554
        %v1559 = vsel %vm1475, %v1554, %v1556
        %v1563 = vadd.f32 %v1346, %v1557
        %v1564 = vadd.f32 %v1347, %v1558
        %v1565 = vadd.f32 %v1348, %v1559
        %s1566 = sld [smem:[#allocation2 + $0x34]]
        %v1567 = vstv %s1566
        %v1568 = vmul.f32 %v368, %v1567
        %v1569 = vmul.f32 %v369, %v1567
        %v1570 = vmul.f32 %v370, %v1567
        %v1571 = vmul.f32 %v371, %v1567
        %1576 = vrot.lane.b32.xlu0 %v1568, 92
        %v1577 = vpop.permute.xlu0 %1576
        %1578 = vrot.lane.b32.xlu0 %v1569, 92
        %v1579 = vpop.permute.xlu0 %1578
        %1580 = vrot.lane.b32.xlu0 %v1570, 92
        %v1581 = vpop.permute.xlu0 %1580
        %1582 = vrot.lane.b32.xlu0 %v1571, 92
        %v1583 = vpop.permute.xlu0 %1582
        %v1584 = vsel %vm1475, %v1577, %v1579
        %v1585 = vsel %vm1475, %v1579, %v1581
        %v1586 = vsel %vm1475, %v1581, %v1583
        %v1590 = vadd.f32 %v1373, %v1584
        %v1591 = vadd.f32 %v1374, %v1585
        %v1592 = vadd.f32 %v1375, %v1586
        %s1593 = sld [smem:[#allocation2 + $0x35]]
        %v1594 = vstv %s1593
        %v1595 = vmul.f32 %v368, %v1594
        %v1596 = vmul.f32 %v369, %v1594
        %v1597 = vmul.f32 %v370, %v1594
        %v1598 = vmul.f32 %v371, %v1594
        %1603 = vrot.lane.b32.xlu0 %v1595, 92
        %v1604 = vpop.permute.xlu0 %1603
        %1605 = vrot.lane.b32.xlu0 %v1596, 92
        %v1606 = vpop.permute.xlu0 %1605
        %1607 = vrot.lane.b32.xlu0 %v1597, 92
        %v1608 = vpop.permute.xlu0 %1607
        %1609 = vrot.lane.b32.xlu0 %v1598, 92
        %v1610 = vpop.permute.xlu0 %1609
        %v1611 = vsel %vm1475, %v1604, %v1606
        %v1612 = vsel %vm1475, %v1606, %v1608
        %v1613 = vsel %vm1475, %v1608, %v1610
        %v1617 = vadd.f32 %v1400, %v1611
        %v1618 = vadd.f32 %v1401, %v1612
        %v1619 = vadd.f32 %v1402, %v1613
        %s1620 = sld [smem:[#allocation2 + $0x36]]
        %v1621 = vstv %s1620
        %v1622 = vmul.f32 %v368, %v1621
        %v1623 = vmul.f32 %v369, %v1621
        %v1624 = vmul.f32 %v370, %v1621
        %v1625 = vmul.f32 %v371, %v1621
        %1630 = vrot.lane.b32.xlu0 %v1622, 92
        %v1631 = vpop.permute.xlu0 %1630
        %1632 = vrot.lane.b32.xlu0 %v1623, 92
        %v1633 = vpop.permute.xlu0 %1632
        %1634 = vrot.lane.b32.xlu0 %v1624, 92
        %v1635 = vpop.permute.xlu0 %1634
        %1636 = vrot.lane.b32.xlu0 %v1625, 92
        %v1637 = vpop.permute.xlu0 %1636
        %v1638 = vsel %vm1475, %v1631, %v1633
        %v1639 = vsel %vm1475, %v1633, %v1635
        %v1640 = vsel %vm1475, %v1635, %v1637
        %v1644 = vadd.f32 %v1427, %v1638
        %v1645 = vadd.f32 %v1428, %v1639
        %v1646 = vadd.f32 %v1429, %v1640
        %s1647 = sld [smem:[#allocation2 + $0x37]]
        %v1648 = vstv %s1647
        %v1649 = vmul.f32 %v368, %v1648
        %v1650 = vmul.f32 %v369, %v1648
        %v1651 = vmul.f32 %v370, %v1648
        %v1652 = vmul.f32 %v371, %v1648
        %1657 = vrot.lane.b32.xlu0 %v1649, 92
        %v1658 = vpop.permute.xlu0 %1657
        %1659 = vrot.lane.b32.xlu0 %v1650, 92
        %v1660 = vpop.permute.xlu0 %1659
        %1661 = vrot.lane.b32.xlu0 %v1651, 92
        %v1662 = vpop.permute.xlu0 %1661
        %1663 = vrot.lane.b32.xlu0 %v1652, 92
        %v1664 = vpop.permute.xlu0 %1663
        %v1665 = vsel %vm1475, %v1658, %v1660
        %v1666 = vsel %vm1475, %v1660, %v1662
        %v1667 = vsel %vm1475, %v1662, %v1664
        %v1671 = vadd.f32 %v1454, %v1665
        %v1672 = vadd.f32 %v1455, %v1666
        %v1673 = vadd.f32 %v1456, %v1667
        %s1674 = sld [smem:[#allocation2 + $0x38]]
        %v1675 = vstv %s1674
        %v1676 = vmul.f32 %v368, %v1675
        %v1677 = vmul.f32 %v369, %v1675
        %v1678 = vmul.f32 %v370, %v1675
        %v1679 = vmul.f32 %v371, %v1675
        %1684 = vrot.lane.b32.xlu0 %v1676, 91
        %v1685 = vpop.permute.xlu0 %1684
        %1686 = vrot.lane.b32.xlu0 %v1677, 91
        %v1687 = vpop.permute.xlu0 %1686
        %1688 = vrot.lane.b32.xlu0 %v1678, 91
        %v1689 = vpop.permute.xlu0 %1688
        %1690 = vrot.lane.b32.xlu0 %v1679, 91
        %v1691 = vpop.permute.xlu0 %1690
        %vm1692 = vcmask 744448
        %v1693 = vsel %vm1692, %v1685, %v1687
        %v1694 = vsel %vm1692, %v1687, %v1689
        %v1695 = vsel %vm1692, %v1689, %v1691
        %v1699 = vadd.f32 %v1482, %v1693
        %v1700 = vadd.f32 %v1483, %v1694
        %v1701 = vadd.f32 %v1484, %v1695
        %s1702 = sld [smem:[#allocation2 + $0x39]]
        %v1703 = vstv %s1702
        %v1704 = vmul.f32 %v368, %v1703
        %v1705 = vmul.f32 %v369, %v1703
        %v1706 = vmul.f32 %v370, %v1703
        %v1707 = vmul.f32 %v371, %v1703
        %1712 = vrot.lane.b32.xlu0 %v1704, 91
        %v1713 = vpop.permute.xlu0 %1712
        %1714 = vrot.lane.b32.xlu0 %v1705, 91
        %v1715 = vpop.permute.xlu0 %1714
        %1716 = vrot.lane.b32.xlu0 %v1706, 91
        %v1717 = vpop.permute.xlu0 %1716
        %1718 = vrot.lane.b32.xlu0 %v1707, 91
        %v1719 = vpop.permute.xlu0 %1718
        %v1720 = vsel %vm1692, %v1713, %v1715
        %v1721 = vsel %vm1692, %v1715, %v1717
        %v1722 = vsel %vm1692, %v1717, %v1719
        %v1726 = vadd.f32 %v1509, %v1720
        %v1727 = vadd.f32 %v1510, %v1721
        %v1728 = vadd.f32 %v1511, %v1722
        %s1729 = sld [smem:[#allocation2 + $0x3a]]
        %v1730 = vstv %s1729
        %v1731 = vmul.f32 %v368, %v1730
        %v1732 = vmul.f32 %v369, %v1730
        %v1733 = vmul.f32 %v370, %v1730
        %v1734 = vmul.f32 %v371, %v1730
        %1739 = vrot.lane.b32.xlu0 %v1731, 91
        %v1740 = vpop.permute.xlu0 %1739
        %1741 = vrot.lane.b32.xlu0 %v1732, 91
        %v1742 = vpop.permute.xlu0 %1741
        %1743 = vrot.lane.b32.xlu0 %v1733, 91
        %v1744 = vpop.permute.xlu0 %1743
        %1745 = vrot.lane.b32.xlu0 %v1734, 91
        %v1746 = vpop.permute.xlu0 %1745
        %v1747 = vsel %vm1692, %v1740, %v1742
        %v1748 = vsel %vm1692, %v1742, %v1744
        %v1749 = vsel %vm1692, %v1744, %v1746
        %v1753 = vadd.f32 %v1536, %v1747
        %v1754 = vadd.f32 %v1537, %v1748
        %v1755 = vadd.f32 %v1538, %v1749
        %s1756 = sld [smem:[#allocation2 + $0x3b]]
        %v1757 = vstv %s1756
        %v1758 = vmul.f32 %v368, %v1757
        %v1759 = vmul.f32 %v369, %v1757
        %v1760 = vmul.f32 %v370, %v1757
        %v1761 = vmul.f32 %v371, %v1757
        %1766 = vrot.lane.b32.xlu0 %v1758, 91
        %v1767 = vpop.permute.xlu0 %1766
        %1768 = vrot.lane.b32.xlu0 %v1759, 91
        %v1769 = vpop.permute.xlu0 %1768
        %1770 = vrot.lane.b32.xlu0 %v1760, 91
        %v1771 = vpop.permute.xlu0 %1770
        %1772 = vrot.lane.b32.xlu0 %v1761, 91
        %v1773 = vpop.permute.xlu0 %1772
        %v1774 = vsel %vm1692, %v1767, %v1769
        %v1775 = vsel %vm1692, %v1769, %v1771
        %v1776 = vsel %vm1692, %v1771, %v1773
        %v1780 = vadd.f32 %v1563, %v1774
        %v1781 = vadd.f32 %v1564, %v1775
        %v1782 = vadd.f32 %v1565, %v1776
        %s1783 = sld [smem:[#allocation2 + $0x3c]]
        %v1784 = vstv %s1783
        %v1785 = vmul.f32 %v368, %v1784
        %v1786 = vmul.f32 %v369, %v1784
        %v1787 = vmul.f32 %v370, %v1784
        %v1788 = vmul.f32 %v371, %v1784
        %1793 = vrot.lane.b32.xlu0 %v1785, 91
        %v1794 = vpop.permute.xlu0 %1793
        %1795 = vrot.lane.b32.xlu0 %v1786, 91
        %v1796 = vpop.permute.xlu0 %1795
        %1797 = vrot.lane.b32.xlu0 %v1787, 91
        %v1798 = vpop.permute.xlu0 %1797
        %1799 = vrot.lane.b32.xlu0 %v1788, 91
        %v1800 = vpop.permute.xlu0 %1799
        %v1801 = vsel %vm1692, %v1794, %v1796
        %v1802 = vsel %vm1692, %v1796, %v1798
        %v1803 = vsel %vm1692, %v1798, %v1800
        %v1807 = vadd.f32 %v1590, %v1801
        %v1808 = vadd.f32 %v1591, %v1802
        %v1809 = vadd.f32 %v1592, %v1803
        %s1810 = sld [smem:[#allocation2 + $0x3d]]
        %v1811 = vstv %s1810
        %v1812 = vmul.f32 %v368, %v1811
        %v1813 = vmul.f32 %v369, %v1811
        %v1814 = vmul.f32 %v370, %v1811
        %v1815 = vmul.f32 %v371, %v1811
        %1820 = vrot.lane.b32.xlu0 %v1812, 91
        %v1821 = vpop.permute.xlu0 %1820
        %1822 = vrot.lane.b32.xlu0 %v1813, 91
        %v1823 = vpop.permute.xlu0 %1822
        %1824 = vrot.lane.b32.xlu0 %v1814, 91
        %v1825 = vpop.permute.xlu0 %1824
        %1826 = vrot.lane.b32.xlu0 %v1815, 91
        %v1827 = vpop.permute.xlu0 %1826
        %v1828 = vsel %vm1692, %v1821, %v1823
        %v1829 = vsel %vm1692, %v1823, %v1825
        %v1830 = vsel %vm1692, %v1825, %v1827
        %v1834 = vadd.f32 %v1617, %v1828
        %v1835 = vadd.f32 %v1618, %v1829
        %v1836 = vadd.f32 %v1619, %v1830
        %s1837 = sld [smem:[#allocation2 + $0x3e]]
        %v1838 = vstv %s1837
        %v1839 = vmul.f32 %v368, %v1838
        %v1840 = vmul.f32 %v369, %v1838
        %v1841 = vmul.f32 %v370, %v1838
        %v1842 = vmul.f32 %v371, %v1838
        %1847 = vrot.lane.b32.xlu0 %v1839, 91
        %v1848 = vpop.permute.xlu0 %1847
        %1849 = vrot.lane.b32.xlu0 %v1840, 91
        %v1850 = vpop.permute.xlu0 %1849
        %1851 = vrot.lane.b32.xlu0 %v1841, 91
        %v1852 = vpop.permute.xlu0 %1851
        %1853 = vrot.lane.b32.xlu0 %v1842, 91
        %v1854 = vpop.permute.xlu0 %1853
        %v1855 = vsel %vm1692, %v1848, %v1850
        %v1856 = vsel %vm1692, %v1850, %v1852
        %v1857 = vsel %vm1692, %v1852, %v1854
        %v1861 = vadd.f32 %v1644, %v1855
        %v1862 = vadd.f32 %v1645, %v1856
        %v1863 = vadd.f32 %v1646, %v1857
        %s1864 = sld [smem:[#allocation2 + $0x3f]]
        %v1865 = vstv %s1864
        %v1866 = vmul.f32 %v368, %v1865
        %v1867 = vmul.f32 %v369, %v1865
        %v1868 = vmul.f32 %v370, %v1865
        %v1869 = vmul.f32 %v371, %v1865
        %1874 = vrot.lane.b32.xlu0 %v1866, 91
        %v1875 = vpop.permute.xlu0 %1874
        %1876 = vrot.lane.b32.xlu0 %v1867, 91
        %v1877 = vpop.permute.xlu0 %1876
        %1878 = vrot.lane.b32.xlu0 %v1868, 91
        %v1879 = vpop.permute.xlu0 %1878
        %1880 = vrot.lane.b32.xlu0 %v1869, 91
        %v1881 = vpop.permute.xlu0 %1880
        %v1882 = vsel %vm1692, %v1875, %v1877
        %v1883 = vsel %vm1692, %v1877, %v1879
        %v1884 = vsel %vm1692, %v1879, %v1881
        %v1888 = vadd.f32 %v1671, %v1882
        %v1889 = vadd.f32 %v1672, %v1883
        %v1890 = vadd.f32 %v1673, %v1884
        %s1891 = sld [smem:[#allocation2 + $0x40]]
        %v1892 = vstv %s1891
        %v1893 = vmul.f32 %v368, %v1892
        %v1894 = vmul.f32 %v369, %v1892
        %v1895 = vmul.f32 %v370, %v1892
        %v1896 = vmul.f32 %v371, %v1892
        %1901 = vrot.lane.b32.xlu0 %v1893, 90
        %v1902 = vpop.permute.xlu0 %1901
        %1903 = vrot.lane.b32.xlu0 %v1894, 90
        %v1904 = vpop.permute.xlu0 %1903
        %1905 = vrot.lane.b32.xlu0 %v1895, 90
        %v1906 = vpop.permute.xlu0 %1905
        %1907 = vrot.lane.b32.xlu0 %v1896, 90
        %v1908 = vpop.permute.xlu0 %1907
        %vm1909 = vcmask 736256
        %v1910 = vsel %vm1909, %v1902, %v1904
        %v1911 = vsel %vm1909, %v1904, %v1906
        %v1912 = vsel %vm1909, %v1906, %v1908
        %v1916 = vadd.f32 %v1699, %v1910
        %v1917 = vadd.f32 %v1700, %v1911
        %v1918 = vadd.f32 %v1701, %v1912
        %s1919 = sld [smem:[#allocation2 + $0x41]]
        %v1920 = vstv %s1919
        %v1921 = vmul.f32 %v368, %v1920
        %v1922 = vmul.f32 %v369, %v1920
        %v1923 = vmul.f32 %v370, %v1920
        %v1924 = vmul.f32 %v371, %v1920
        %1929 = vrot.lane.b32.xlu0 %v1921, 90
        %v1930 = vpop.permute.xlu0 %1929
        %1931 = vrot.lane.b32.xlu0 %v1922, 90
        %v1932 = vpop.permute.xlu0 %1931
        %1933 = vrot.lane.b32.xlu0 %v1923, 90
        %v1934 = vpop.permute.xlu0 %1933
        %1935 = vrot.lane.b32.xlu0 %v1924, 90
        %v1936 = vpop.permute.xlu0 %1935
        %v1937 = vsel %vm1909, %v1930, %v1932
        %v1938 = vsel %vm1909, %v1932, %v1934
        %v1939 = vsel %vm1909, %v1934, %v1936
        %v1943 = vadd.f32 %v1726, %v1937
        %v1944 = vadd.f32 %v1727, %v1938
        %v1945 = vadd.f32 %v1728, %v1939
        %s1946 = sld [smem:[#allocation2 + $0x42]]
        %v1947 = vstv %s1946
        %v1948 = vmul.f32 %v368, %v1947
        %v1949 = vmul.f32 %v369, %v1947
        %v1950 = vmul.f32 %v370, %v1947
        %v1951 = vmul.f32 %v371, %v1947
        %1956 = vrot.lane.b32.xlu0 %v1948, 90
        %v1957 = vpop.permute.xlu0 %1956
        %1958 = vrot.lane.b32.xlu0 %v1949, 90
        %v1959 = vpop.permute.xlu0 %1958
        %1960 = vrot.lane.b32.xlu0 %v1950, 90
        %v1961 = vpop.permute.xlu0 %1960
        %1962 = vrot.lane.b32.xlu0 %v1951, 90
        %v1963 = vpop.permute.xlu0 %1962
        %v1964 = vsel %vm1909, %v1957, %v1959
        %v1965 = vsel %vm1909, %v1959, %v1961
        %v1966 = vsel %vm1909, %v1961, %v1963
        %v1970 = vadd.f32 %v1753, %v1964
        %v1971 = vadd.f32 %v1754, %v1965
        %v1972 = vadd.f32 %v1755, %v1966
        %s1973 = sld [smem:[#allocation2 + $0x43]]
        %v1974 = vstv %s1973
        %v1975 = vmul.f32 %v368, %v1974
        %v1976 = vmul.f32 %v369, %v1974
        %v1977 = vmul.f32 %v370, %v1974
        %v1978 = vmul.f32 %v371, %v1974
        %1983 = vrot.lane.b32.xlu0 %v1975, 90
        %v1984 = vpop.permute.xlu0 %1983
        %1985 = vrot.lane.b32.xlu0 %v1976, 90
        %v1986 = vpop.permute.xlu0 %1985
        %1987 = vrot.lane.b32.xlu0 %v1977, 90
        %v1988 = vpop.permute.xlu0 %1987
        %1989 = vrot.lane.b32.xlu0 %v1978, 90
        %v1990 = vpop.permute.xlu0 %1989
        %v1991 = vsel %vm1909, %v1984, %v1986
        %v1992 = vsel %vm1909, %v1986, %v1988
        %v1993 = vsel %vm1909, %v1988, %v1990
        %v1997 = vadd.f32 %v1780, %v1991
        %v1998 = vadd.f32 %v1781, %v1992
        %v1999 = vadd.f32 %v1782, %v1993
        %s2000 = sld [smem:[#allocation2 + $0x44]]
        %v2001 = vstv %s2000
        %v2002 = vmul.f32 %v368, %v2001
        %v2003 = vmul.f32 %v369, %v2001
        %v2004 = vmul.f32 %v370, %v2001
        %v2005 = vmul.f32 %v371, %v2001
        %2010 = vrot.lane.b32.xlu0 %v2002, 90
        %v2011 = vpop.permute.xlu0 %2010
        %2012 = vrot.lane.b32.xlu0 %v2003, 90
        %v2013 = vpop.permute.xlu0 %2012
        %2014 = vrot.lane.b32.xlu0 %v2004, 90
        %v2015 = vpop.permute.xlu0 %2014
        %2016 = vrot.lane.b32.xlu0 %v2005, 90
        %v2017 = vpop.permute.xlu0 %2016
        %v2018 = vsel %vm1909, %v2011, %v2013
        %v2019 = vsel %vm1909, %v2013, %v2015
        %v2020 = vsel %vm1909, %v2015, %v2017
        %v2024 = vadd.f32 %v1807, %v2018
        %v2025 = vadd.f32 %v1808, %v2019
        %v2026 = vadd.f32 %v1809, %v2020
        %s2027 = sld [smem:[#allocation2 + $0x45]]
        %v2028 = vstv %s2027
        %v2029 = vmul.f32 %v368, %v2028
        %v2030 = vmul.f32 %v369, %v2028
        %v2031 = vmul.f32 %v370, %v2028
        %v2032 = vmul.f32 %v371, %v2028
        %2037 = vrot.lane.b32.xlu0 %v2029, 90
        %v2038 = vpop.permute.xlu0 %2037
        %2039 = vrot.lane.b32.xlu0 %v2030, 90
        %v2040 = vpop.permute.xlu0 %2039
        %2041 = vrot.lane.b32.xlu0 %v2031, 90
        %v2042 = vpop.permute.xlu0 %2041
        %2043 = vrot.lane.b32.xlu0 %v2032, 90
        %v2044 = vpop.permute.xlu0 %2043
        %v2045 = vsel %vm1909, %v2038, %v2040
        %v2046 = vsel %vm1909, %v2040, %v2042
        %v2047 = vsel %vm1909, %v2042, %v2044
        %v2051 = vadd.f32 %v1834, %v2045
        %v2052 = vadd.f32 %v1835, %v2046
        %v2053 = vadd.f32 %v1836, %v2047
        %s2054 = sld [smem:[#allocation2 + $0x46]]
        %v2055 = vstv %s2054
        %v2056 = vmul.f32 %v368, %v2055
        %v2057 = vmul.f32 %v369, %v2055
        %v2058 = vmul.f32 %v370, %v2055
        %v2059 = vmul.f32 %v371, %v2055
        %2064 = vrot.lane.b32.xlu0 %v2056, 90
        %v2065 = vpop.permute.xlu0 %2064
        %2066 = vrot.lane.b32.xlu0 %v2057, 90
        %v2067 = vpop.permute.xlu0 %2066
        %2068 = vrot.lane.b32.xlu0 %v2058, 90
        %v2069 = vpop.permute.xlu0 %2068
        %2070 = vrot.lane.b32.xlu0 %v2059, 90
        %v2071 = vpop.permute.xlu0 %2070
        %v2072 = vsel %vm1909, %v2065, %v2067
        %v2073 = vsel %vm1909, %v2067, %v2069
        %v2074 = vsel %vm1909, %v2069, %v2071
        %v2078 = vadd.f32 %v1861, %v2072
        %v2079 = vadd.f32 %v1862, %v2073
        %v2080 = vadd.f32 %v1863, %v2074
        %s2081 = sld [smem:[#allocation2 + $0x47]]
        %v2082 = vstv %s2081
        %v2083 = vmul.f32 %v368, %v2082
        %v2084 = vmul.f32 %v369, %v2082
        %v2085 = vmul.f32 %v370, %v2082
        %v2086 = vmul.f32 %v371, %v2082
        %2091 = vrot.lane.b32.xlu0 %v2083, 90
        %v2092 = vpop.permute.xlu0 %2091
        %2093 = vrot.lane.b32.xlu0 %v2084, 90
        %v2094 = vpop.permute.xlu0 %2093
        %2095 = vrot.lane.b32.xlu0 %v2085, 90
        %v2096 = vpop.permute.xlu0 %2095
        %2097 = vrot.lane.b32.xlu0 %v2086, 90
        %v2098 = vpop.permute.xlu0 %2097
        %v2099 = vsel %vm1909, %v2092, %v2094
        %v2100 = vsel %vm1909, %v2094, %v2096
        %v2101 = vsel %vm1909, %v2096, %v2098
        %v2105 = vadd.f32 %v1888, %v2099
        %v2106 = vadd.f32 %v1889, %v2100
        %v2107 = vadd.f32 %v1890, %v2101
        %v2108 = vld [vmem:[%s271] sm:$0xfe]
        %v2109 = vld [vmem:[%s271 + $0x8] sm:$0xfe]
        %v2110 = vld [vmem:[%s271 + $0x10] sm:$0xfe]
        %v2111 = vld [vmem:[%s271 + $0x20] sm:$0x1]
        %v2112 = vld [vmem:[%s271 + $0x28] sm:$0x1]
        %v2113 = vld [vmem:[%s271 + $0x30] sm:$0x1]
        %s2114 = sld [smem:[#allocation2 + $0x48]]
        %v2115 = vstv %s2114
        %v2116 = vmul.f32 %v2108, %v2115
        %v2117 = vmul.f32 %v2109, %v2115
        %v2118 = vmul.f32 %v2110, %v2115
        %v2119 = vmul.f32 %v2111, %v2115
        %v2120 = vmul.f32 %v2112, %v2115
        %v2121 = vmul.f32 %v2113, %v2115
        %vm2128 = vcmask 1046528
        %v2129 = vrot.slane %v2116, 1
        %v2130 = vrot.slane %v2119, 1
        %v2131 = vsel %vm2128, %v2129, %v2130
        %v2132 = vrot.slane %v2117, 1
        %v2133 = vrot.slane %v2120, 1
        %v2134 = vsel %vm2128, %v2132, %v2133
        %v2135 = vrot.slane %v2118, 1
        %v2136 = vrot.slane %v2121, 1
        %v2137 = vsel %vm2128, %v2135, %v2136
        %v2141 = vadd.f32 %v1916, %v2131
        %v2142 = vadd.f32 %v1917, %v2134
        %v2143 = vadd.f32 %v1918, %v2137
        %s2144 = sld [smem:[#allocation2 + $0x49]]
        %v2145 = vstv %s2144
        %v2146 = vmul.f32 %v2108, %v2145
        %v2147 = vmul.f32 %v2109, %v2145
        %v2148 = vmul.f32 %v2110, %v2145
        %v2149 = vmul.f32 %v2111, %v2145
        %v2150 = vmul.f32 %v2112, %v2145
        %v2151 = vmul.f32 %v2113, %v2145
        %v2158 = vrot.slane %v2146, 1
        %v2159 = vrot.slane %v2149, 1
        %v2160 = vsel %vm2128, %v2158, %v2159
        %v2161 = vrot.slane %v2147, 1
        %v2162 = vrot.slane %v2150, 1
        %v2163 = vsel %vm2128, %v2161, %v2162
        %v2164 = vrot.slane %v2148, 1
        %v2165 = vrot.slane %v2151, 1
        %v2166 = vsel %vm2128, %v2164, %v2165
        %v2170 = vadd.f32 %v1943, %v2160
        %v2171 = vadd.f32 %v1944, %v2163
        %v2172 = vadd.f32 %v1945, %v2166
        %s2173 = sld [smem:[#allocation2 + $0x4a]]
        %v2174 = vstv %s2173
        %v2175 = vmul.f32 %v2108, %v2174
        %v2176 = vmul.f32 %v2109, %v2174
        %v2177 = vmul.f32 %v2110, %v2174
        %v2178 = vmul.f32 %v2111, %v2174
        %v2179 = vmul.f32 %v2112, %v2174
        %v2180 = vmul.f32 %v2113, %v2174
        %v2187 = vrot.slane %v2175, 1
        %v2188 = vrot.slane %v2178, 1
        %v2189 = vsel %vm2128, %v2187, %v2188
        %v2190 = vrot.slane %v2176, 1
        %v2191 = vrot.slane %v2179, 1
        %v2192 = vsel %vm2128, %v2190, %v2191
        %v2193 = vrot.slane %v2177, 1
        %v2194 = vrot.slane %v2180, 1
        %v2195 = vsel %vm2128, %v2193, %v2194
        %v2199 = vadd.f32 %v1970, %v2189
        %v2200 = vadd.f32 %v1971, %v2192
        %v2201 = vadd.f32 %v1972, %v2195
        %s2202 = sld [smem:[#allocation2 + $0x4b]]
        %v2203 = vstv %s2202
        %v2204 = vmul.f32 %v2108, %v2203
        %v2205 = vmul.f32 %v2109, %v2203
        %v2206 = vmul.f32 %v2110, %v2203
        %v2207 = vmul.f32 %v2111, %v2203
        %v2208 = vmul.f32 %v2112, %v2203
        %v2209 = vmul.f32 %v2113, %v2203
        %v2216 = vrot.slane %v2204, 1
        %v2217 = vrot.slane %v2207, 1
        %v2218 = vsel %vm2128, %v2216, %v2217
        %v2219 = vrot.slane %v2205, 1
        %v2220 = vrot.slane %v2208, 1
        %v2221 = vsel %vm2128, %v2219, %v2220
        %v2222 = vrot.slane %v2206, 1
        %v2223 = vrot.slane %v2209, 1
        %v2224 = vsel %vm2128, %v2222, %v2223
        %v2228 = vadd.f32 %v1997, %v2218
        %v2229 = vadd.f32 %v1998, %v2221
        %v2230 = vadd.f32 %v1999, %v2224
        %s2231 = sld [smem:[#allocation2 + $0x4c]]
        %v2232 = vstv %s2231
        %v2233 = vmul.f32 %v2108, %v2232
        %v2234 = vmul.f32 %v2109, %v2232
        %v2235 = vmul.f32 %v2110, %v2232
        %v2236 = vmul.f32 %v2111, %v2232
        %v2237 = vmul.f32 %v2112, %v2232
        %v2238 = vmul.f32 %v2113, %v2232
        %v2245 = vrot.slane %v2233, 1
        %v2246 = vrot.slane %v2236, 1
        %v2247 = vsel %vm2128, %v2245, %v2246
        %v2248 = vrot.slane %v2234, 1
        %v2249 = vrot.slane %v2237, 1
        %v2250 = vsel %vm2128, %v2248, %v2249
        %v2251 = vrot.slane %v2235, 1
        %v2252 = vrot.slane %v2238, 1
        %v2253 = vsel %vm2128, %v2251, %v2252
        %v2257 = vadd.f32 %v2024, %v2247
        %v2258 = vadd.f32 %v2025, %v2250
        %v2259 = vadd.f32 %v2026, %v2253
        %s2260 = sld [smem:[#allocation2 + $0x4d]]
        %v2261 = vstv %s2260
        %v2262 = vmul.f32 %v2108, %v2261
        %v2263 = vmul.f32 %v2109, %v2261
        %v2264 = vmul.f32 %v2110, %v2261
        %v2265 = vmul.f32 %v2111, %v2261
        %v2266 = vmul.f32 %v2112, %v2261
        %v2267 = vmul.f32 %v2113, %v2261
        %v2274 = vrot.slane %v2262, 1
        %v2275 = vrot.slane %v2265, 1
        %v2276 = vsel %vm2128, %v2274, %v2275
        %v2277 = vrot.slane %v2263, 1
        %v2278 = vrot.slane %v2266, 1
        %v2279 = vsel %vm2128, %v2277, %v2278
        %v2280 = vrot.slane %v2264, 1
        %v2281 = vrot.slane %v2267, 1
        %v2282 = vsel %vm2128, %v2280, %v2281
        %v2286 = vadd.f32 %v2051, %v2276
        %v2287 = vadd.f32 %v2052, %v2279
        %v2288 = vadd.f32 %v2053, %v2282
        %s2289 = sld [smem:[#allocation2 + $0x4e]]
        %v2290 = vstv %s2289
        %v2291 = vmul.f32 %v2108, %v2290
        %v2292 = vmul.f32 %v2109, %v2290
        %v2293 = vmul.f32 %v2110, %v2290
        %v2294 = vmul.f32 %v2111, %v2290
        %v2295 = vmul.f32 %v2112, %v2290
        %v2296 = vmul.f32 %v2113, %v2290
        %v2303 = vrot.slane %v2291, 1
        %v2304 = vrot.slane %v2294, 1
        %v2305 = vsel %vm2128, %v2303, %v2304
        %v2306 = vrot.slane %v2292, 1
        %v2307 = vrot.slane %v2295, 1
        %v2308 = vsel %vm2128, %v2306, %v2307
        %v2309 = vrot.slane %v2293, 1
        %v2310 = vrot.slane %v2296, 1
        %v2311 = vsel %vm2128, %v2309, %v2310
        %v2315 = vadd.f32 %v2078, %v2305
        %v2316 = vadd.f32 %v2079, %v2308
        %v2317 = vadd.f32 %v2080, %v2311
        %s2318 = sld [smem:[#allocation2 + $0x4f]]
        %v2319 = vstv %s2318
        %v2320 = vmul.f32 %v2108, %v2319
        %v2321 = vmul.f32 %v2109, %v2319
        %v2322 = vmul.f32 %v2110, %v2319
        %v2323 = vmul.f32 %v2111, %v2319
        %v2324 = vmul.f32 %v2112, %v2319
        %v2325 = vmul.f32 %v2113, %v2319
        %v2332 = vrot.slane %v2320, 1
        %v2333 = vrot.slane %v2323, 1
        %v2334 = vsel %vm2128, %v2332, %v2333
        %v2335 = vrot.slane %v2321, 1
        %v2336 = vrot.slane %v2324, 1
        %v2337 = vsel %vm2128, %v2335, %v2336
        %v2338 = vrot.slane %v2322, 1
        %v2339 = vrot.slane %v2325, 1
        %v2340 = vsel %vm2128, %v2338, %v2339
        %v2344 = vadd.f32 %v2105, %v2334
        %v2345 = vadd.f32 %v2106, %v2337
        %v2346 = vadd.f32 %v2107, %v2340
        %v2347 = vld [vmem:[%s271] sm:$0xfe]
        %v2348 = vld [vmem:[%s271 + $0x8] sm:$0xfe]
        %v2349 = vld [vmem:[%s271 + $0x10] sm:$0xfe]
        %v2350 = vld [vmem:[%s271 + $0x18] sm:$0xfe]
        %v2351 = vld [vmem:[%s271 + $0x20] sm:$0x1]
        %v2352 = vld [vmem:[%s271 + $0x28] sm:$0x1]
        %v2353 = vld [vmem:[%s271 + $0x30] sm:$0x1]
        %v2354 = vld [vmem:[%s271 + $0x38] sm:$0x1]
        %s2355 = sld [smem:[#allocation2 + $0x50]]
        %v2356 = vstv %s2355
        %v2357 = vmul.f32 %v2347, %v2356
        %v2358 = vmul.f32 %v2348, %v2356
        %v2359 = vmul.f32 %v2349, %v2356
        %v2360 = vmul.f32 %v2350, %v2356
        %v2361 = vmul.f32 %v2351, %v2356
        %v2362 = vmul.f32 %v2352, %v2356
        %v2363 = vmul.f32 %v2353, %v2356
        %v2364 = vmul.f32 %v2354, %v2356
        %v2373 = vrot.slane %v2357, 1
        %v2374 = vrot.slane %v2361, 1
        %v2375 = vsel %vm2128, %v2373, %v2374
        %v2376 = vrot.slane %v2358, 1
        %v2377 = vrot.slane %v2362, 1
        %v2378 = vsel %vm2128, %v2376, %v2377
        %v2379 = vrot.slane %v2359, 1
        %v2380 = vrot.slane %v2363, 1
        %v2381 = vsel %vm2128, %v2379, %v2380
        %v2382 = vrot.slane %v2360, 1
        %v2383 = vrot.slane %v2364, 1
        %v2384 = vsel %vm2128, %v2382, %v2383
        %2385 = vrot.lane.b32.xlu0 %v2375, 127
        %v2386 = vpop.permute.xlu0 %2385
        %2387 = vrot.lane.b32.xlu0 %v2378, 127
        %v2388 = vpop.permute.xlu0 %2387
        %2389 = vrot.lane.b32.xlu0 %v2381, 127
        %v2390 = vpop.permute.xlu0 %2389
        %2391 = vrot.lane.b32.xlu0 %v2384, 127
        %v2392 = vpop.permute.xlu0 %2391
        %v2393 = vsel %vm390, %v2386, %v2388
        %v2394 = vsel %vm390, %v2388, %v2390
        %v2395 = vsel %vm390, %v2390, %v2392
        %v2399 = vadd.f32 %v2141, %v2393
        %v2400 = vadd.f32 %v2142, %v2394
        %v2401 = vadd.f32 %v2143, %v2395
        %s2402 = sld [smem:[#allocation2 + $0x51]]
        %v2403 = vstv %s2402
        %v2404 = vmul.f32 %v2347, %v2403
        %v2405 = vmul.f32 %v2348, %v2403
        %v2406 = vmul.f32 %v2349, %v2403
        %v2407 = vmul.f32 %v2350, %v2403
        %v2408 = vmul.f32 %v2351, %v2403
        %v2409 = vmul.f32 %v2352, %v2403
        %v2410 = vmul.f32 %v2353, %v2403
        %v2411 = vmul.f32 %v2354, %v2403
        %v2420 = vrot.slane %v2404, 1
        %v2421 = vrot.slane %v2408, 1
        %v2422 = vsel %vm2128, %v2420, %v2421
        %v2423 = vrot.slane %v2405, 1
        %v2424 = vrot.slane %v2409, 1
        %v2425 = vsel %vm2128, %v2423, %v2424
        %v2426 = vrot.slane %v2406, 1
        %v2427 = vrot.slane %v2410, 1
        %v2428 = vsel %vm2128, %v2426, %v2427
        %v2429 = vrot.slane %v2407, 1
        %v2430 = vrot.slane %v2411, 1
        %v2431 = vsel %vm2128, %v2429, %v2430
        %2432 = vrot.lane.b32.xlu0 %v2422, 127
        %v2433 = vpop.permute.xlu0 %2432
        %2434 = vrot.lane.b32.xlu0 %v2425, 127
        %v2435 = vpop.permute.xlu0 %2434
        %2436 = vrot.lane.b32.xlu0 %v2428, 127
        %v2437 = vpop.permute.xlu0 %2436
        %2438 = vrot.lane.b32.xlu0 %v2431, 127
        %v2439 = vpop.permute.xlu0 %2438
        %v2440 = vsel %vm390, %v2433, %v2435
        %v2441 = vsel %vm390, %v2435, %v2437
        %v2442 = vsel %vm390, %v2437, %v2439
        %v2446 = vadd.f32 %v2170, %v2440
        %v2447 = vadd.f32 %v2171, %v2441
        %v2448 = vadd.f32 %v2172, %v2442
        %s2449 = sld [smem:[#allocation2 + $0x52]]
        %v2450 = vstv %s2449
        %v2451 = vmul.f32 %v2347, %v2450
        %v2452 = vmul.f32 %v2348, %v2450
        %v2453 = vmul.f32 %v2349, %v2450
        %v2454 = vmul.f32 %v2350, %v2450
        %v2455 = vmul.f32 %v2351, %v2450
        %v2456 = vmul.f32 %v2352, %v2450
        %v2457 = vmul.f32 %v2353, %v2450
        %v2458 = vmul.f32 %v2354, %v2450
        %v2467 = vrot.slane %v2451, 1
        %v2468 = vrot.slane %v2455, 1
        %v2469 = vsel %vm2128, %v2467, %v2468
        %v2470 = vrot.slane %v2452, 1
        %v2471 = vrot.slane %v2456, 1
        %v2472 = vsel %vm2128, %v2470, %v2471
        %v2473 = vrot.slane %v2453, 1
        %v2474 = vrot.slane %v2457, 1
        %v2475 = vsel %vm2128, %v2473, %v2474
        %v2476 = vrot.slane %v2454, 1
        %v2477 = vrot.slane %v2458, 1
        %v2478 = vsel %vm2128, %v2476, %v2477
        %2479 = vrot.lane.b32.xlu0 %v2469, 127
        %v2480 = vpop.permute.xlu0 %2479
        %2481 = vrot.lane.b32.xlu0 %v2472, 127
        %v2482 = vpop.permute.xlu0 %2481
        %2483 = vrot.lane.b32.xlu0 %v2475, 127
        %v2484 = vpop.permute.xlu0 %2483
        %2485 = vrot.lane.b32.xlu0 %v2478, 127
        %v2486 = vpop.permute.xlu0 %2485
        %v2487 = vsel %vm390, %v2480, %v2482
        %v2488 = vsel %vm390, %v2482, %v2484
        %v2489 = vsel %vm390, %v2484, %v2486
        %v2493 = vadd.f32 %v2199, %v2487
        %v2494 = vadd.f32 %v2200, %v2488
        %v2495 = vadd.f32 %v2201, %v2489
        %s2496 = sld [smem:[#allocation2 + $0x53]]
        %v2497 = vstv %s2496
        %v2498 = vmul.f32 %v2347, %v2497
        %v2499 = vmul.f32 %v2348, %v2497
        %v2500 = vmul.f32 %v2349, %v2497
        %v2501 = vmul.f32 %v2350, %v2497
        %v2502 = vmul.f32 %v2351, %v2497
        %v2503 = vmul.f32 %v2352, %v2497
        %v2504 = vmul.f32 %v2353, %v2497
        %v2505 = vmul.f32 %v2354, %v2497
        %v2514 = vrot.slane %v2498, 1
        %v2515 = vrot.slane %v2502, 1
        %v2516 = vsel %vm2128, %v2514, %v2515
        %v2517 = vrot.slane %v2499, 1
        %v2518 = vrot.slane %v2503, 1
        %v2519 = vsel %vm2128, %v2517, %v2518
        %v2520 = vrot.slane %v2500, 1
        %v2521 = vrot.slane %v2504, 1
        %v2522 = vsel %vm2128, %v2520, %v2521
        %v2523 = vrot.slane %v2501, 1
        %v2524 = vrot.slane %v2505, 1
        %v2525 = vsel %vm2128, %v2523, %v2524
        %2526 = vrot.lane.b32.xlu0 %v2516, 127
        %v2527 = vpop.permute.xlu0 %2526
        %2528 = vrot.lane.b32.xlu0 %v2519, 127
        %v2529 = vpop.permute.xlu0 %2528
        %2530 = vrot.lane.b32.xlu0 %v2522, 127
        %v2531 = vpop.permute.xlu0 %2530
        %2532 = vrot.lane.b32.xlu0 %v2525, 127
        %v2533 = vpop.permute.xlu0 %2532
        %v2534 = vsel %vm390, %v2527, %v2529
        %v2535 = vsel %vm390, %v2529, %v2531
        %v2536 = vsel %vm390, %v2531, %v2533
        %v2540 = vadd.f32 %v2228, %v2534
        %v2541 = vadd.f32 %v2229, %v2535
        %v2542 = vadd.f32 %v2230, %v2536
        %s2543 = sld [smem:[#allocation2 + $0x54]]
        %v2544 = vstv %s2543
        %v2545 = vmul.f32 %v2347, %v2544
        %v2546 = vmul.f32 %v2348, %v2544
        %v2547 = vmul.f32 %v2349, %v2544
        %v2548 = vmul.f32 %v2350, %v2544
        %v2549 = vmul.f32 %v2351, %v2544
        %v2550 = vmul.f32 %v2352, %v2544
        %v2551 = vmul.f32 %v2353, %v2544
        %v2552 = vmul.f32 %v2354, %v2544
        %v2561 = vrot.slane %v2545, 1
        %v2562 = vrot.slane %v2549, 1
        %v2563 = vsel %vm2128, %v2561, %v2562
        %v2564 = vrot.slane %v2546, 1
        %v2565 = vrot.slane %v2550, 1
        %v2566 = vsel %vm2128, %v2564, %v2565
        %v2567 = vrot.slane %v2547, 1
        %v2568 = vrot.slane %v2551, 1
        %v2569 = vsel %vm2128, %v2567, %v2568
        %v2570 = vrot.slane %v2548, 1
        %v2571 = vrot.slane %v2552, 1
        %v2572 = vsel %vm2128, %v2570, %v2571
        %2573 = vrot.lane.b32.xlu0 %v2563, 127
        %v2574 = vpop.permute.xlu0 %2573
        %2575 = vrot.lane.b32.xlu0 %v2566, 127
        %v2576 = vpop.permute.xlu0 %2575
        %2577 = vrot.lane.b32.xlu0 %v2569, 127
        %v2578 = vpop.permute.xlu0 %2577
        %2579 = vrot.lane.b32.xlu0 %v2572, 127
        %v2580 = vpop.permute.xlu0 %2579
        %v2581 = vsel %vm390, %v2574, %v2576
        %v2582 = vsel %vm390, %v2576, %v2578
        %v2583 = vsel %vm390, %v2578, %v2580
        %v2587 = vadd.f32 %v2257, %v2581
        %v2588 = vadd.f32 %v2258, %v2582
        %v2589 = vadd.f32 %v2259, %v2583
        %s2590 = sld [smem:[#allocation2 + $0x55]]
        %v2591 = vstv %s2590
        %v2592 = vmul.f32 %v2347, %v2591
        %v2593 = vmul.f32 %v2348, %v2591
        %v2594 = vmul.f32 %v2349, %v2591
        %v2595 = vmul.f32 %v2350, %v2591
        %v2596 = vmul.f32 %v2351, %v2591
        %v2597 = vmul.f32 %v2352, %v2591
        %v2598 = vmul.f32 %v2353, %v2591
        %v2599 = vmul.f32 %v2354, %v2591
        %v2608 = vrot.slane %v2592, 1
        %v2609 = vrot.slane %v2596, 1
        %v2610 = vsel %vm2128, %v2608, %v2609
        %v2611 = vrot.slane %v2593, 1
        %v2612 = vrot.slane %v2597, 1
        %v2613 = vsel %vm2128, %v2611, %v2612
        %v2614 = vrot.slane %v2594, 1
        %v2615 = vrot.slane %v2598, 1
        %v2616 = vsel %vm2128, %v2614, %v2615
        %v2617 = vrot.slane %v2595, 1
        %v2618 = vrot.slane %v2599, 1
        %v2619 = vsel %vm2128, %v2617, %v2618
        %2620 = vrot.lane.b32.xlu0 %v2610, 127
        %v2621 = vpop.permute.xlu0 %2620
        %2622 = vrot.lane.b32.xlu0 %v2613, 127
        %v2623 = vpop.permute.xlu0 %2622
        %2624 = vrot.lane.b32.xlu0 %v2616, 127
        %v2625 = vpop.permute.xlu0 %2624
        %2626 = vrot.lane.b32.xlu0 %v2619, 127
        %v2627 = vpop.permute.xlu0 %2626
        %v2628 = vsel %vm390, %v2621, %v2623
        %v2629 = vsel %vm390, %v2623, %v2625
        %v2630 = vsel %vm390, %v2625, %v2627
        %v2634 = vadd.f32 %v2286, %v2628
        %v2635 = vadd.f32 %v2287, %v2629
        %v2636 = vadd.f32 %v2288, %v2630
        %s2637 = sld [smem:[#allocation2 + $0x56]]
        %v2638 = vstv %s2637
        %v2639 = vmul.f32 %v2347, %v2638
        %v2640 = vmul.f32 %v2348, %v2638
        %v2641 = vmul.f32 %v2349, %v2638
        %v2642 = vmul.f32 %v2350, %v2638
        %v2643 = vmul.f32 %v2351, %v2638
        %v2644 = vmul.f32 %v2352, %v2638
        %v2645 = vmul.f32 %v2353, %v2638
        %v2646 = vmul.f32 %v2354, %v2638
        %v2655 = vrot.slane %v2639, 1
        %v2656 = vrot.slane %v2643, 1
        %v2657 = vsel %vm2128, %v2655, %v2656
        %v2658 = vrot.slane %v2640, 1
        %v2659 = vrot.slane %v2644, 1
        %v2660 = vsel %vm2128, %v2658, %v2659
        %v2661 = vrot.slane %v2641, 1
        %v2662 = vrot.slane %v2645, 1
        %v2663 = vsel %vm2128, %v2661, %v2662
        %v2664 = vrot.slane %v2642, 1
        %v2665 = vrot.slane %v2646, 1
        %v2666 = vsel %vm2128, %v2664, %v2665
        %2667 = vrot.lane.b32.xlu0 %v2657, 127
        %v2668 = vpop.permute.xlu0 %2667
        %2669 = vrot.lane.b32.xlu0 %v2660, 127
        %v2670 = vpop.permute.xlu0 %2669
        %2671 = vrot.lane.b32.xlu0 %v2663, 127
        %v2672 = vpop.permute.xlu0 %2671
        %2673 = vrot.lane.b32.xlu0 %v2666, 127
        %v2674 = vpop.permute.xlu0 %2673
        %v2675 = vsel %vm390, %v2668, %v2670
        %v2676 = vsel %vm390, %v2670, %v2672
        %v2677 = vsel %vm390, %v2672, %v2674
        %v2681 = vadd.f32 %v2315, %v2675
        %v2682 = vadd.f32 %v2316, %v2676
        %v2683 = vadd.f32 %v2317, %v2677
        %s2684 = sld [smem:[#allocation2 + $0x57]]
        %v2685 = vstv %s2684
        %v2686 = vmul.f32 %v2347, %v2685
        %v2687 = vmul.f32 %v2348, %v2685
        %v2688 = vmul.f32 %v2349, %v2685
        %v2689 = vmul.f32 %v2350, %v2685
        %v2690 = vmul.f32 %v2351, %v2685
        %v2691 = vmul.f32 %v2352, %v2685
        %v2692 = vmul.f32 %v2353, %v2685
        %v2693 = vmul.f32 %v2354, %v2685
        %v2702 = vrot.slane %v2686, 1
        %v2703 = vrot.slane %v2690, 1
        %v2704 = vsel %vm2128, %v2702, %v2703
        %v2705 = vrot.slane %v2687, 1
        %v2706 = vrot.slane %v2691, 1
        %v2707 = vsel %vm2128, %v2705, %v2706
        %v2708 = vrot.slane %v2688, 1
        %v2709 = vrot.slane %v2692, 1
        %v2710 = vsel %vm2128, %v2708, %v2709
        %v2711 = vrot.slane %v2689, 1
        %v2712 = vrot.slane %v2693, 1
        %v2713 = vsel %vm2128, %v2711, %v2712
        %2714 = vrot.lane.b32.xlu0 %v2704, 127
        %v2715 = vpop.permute.xlu0 %2714
        %2716 = vrot.lane.b32.xlu0 %v2707, 127
        %v2717 = vpop.permute.xlu0 %2716
        %2718 = vrot.lane.b32.xlu0 %v2710, 127
        %v2719 = vpop.permute.xlu0 %2718
        %2720 = vrot.lane.b32.xlu0 %v2713, 127
        %v2721 = vpop.permute.xlu0 %2720
        %v2722 = vsel %vm390, %v2715, %v2717
        %v2723 = vsel %vm390, %v2717, %v2719
        %v2724 = vsel %vm390, %v2719, %v2721
        %v2728 = vadd.f32 %v2344, %v2722
        %v2729 = vadd.f32 %v2345, %v2723
        %v2730 = vadd.f32 %v2346, %v2724
        %s2731 = sld [smem:[#allocation2 + $0x58]]
        %v2732 = vstv %s2731
        %v2733 = vmul.f32 %v2347, %v2732
        %v2734 = vmul.f32 %v2348, %v2732
        %v2735 = vmul.f32 %v2349, %v2732
        %v2736 = vmul.f32 %v2350, %v2732
        %v2737 = vmul.f32 %v2351, %v2732
        %v2738 = vmul.f32 %v2352, %v2732
        %v2739 = vmul.f32 %v2353, %v2732
        %v2740 = vmul.f32 %v2354, %v2732
        %v2749 = vrot.slane %v2733, 1
        %v2750 = vrot.slane %v2737, 1
        %v2751 = vsel %vm2128, %v2749, %v2750
        %v2752 = vrot.slane %v2734, 1
        %v2753 = vrot.slane %v2738, 1
        %v2754 = vsel %vm2128, %v2752, %v2753
        %v2755 = vrot.slane %v2735, 1
        %v2756 = vrot.slane %v2739, 1
        %v2757 = vsel %vm2128, %v2755, %v2756
        %v2758 = vrot.slane %v2736, 1
        %v2759 = vrot.slane %v2740, 1
        %v2760 = vsel %vm2128, %v2758, %v2759
        %2761 = vrot.lane.b32.xlu0 %v2751, 126
        %v2762 = vpop.permute.xlu0 %2761
        %2763 = vrot.lane.b32.xlu0 %v2754, 126
        %v2764 = vpop.permute.xlu0 %2763
        %2765 = vrot.lane.b32.xlu0 %v2757, 126
        %v2766 = vpop.permute.xlu0 %2765
        %2767 = vrot.lane.b32.xlu0 %v2760, 126
        %v2768 = vpop.permute.xlu0 %2767
        %v2769 = vsel %vm607, %v2762, %v2764
        %v2770 = vsel %vm607, %v2764, %v2766
        %v2771 = vsel %vm607, %v2766, %v2768
        %v2775 = vadd.f32 %v2399, %v2769
        %v2776 = vadd.f32 %v2400, %v2770
        %v2777 = vadd.f32 %v2401, %v2771
        %s2778 = sld [smem:[#allocation2 + $0x59]]
        %v2779 = vstv %s2778
        %v2780 = vmul.f32 %v2347, %v2779
        %v2781 = vmul.f32 %v2348, %v2779
        %v2782 = vmul.f32 %v2349, %v2779
        %v2783 = vmul.f32 %v2350, %v2779
        %v2784 = vmul.f32 %v2351, %v2779
        %v2785 = vmul.f32 %v2352, %v2779
        %v2786 = vmul.f32 %v2353, %v2779
        %v2787 = vmul.f32 %v2354, %v2779
        %v2796 = vrot.slane %v2780, 1
        %v2797 = vrot.slane %v2784, 1
        %v2798 = vsel %vm2128, %v2796, %v2797
        %v2799 = vrot.slane %v2781, 1
        %v2800 = vrot.slane %v2785, 1
        %v2801 = vsel %vm2128, %v2799, %v2800
        %v2802 = vrot.slane %v2782, 1
        %v2803 = vrot.slane %v2786, 1
        %v2804 = vsel %vm2128, %v2802, %v2803
        %v2805 = vrot.slane %v2783, 1
        %v2806 = vrot.slane %v2787, 1
        %v2807 = vsel %vm2128, %v2805, %v2806
        %2808 = vrot.lane.b32.xlu0 %v2798, 126
        %v2809 = vpop.permute.xlu0 %2808
        %2810 = vrot.lane.b32.xlu0 %v2801, 126
        %v2811 = vpop.permute.xlu0 %2810
        %2812 = vrot.lane.b32.xlu0 %v2804, 126
        %v2813 = vpop.permute.xlu0 %2812
        %2814 = vrot.lane.b32.xlu0 %v2807, 126
        %v2815 = vpop.permute.xlu0 %2814
        %v2816 = vsel %vm607, %v2809, %v2811
        %v2817 = vsel %vm607, %v2811, %v2813
        %v2818 = vsel %vm607, %v2813, %v2815
        %v2822 = vadd.f32 %v2446, %v2816
        %v2823 = vadd.f32 %v2447, %v2817
        %v2824 = vadd.f32 %v2448, %v2818
        %s2825 = sld [smem:[#allocation2 + $0x5a]]
        %v2826 = vstv %s2825
        %v2827 = vmul.f32 %v2347, %v2826
        %v2828 = vmul.f32 %v2348, %v2826
        %v2829 = vmul.f32 %v2349, %v2826
        %v2830 = vmul.f32 %v2350, %v2826
        %v2831 = vmul.f32 %v2351, %v2826
        %v2832 = vmul.f32 %v2352, %v2826
        %v2833 = vmul.f32 %v2353, %v2826
        %v2834 = vmul.f32 %v2354, %v2826
        %v2843 = vrot.slane %v2827, 1
        %v2844 = vrot.slane %v2831, 1
        %v2845 = vsel %vm2128, %v2843, %v2844
        %v2846 = vrot.slane %v2828, 1
        %v2847 = vrot.slane %v2832, 1
        %v2848 = vsel %vm2128, %v2846, %v2847
        %v2849 = vrot.slane %v2829, 1
        %v2850 = vrot.slane %v2833, 1
        %v2851 = vsel %vm2128, %v2849, %v2850
        %v2852 = vrot.slane %v2830, 1
        %v2853 = vrot.slane %v2834, 1
        %v2854 = vsel %vm2128, %v2852, %v2853
        %2855 = vrot.lane.b32.xlu0 %v2845, 126
        %v2856 = vpop.permute.xlu0 %2855
        %2857 = vrot.lane.b32.xlu0 %v2848, 126
        %v2858 = vpop.permute.xlu0 %2857
        %2859 = vrot.lane.b32.xlu0 %v2851, 126
        %v2860 = vpop.permute.xlu0 %2859
        %2861 = vrot.lane.b32.xlu0 %v2854, 126
        %v2862 = vpop.permute.xlu0 %2861
        %v2863 = vsel %vm607, %v2856, %v2858
        %v2864 = vsel %vm607, %v2858, %v2860
        %v2865 = vsel %vm607, %v2860, %v2862
        %v2869 = vadd.f32 %v2493, %v2863
        %v2870 = vadd.f32 %v2494, %v2864
        %v2871 = vadd.f32 %v2495, %v2865
        %s2872 = sld [smem:[#allocation2 + $0x5b]]
        %v2873 = vstv %s2872
        %v2874 = vmul.f32 %v2347, %v2873
        %v2875 = vmul.f32 %v2348, %v2873
        %v2876 = vmul.f32 %v2349, %v2873
        %v2877 = vmul.f32 %v2350, %v2873
        %v2878 = vmul.f32 %v2351, %v2873
        %v2879 = vmul.f32 %v2352, %v2873
        %v2880 = vmul.f32 %v2353, %v2873
        %v2881 = vmul.f32 %v2354, %v2873
        %v2890 = vrot.slane %v2874, 1
        %v2891 = vrot.slane %v2878, 1
        %v2892 = vsel %vm2128, %v2890, %v2891
        %v2893 = vrot.slane %v2875, 1
        %v2894 = vrot.slane %v2879, 1
        %v2895 = vsel %vm2128, %v2893, %v2894
        %v2896 = vrot.slane %v2876, 1
        %v2897 = vrot.slane %v2880, 1
        %v2898 = vsel %vm2128, %v2896, %v2897
        %v2899 = vrot.slane %v2877, 1
        %v2900 = vrot.slane %v2881, 1
        %v2901 = vsel %vm2128, %v2899, %v2900
        %2902 = vrot.lane.b32.xlu0 %v2892, 126
        %v2903 = vpop.permute.xlu0 %2902
        %2904 = vrot.lane.b32.xlu0 %v2895, 126
        %v2905 = vpop.permute.xlu0 %2904
        %2906 = vrot.lane.b32.xlu0 %v2898, 126
        %v2907 = vpop.permute.xlu0 %2906
        %2908 = vrot.lane.b32.xlu0 %v2901, 126
        %v2909 = vpop.permute.xlu0 %2908
        %v2910 = vsel %vm607, %v2903, %v2905
        %v2911 = vsel %vm607, %v2905, %v2907
        %v2912 = vsel %vm607, %v2907, %v2909
        %v2916 = vadd.f32 %v2540, %v2910
        %v2917 = vadd.f32 %v2541, %v2911
        %v2918 = vadd.f32 %v2542, %v2912
        %s2919 = sld [smem:[#allocation2 + $0x5c]]
        %v2920 = vstv %s2919
        %v2921 = vmul.f32 %v2347, %v2920
        %v2922 = vmul.f32 %v2348, %v2920
        %v2923 = vmul.f32 %v2349, %v2920
        %v2924 = vmul.f32 %v2350, %v2920
        %v2925 = vmul.f32 %v2351, %v2920
        %v2926 = vmul.f32 %v2352, %v2920
        %v2927 = vmul.f32 %v2353, %v2920
        %v2928 = vmul.f32 %v2354, %v2920
        %v2937 = vrot.slane %v2921, 1
        %v2938 = vrot.slane %v2925, 1
        %v2939 = vsel %vm2128, %v2937, %v2938
        %v2940 = vrot.slane %v2922, 1
        %v2941 = vrot.slane %v2926, 1
        %v2942 = vsel %vm2128, %v2940, %v2941
        %v2943 = vrot.slane %v2923, 1
        %v2944 = vrot.slane %v2927, 1
        %v2945 = vsel %vm2128, %v2943, %v2944
        %v2946 = vrot.slane %v2924, 1
        %v2947 = vrot.slane %v2928, 1
        %v2948 = vsel %vm2128, %v2946, %v2947
        %2949 = vrot.lane.b32.xlu0 %v2939, 126
        %v2950 = vpop.permute.xlu0 %2949
        %2951 = vrot.lane.b32.xlu0 %v2942, 126
        %v2952 = vpop.permute.xlu0 %2951
        %2953 = vrot.lane.b32.xlu0 %v2945, 126
        %v2954 = vpop.permute.xlu0 %2953
        %2955 = vrot.lane.b32.xlu0 %v2948, 126
        %v2956 = vpop.permute.xlu0 %2955
        %v2957 = vsel %vm607, %v2950, %v2952
        %v2958 = vsel %vm607, %v2952, %v2954
        %v2959 = vsel %vm607, %v2954, %v2956
        %v2963 = vadd.f32 %v2587, %v2957
        %v2964 = vadd.f32 %v2588, %v2958
        %v2965 = vadd.f32 %v2589, %v2959
        %s2966 = sld [smem:[#allocation2 + $0x5d]]
        %v2967 = vstv %s2966
        %v2968 = vmul.f32 %v2347, %v2967
        %v2969 = vmul.f32 %v2348, %v2967
        %v2970 = vmul.f32 %v2349, %v2967
        %v2971 = vmul.f32 %v2350, %v2967
        %v2972 = vmul.f32 %v2351, %v2967
        %v2973 = vmul.f32 %v2352, %v2967
        %v2974 = vmul.f32 %v2353, %v2967
        %v2975 = vmul.f32 %v2354, %v2967
        %v2984 = vrot.slane %v2968, 1
        %v2985 = vrot.slane %v2972, 1
        %v2986 = vsel %vm2128, %v2984, %v2985
        %v2987 = vrot.slane %v2969, 1
        %v2988 = vrot.slane %v2973, 1
        %v2989 = vsel %vm2128, %v2987, %v2988
        %v2990 = vrot.slane %v2970, 1
        %v2991 = vrot.slane %v2974, 1
        %v2992 = vsel %vm2128, %v2990, %v2991
        %v2993 = vrot.slane %v2971, 1
        %v2994 = vrot.slane %v2975, 1
        %v2995 = vsel %vm2128, %v2993, %v2994
        %2996 = vrot.lane.b32.xlu0 %v2986, 126
        %v2997 = vpop.permute.xlu0 %2996
        %2998 = vrot.lane.b32.xlu0 %v2989, 126
        %v2999 = vpop.permute.xlu0 %2998
        %3000 = vrot.lane.b32.xlu0 %v2992, 126
        %v3001 = vpop.permute.xlu0 %3000
        %3002 = vrot.lane.b32.xlu0 %v2995, 126
        %v3003 = vpop.permute.xlu0 %3002
        %v3004 = vsel %vm607, %v2997, %v2999
        %v3005 = vsel %vm607, %v2999, %v3001
        %v3006 = vsel %vm607, %v3001, %v3003
        %v3010 = vadd.f32 %v2634, %v3004
        %v3011 = vadd.f32 %v2635, %v3005
        %v3012 = vadd.f32 %v2636, %v3006
        %s3013 = sld [smem:[#allocation2 + $0x5e]]
        %v3014 = vstv %s3013
        %v3015 = vmul.f32 %v2347, %v3014
        %v3016 = vmul.f32 %v2348, %v3014
        %v3017 = vmul.f32 %v2349, %v3014
        %v3018 = vmul.f32 %v2350, %v3014
        %v3019 = vmul.f32 %v2351, %v3014
        %v3020 = vmul.f32 %v2352, %v3014
        %v3021 = vmul.f32 %v2353, %v3014
        %v3022 = vmul.f32 %v2354, %v3014
        %v3031 = vrot.slane %v3015, 1
        %v3032 = vrot.slane %v3019, 1
        %v3033 = vsel %vm2128, %v3031, %v3032
        %v3034 = vrot.slane %v3016, 1
        %v3035 = vrot.slane %v3020, 1
        %v3036 = vsel %vm2128, %v3034, %v3035
        %v3037 = vrot.slane %v3017, 1
        %v3038 = vrot.slane %v3021, 1
        %v3039 = vsel %vm2128, %v3037, %v3038
        %v3040 = vrot.slane %v3018, 1
        %v3041 = vrot.slane %v3022, 1
        %v3042 = vsel %vm2128, %v3040, %v3041
        %3043 = vrot.lane.b32.xlu0 %v3033, 126
        %v3044 = vpop.permute.xlu0 %3043
        %3045 = vrot.lane.b32.xlu0 %v3036, 126
        %v3046 = vpop.permute.xlu0 %3045
        %3047 = vrot.lane.b32.xlu0 %v3039, 126
        %v3048 = vpop.permute.xlu0 %3047
        %3049 = vrot.lane.b32.xlu0 %v3042, 126
        %v3050 = vpop.permute.xlu0 %3049
        %v3051 = vsel %vm607, %v3044, %v3046
        %v3052 = vsel %vm607, %v3046, %v3048
        %v3053 = vsel %vm607, %v3048, %v3050
        %v3057 = vadd.f32 %v2681, %v3051
        %v3058 = vadd.f32 %v2682, %v3052
        %v3059 = vadd.f32 %v2683, %v3053
        %s3060 = sld [smem:[#allocation2 + $0x5f]]
        %v3061 = vstv %s3060
        %v3062 = vmul.f32 %v2347, %v3061
        %v3063 = vmul.f32 %v2348, %v3061
        %v3064 = vmul.f32 %v2349, %v3061
        %v3065 = vmul.f32 %v2350, %v3061
        %v3066 = vmul.f32 %v2351, %v3061
        %v3067 = vmul.f32 %v2352, %v3061
        %v3068 = vmul.f32 %v2353, %v3061
        %v3069 = vmul.f32 %v2354, %v3061
        %v3078 = vrot.slane %v3062, 1
        %v3079 = vrot.slane %v3066, 1
        %v3080 = vsel %vm2128, %v3078, %v3079
        %v3081 = vrot.slane %v3063, 1
        %v3082 = vrot.slane %v3067, 1
        %v3083 = vsel %vm2128, %v3081, %v3082
        %v3084 = vrot.slane %v3064, 1
        %v3085 = vrot.slane %v3068, 1
        %v3086 = vsel %vm2128, %v3084, %v3085
        %v3087 = vrot.slane %v3065, 1
        %v3088 = vrot.slane %v3069, 1
        %v3089 = vsel %vm2128, %v3087, %v3088
        %3090 = vrot.lane.b32.xlu0 %v3080, 126
        %v3091 = vpop.permute.xlu0 %3090
        %3092 = vrot.lane.b32.xlu0 %v3083, 126
        %v3093 = vpop.permute.xlu0 %3092
        %3094 = vrot.lane.b32.xlu0 %v3086, 126
        %v3095 = vpop.permute.xlu0 %3094
        %3096 = vrot.lane.b32.xlu0 %v3089, 126
        %v3097 = vpop.permute.xlu0 %3096
        %v3098 = vsel %vm607, %v3091, %v3093
        %v3099 = vsel %vm607, %v3093, %v3095
        %v3100 = vsel %vm607, %v3095, %v3097
        %v3104 = vadd.f32 %v2728, %v3098
        %v3105 = vadd.f32 %v2729, %v3099
        %v3106 = vadd.f32 %v2730, %v3100
        %s3107 = sld [smem:[#allocation2 + $0x60]]
        %v3108 = vstv %s3107
        %v3109 = vmul.f32 %v2347, %v3108
        %v3110 = vmul.f32 %v2348, %v3108
        %v3111 = vmul.f32 %v2349, %v3108
        %v3112 = vmul.f32 %v2350, %v3108
        %v3113 = vmul.f32 %v2351, %v3108
        %v3114 = vmul.f32 %v2352, %v3108
        %v3115 = vmul.f32 %v2353, %v3108
        %v3116 = vmul.f32 %v2354, %v3108
        %v3125 = vrot.slane %v3109, 1
        %v3126 = vrot.slane %v3113, 1
        %v3127 = vsel %vm2128, %v3125, %v3126
        %v3128 = vrot.slane %v3110, 1
        %v3129 = vrot.slane %v3114, 1
        %v3130 = vsel %vm2128, %v3128, %v3129
        %v3131 = vrot.slane %v3111, 1
        %v3132 = vrot.slane %v3115, 1
        %v3133 = vsel %vm2128, %v3131, %v3132
        %v3134 = vrot.slane %v3112, 1
        %v3135 = vrot.slane %v3116, 1
        %v3136 = vsel %vm2128, %v3134, %v3135
        %3137 = vrot.lane.b32.xlu0 %v3127, 110
        %v3138 = vpop.permute.xlu0 %3137
        %3139 = vrot.lane.b32.xlu0 %v3130, 110
        %v3140 = vpop.permute.xlu0 %3139
        %3141 = vrot.lane.b32.xlu0 %v3133, 110
        %v3142 = vpop.permute.xlu0 %3141
        %3143 = vrot.lane.b32.xlu0 %v3136, 110
        %v3144 = vpop.permute.xlu0 %3143
        %v3145 = vsel %vm824, %v3138, %v3140
        %v3146 = vsel %vm824, %v3140, %v3142
        %v3147 = vsel %vm824, %v3142, %v3144
        %v3151 = vadd.f32 %v2775, %v3145
        %v3152 = vadd.f32 %v2776, %v3146
        %v3153 = vadd.f32 %v2777, %v3147
        %s3154 = sld [smem:[#allocation2 + $0x61]]
        %v3155 = vstv %s3154
        %v3156 = vmul.f32 %v2347, %v3155
        %v3157 = vmul.f32 %v2348, %v3155
        %v3158 = vmul.f32 %v2349, %v3155
        %v3159 = vmul.f32 %v2350, %v3155
        %v3160 = vmul.f32 %v2351, %v3155
        %v3161 = vmul.f32 %v2352, %v3155
        %v3162 = vmul.f32 %v2353, %v3155
        %v3163 = vmul.f32 %v2354, %v3155
        %v3172 = vrot.slane %v3156, 1
        %v3173 = vrot.slane %v3160, 1
        %v3174 = vsel %vm2128, %v3172, %v3173
        %v3175 = vrot.slane %v3157, 1
        %v3176 = vrot.slane %v3161, 1
        %v3177 = vsel %vm2128, %v3175, %v3176
        %v3178 = vrot.slane %v3158, 1
        %v3179 = vrot.slane %v3162, 1
        %v3180 = vsel %vm2128, %v3178, %v3179
        %v3181 = vrot.slane %v3159, 1
        %v3182 = vrot.slane %v3163, 1
        %v3183 = vsel %vm2128, %v3181, %v3182
        %3184 = vrot.lane.b32.xlu0 %v3174, 110
        %v3185 = vpop.permute.xlu0 %3184
        %3186 = vrot.lane.b32.xlu0 %v3177, 110
        %v3187 = vpop.permute.xlu0 %3186
        %3188 = vrot.lane.b32.xlu0 %v3180, 110
        %v3189 = vpop.permute.xlu0 %3188
        %3190 = vrot.lane.b32.xlu0 %v3183, 110
        %v3191 = vpop.permute.xlu0 %3190
        %v3192 = vsel %vm824, %v3185, %v3187
        %v3193 = vsel %vm824, %v3187, %v3189
        %v3194 = vsel %vm824, %v3189, %v3191
        %v3198 = vadd.f32 %v2822, %v3192
        %v3199 = vadd.f32 %v2823, %v3193
        %v3200 = vadd.f32 %v2824, %v3194
        %s3201 = sld [smem:[#allocation2 + $0x62]]
        %v3202 = vstv %s3201
        %v3203 = vmul.f32 %v2347, %v3202
        %v3204 = vmul.f32 %v2348, %v3202
        %v3205 = vmul.f32 %v2349, %v3202
        %v3206 = vmul.f32 %v2350, %v3202
        %v3207 = vmul.f32 %v2351, %v3202
        %v3208 = vmul.f32 %v2352, %v3202
        %v3209 = vmul.f32 %v2353, %v3202
        %v3210 = vmul.f32 %v2354, %v3202
        %v3219 = vrot.slane %v3203, 1
        %v3220 = vrot.slane %v3207, 1
        %v3221 = vsel %vm2128, %v3219, %v3220
        %v3222 = vrot.slane %v3204, 1
        %v3223 = vrot.slane %v3208, 1
        %v3224 = vsel %vm2128, %v3222, %v3223
        %v3225 = vrot.slane %v3205, 1
        %v3226 = vrot.slane %v3209, 1
        %v3227 = vsel %vm2128, %v3225, %v3226
        %v3228 = vrot.slane %v3206, 1
        %v3229 = vrot.slane %v3210, 1
        %v3230 = vsel %vm2128, %v3228, %v3229
        %3231 = vrot.lane.b32.xlu0 %v3221, 110
        %v3232 = vpop.permute.xlu0 %3231
        %3233 = vrot.lane.b32.xlu0 %v3224, 110
        %v3234 = vpop.permute.xlu0 %3233
        %3235 = vrot.lane.b32.xlu0 %v3227, 110
        %v3236 = vpop.permute.xlu0 %3235
        %3237 = vrot.lane.b32.xlu0 %v3230, 110
        %v3238 = vpop.permute.xlu0 %3237
        %v3239 = vsel %vm824, %v3232, %v3234
        %v3240 = vsel %vm824, %v3234, %v3236
        %v3241 = vsel %vm824, %v3236, %v3238
        %v3245 = vadd.f32 %v2869, %v3239
        %v3246 = vadd.f32 %v2870, %v3240
        %v3247 = vadd.f32 %v2871, %v3241
        %s3248 = sld [smem:[#allocation2 + $0x63]]
        %v3249 = vstv %s3248
        %v3250 = vmul.f32 %v2347, %v3249
        %v3251 = vmul.f32 %v2348, %v3249
        %v3252 = vmul.f32 %v2349, %v3249
        %v3253 = vmul.f32 %v2350, %v3249
        %v3254 = vmul.f32 %v2351, %v3249
        %v3255 = vmul.f32 %v2352, %v3249
        %v3256 = vmul.f32 %v2353, %v3249
        %v3257 = vmul.f32 %v2354, %v3249
        %v3266 = vrot.slane %v3250, 1
        %v3267 = vrot.slane %v3254, 1
        %v3268 = vsel %vm2128, %v3266, %v3267
        %v3269 = vrot.slane %v3251, 1
        %v3270 = vrot.slane %v3255, 1
        %v3271 = vsel %vm2128, %v3269, %v3270
        %v3272 = vrot.slane %v3252, 1
        %v3273 = vrot.slane %v3256, 1
        %v3274 = vsel %vm2128, %v3272, %v3273
        %v3275 = vrot.slane %v3253, 1
        %v3276 = vrot.slane %v3257, 1
        %v3277 = vsel %vm2128, %v3275, %v3276
        %3278 = vrot.lane.b32.xlu0 %v3268, 110
        %v3279 = vpop.permute.xlu0 %3278
        %3280 = vrot.lane.b32.xlu0 %v3271, 110
        %v3281 = vpop.permute.xlu0 %3280
        %3282 = vrot.lane.b32.xlu0 %v3274, 110
        %v3283 = vpop.permute.xlu0 %3282
        %3284 = vrot.lane.b32.xlu0 %v3277, 110
        %v3285 = vpop.permute.xlu0 %3284
        %v3286 = vsel %vm824, %v3279, %v3281
        %v3287 = vsel %vm824, %v3281, %v3283
        %v3288 = vsel %vm824, %v3283, %v3285
        %v3292 = vadd.f32 %v2916, %v3286
        %v3293 = vadd.f32 %v2917, %v3287
        %v3294 = vadd.f32 %v2918, %v3288
        %s3295 = sld [smem:[#allocation2 + $0x64]]
        %v3296 = vstv %s3295
        %v3297 = vmul.f32 %v2347, %v3296
        %v3298 = vmul.f32 %v2348, %v3296
        %v3299 = vmul.f32 %v2349, %v3296
        %v3300 = vmul.f32 %v2350, %v3296
        %v3301 = vmul.f32 %v2351, %v3296
        %v3302 = vmul.f32 %v2352, %v3296
        %v3303 = vmul.f32 %v2353, %v3296
        %v3304 = vmul.f32 %v2354, %v3296
        %v3313 = vrot.slane %v3297, 1
        %v3314 = vrot.slane %v3301, 1
        %v3315 = vsel %vm2128, %v3313, %v3314
        %v3316 = vrot.slane %v3298, 1
        %v3317 = vrot.slane %v3302, 1
        %v3318 = vsel %vm2128, %v3316, %v3317
        %v3319 = vrot.slane %v3299, 1
        %v3320 = vrot.slane %v3303, 1
        %v3321 = vsel %vm2128, %v3319, %v3320
        %v3322 = vrot.slane %v3300, 1
        %v3323 = vrot.slane %v3304, 1
        %v3324 = vsel %vm2128, %v3322, %v3323
        %3325 = vrot.lane.b32.xlu0 %v3315, 110
        %v3326 = vpop.permute.xlu0 %3325
        %3327 = vrot.lane.b32.xlu0 %v3318, 110
        %v3328 = vpop.permute.xlu0 %3327
        %3329 = vrot.lane.b32.xlu0 %v3321, 110
        %v3330 = vpop.permute.xlu0 %3329
        %3331 = vrot.lane.b32.xlu0 %v3324, 110
        %v3332 = vpop.permute.xlu0 %3331
        %v3333 = vsel %vm824, %v3326, %v3328
        %v3334 = vsel %vm824, %v3328, %v3330
        %v3335 = vsel %vm824, %v3330, %v3332
        %v3339 = vadd.f32 %v2963, %v3333
        %v3340 = vadd.f32 %v2964, %v3334
        %v3341 = vadd.f32 %v2965, %v3335
        %s3342 = sld [smem:[#allocation2 + $0x65]]
        %v3343 = vstv %s3342
        %v3344 = vmul.f32 %v2347, %v3343
        %v3345 = vmul.f32 %v2348, %v3343
        %v3346 = vmul.f32 %v2349, %v3343
        %v3347 = vmul.f32 %v2350, %v3343
        %v3348 = vmul.f32 %v2351, %v3343
        %v3349 = vmul.f32 %v2352, %v3343
        %v3350 = vmul.f32 %v2353, %v3343
        %v3351 = vmul.f32 %v2354, %v3343
        %v3360 = vrot.slane %v3344, 1
        %v3361 = vrot.slane %v3348, 1
        %v3362 = vsel %vm2128, %v3360, %v3361
        %v3363 = vrot.slane %v3345, 1
        %v3364 = vrot.slane %v3349, 1
        %v3365 = vsel %vm2128, %v3363, %v3364
        %v3366 = vrot.slane %v3346, 1
        %v3367 = vrot.slane %v3350, 1
        %v3368 = vsel %vm2128, %v3366, %v3367
        %v3369 = vrot.slane %v3347, 1
        %v3370 = vrot.slane %v3351, 1
        %v3371 = vsel %vm2128, %v3369, %v3370
        %3372 = vrot.lane.b32.xlu0 %v3362, 110
        %v3373 = vpop.permute.xlu0 %3372
        %3374 = vrot.lane.b32.xlu0 %v3365, 110
        %v3375 = vpop.permute.xlu0 %3374
        %3376 = vrot.lane.b32.xlu0 %v3368, 110
        %v3377 = vpop.permute.xlu0 %3376
        %3378 = vrot.lane.b32.xlu0 %v3371, 110
        %v3379 = vpop.permute.xlu0 %3378
        %v3380 = vsel %vm824, %v3373, %v3375
        %v3381 = vsel %vm824, %v3375, %v3377
        %v3382 = vsel %vm824, %v3377, %v3379
        %v3386 = vadd.f32 %v3010, %v3380
        %v3387 = vadd.f32 %v3011, %v3381
        %v3388 = vadd.f32 %v3012, %v3382
        %s3389 = sld [smem:[#allocation2 + $0x66]]
        %v3390 = vstv %s3389
        %v3391 = vmul.f32 %v2347, %v3390
        %v3392 = vmul.f32 %v2348, %v3390
        %v3393 = vmul.f32 %v2349, %v3390
        %v3394 = vmul.f32 %v2350, %v3390
        %v3395 = vmul.f32 %v2351, %v3390
        %v3396 = vmul.f32 %v2352, %v3390
        %v3397 = vmul.f32 %v2353, %v3390
        %v3398 = vmul.f32 %v2354, %v3390
        %v3407 = vrot.slane %v3391, 1
        %v3408 = vrot.slane %v3395, 1
        %v3409 = vsel %vm2128, %v3407, %v3408
        %v3410 = vrot.slane %v3392, 1
        %v3411 = vrot.slane %v3396, 1
        %v3412 = vsel %vm2128, %v3410, %v3411
        %v3413 = vrot.slane %v3393, 1
        %v3414 = vrot.slane %v3397, 1
        %v3415 = vsel %vm2128, %v3413, %v3414
        %v3416 = vrot.slane %v3394, 1
        %v3417 = vrot.slane %v3398, 1
        %v3418 = vsel %vm2128, %v3416, %v3417
        %3419 = vrot.lane.b32.xlu0 %v3409, 110
        %v3420 = vpop.permute.xlu0 %3419
        %3421 = vrot.lane.b32.xlu0 %v3412, 110
        %v3422 = vpop.permute.xlu0 %3421
        %3423 = vrot.lane.b32.xlu0 %v3415, 110
        %v3424 = vpop.permute.xlu0 %3423
        %3425 = vrot.lane.b32.xlu0 %v3418, 110
        %v3426 = vpop.permute.xlu0 %3425
        %v3427 = vsel %vm824, %v3420, %v3422
        %v3428 = vsel %vm824, %v3422, %v3424
        %v3429 = vsel %vm824, %v3424, %v3426
        %v3433 = vadd.f32 %v3057, %v3427
        %v3434 = vadd.f32 %v3058, %v3428
        %v3435 = vadd.f32 %v3059, %v3429
        %s3436 = sld [smem:[#allocation2 + $0x67]]
        %v3437 = vstv %s3436
        %v3438 = vmul.f32 %v2347, %v3437
        %v3439 = vmul.f32 %v2348, %v3437
        %v3440 = vmul.f32 %v2349, %v3437
        %v3441 = vmul.f32 %v2350, %v3437
        %v3442 = vmul.f32 %v2351, %v3437
        %v3443 = vmul.f32 %v2352, %v3437
        %v3444 = vmul.f32 %v2353, %v3437
        %v3445 = vmul.f32 %v2354, %v3437
        %v3454 = vrot.slane %v3438, 1
        %v3455 = vrot.slane %v3442, 1
        %v3456 = vsel %vm2128, %v3454, %v3455
        %v3457 = vrot.slane %v3439, 1
        %v3458 = vrot.slane %v3443, 1
        %v3459 = vsel %vm2128, %v3457, %v3458
        %v3460 = vrot.slane %v3440, 1
        %v3461 = vrot.slane %v3444, 1
        %v3462 = vsel %vm2128, %v3460, %v3461
        %v3463 = vrot.slane %v3441, 1
        %v3464 = vrot.slane %v3445, 1
        %v3465 = vsel %vm2128, %v3463, %v3464
        %3466 = vrot.lane.b32.xlu0 %v3456, 110
        %v3467 = vpop.permute.xlu0 %3466
        %3468 = vrot.lane.b32.xlu0 %v3459, 110
        %v3469 = vpop.permute.xlu0 %3468
        %3470 = vrot.lane.b32.xlu0 %v3462, 110
        %v3471 = vpop.permute.xlu0 %3470
        %3472 = vrot.lane.b32.xlu0 %v3465, 110
        %v3473 = vpop.permute.xlu0 %3472
        %v3474 = vsel %vm824, %v3467, %v3469
        %v3475 = vsel %vm824, %v3469, %v3471
        %v3476 = vsel %vm824, %v3471, %v3473
        %v3480 = vadd.f32 %v3104, %v3474
        %v3481 = vadd.f32 %v3105, %v3475
        %v3482 = vadd.f32 %v3106, %v3476
        %s3483 = sld [smem:[#allocation2 + $0x68]]
        %v3484 = vstv %s3483
        %v3485 = vmul.f32 %v2347, %v3484
        %v3486 = vmul.f32 %v2348, %v3484
        %v3487 = vmul.f32 %v2349, %v3484
        %v3488 = vmul.f32 %v2350, %v3484
        %v3489 = vmul.f32 %v2351, %v3484
        %v3490 = vmul.f32 %v2352, %v3484
        %v3491 = vmul.f32 %v2353, %v3484
        %v3492 = vmul.f32 %v2354, %v3484
        %v3501 = vrot.slane %v3485, 1
        %v3502 = vrot.slane %v3489, 1
        %v3503 = vsel %vm2128, %v3501, %v3502
        %v3504 = vrot.slane %v3486, 1
        %v3505 = vrot.slane %v3490, 1
        %v3506 = vsel %vm2128, %v3504, %v3505
        %v3507 = vrot.slane %v3487, 1
        %v3508 = vrot.slane %v3491, 1
        %v3509 = vsel %vm2128, %v3507, %v3508
        %v3510 = vrot.slane %v3488, 1
        %v3511 = vrot.slane %v3492, 1
        %v3512 = vsel %vm2128, %v3510, %v3511
        %3513 = vrot.lane.b32.xlu0 %v3503, 109
        %v3514 = vpop.permute.xlu0 %3513
        %3515 = vrot.lane.b32.xlu0 %v3506, 109
        %v3516 = vpop.permute.xlu0 %3515
        %3517 = vrot.lane.b32.xlu0 %v3509, 109
        %v3518 = vpop.permute.xlu0 %3517
        %3519 = vrot.lane.b32.xlu0 %v3512, 109
        %v3520 = vpop.permute.xlu0 %3519
        %v3521 = vsel %vm1041, %v3514, %v3516
        %v3522 = vsel %vm1041, %v3516, %v3518
        %v3523 = vsel %vm1041, %v3518, %v3520
        %v3527 = vadd.f32 %v3151, %v3521
        %v3528 = vadd.f32 %v3152, %v3522
        %v3529 = vadd.f32 %v3153, %v3523
        %s3530 = sld [smem:[#allocation2 + $0x69]]
        %v3531 = vstv %s3530
        %v3532 = vmul.f32 %v2347, %v3531
        %v3533 = vmul.f32 %v2348, %v3531
        %v3534 = vmul.f32 %v2349, %v3531
        %v3535 = vmul.f32 %v2350, %v3531
        %v3536 = vmul.f32 %v2351, %v3531
        %v3537 = vmul.f32 %v2352, %v3531
        %v3538 = vmul.f32 %v2353, %v3531
        %v3539 = vmul.f32 %v2354, %v3531
        %v3548 = vrot.slane %v3532, 1
        %v3549 = vrot.slane %v3536, 1
        %v3550 = vsel %vm2128, %v3548, %v3549
        %v3551 = vrot.slane %v3533, 1
        %v3552 = vrot.slane %v3537, 1
        %v3553 = vsel %vm2128, %v3551, %v3552
        %v3554 = vrot.slane %v3534, 1
        %v3555 = vrot.slane %v3538, 1
        %v3556 = vsel %vm2128, %v3554, %v3555
        %v3557 = vrot.slane %v3535, 1
        %v3558 = vrot.slane %v3539, 1
        %v3559 = vsel %vm2128, %v3557, %v3558
        %3560 = vrot.lane.b32.xlu0 %v3550, 109
        %v3561 = vpop.permute.xlu0 %3560
        %3562 = vrot.lane.b32.xlu0 %v3553, 109
        %v3563 = vpop.permute.xlu0 %3562
        %3564 = vrot.lane.b32.xlu0 %v3556, 109
        %v3565 = vpop.permute.xlu0 %3564
        %3566 = vrot.lane.b32.xlu0 %v3559, 109
        %v3567 = vpop.permute.xlu0 %3566
        %v3568 = vsel %vm1041, %v3561, %v3563
        %v3569 = vsel %vm1041, %v3563, %v3565
        %v3570 = vsel %vm1041, %v3565, %v3567
        %v3574 = vadd.f32 %v3198, %v3568
        %v3575 = vadd.f32 %v3199, %v3569
        %v3576 = vadd.f32 %v3200, %v3570
        %s3577 = sld [smem:[#allocation2 + $0x6a]]
        %v3578 = vstv %s3577
        %v3579 = vmul.f32 %v2347, %v3578
        %v3580 = vmul.f32 %v2348, %v3578
        %v3581 = vmul.f32 %v2349, %v3578
        %v3582 = vmul.f32 %v2350, %v3578
        %v3583 = vmul.f32 %v2351, %v3578
        %v3584 = vmul.f32 %v2352, %v3578
        %v3585 = vmul.f32 %v2353, %v3578
        %v3586 = vmul.f32 %v2354, %v3578
        %v3595 = vrot.slane %v3579, 1
        %v3596 = vrot.slane %v3583, 1
        %v3597 = vsel %vm2128, %v3595, %v3596
        %v3598 = vrot.slane %v3580, 1
        %v3599 = vrot.slane %v3584, 1
        %v3600 = vsel %vm2128, %v3598, %v3599
        %v3601 = vrot.slane %v3581, 1
        %v3602 = vrot.slane %v3585, 1
        %v3603 = vsel %vm2128, %v3601, %v3602
        %v3604 = vrot.slane %v3582, 1
        %v3605 = vrot.slane %v3586, 1
        %v3606 = vsel %vm2128, %v3604, %v3605
        %3607 = vrot.lane.b32.xlu0 %v3597, 109
        %v3608 = vpop.permute.xlu0 %3607
        %3609 = vrot.lane.b32.xlu0 %v3600, 109
        %v3610 = vpop.permute.xlu0 %3609
        %3611 = vrot.lane.b32.xlu0 %v3603, 109
        %v3612 = vpop.permute.xlu0 %3611
        %3613 = vrot.lane.b32.xlu0 %v3606, 109
        %v3614 = vpop.permute.xlu0 %3613
        %v3615 = vsel %vm1041, %v3608, %v3610
        %v3616 = vsel %vm1041, %v3610, %v3612
        %v3617 = vsel %vm1041, %v3612, %v3614
        %v3621 = vadd.f32 %v3245, %v3615
        %v3622 = vadd.f32 %v3246, %v3616
        %v3623 = vadd.f32 %v3247, %v3617
        %s3624 = sld [smem:[#allocation2 + $0x6b]]
        %v3625 = vstv %s3624
        %v3626 = vmul.f32 %v2347, %v3625
        %v3627 = vmul.f32 %v2348, %v3625
        %v3628 = vmul.f32 %v2349, %v3625
        %v3629 = vmul.f32 %v2350, %v3625
        %v3630 = vmul.f32 %v2351, %v3625
        %v3631 = vmul.f32 %v2352, %v3625
        %v3632 = vmul.f32 %v2353, %v3625
        %v3633 = vmul.f32 %v2354, %v3625
        %v3642 = vrot.slane %v3626, 1
        %v3643 = vrot.slane %v3630, 1
        %v3644 = vsel %vm2128, %v3642, %v3643
        %v3645 = vrot.slane %v3627, 1
        %v3646 = vrot.slane %v3631, 1
        %v3647 = vsel %vm2128, %v3645, %v3646
        %v3648 = vrot.slane %v3628, 1
        %v3649 = vrot.slane %v3632, 1
        %v3650 = vsel %vm2128, %v3648, %v3649
        %v3651 = vrot.slane %v3629, 1
        %v3652 = vrot.slane %v3633, 1
        %v3653 = vsel %vm2128, %v3651, %v3652
        %3654 = vrot.lane.b32.xlu0 %v3644, 109
        %v3655 = vpop.permute.xlu0 %3654
        %3656 = vrot.lane.b32.xlu0 %v3647, 109
        %v3657 = vpop.permute.xlu0 %3656
        %3658 = vrot.lane.b32.xlu0 %v3650, 109
        %v3659 = vpop.permute.xlu0 %3658
        %3660 = vrot.lane.b32.xlu0 %v3653, 109
        %v3661 = vpop.permute.xlu0 %3660
        %v3662 = vsel %vm1041, %v3655, %v3657
        %v3663 = vsel %vm1041, %v3657, %v3659
        %v3664 = vsel %vm1041, %v3659, %v3661
        %v3668 = vadd.f32 %v3292, %v3662
        %v3669 = vadd.f32 %v3293, %v3663
        %v3670 = vadd.f32 %v3294, %v3664
        %s3671 = sld [smem:[#allocation2 + $0x6c]]
        %v3672 = vstv %s3671
        %v3673 = vmul.f32 %v2347, %v3672
        %v3674 = vmul.f32 %v2348, %v3672
        %v3675 = vmul.f32 %v2349, %v3672
        %v3676 = vmul.f32 %v2350, %v3672
        %v3677 = vmul.f32 %v2351, %v3672
        %v3678 = vmul.f32 %v2352, %v3672
        %v3679 = vmul.f32 %v2353, %v3672
        %v3680 = vmul.f32 %v2354, %v3672
        %v3689 = vrot.slane %v3673, 1
        %v3690 = vrot.slane %v3677, 1
        %v3691 = vsel %vm2128, %v3689, %v3690
        %v3692 = vrot.slane %v3674, 1
        %v3693 = vrot.slane %v3678, 1
        %v3694 = vsel %vm2128, %v3692, %v3693
        %v3695 = vrot.slane %v3675, 1
        %v3696 = vrot.slane %v3679, 1
        %v3697 = vsel %vm2128, %v3695, %v3696
        %v3698 = vrot.slane %v3676, 1
        %v3699 = vrot.slane %v3680, 1
        %v3700 = vsel %vm2128, %v3698, %v3699
        %3701 = vrot.lane.b32.xlu0 %v3691, 109
        %v3702 = vpop.permute.xlu0 %3701
        %3703 = vrot.lane.b32.xlu0 %v3694, 109
        %v3704 = vpop.permute.xlu0 %3703
        %3705 = vrot.lane.b32.xlu0 %v3697, 109
        %v3706 = vpop.permute.xlu0 %3705
        %3707 = vrot.lane.b32.xlu0 %v3700, 109
        %v3708 = vpop.permute.xlu0 %3707
        %v3709 = vsel %vm1041, %v3702, %v3704
        %v3710 = vsel %vm1041, %v3704, %v3706
        %v3711 = vsel %vm1041, %v3706, %v3708
        %v3715 = vadd.f32 %v3339, %v3709
        %v3716 = vadd.f32 %v3340, %v3710
        %v3717 = vadd.f32 %v3341, %v3711
        %s3718 = sld [smem:[#allocation2 + $0x6d]]
        %v3719 = vstv %s3718
        %v3720 = vmul.f32 %v2347, %v3719
        %v3721 = vmul.f32 %v2348, %v3719
        %v3722 = vmul.f32 %v2349, %v3719
        %v3723 = vmul.f32 %v2350, %v3719
        %v3724 = vmul.f32 %v2351, %v3719
        %v3725 = vmul.f32 %v2352, %v3719
        %v3726 = vmul.f32 %v2353, %v3719
        %v3727 = vmul.f32 %v2354, %v3719
        %v3736 = vrot.slane %v3720, 1
        %v3737 = vrot.slane %v3724, 1
        %v3738 = vsel %vm2128, %v3736, %v3737
        %v3739 = vrot.slane %v3721, 1
        %v3740 = vrot.slane %v3725, 1
        %v3741 = vsel %vm2128, %v3739, %v3740
        %v3742 = vrot.slane %v3722, 1
        %v3743 = vrot.slane %v3726, 1
        %v3744 = vsel %vm2128, %v3742, %v3743
        %v3745 = vrot.slane %v3723, 1
        %v3746 = vrot.slane %v3727, 1
        %v3747 = vsel %vm2128, %v3745, %v3746
        %3748 = vrot.lane.b32.xlu0 %v3738, 109
        %v3749 = vpop.permute.xlu0 %3748
        %3750 = vrot.lane.b32.xlu0 %v3741, 109
        %v3751 = vpop.permute.xlu0 %3750
        %3752 = vrot.lane.b32.xlu0 %v3744, 109
        %v3753 = vpop.permute.xlu0 %3752
        %3754 = vrot.lane.b32.xlu0 %v3747, 109
        %v3755 = vpop.permute.xlu0 %3754
        %v3756 = vsel %vm1041, %v3749, %v3751
        %v3757 = vsel %vm1041, %v3751, %v3753
        %v3758 = vsel %vm1041, %v3753, %v3755
        %v3762 = vadd.f32 %v3386, %v3756
        %v3763 = vadd.f32 %v3387, %v3757
        %v3764 = vadd.f32 %v3388, %v3758
        %s3765 = sld [smem:[#allocation2 + $0x6e]]
        %v3766 = vstv %s3765
        %v3767 = vmul.f32 %v2347, %v3766
        %v3768 = vmul.f32 %v2348, %v3766
        %v3769 = vmul.f32 %v2349, %v3766
        %v3770 = vmul.f32 %v2350, %v3766
        %v3771 = vmul.f32 %v2351, %v3766
        %v3772 = vmul.f32 %v2352, %v3766
        %v3773 = vmul.f32 %v2353, %v3766
        %v3774 = vmul.f32 %v2354, %v3766
        %v3783 = vrot.slane %v3767, 1
        %v3784 = vrot.slane %v3771, 1
        %v3785 = vsel %vm2128, %v3783, %v3784
        %v3786 = vrot.slane %v3768, 1
        %v3787 = vrot.slane %v3772, 1
        %v3788 = vsel %vm2128, %v3786, %v3787
        %v3789 = vrot.slane %v3769, 1
        %v3790 = vrot.slane %v3773, 1
        %v3791 = vsel %vm2128, %v3789, %v3790
        %v3792 = vrot.slane %v3770, 1
        %v3793 = vrot.slane %v3774, 1
        %v3794 = vsel %vm2128, %v3792, %v3793
        %3795 = vrot.lane.b32.xlu0 %v3785, 109
        %v3796 = vpop.permute.xlu0 %3795
        %3797 = vrot.lane.b32.xlu0 %v3788, 109
        %v3798 = vpop.permute.xlu0 %3797
        %3799 = vrot.lane.b32.xlu0 %v3791, 109
        %v3800 = vpop.permute.xlu0 %3799
        %3801 = vrot.lane.b32.xlu0 %v3794, 109
        %v3802 = vpop.permute.xlu0 %3801
        %v3803 = vsel %vm1041, %v3796, %v3798
        %v3804 = vsel %vm1041, %v3798, %v3800
        %v3805 = vsel %vm1041, %v3800, %v3802
        %v3809 = vadd.f32 %v3433, %v3803
        %v3810 = vadd.f32 %v3434, %v3804
        %v3811 = vadd.f32 %v3435, %v3805
        %s3812 = sld [smem:[#allocation2 + $0x6f]]
        %v3813 = vstv %s3812
        %v3814 = vmul.f32 %v2347, %v3813
        %v3815 = vmul.f32 %v2348, %v3813
        %v3816 = vmul.f32 %v2349, %v3813
        %v3817 = vmul.f32 %v2350, %v3813
        %v3818 = vmul.f32 %v2351, %v3813
        %v3819 = vmul.f32 %v2352, %v3813
        %v3820 = vmul.f32 %v2353, %v3813
        %v3821 = vmul.f32 %v2354, %v3813
        %v3830 = vrot.slane %v3814, 1
        %v3831 = vrot.slane %v3818, 1
        %v3832 = vsel %vm2128, %v3830, %v3831
        %v3833 = vrot.slane %v3815, 1
        %v3834 = vrot.slane %v3819, 1
        %v3835 = vsel %vm2128, %v3833, %v3834
        %v3836 = vrot.slane %v3816, 1
        %v3837 = vrot.slane %v3820, 1
        %v3838 = vsel %vm2128, %v3836, %v3837
        %v3839 = vrot.slane %v3817, 1
        %v3840 = vrot.slane %v3821, 1
        %v3841 = vsel %vm2128, %v3839, %v3840
        %3842 = vrot.lane.b32.xlu0 %v3832, 109
        %v3843 = vpop.permute.xlu0 %3842
        %3844 = vrot.lane.b32.xlu0 %v3835, 109
        %v3845 = vpop.permute.xlu0 %3844
        %3846 = vrot.lane.b32.xlu0 %v3838, 109
        %v3847 = vpop.permute.xlu0 %3846
        %3848 = vrot.lane.b32.xlu0 %v3841, 109
        %v3849 = vpop.permute.xlu0 %3848
        %v3850 = vsel %vm1041, %v3843, %v3845
        %v3851 = vsel %vm1041, %v3845, %v3847
        %v3852 = vsel %vm1041, %v3847, %v3849
        %v3856 = vadd.f32 %v3480, %v3850
        %v3857 = vadd.f32 %v3481, %v3851
        %v3858 = vadd.f32 %v3482, %v3852
        %s3859 = sld [smem:[#allocation2 + $0x70]]
        %v3860 = vstv %s3859
        %v3861 = vmul.f32 %v2347, %v3860
        %v3862 = vmul.f32 %v2348, %v3860
        %v3863 = vmul.f32 %v2349, %v3860
        %v3864 = vmul.f32 %v2350, %v3860
        %v3865 = vmul.f32 %v2351, %v3860
        %v3866 = vmul.f32 %v2352, %v3860
        %v3867 = vmul.f32 %v2353, %v3860
        %v3868 = vmul.f32 %v2354, %v3860
        %v3877 = vrot.slane %v3861, 1
        %v3878 = vrot.slane %v3865, 1
        %v3879 = vsel %vm2128, %v3877, %v3878
        %v3880 = vrot.slane %v3862, 1
        %v3881 = vrot.slane %v3866, 1
        %v3882 = vsel %vm2128, %v3880, %v3881
        %v3883 = vrot.slane %v3863, 1
        %v3884 = vrot.slane %v3867, 1
        %v3885 = vsel %vm2128, %v3883, %v3884
        %v3886 = vrot.slane %v3864, 1
        %v3887 = vrot.slane %v3868, 1
        %v3888 = vsel %vm2128, %v3886, %v3887
        %3889 = vrot.lane.b32.xlu0 %v3879, 108
        %v3890 = vpop.permute.xlu0 %3889
        %3891 = vrot.lane.b32.xlu0 %v3882, 108
        %v3892 = vpop.permute.xlu0 %3891
        %3893 = vrot.lane.b32.xlu0 %v3885, 108
        %v3894 = vpop.permute.xlu0 %3893
        %3895 = vrot.lane.b32.xlu0 %v3888, 108
        %v3896 = vpop.permute.xlu0 %3895
        %v3897 = vsel %vm1258, %v3890, %v3892
        %v3898 = vsel %vm1258, %v3892, %v3894
        %v3899 = vsel %vm1258, %v3894, %v3896
        %v3903 = vadd.f32 %v3527, %v3897
        %v3904 = vadd.f32 %v3528, %v3898
        %v3905 = vadd.f32 %v3529, %v3899
        %s3906 = sld [smem:[#allocation2 + $0x71]]
        %v3907 = vstv %s3906
        %v3908 = vmul.f32 %v2347, %v3907
        %v3909 = vmul.f32 %v2348, %v3907
        %v3910 = vmul.f32 %v2349, %v3907
        %v3911 = vmul.f32 %v2350, %v3907
        %v3912 = vmul.f32 %v2351, %v3907
        %v3913 = vmul.f32 %v2352, %v3907
        %v3914 = vmul.f32 %v2353, %v3907
        %v3915 = vmul.f32 %v2354, %v3907
        %v3924 = vrot.slane %v3908, 1
        %v3925 = vrot.slane %v3912, 1
        %v3926 = vsel %vm2128, %v3924, %v3925
        %v3927 = vrot.slane %v3909, 1
        %v3928 = vrot.slane %v3913, 1
        %v3929 = vsel %vm2128, %v3927, %v3928
        %v3930 = vrot.slane %v3910, 1
        %v3931 = vrot.slane %v3914, 1
        %v3932 = vsel %vm2128, %v3930, %v3931
        %v3933 = vrot.slane %v3911, 1
        %v3934 = vrot.slane %v3915, 1
        %v3935 = vsel %vm2128, %v3933, %v3934
        %3936 = vrot.lane.b32.xlu0 %v3926, 108
        %v3937 = vpop.permute.xlu0 %3936
        %3938 = vrot.lane.b32.xlu0 %v3929, 108
        %v3939 = vpop.permute.xlu0 %3938
        %3940 = vrot.lane.b32.xlu0 %v3932, 108
        %v3941 = vpop.permute.xlu0 %3940
        %3942 = vrot.lane.b32.xlu0 %v3935, 108
        %v3943 = vpop.permute.xlu0 %3942
        %v3944 = vsel %vm1258, %v3937, %v3939
        %v3945 = vsel %vm1258, %v3939, %v3941
        %v3946 = vsel %vm1258, %v3941, %v3943
        %v3950 = vadd.f32 %v3574, %v3944
        %v3951 = vadd.f32 %v3575, %v3945
        %v3952 = vadd.f32 %v3576, %v3946
        %s3953 = sld [smem:[#allocation2 + $0x72]]
        %v3954 = vstv %s3953
        %v3955 = vmul.f32 %v2347, %v3954
        %v3956 = vmul.f32 %v2348, %v3954
        %v3957 = vmul.f32 %v2349, %v3954
        %v3958 = vmul.f32 %v2350, %v3954
        %v3959 = vmul.f32 %v2351, %v3954
        %v3960 = vmul.f32 %v2352, %v3954
        %v3961 = vmul.f32 %v2353, %v3954
        %v3962 = vmul.f32 %v2354, %v3954
        %v3971 = vrot.slane %v3955, 1
        %v3972 = vrot.slane %v3959, 1
        %v3973 = vsel %vm2128, %v3971, %v3972
        %v3974 = vrot.slane %v3956, 1
        %v3975 = vrot.slane %v3960, 1
        %v3976 = vsel %vm2128, %v3974, %v3975
        %v3977 = vrot.slane %v3957, 1
        %v3978 = vrot.slane %v3961, 1
        %v3979 = vsel %vm2128, %v3977, %v3978
        %v3980 = vrot.slane %v3958, 1
        %v3981 = vrot.slane %v3962, 1
        %v3982 = vsel %vm2128, %v3980, %v3981
        %3983 = vrot.lane.b32.xlu0 %v3973, 108
        %v3984 = vpop.permute.xlu0 %3983
        %3985 = vrot.lane.b32.xlu0 %v3976, 108
        %v3986 = vpop.permute.xlu0 %3985
        %3987 = vrot.lane.b32.xlu0 %v3979, 108
        %v3988 = vpop.permute.xlu0 %3987
        %3989 = vrot.lane.b32.xlu0 %v3982, 108
        %v3990 = vpop.permute.xlu0 %3989
        %v3991 = vsel %vm1258, %v3984, %v3986
        %v3992 = vsel %vm1258, %v3986, %v3988
        %v3993 = vsel %vm1258, %v3988, %v3990
        %v3997 = vadd.f32 %v3621, %v3991
        %v3998 = vadd.f32 %v3622, %v3992
        %v3999 = vadd.f32 %v3623, %v3993
        %s4000 = sld [smem:[#allocation2 + $0x73]]
        %v4001 = vstv %s4000
        %v4002 = vmul.f32 %v2347, %v4001
        %v4003 = vmul.f32 %v2348, %v4001
        %v4004 = vmul.f32 %v2349, %v4001
        %v4005 = vmul.f32 %v2350, %v4001
        %v4006 = vmul.f32 %v2351, %v4001
        %v4007 = vmul.f32 %v2352, %v4001
        %v4008 = vmul.f32 %v2353, %v4001
        %v4009 = vmul.f32 %v2354, %v4001
        %v4018 = vrot.slane %v4002, 1
        %v4019 = vrot.slane %v4006, 1
        %v4020 = vsel %vm2128, %v4018, %v4019
        %v4021 = vrot.slane %v4003, 1
        %v4022 = vrot.slane %v4007, 1
        %v4023 = vsel %vm2128, %v4021, %v4022
        %v4024 = vrot.slane %v4004, 1
        %v4025 = vrot.slane %v4008, 1
        %v4026 = vsel %vm2128, %v4024, %v4025
        %v4027 = vrot.slane %v4005, 1
        %v4028 = vrot.slane %v4009, 1
        %v4029 = vsel %vm2128, %v4027, %v4028
        %4030 = vrot.lane.b32.xlu0 %v4020, 108
        %v4031 = vpop.permute.xlu0 %4030
        %4032 = vrot.lane.b32.xlu0 %v4023, 108
        %v4033 = vpop.permute.xlu0 %4032
        %4034 = vrot.lane.b32.xlu0 %v4026, 108
        %v4035 = vpop.permute.xlu0 %4034
        %4036 = vrot.lane.b32.xlu0 %v4029, 108
        %v4037 = vpop.permute.xlu0 %4036
        %v4038 = vsel %vm1258, %v4031, %v4033
        %v4039 = vsel %vm1258, %v4033, %v4035
        %v4040 = vsel %vm1258, %v4035, %v4037
        %v4044 = vadd.f32 %v3668, %v4038
        %v4045 = vadd.f32 %v3669, %v4039
        %v4046 = vadd.f32 %v3670, %v4040
        %s4047 = sld [smem:[#allocation2 + $0x74]]
        %v4048 = vstv %s4047
        %v4049 = vmul.f32 %v2347, %v4048
        %v4050 = vmul.f32 %v2348, %v4048
        %v4051 = vmul.f32 %v2349, %v4048
        %v4052 = vmul.f32 %v2350, %v4048
        %v4053 = vmul.f32 %v2351, %v4048
        %v4054 = vmul.f32 %v2352, %v4048
        %v4055 = vmul.f32 %v2353, %v4048
        %v4056 = vmul.f32 %v2354, %v4048
        %v4065 = vrot.slane %v4049, 1
        %v4066 = vrot.slane %v4053, 1
        %v4067 = vsel %vm2128, %v4065, %v4066
        %v4068 = vrot.slane %v4050, 1
        %v4069 = vrot.slane %v4054, 1
        %v4070 = vsel %vm2128, %v4068, %v4069
        %v4071 = vrot.slane %v4051, 1
        %v4072 = vrot.slane %v4055, 1
        %v4073 = vsel %vm2128, %v4071, %v4072
        %v4074 = vrot.slane %v4052, 1
        %v4075 = vrot.slane %v4056, 1
        %v4076 = vsel %vm2128, %v4074, %v4075
        %4077 = vrot.lane.b32.xlu0 %v4067, 108
        %v4078 = vpop.permute.xlu0 %4077
        %4079 = vrot.lane.b32.xlu0 %v4070, 108
        %v4080 = vpop.permute.xlu0 %4079
        %4081 = vrot.lane.b32.xlu0 %v4073, 108
        %v4082 = vpop.permute.xlu0 %4081
        %4083 = vrot.lane.b32.xlu0 %v4076, 108
        %v4084 = vpop.permute.xlu0 %4083
        %v4085 = vsel %vm1258, %v4078, %v4080
        %v4086 = vsel %vm1258, %v4080, %v4082
        %v4087 = vsel %vm1258, %v4082, %v4084
        %v4091 = vadd.f32 %v3715, %v4085
        %v4092 = vadd.f32 %v3716, %v4086
        %v4093 = vadd.f32 %v3717, %v4087
        %s4094 = sld [smem:[#allocation2 + $0x75]]
        %v4095 = vstv %s4094
        %v4096 = vmul.f32 %v2347, %v4095
        %v4097 = vmul.f32 %v2348, %v4095
        %v4098 = vmul.f32 %v2349, %v4095
        %v4099 = vmul.f32 %v2350, %v4095
        %v4100 = vmul.f32 %v2351, %v4095
        %v4101 = vmul.f32 %v2352, %v4095
        %v4102 = vmul.f32 %v2353, %v4095
        %v4103 = vmul.f32 %v2354, %v4095
        %v4112 = vrot.slane %v4096, 1
        %v4113 = vrot.slane %v4100, 1
        %v4114 = vsel %vm2128, %v4112, %v4113
        %v4115 = vrot.slane %v4097, 1
        %v4116 = vrot.slane %v4101, 1
        %v4117 = vsel %vm2128, %v4115, %v4116
        %v4118 = vrot.slane %v4098, 1
        %v4119 = vrot.slane %v4102, 1
        %v4120 = vsel %vm2128, %v4118, %v4119
        %v4121 = vrot.slane %v4099, 1
        %v4122 = vrot.slane %v4103, 1
        %v4123 = vsel %vm2128, %v4121, %v4122
        %4124 = vrot.lane.b32.xlu0 %v4114, 108
        %v4125 = vpop.permute.xlu0 %4124
        %4126 = vrot.lane.b32.xlu0 %v4117, 108
        %v4127 = vpop.permute.xlu0 %4126
        %4128 = vrot.lane.b32.xlu0 %v4120, 108
        %v4129 = vpop.permute.xlu0 %4128
        %4130 = vrot.lane.b32.xlu0 %v4123, 108
        %v4131 = vpop.permute.xlu0 %4130
        %v4132 = vsel %vm1258, %v4125, %v4127
        %v4133 = vsel %vm1258, %v4127, %v4129
        %v4134 = vsel %vm1258, %v4129, %v4131
        %v4138 = vadd.f32 %v3762, %v4132
        %v4139 = vadd.f32 %v3763, %v4133
        %v4140 = vadd.f32 %v3764, %v4134
        %s4141 = sld [smem:[#allocation2 + $0x76]]
        %v4142 = vstv %s4141
        %v4143 = vmul.f32 %v2347, %v4142
        %v4144 = vmul.f32 %v2348, %v4142
        %v4145 = vmul.f32 %v2349, %v4142
        %v4146 = vmul.f32 %v2350, %v4142
        %v4147 = vmul.f32 %v2351, %v4142
        %v4148 = vmul.f32 %v2352, %v4142
        %v4149 = vmul.f32 %v2353, %v4142
        %v4150 = vmul.f32 %v2354, %v4142
        %v4159 = vrot.slane %v4143, 1
        %v4160 = vrot.slane %v4147, 1
        %v4161 = vsel %vm2128, %v4159, %v4160
        %v4162 = vrot.slane %v4144, 1
        %v4163 = vrot.slane %v4148, 1
        %v4164 = vsel %vm2128, %v4162, %v4163
        %v4165 = vrot.slane %v4145, 1
        %v4166 = vrot.slane %v4149, 1
        %v4167 = vsel %vm2128, %v4165, %v4166
        %v4168 = vrot.slane %v4146, 1
        %v4169 = vrot.slane %v4150, 1
        %v4170 = vsel %vm2128, %v4168, %v4169
        %4171 = vrot.lane.b32.xlu0 %v4161, 108
        %v4172 = vpop.permute.xlu0 %4171
        %4173 = vrot.lane.b32.xlu0 %v4164, 108
        %v4174 = vpop.permute.xlu0 %4173
        %4175 = vrot.lane.b32.xlu0 %v4167, 108
        %v4176 = vpop.permute.xlu0 %4175
        %4177 = vrot.lane.b32.xlu0 %v4170, 108
        %v4178 = vpop.permute.xlu0 %4177
        %v4179 = vsel %vm1258, %v4172, %v4174
        %v4180 = vsel %vm1258, %v4174, %v4176
        %v4181 = vsel %vm1258, %v4176, %v4178
        %v4185 = vadd.f32 %v3809, %v4179
        %v4186 = vadd.f32 %v3810, %v4180
        %v4187 = vadd.f32 %v3811, %v4181
        %s4188 = sld [smem:[#allocation2 + $0x77]]
        %v4189 = vstv %s4188
        %v4190 = vmul.f32 %v2347, %v4189
        %v4191 = vmul.f32 %v2348, %v4189
        %v4192 = vmul.f32 %v2349, %v4189
        %v4193 = vmul.f32 %v2350, %v4189
        %v4194 = vmul.f32 %v2351, %v4189
        %v4195 = vmul.f32 %v2352, %v4189
        %v4196 = vmul.f32 %v2353, %v4189
        %v4197 = vmul.f32 %v2354, %v4189
        %v4206 = vrot.slane %v4190, 1
        %v4207 = vrot.slane %v4194, 1
        %v4208 = vsel %vm2128, %v4206, %v4207
        %v4209 = vrot.slane %v4191, 1
        %v4210 = vrot.slane %v4195, 1
        %v4211 = vsel %vm2128, %v4209, %v4210
        %v4212 = vrot.slane %v4192, 1
        %v4213 = vrot.slane %v4196, 1
        %v4214 = vsel %vm2128, %v4212, %v4213
        %v4215 = vrot.slane %v4193, 1
        %v4216 = vrot.slane %v4197, 1
        %v4217 = vsel %vm2128, %v4215, %v4216
        %4218 = vrot.lane.b32.xlu0 %v4208, 108
        %v4219 = vpop.permute.xlu0 %4218
        %4220 = vrot.lane.b32.xlu0 %v4211, 108
        %v4221 = vpop.permute.xlu0 %4220
        %4222 = vrot.lane.b32.xlu0 %v4214, 108
        %v4223 = vpop.permute.xlu0 %4222
        %4224 = vrot.lane.b32.xlu0 %v4217, 108
        %v4225 = vpop.permute.xlu0 %4224
        %v4226 = vsel %vm1258, %v4219, %v4221
        %v4227 = vsel %vm1258, %v4221, %v4223
        %v4228 = vsel %vm1258, %v4223, %v4225
        %v4232 = vadd.f32 %v3856, %v4226
        %v4233 = vadd.f32 %v3857, %v4227
        %v4234 = vadd.f32 %v3858, %v4228
        %s4235 = sld [smem:[#allocation2 + $0x78]]
        %v4236 = vstv %s4235
        %v4237 = vmul.f32 %v2347, %v4236
        %v4238 = vmul.f32 %v2348, %v4236
        %v4239 = vmul.f32 %v2349, %v4236
        %v4240 = vmul.f32 %v2350, %v4236
        %v4241 = vmul.f32 %v2351, %v4236
        %v4242 = vmul.f32 %v2352, %v4236
        %v4243 = vmul.f32 %v2353, %v4236
        %v4244 = vmul.f32 %v2354, %v4236
        %v4253 = vrot.slane %v4237, 1
        %v4254 = vrot.slane %v4241, 1
        %v4255 = vsel %vm2128, %v4253, %v4254
        %v4256 = vrot.slane %v4238, 1
        %v4257 = vrot.slane %v4242, 1
        %v4258 = vsel %vm2128, %v4256, %v4257
        %v4259 = vrot.slane %v4239, 1
        %v4260 = vrot.slane %v4243, 1
        %v4261 = vsel %vm2128, %v4259, %v4260
        %v4262 = vrot.slane %v4240, 1
        %v4263 = vrot.slane %v4244, 1
        %v4264 = vsel %vm2128, %v4262, %v4263
        %4265 = vrot.lane.b32.xlu0 %v4255, 92
        %v4266 = vpop.permute.xlu0 %4265
        %4267 = vrot.lane.b32.xlu0 %v4258, 92
        %v4268 = vpop.permute.xlu0 %4267
        %4269 = vrot.lane.b32.xlu0 %v4261, 92
        %v4270 = vpop.permute.xlu0 %4269
        %4271 = vrot.lane.b32.xlu0 %v4264, 92
        %v4272 = vpop.permute.xlu0 %4271
        %v4273 = vsel %vm1475, %v4266, %v4268
        %v4274 = vsel %vm1475, %v4268, %v4270
        %v4275 = vsel %vm1475, %v4270, %v4272
        %v4279 = vadd.f32 %v3903, %v4273
        %v4280 = vadd.f32 %v3904, %v4274
        %v4281 = vadd.f32 %v3905, %v4275
        %s4282 = sld [smem:[#allocation2 + $0x79]]
        %v4283 = vstv %s4282
        %v4284 = vmul.f32 %v2347, %v4283
        %v4285 = vmul.f32 %v2348, %v4283
        %v4286 = vmul.f32 %v2349, %v4283
        %v4287 = vmul.f32 %v2350, %v4283
        %v4288 = vmul.f32 %v2351, %v4283
        %v4289 = vmul.f32 %v2352, %v4283
        %v4290 = vmul.f32 %v2353, %v4283
        %v4291 = vmul.f32 %v2354, %v4283
        %v4300 = vrot.slane %v4284, 1
        %v4301 = vrot.slane %v4288, 1
        %v4302 = vsel %vm2128, %v4300, %v4301
        %v4303 = vrot.slane %v4285, 1
        %v4304 = vrot.slane %v4289, 1
        %v4305 = vsel %vm2128, %v4303, %v4304
        %v4306 = vrot.slane %v4286, 1
        %v4307 = vrot.slane %v4290, 1
        %v4308 = vsel %vm2128, %v4306, %v4307
        %v4309 = vrot.slane %v4287, 1
        %v4310 = vrot.slane %v4291, 1
        %v4311 = vsel %vm2128, %v4309, %v4310
        %4312 = vrot.lane.b32.xlu0 %v4302, 92
        %v4313 = vpop.permute.xlu0 %4312
        %4314 = vrot.lane.b32.xlu0 %v4305, 92
        %v4315 = vpop.permute.xlu0 %4314
        %4316 = vrot.lane.b32.xlu0 %v4308, 92
        %v4317 = vpop.permute.xlu0 %4316
        %4318 = vrot.lane.b32.xlu0 %v4311, 92
        %v4319 = vpop.permute.xlu0 %4318
        %v4320 = vsel %vm1475, %v4313, %v4315
        %v4321 = vsel %vm1475, %v4315, %v4317
        %v4322 = vsel %vm1475, %v4317, %v4319
        %v4326 = vadd.f32 %v3950, %v4320
        %v4327 = vadd.f32 %v3951, %v4321
        %v4328 = vadd.f32 %v3952, %v4322
        %s4329 = sld [smem:[#allocation2 + $0x7a]]
        %v4330 = vstv %s4329
        %v4331 = vmul.f32 %v2347, %v4330
        %v4332 = vmul.f32 %v2348, %v4330
        %v4333 = vmul.f32 %v2349, %v4330
        %v4334 = vmul.f32 %v2350, %v4330
        %v4335 = vmul.f32 %v2351, %v4330
        %v4336 = vmul.f32 %v2352, %v4330
        %v4337 = vmul.f32 %v2353, %v4330
        %v4338 = vmul.f32 %v2354, %v4330
        %v4347 = vrot.slane %v4331, 1
        %v4348 = vrot.slane %v4335, 1
        %v4349 = vsel %vm2128, %v4347, %v4348
        %v4350 = vrot.slane %v4332, 1
        %v4351 = vrot.slane %v4336, 1
        %v4352 = vsel %vm2128, %v4350, %v4351
        %v4353 = vrot.slane %v4333, 1
        %v4354 = vrot.slane %v4337, 1
        %v4355 = vsel %vm2128, %v4353, %v4354
        %v4356 = vrot.slane %v4334, 1
        %v4357 = vrot.slane %v4338, 1
        %v4358 = vsel %vm2128, %v4356, %v4357
        %4359 = vrot.lane.b32.xlu0 %v4349, 92
        %v4360 = vpop.permute.xlu0 %4359
        %4361 = vrot.lane.b32.xlu0 %v4352, 92
        %v4362 = vpop.permute.xlu0 %4361
        %4363 = vrot.lane.b32.xlu0 %v4355, 92
        %v4364 = vpop.permute.xlu0 %4363
        %4365 = vrot.lane.b32.xlu0 %v4358, 92
        %v4366 = vpop.permute.xlu0 %4365
        %v4367 = vsel %vm1475, %v4360, %v4362
        %v4368 = vsel %vm1475, %v4362, %v4364
        %v4369 = vsel %vm1475, %v4364, %v4366
        %v4373 = vadd.f32 %v3997, %v4367
        %v4374 = vadd.f32 %v3998, %v4368
        %v4375 = vadd.f32 %v3999, %v4369
        %s4376 = sld [smem:[#allocation2 + $0x7b]]
        %v4377 = vstv %s4376
        %v4378 = vmul.f32 %v2347, %v4377
        %v4379 = vmul.f32 %v2348, %v4377
        %v4380 = vmul.f32 %v2349, %v4377
        %v4381 = vmul.f32 %v2350, %v4377
        %v4382 = vmul.f32 %v2351, %v4377
        %v4383 = vmul.f32 %v2352, %v4377
        %v4384 = vmul.f32 %v2353, %v4377
        %v4385 = vmul.f32 %v2354, %v4377
        %v4394 = vrot.slane %v4378, 1
        %v4395 = vrot.slane %v4382, 1
        %v4396 = vsel %vm2128, %v4394, %v4395
        %v4397 = vrot.slane %v4379, 1
        %v4398 = vrot.slane %v4383, 1
        %v4399 = vsel %vm2128, %v4397, %v4398
        %v4400 = vrot.slane %v4380, 1
        %v4401 = vrot.slane %v4384, 1
        %v4402 = vsel %vm2128, %v4400, %v4401
        %v4403 = vrot.slane %v4381, 1
        %v4404 = vrot.slane %v4385, 1
        %v4405 = vsel %vm2128, %v4403, %v4404
        %4406 = vrot.lane.b32.xlu0 %v4396, 92
        %v4407 = vpop.permute.xlu0 %4406
        %4408 = vrot.lane.b32.xlu0 %v4399, 92
        %v4409 = vpop.permute.xlu0 %4408
        %4410 = vrot.lane.b32.xlu0 %v4402, 92
        %v4411 = vpop.permute.xlu0 %4410
        %4412 = vrot.lane.b32.xlu0 %v4405, 92
        %v4413 = vpop.permute.xlu0 %4412
        %v4414 = vsel %vm1475, %v4407, %v4409
        %v4415 = vsel %vm1475, %v4409, %v4411
        %v4416 = vsel %vm1475, %v4411, %v4413
        %v4420 = vadd.f32 %v4044, %v4414
        %v4421 = vadd.f32 %v4045, %v4415
        %v4422 = vadd.f32 %v4046, %v4416
        %s4423 = sld [smem:[#allocation2 + $0x7c]]
        %v4424 = vstv %s4423
        %v4425 = vmul.f32 %v2347, %v4424
        %v4426 = vmul.f32 %v2348, %v4424
        %v4427 = vmul.f32 %v2349, %v4424
        %v4428 = vmul.f32 %v2350, %v4424
        %v4429 = vmul.f32 %v2351, %v4424
        %v4430 = vmul.f32 %v2352, %v4424
        %v4431 = vmul.f32 %v2353, %v4424
        %v4432 = vmul.f32 %v2354, %v4424
        %v4441 = vrot.slane %v4425, 1
        %v4442 = vrot.slane %v4429, 1
        %v4443 = vsel %vm2128, %v4441, %v4442
        %v4444 = vrot.slane %v4426, 1
        %v4445 = vrot.slane %v4430, 1
        %v4446 = vsel %vm2128, %v4444, %v4445
        %v4447 = vrot.slane %v4427, 1
        %v4448 = vrot.slane %v4431, 1
        %v4449 = vsel %vm2128, %v4447, %v4448
        %v4450 = vrot.slane %v4428, 1
        %v4451 = vrot.slane %v4432, 1
        %v4452 = vsel %vm2128, %v4450, %v4451
        %4453 = vrot.lane.b32.xlu0 %v4443, 92
        %v4454 = vpop.permute.xlu0 %4453
        %4455 = vrot.lane.b32.xlu0 %v4446, 92
        %v4456 = vpop.permute.xlu0 %4455
        %4457 = vrot.lane.b32.xlu0 %v4449, 92
        %v4458 = vpop.permute.xlu0 %4457
        %4459 = vrot.lane.b32.xlu0 %v4452, 92
        %v4460 = vpop.permute.xlu0 %4459
        %v4461 = vsel %vm1475, %v4454, %v4456
        %v4462 = vsel %vm1475, %v4456, %v4458
        %v4463 = vsel %vm1475, %v4458, %v4460
        %v4467 = vadd.f32 %v4091, %v4461
        %v4468 = vadd.f32 %v4092, %v4462
        %v4469 = vadd.f32 %v4093, %v4463
        %s4470 = sld [smem:[#allocation2 + $0x7d]]
        %v4471 = vstv %s4470
        %v4472 = vmul.f32 %v2347, %v4471
        %v4473 = vmul.f32 %v2348, %v4471
        %v4474 = vmul.f32 %v2349, %v4471
        %v4475 = vmul.f32 %v2350, %v4471
        %v4476 = vmul.f32 %v2351, %v4471
        %v4477 = vmul.f32 %v2352, %v4471
        %v4478 = vmul.f32 %v2353, %v4471
        %v4479 = vmul.f32 %v2354, %v4471
        %v4488 = vrot.slane %v4472, 1
        %v4489 = vrot.slane %v4476, 1
        %v4490 = vsel %vm2128, %v4488, %v4489
        %v4491 = vrot.slane %v4473, 1
        %v4492 = vrot.slane %v4477, 1
        %v4493 = vsel %vm2128, %v4491, %v4492
        %v4494 = vrot.slane %v4474, 1
        %v4495 = vrot.slane %v4478, 1
        %v4496 = vsel %vm2128, %v4494, %v4495
        %v4497 = vrot.slane %v4475, 1
        %v4498 = vrot.slane %v4479, 1
        %v4499 = vsel %vm2128, %v4497, %v4498
        %4500 = vrot.lane.b32.xlu0 %v4490, 92
        %v4501 = vpop.permute.xlu0 %4500
        %4502 = vrot.lane.b32.xlu0 %v4493, 92
        %v4503 = vpop.permute.xlu0 %4502
        %4504 = vrot.lane.b32.xlu0 %v4496, 92
        %v4505 = vpop.permute.xlu0 %4504
        %4506 = vrot.lane.b32.xlu0 %v4499, 92
        %v4507 = vpop.permute.xlu0 %4506
        %v4508 = vsel %vm1475, %v4501, %v4503
        %v4509 = vsel %vm1475, %v4503, %v4505
        %v4510 = vsel %vm1475, %v4505, %v4507
        %v4514 = vadd.f32 %v4138, %v4508
        %v4515 = vadd.f32 %v4139, %v4509
        %v4516 = vadd.f32 %v4140, %v4510
        %s4517 = sld [smem:[#allocation2 + $0x7e]]
        %v4518 = vstv %s4517
        %v4519 = vmul.f32 %v2347, %v4518
        %v4520 = vmul.f32 %v2348, %v4518
        %v4521 = vmul.f32 %v2349, %v4518
        %v4522 = vmul.f32 %v2350, %v4518
        %v4523 = vmul.f32 %v2351, %v4518
        %v4524 = vmul.f32 %v2352, %v4518
        %v4525 = vmul.f32 %v2353, %v4518
        %v4526 = vmul.f32 %v2354, %v4518
        %v4535 = vrot.slane %v4519, 1
        %v4536 = vrot.slane %v4523, 1
        %v4537 = vsel %vm2128, %v4535, %v4536
        %v4538 = vrot.slane %v4520, 1
        %v4539 = vrot.slane %v4524, 1
        %v4540 = vsel %vm2128, %v4538, %v4539
        %v4541 = vrot.slane %v4521, 1
        %v4542 = vrot.slane %v4525, 1
        %v4543 = vsel %vm2128, %v4541, %v4542
        %v4544 = vrot.slane %v4522, 1
        %v4545 = vrot.slane %v4526, 1
        %v4546 = vsel %vm2128, %v4544, %v4545
        %4547 = vrot.lane.b32.xlu0 %v4537, 92
        %v4548 = vpop.permute.xlu0 %4547
        %4549 = vrot.lane.b32.xlu0 %v4540, 92
        %v4550 = vpop.permute.xlu0 %4549
        %4551 = vrot.lane.b32.xlu0 %v4543, 92
        %v4552 = vpop.permute.xlu0 %4551
        %4553 = vrot.lane.b32.xlu0 %v4546, 92
        %v4554 = vpop.permute.xlu0 %4553
        %v4555 = vsel %vm1475, %v4548, %v4550
        %v4556 = vsel %vm1475, %v4550, %v4552
        %v4557 = vsel %vm1475, %v4552, %v4554
        %v4561 = vadd.f32 %v4185, %v4555
        %v4562 = vadd.f32 %v4186, %v4556
        %v4563 = vadd.f32 %v4187, %v4557
        %s4564 = sld [smem:[#allocation2 + $0x7f]]
        %v4565 = vstv %s4564
        %v4566 = vmul.f32 %v2347, %v4565
        %v4567 = vmul.f32 %v2348, %v4565
        %v4568 = vmul.f32 %v2349, %v4565
        %v4569 = vmul.f32 %v2350, %v4565
        %v4570 = vmul.f32 %v2351, %v4565
        %v4571 = vmul.f32 %v2352, %v4565
        %v4572 = vmul.f32 %v2353, %v4565
        %v4573 = vmul.f32 %v2354, %v4565
        %v4582 = vrot.slane %v4566, 1
        %v4583 = vrot.slane %v4570, 1
        %v4584 = vsel %vm2128, %v4582, %v4583
        %v4585 = vrot.slane %v4567, 1
        %v4586 = vrot.slane %v4571, 1
        %v4587 = vsel %vm2128, %v4585, %v4586
        %v4588 = vrot.slane %v4568, 1
        %v4589 = vrot.slane %v4572, 1
        %v4590 = vsel %vm2128, %v4588, %v4589
        %v4591 = vrot.slane %v4569, 1
        %v4592 = vrot.slane %v4573, 1
        %v4593 = vsel %vm2128, %v4591, %v4592
        %4594 = vrot.lane.b32.xlu0 %v4584, 92
        %v4595 = vpop.permute.xlu0 %4594
        %4596 = vrot.lane.b32.xlu0 %v4587, 92
        %v4597 = vpop.permute.xlu0 %4596
        %4598 = vrot.lane.b32.xlu0 %v4590, 92
        %v4599 = vpop.permute.xlu0 %4598
        %4600 = vrot.lane.b32.xlu0 %v4593, 92
        %v4601 = vpop.permute.xlu0 %4600
        %v4602 = vsel %vm1475, %v4595, %v4597
        %v4603 = vsel %vm1475, %v4597, %v4599
        %v4604 = vsel %vm1475, %v4599, %v4601
        %v4608 = vadd.f32 %v4232, %v4602
        %v4609 = vadd.f32 %v4233, %v4603
        %v4610 = vadd.f32 %v4234, %v4604
        %s4611 = sld [smem:[#allocation2 + $0x80]]
        %v4612 = vstv %s4611
        %v4613 = vmul.f32 %v2347, %v4612
        %v4614 = vmul.f32 %v2348, %v4612
        %v4615 = vmul.f32 %v2349, %v4612
        %v4616 = vmul.f32 %v2350, %v4612
        %v4617 = vmul.f32 %v2351, %v4612
        %v4618 = vmul.f32 %v2352, %v4612
        %v4619 = vmul.f32 %v2353, %v4612
        %v4620 = vmul.f32 %v2354, %v4612
        %v4629 = vrot.slane %v4613, 1
        %v4630 = vrot.slane %v4617, 1
        %v4631 = vsel %vm2128, %v4629, %v4630
        %v4632 = vrot.slane %v4614, 1
        %v4633 = vrot.slane %v4618, 1
        %v4634 = vsel %vm2128, %v4632, %v4633
        %v4635 = vrot.slane %v4615, 1
        %v4636 = vrot.slane %v4619, 1
        %v4637 = vsel %vm2128, %v4635, %v4636
        %v4638 = vrot.slane %v4616, 1
        %v4639 = vrot.slane %v4620, 1
        %v4640 = vsel %vm2128, %v4638, %v4639
        %4641 = vrot.lane.b32.xlu0 %v4631, 91
        %v4642 = vpop.permute.xlu0 %4641
        %4643 = vrot.lane.b32.xlu0 %v4634, 91
        %v4644 = vpop.permute.xlu0 %4643
        %4645 = vrot.lane.b32.xlu0 %v4637, 91
        %v4646 = vpop.permute.xlu0 %4645
        %4647 = vrot.lane.b32.xlu0 %v4640, 91
        %v4648 = vpop.permute.xlu0 %4647
        %v4649 = vsel %vm1692, %v4642, %v4644
        %v4650 = vsel %vm1692, %v4644, %v4646
        %v4651 = vsel %vm1692, %v4646, %v4648
        %v4655 = vadd.f32 %v4279, %v4649
        %v4656 = vadd.f32 %v4280, %v4650
        %v4657 = vadd.f32 %v4281, %v4651
        %s4658 = sld [smem:[#allocation2 + $0x81]]
        %v4659 = vstv %s4658
        %v4660 = vmul.f32 %v2347, %v4659
        %v4661 = vmul.f32 %v2348, %v4659
        %v4662 = vmul.f32 %v2349, %v4659
        %v4663 = vmul.f32 %v2350, %v4659
        %v4664 = vmul.f32 %v2351, %v4659
        %v4665 = vmul.f32 %v2352, %v4659
        %v4666 = vmul.f32 %v2353, %v4659
        %v4667 = vmul.f32 %v2354, %v4659
        %v4676 = vrot.slane %v4660, 1
        %v4677 = vrot.slane %v4664, 1
        %v4678 = vsel %vm2128, %v4676, %v4677
        %v4679 = vrot.slane %v4661, 1
        %v4680 = vrot.slane %v4665, 1
        %v4681 = vsel %vm2128, %v4679, %v4680
        %v4682 = vrot.slane %v4662, 1
        %v4683 = vrot.slane %v4666, 1
        %v4684 = vsel %vm2128, %v4682, %v4683
        %v4685 = vrot.slane %v4663, 1
        %v4686 = vrot.slane %v4667, 1
        %v4687 = vsel %vm2128, %v4685, %v4686
        %4688 = vrot.lane.b32.xlu0 %v4678, 91
        %v4689 = vpop.permute.xlu0 %4688
        %4690 = vrot.lane.b32.xlu0 %v4681, 91
        %v4691 = vpop.permute.xlu0 %4690
        %4692 = vrot.lane.b32.xlu0 %v4684, 91
        %v4693 = vpop.permute.xlu0 %4692
        %4694 = vrot.lane.b32.xlu0 %v4687, 91
        %v4695 = vpop.permute.xlu0 %4694
        %v4696 = vsel %vm1692, %v4689, %v4691
        %v4697 = vsel %vm1692, %v4691, %v4693
        %v4698 = vsel %vm1692, %v4693, %v4695
        %v4702 = vadd.f32 %v4326, %v4696
        %v4703 = vadd.f32 %v4327, %v4697
        %v4704 = vadd.f32 %v4328, %v4698
        %s4705 = sld [smem:[#allocation2 + $0x82]]
        %v4706 = vstv %s4705
        %v4707 = vmul.f32 %v2347, %v4706
        %v4708 = vmul.f32 %v2348, %v4706
        %v4709 = vmul.f32 %v2349, %v4706
        %v4710 = vmul.f32 %v2350, %v4706
        %v4711 = vmul.f32 %v2351, %v4706
        %v4712 = vmul.f32 %v2352, %v4706
        %v4713 = vmul.f32 %v2353, %v4706
        %v4714 = vmul.f32 %v2354, %v4706
        %v4723 = vrot.slane %v4707, 1
        %v4724 = vrot.slane %v4711, 1
        %v4725 = vsel %vm2128, %v4723, %v4724
        %v4726 = vrot.slane %v4708, 1
        %v4727 = vrot.slane %v4712, 1
        %v4728 = vsel %vm2128, %v4726, %v4727
        %v4729 = vrot.slane %v4709, 1
        %v4730 = vrot.slane %v4713, 1
        %v4731 = vsel %vm2128, %v4729, %v4730
        %v4732 = vrot.slane %v4710, 1
        %v4733 = vrot.slane %v4714, 1
        %v4734 = vsel %vm2128, %v4732, %v4733
        %4735 = vrot.lane.b32.xlu0 %v4725, 91
        %v4736 = vpop.permute.xlu0 %4735
        %4737 = vrot.lane.b32.xlu0 %v4728, 91
        %v4738 = vpop.permute.xlu0 %4737
        %4739 = vrot.lane.b32.xlu0 %v4731, 91
        %v4740 = vpop.permute.xlu0 %4739
        %4741 = vrot.lane.b32.xlu0 %v4734, 91
        %v4742 = vpop.permute.xlu0 %4741
        %v4743 = vsel %vm1692, %v4736, %v4738
        %v4744 = vsel %vm1692, %v4738, %v4740
        %v4745 = vsel %vm1692, %v4740, %v4742
        %v4749 = vadd.f32 %v4373, %v4743
        %v4750 = vadd.f32 %v4374, %v4744
        %v4751 = vadd.f32 %v4375, %v4745
        %s4752 = sld [smem:[#allocation2 + $0x83]]
        %v4753 = vstv %s4752
        %v4754 = vmul.f32 %v2347, %v4753
        %v4755 = vmul.f32 %v2348, %v4753
        %v4756 = vmul.f32 %v2349, %v4753
        %v4757 = vmul.f32 %v2350, %v4753
        %v4758 = vmul.f32 %v2351, %v4753
        %v4759 = vmul.f32 %v2352, %v4753
        %v4760 = vmul.f32 %v2353, %v4753
        %v4761 = vmul.f32 %v2354, %v4753
        %v4770 = vrot.slane %v4754, 1
        %v4771 = vrot.slane %v4758, 1
        %v4772 = vsel %vm2128, %v4770, %v4771
        %v4773 = vrot.slane %v4755, 1
        %v4774 = vrot.slane %v4759, 1
        %v4775 = vsel %vm2128, %v4773, %v4774
        %v4776 = vrot.slane %v4756, 1
        %v4777 = vrot.slane %v4760, 1
        %v4778 = vsel %vm2128, %v4776, %v4777
        %v4779 = vrot.slane %v4757, 1
        %v4780 = vrot.slane %v4761, 1
        %v4781 = vsel %vm2128, %v4779, %v4780
        %4782 = vrot.lane.b32.xlu0 %v4772, 91
        %v4783 = vpop.permute.xlu0 %4782
        %4784 = vrot.lane.b32.xlu0 %v4775, 91
        %v4785 = vpop.permute.xlu0 %4784
        %4786 = vrot.lane.b32.xlu0 %v4778, 91
        %v4787 = vpop.permute.xlu0 %4786
        %4788 = vrot.lane.b32.xlu0 %v4781, 91
        %v4789 = vpop.permute.xlu0 %4788
        %v4790 = vsel %vm1692, %v4783, %v4785
        %v4791 = vsel %vm1692, %v4785, %v4787
        %v4792 = vsel %vm1692, %v4787, %v4789
        %v4796 = vadd.f32 %v4420, %v4790
        %v4797 = vadd.f32 %v4421, %v4791
        %v4798 = vadd.f32 %v4422, %v4792
        %s4799 = sld [smem:[#allocation2 + $0x84]]
        %v4800 = vstv %s4799
        %v4801 = vmul.f32 %v2347, %v4800
        %v4802 = vmul.f32 %v2348, %v4800
        %v4803 = vmul.f32 %v2349, %v4800
        %v4804 = vmul.f32 %v2350, %v4800
        %v4805 = vmul.f32 %v2351, %v4800
        %v4806 = vmul.f32 %v2352, %v4800
        %v4807 = vmul.f32 %v2353, %v4800
        %v4808 = vmul.f32 %v2354, %v4800
        %v4817 = vrot.slane %v4801, 1
        %v4818 = vrot.slane %v4805, 1
        %v4819 = vsel %vm2128, %v4817, %v4818
        %v4820 = vrot.slane %v4802, 1
        %v4821 = vrot.slane %v4806, 1
        %v4822 = vsel %vm2128, %v4820, %v4821
        %v4823 = vrot.slane %v4803, 1
        %v4824 = vrot.slane %v4807, 1
        %v4825 = vsel %vm2128, %v4823, %v4824
        %v4826 = vrot.slane %v4804, 1
        %v4827 = vrot.slane %v4808, 1
        %v4828 = vsel %vm2128, %v4826, %v4827
        %4829 = vrot.lane.b32.xlu0 %v4819, 91
        %v4830 = vpop.permute.xlu0 %4829
        %4831 = vrot.lane.b32.xlu0 %v4822, 91
        %v4832 = vpop.permute.xlu0 %4831
        %4833 = vrot.lane.b32.xlu0 %v4825, 91
        %v4834 = vpop.permute.xlu0 %4833
        %4835 = vrot.lane.b32.xlu0 %v4828, 91
        %v4836 = vpop.permute.xlu0 %4835
        %v4837 = vsel %vm1692, %v4830, %v4832
        %v4838 = vsel %vm1692, %v4832, %v4834
        %v4839 = vsel %vm1692, %v4834, %v4836
        %v4843 = vadd.f32 %v4467, %v4837
        %v4844 = vadd.f32 %v4468, %v4838
        %v4845 = vadd.f32 %v4469, %v4839
        %s4846 = sld [smem:[#allocation2 + $0x85]]
        %v4847 = vstv %s4846
        %v4848 = vmul.f32 %v2347, %v4847
        %v4849 = vmul.f32 %v2348, %v4847
        %v4850 = vmul.f32 %v2349, %v4847
        %v4851 = vmul.f32 %v2350, %v4847
        %v4852 = vmul.f32 %v2351, %v4847
        %v4853 = vmul.f32 %v2352, %v4847
        %v4854 = vmul.f32 %v2353, %v4847
        %v4855 = vmul.f32 %v2354, %v4847
        %v4864 = vrot.slane %v4848, 1
        %v4865 = vrot.slane %v4852, 1
        %v4866 = vsel %vm2128, %v4864, %v4865
        %v4867 = vrot.slane %v4849, 1
        %v4868 = vrot.slane %v4853, 1
        %v4869 = vsel %vm2128, %v4867, %v4868
        %v4870 = vrot.slane %v4850, 1
        %v4871 = vrot.slane %v4854, 1
        %v4872 = vsel %vm2128, %v4870, %v4871
        %v4873 = vrot.slane %v4851, 1
        %v4874 = vrot.slane %v4855, 1
        %v4875 = vsel %vm2128, %v4873, %v4874
        %4876 = vrot.lane.b32.xlu0 %v4866, 91
        %v4877 = vpop.permute.xlu0 %4876
        %4878 = vrot.lane.b32.xlu0 %v4869, 91
        %v4879 = vpop.permute.xlu0 %4878
        %4880 = vrot.lane.b32.xlu0 %v4872, 91
        %v4881 = vpop.permute.xlu0 %4880
        %4882 = vrot.lane.b32.xlu0 %v4875, 91
        %v4883 = vpop.permute.xlu0 %4882
        %v4884 = vsel %vm1692, %v4877, %v4879
        %v4885 = vsel %vm1692, %v4879, %v4881
        %v4886 = vsel %vm1692, %v4881, %v4883
        %v4890 = vadd.f32 %v4514, %v4884
        %v4891 = vadd.f32 %v4515, %v4885
        %v4892 = vadd.f32 %v4516, %v4886
        %s4893 = sld [smem:[#allocation2 + $0x86]]
        %v4894 = vstv %s4893
        %v4895 = vmul.f32 %v2347, %v4894
        %v4896 = vmul.f32 %v2348, %v4894
        %v4897 = vmul.f32 %v2349, %v4894
        %v4898 = vmul.f32 %v2350, %v4894
        %v4899 = vmul.f32 %v2351, %v4894
        %v4900 = vmul.f32 %v2352, %v4894
        %v4901 = vmul.f32 %v2353, %v4894
        %v4902 = vmul.f32 %v2354, %v4894
        %v4911 = vrot.slane %v4895, 1
        %v4912 = vrot.slane %v4899, 1
        %v4913 = vsel %vm2128, %v4911, %v4912
        %v4914 = vrot.slane %v4896, 1
        %v4915 = vrot.slane %v4900, 1
        %v4916 = vsel %vm2128, %v4914, %v4915
        %v4917 = vrot.slane %v4897, 1
        %v4918 = vrot.slane %v4901, 1
        %v4919 = vsel %vm2128, %v4917, %v4918
        %v4920 = vrot.slane %v4898, 1
        %v4921 = vrot.slane %v4902, 1
        %v4922 = vsel %vm2128, %v4920, %v4921
        %4923 = vrot.lane.b32.xlu0 %v4913, 91
        %v4924 = vpop.permute.xlu0 %4923
        %4925 = vrot.lane.b32.xlu0 %v4916, 91
        %v4926 = vpop.permute.xlu0 %4925
        %4927 = vrot.lane.b32.xlu0 %v4919, 91
        %v4928 = vpop.permute.xlu0 %4927
        %4929 = vrot.lane.b32.xlu0 %v4922, 91
        %v4930 = vpop.permute.xlu0 %4929
        %v4931 = vsel %vm1692, %v4924, %v4926
        %v4932 = vsel %vm1692, %v4926, %v4928
        %v4933 = vsel %vm1692, %v4928, %v4930
        %v4937 = vadd.f32 %v4561, %v4931
        %v4938 = vadd.f32 %v4562, %v4932
        %v4939 = vadd.f32 %v4563, %v4933
        %s4940 = sld [smem:[#allocation2 + $0x87]]
        %v4941 = vstv %s4940
        %v4942 = vmul.f32 %v2347, %v4941
        %v4943 = vmul.f32 %v2348, %v4941
        %v4944 = vmul.f32 %v2349, %v4941
        %v4945 = vmul.f32 %v2350, %v4941
        %v4946 = vmul.f32 %v2351, %v4941
        %v4947 = vmul.f32 %v2352, %v4941
        %v4948 = vmul.f32 %v2353, %v4941
        %v4949 = vmul.f32 %v2354, %v4941
        %v4958 = vrot.slane %v4942, 1
        %v4959 = vrot.slane %v4946, 1
        %v4960 = vsel %vm2128, %v4958, %v4959
        %v4961 = vrot.slane %v4943, 1
        %v4962 = vrot.slane %v4947, 1
        %v4963 = vsel %vm2128, %v4961, %v4962
        %v4964 = vrot.slane %v4944, 1
        %v4965 = vrot.slane %v4948, 1
        %v4966 = vsel %vm2128, %v4964, %v4965
        %v4967 = vrot.slane %v4945, 1
        %v4968 = vrot.slane %v4949, 1
        %v4969 = vsel %vm2128, %v4967, %v4968
        %4970 = vrot.lane.b32.xlu0 %v4960, 91
        %v4971 = vpop.permute.xlu0 %4970
        %4972 = vrot.lane.b32.xlu0 %v4963, 91
        %v4973 = vpop.permute.xlu0 %4972
        %4974 = vrot.lane.b32.xlu0 %v4966, 91
        %v4975 = vpop.permute.xlu0 %4974
        %4976 = vrot.lane.b32.xlu0 %v4969, 91
        %v4977 = vpop.permute.xlu0 %4976
        %v4978 = vsel %vm1692, %v4971, %v4973
        %v4979 = vsel %vm1692, %v4973, %v4975
        %v4980 = vsel %vm1692, %v4975, %v4977
        %v4984 = vadd.f32 %v4608, %v4978
        %v4985 = vadd.f32 %v4609, %v4979
        %v4986 = vadd.f32 %v4610, %v4980
        %s4987 = sld [smem:[#allocation2 + $0x88]]
        %v4988 = vstv %s4987
        %v4989 = vmul.f32 %v2347, %v4988
        %v4990 = vmul.f32 %v2348, %v4988
        %v4991 = vmul.f32 %v2349, %v4988
        %v4992 = vmul.f32 %v2350, %v4988
        %v4993 = vmul.f32 %v2351, %v4988
        %v4994 = vmul.f32 %v2352, %v4988
        %v4995 = vmul.f32 %v2353, %v4988
        %v4996 = vmul.f32 %v2354, %v4988
        %v5005 = vrot.slane %v4989, 1
        %v5006 = vrot.slane %v4993, 1
        %v5007 = vsel %vm2128, %v5005, %v5006
        %v5008 = vrot.slane %v4990, 1
        %v5009 = vrot.slane %v4994, 1
        %v5010 = vsel %vm2128, %v5008, %v5009
        %v5011 = vrot.slane %v4991, 1
        %v5012 = vrot.slane %v4995, 1
        %v5013 = vsel %vm2128, %v5011, %v5012
        %v5014 = vrot.slane %v4992, 1
        %v5015 = vrot.slane %v4996, 1
        %v5016 = vsel %vm2128, %v5014, %v5015
        %5017 = vrot.lane.b32.xlu0 %v5007, 90
        %v5018 = vpop.permute.xlu0 %5017
        %5019 = vrot.lane.b32.xlu0 %v5010, 90
        %v5020 = vpop.permute.xlu0 %5019
        %5021 = vrot.lane.b32.xlu0 %v5013, 90
        %v5022 = vpop.permute.xlu0 %5021
        %5023 = vrot.lane.b32.xlu0 %v5016, 90
        %v5024 = vpop.permute.xlu0 %5023
        %v5025 = vsel %vm1909, %v5018, %v5020
        %v5026 = vsel %vm1909, %v5020, %v5022
        %v5027 = vsel %vm1909, %v5022, %v5024
        %v5031 = vadd.f32 %v4655, %v5025
        %v5032 = vadd.f32 %v4656, %v5026
        %v5033 = vadd.f32 %v4657, %v5027
        %s5034 = sld [smem:[#allocation2 + $0x89]]
        %v5035 = vstv %s5034
        %v5036 = vmul.f32 %v2347, %v5035
        %v5037 = vmul.f32 %v2348, %v5035
        %v5038 = vmul.f32 %v2349, %v5035
        %v5039 = vmul.f32 %v2350, %v5035
        %v5040 = vmul.f32 %v2351, %v5035
        %v5041 = vmul.f32 %v2352, %v5035
        %v5042 = vmul.f32 %v2353, %v5035
        %v5043 = vmul.f32 %v2354, %v5035
        %v5052 = vrot.slane %v5036, 1
        %v5053 = vrot.slane %v5040, 1
        %v5054 = vsel %vm2128, %v5052, %v5053
        %v5055 = vrot.slane %v5037, 1
        %v5056 = vrot.slane %v5041, 1
        %v5057 = vsel %vm2128, %v5055, %v5056
        %v5058 = vrot.slane %v5038, 1
        %v5059 = vrot.slane %v5042, 1
        %v5060 = vsel %vm2128, %v5058, %v5059
        %v5061 = vrot.slane %v5039, 1
        %v5062 = vrot.slane %v5043, 1
        %v5063 = vsel %vm2128, %v5061, %v5062
        %5064 = vrot.lane.b32.xlu0 %v5054, 90
        %v5065 = vpop.permute.xlu0 %5064
        %5066 = vrot.lane.b32.xlu0 %v5057, 90
        %v5067 = vpop.permute.xlu0 %5066
        %5068 = vrot.lane.b32.xlu0 %v5060, 90
        %v5069 = vpop.permute.xlu0 %5068
        %5070 = vrot.lane.b32.xlu0 %v5063, 90
        %v5071 = vpop.permute.xlu0 %5070
        %v5072 = vsel %vm1909, %v5065, %v5067
        %v5073 = vsel %vm1909, %v5067, %v5069
        %v5074 = vsel %vm1909, %v5069, %v5071
        %v5078 = vadd.f32 %v4702, %v5072
        %v5079 = vadd.f32 %v4703, %v5073
        %v5080 = vadd.f32 %v4704, %v5074
        %s5081 = sld [smem:[#allocation2 + $0x8a]]
        %v5082 = vstv %s5081
        %v5083 = vmul.f32 %v2347, %v5082
        %v5084 = vmul.f32 %v2348, %v5082
        %v5085 = vmul.f32 %v2349, %v5082
        %v5086 = vmul.f32 %v2350, %v5082
        %v5087 = vmul.f32 %v2351, %v5082
        %v5088 = vmul.f32 %v2352, %v5082
        %v5089 = vmul.f32 %v2353, %v5082
        %v5090 = vmul.f32 %v2354, %v5082
        %v5099 = vrot.slane %v5083, 1
        %v5100 = vrot.slane %v5087, 1
        %v5101 = vsel %vm2128, %v5099, %v5100
        %v5102 = vrot.slane %v5084, 1
        %v5103 = vrot.slane %v5088, 1
        %v5104 = vsel %vm2128, %v5102, %v5103
        %v5105 = vrot.slane %v5085, 1
        %v5106 = vrot.slane %v5089, 1
        %v5107 = vsel %vm2128, %v5105, %v5106
        %v5108 = vrot.slane %v5086, 1
        %v5109 = vrot.slane %v5090, 1
        %v5110 = vsel %vm2128, %v5108, %v5109
        %5111 = vrot.lane.b32.xlu0 %v5101, 90
        %v5112 = vpop.permute.xlu0 %5111
        %5113 = vrot.lane.b32.xlu0 %v5104, 90
        %v5114 = vpop.permute.xlu0 %5113
        %5115 = vrot.lane.b32.xlu0 %v5107, 90
        %v5116 = vpop.permute.xlu0 %5115
        %5117 = vrot.lane.b32.xlu0 %v5110, 90
        %v5118 = vpop.permute.xlu0 %5117
        %v5119 = vsel %vm1909, %v5112, %v5114
        %v5120 = vsel %vm1909, %v5114, %v5116
        %v5121 = vsel %vm1909, %v5116, %v5118
        %v5125 = vadd.f32 %v4749, %v5119
        %v5126 = vadd.f32 %v4750, %v5120
        %v5127 = vadd.f32 %v4751, %v5121
        %s5128 = sld [smem:[#allocation2 + $0x8b]]
        %v5129 = vstv %s5128
        %v5130 = vmul.f32 %v2347, %v5129
        %v5131 = vmul.f32 %v2348, %v5129
        %v5132 = vmul.f32 %v2349, %v5129
        %v5133 = vmul.f32 %v2350, %v5129
        %v5134 = vmul.f32 %v2351, %v5129
        %v5135 = vmul.f32 %v2352, %v5129
        %v5136 = vmul.f32 %v2353, %v5129
        %v5137 = vmul.f32 %v2354, %v5129
        %v5146 = vrot.slane %v5130, 1
        %v5147 = vrot.slane %v5134, 1
        %v5148 = vsel %vm2128, %v5146, %v5147
        %v5149 = vrot.slane %v5131, 1
        %v5150 = vrot.slane %v5135, 1
        %v5151 = vsel %vm2128, %v5149, %v5150
        %v5152 = vrot.slane %v5132, 1
        %v5153 = vrot.slane %v5136, 1
        %v5154 = vsel %vm2128, %v5152, %v5153
        %v5155 = vrot.slane %v5133, 1
        %v5156 = vrot.slane %v5137, 1
        %v5157 = vsel %vm2128, %v5155, %v5156
        %5158 = vrot.lane.b32.xlu0 %v5148, 90
        %v5159 = vpop.permute.xlu0 %5158
        %5160 = vrot.lane.b32.xlu0 %v5151, 90
        %v5161 = vpop.permute.xlu0 %5160
        %5162 = vrot.lane.b32.xlu0 %v5154, 90
        %v5163 = vpop.permute.xlu0 %5162
        %5164 = vrot.lane.b32.xlu0 %v5157, 90
        %v5165 = vpop.permute.xlu0 %5164
        %v5166 = vsel %vm1909, %v5159, %v5161
        %v5167 = vsel %vm1909, %v5161, %v5163
        %v5168 = vsel %vm1909, %v5163, %v5165
        %v5172 = vadd.f32 %v4796, %v5166
        %v5173 = vadd.f32 %v4797, %v5167
        %v5174 = vadd.f32 %v4798, %v5168
        %s5175 = sld [smem:[#allocation2 + $0x8c]]
        %v5176 = vstv %s5175
        %v5177 = vmul.f32 %v2347, %v5176
        %v5178 = vmul.f32 %v2348, %v5176
        %v5179 = vmul.f32 %v2349, %v5176
        %v5180 = vmul.f32 %v2350, %v5176
        %v5181 = vmul.f32 %v2351, %v5176
        %v5182 = vmul.f32 %v2352, %v5176
        %v5183 = vmul.f32 %v2353, %v5176
        %v5184 = vmul.f32 %v2354, %v5176
        %v5193 = vrot.slane %v5177, 1
        %v5194 = vrot.slane %v5181, 1
        %v5195 = vsel %vm2128, %v5193, %v5194
        %v5196 = vrot.slane %v5178, 1
        %v5197 = vrot.slane %v5182, 1
        %v5198 = vsel %vm2128, %v5196, %v5197
        %v5199 = vrot.slane %v5179, 1
        %v5200 = vrot.slane %v5183, 1
        %v5201 = vsel %vm2128, %v5199, %v5200
        %v5202 = vrot.slane %v5180, 1
        %v5203 = vrot.slane %v5184, 1
        %v5204 = vsel %vm2128, %v5202, %v5203
        %5205 = vrot.lane.b32.xlu0 %v5195, 90
        %v5206 = vpop.permute.xlu0 %5205
        %5207 = vrot.lane.b32.xlu0 %v5198, 90
        %v5208 = vpop.permute.xlu0 %5207
        %5209 = vrot.lane.b32.xlu0 %v5201, 90
        %v5210 = vpop.permute.xlu0 %5209
        %5211 = vrot.lane.b32.xlu0 %v5204, 90
        %v5212 = vpop.permute.xlu0 %5211
        %v5213 = vsel %vm1909, %v5206, %v5208
        %v5214 = vsel %vm1909, %v5208, %v5210
        %v5215 = vsel %vm1909, %v5210, %v5212
        %v5219 = vadd.f32 %v4843, %v5213
        %v5220 = vadd.f32 %v4844, %v5214
        %v5221 = vadd.f32 %v4845, %v5215
        %s5222 = sld [smem:[#allocation2 + $0x8d]]
        %v5223 = vstv %s5222
        %v5224 = vmul.f32 %v2347, %v5223
        %v5225 = vmul.f32 %v2348, %v5223
        %v5226 = vmul.f32 %v2349, %v5223
        %v5227 = vmul.f32 %v2350, %v5223
        %v5228 = vmul.f32 %v2351, %v5223
        %v5229 = vmul.f32 %v2352, %v5223
        %v5230 = vmul.f32 %v2353, %v5223
        %v5231 = vmul.f32 %v2354, %v5223
        %v5240 = vrot.slane %v5224, 1
        %v5241 = vrot.slane %v5228, 1
        %v5242 = vsel %vm2128, %v5240, %v5241
        %v5243 = vrot.slane %v5225, 1
        %v5244 = vrot.slane %v5229, 1
        %v5245 = vsel %vm2128, %v5243, %v5244
        %v5246 = vrot.slane %v5226, 1
        %v5247 = vrot.slane %v5230, 1
        %v5248 = vsel %vm2128, %v5246, %v5247
        %v5249 = vrot.slane %v5227, 1
        %v5250 = vrot.slane %v5231, 1
        %v5251 = vsel %vm2128, %v5249, %v5250
        %5252 = vrot.lane.b32.xlu0 %v5242, 90
        %v5253 = vpop.permute.xlu0 %5252
        %5254 = vrot.lane.b32.xlu0 %v5245, 90
        %v5255 = vpop.permute.xlu0 %5254
        %5256 = vrot.lane.b32.xlu0 %v5248, 90
        %v5257 = vpop.permute.xlu0 %5256
        %5258 = vrot.lane.b32.xlu0 %v5251, 90
        %v5259 = vpop.permute.xlu0 %5258
        %v5260 = vsel %vm1909, %v5253, %v5255
        %v5261 = vsel %vm1909, %v5255, %v5257
        %v5262 = vsel %vm1909, %v5257, %v5259
        %v5266 = vadd.f32 %v4890, %v5260
        %v5267 = vadd.f32 %v4891, %v5261
        %v5268 = vadd.f32 %v4892, %v5262
        %s5269 = sld [smem:[#allocation2 + $0x8e]]
        %v5270 = vstv %s5269
        %v5271 = vmul.f32 %v2347, %v5270
        %v5272 = vmul.f32 %v2348, %v5270
        %v5273 = vmul.f32 %v2349, %v5270
        %v5274 = vmul.f32 %v2350, %v5270
        %v5275 = vmul.f32 %v2351, %v5270
        %v5276 = vmul.f32 %v2352, %v5270
        %v5277 = vmul.f32 %v2353, %v5270
        %v5278 = vmul.f32 %v2354, %v5270
        %v5287 = vrot.slane %v5271, 1
        %v5288 = vrot.slane %v5275, 1
        %v5289 = vsel %vm2128, %v5287, %v5288
        %v5290 = vrot.slane %v5272, 1
        %v5291 = vrot.slane %v5276, 1
        %v5292 = vsel %vm2128, %v5290, %v5291
        %v5293 = vrot.slane %v5273, 1
        %v5294 = vrot.slane %v5277, 1
        %v5295 = vsel %vm2128, %v5293, %v5294
        %v5296 = vrot.slane %v5274, 1
        %v5297 = vrot.slane %v5278, 1
        %v5298 = vsel %vm2128, %v5296, %v5297
        %5299 = vrot.lane.b32.xlu0 %v5289, 90
        %v5300 = vpop.permute.xlu0 %5299
        %5301 = vrot.lane.b32.xlu0 %v5292, 90
        %v5302 = vpop.permute.xlu0 %5301
        %5303 = vrot.lane.b32.xlu0 %v5295, 90
        %v5304 = vpop.permute.xlu0 %5303
        %5305 = vrot.lane.b32.xlu0 %v5298, 90
        %v5306 = vpop.permute.xlu0 %5305
        %v5307 = vsel %vm1909, %v5300, %v5302
        %v5308 = vsel %vm1909, %v5302, %v5304
        %v5309 = vsel %vm1909, %v5304, %v5306
        %v5313 = vadd.f32 %v4937, %v5307
        %v5314 = vadd.f32 %v4938, %v5308
        %v5315 = vadd.f32 %v4939, %v5309
        %s5316 = sld [smem:[#allocation2 + $0x8f]]
        %v5317 = vstv %s5316
        %v5318 = vmul.f32 %v2347, %v5317
        %v5319 = vmul.f32 %v2348, %v5317
        %v5320 = vmul.f32 %v2349, %v5317
        %v5321 = vmul.f32 %v2350, %v5317
        %v5322 = vmul.f32 %v2351, %v5317
        %v5323 = vmul.f32 %v2352, %v5317
        %v5324 = vmul.f32 %v2353, %v5317
        %v5325 = vmul.f32 %v2354, %v5317
        %v5334 = vrot.slane %v5318, 1
        %v5335 = vrot.slane %v5322, 1
        %v5336 = vsel %vm2128, %v5334, %v5335
        %v5337 = vrot.slane %v5319, 1
        %v5338 = vrot.slane %v5323, 1
        %v5339 = vsel %vm2128, %v5337, %v5338
        %v5340 = vrot.slane %v5320, 1
        %v5341 = vrot.slane %v5324, 1
        %v5342 = vsel %vm2128, %v5340, %v5341
        %v5343 = vrot.slane %v5321, 1
        %v5344 = vrot.slane %v5325, 1
        %v5345 = vsel %vm2128, %v5343, %v5344
        %5346 = vrot.lane.b32.xlu0 %v5336, 90
        %v5347 = vpop.permute.xlu0 %5346
        %5348 = vrot.lane.b32.xlu0 %v5339, 90
        %v5349 = vpop.permute.xlu0 %5348
        %5350 = vrot.lane.b32.xlu0 %v5342, 90
        %v5351 = vpop.permute.xlu0 %5350
        %5352 = vrot.lane.b32.xlu0 %v5345, 90
        %v5353 = vpop.permute.xlu0 %5352
        %v5354 = vsel %vm1909, %v5347, %v5349
        %v5355 = vsel %vm1909, %v5349, %v5351
        %v5356 = vsel %vm1909, %v5351, %v5353
        %v5360 = vadd.f32 %v4984, %v5354
        %v5361 = vadd.f32 %v4985, %v5355
        %v5362 = vadd.f32 %v4986, %v5356
        %v5363 = vld [vmem:[%s271] sm:$0xfc]
        %v5364 = vld [vmem:[%s271 + $0x8] sm:$0xfc]
        %v5365 = vld [vmem:[%s271 + $0x10] sm:$0xfc]
        %v5366 = vld [vmem:[%s271 + $0x20] sm:$0x3]
        %v5367 = vld [vmem:[%s271 + $0x28] sm:$0x3]
        %v5368 = vld [vmem:[%s271 + $0x30] sm:$0x3]
        %s5369 = sld [smem:[#allocation2 + $0x90]]
        %v5370 = vstv %s5369
        %v5371 = vmul.f32 %v5363, %v5370
        %v5372 = vmul.f32 %v5364, %v5370
        %v5373 = vmul.f32 %v5365, %v5370
        %v5374 = vmul.f32 %v5366, %v5370
        %v5375 = vmul.f32 %v5367, %v5370
        %v5376 = vmul.f32 %v5368, %v5370
        %vm5383 = vcmask 1045504
        %v5384 = vrot.slane %v5371, 2
        %v5385 = vrot.slane %v5374, 2
        %v5386 = vsel %vm5383, %v5384, %v5385
        %v5387 = vrot.slane %v5372, 2
        %v5388 = vrot.slane %v5375, 2
        %v5389 = vsel %vm5383, %v5387, %v5388
        %v5390 = vrot.slane %v5373, 2
        %v5391 = vrot.slane %v5376, 2
        %v5392 = vsel %vm5383, %v5390, %v5391
        %v5396 = vadd.f32 %v5031, %v5386
        %v5397 = vadd.f32 %v5032, %v5389
        %v5398 = vadd.f32 %v5033, %v5392
        %s5399 = sld [smem:[#allocation2 + $0x91]]
        %v5400 = vstv %s5399
        %v5401 = vmul.f32 %v5363, %v5400
        %v5402 = vmul.f32 %v5364, %v5400
        %v5403 = vmul.f32 %v5365, %v5400
        %v5404 = vmul.f32 %v5366, %v5400
        %v5405 = vmul.f32 %v5367, %v5400
        %v5406 = vmul.f32 %v5368, %v5400
        %v5413 = vrot.slane %v5401, 2
        %v5414 = vrot.slane %v5404, 2
        %v5415 = vsel %vm5383, %v5413, %v5414
        %v5416 = vrot.slane %v5402, 2
        %v5417 = vrot.slane %v5405, 2
        %v5418 = vsel %vm5383, %v5416, %v5417
        %v5419 = vrot.slane %v5403, 2
        %v5420 = vrot.slane %v5406, 2
        %v5421 = vsel %vm5383, %v5419, %v5420
        %v5425 = vadd.f32 %v5078, %v5415
        %v5426 = vadd.f32 %v5079, %v5418
        %v5427 = vadd.f32 %v5080, %v5421
        %s5428 = sld [smem:[#allocation2 + $0x92]]
        %v5429 = vstv %s5428
        %v5430 = vmul.f32 %v5363, %v5429
        %v5431 = vmul.f32 %v5364, %v5429
        %v5432 = vmul.f32 %v5365, %v5429
        %v5433 = vmul.f32 %v5366, %v5429
        %v5434 = vmul.f32 %v5367, %v5429
        %v5435 = vmul.f32 %v5368, %v5429
        %v5442 = vrot.slane %v5430, 2
        %v5443 = vrot.slane %v5433, 2
        %v5444 = vsel %vm5383, %v5442, %v5443
        %v5445 = vrot.slane %v5431, 2
        %v5446 = vrot.slane %v5434, 2
        %v5447 = vsel %vm5383, %v5445, %v5446
        %v5448 = vrot.slane %v5432, 2
        %v5449 = vrot.slane %v5435, 2
        %v5450 = vsel %vm5383, %v5448, %v5449
        %v5454 = vadd.f32 %v5125, %v5444
        %v5455 = vadd.f32 %v5126, %v5447
        %v5456 = vadd.f32 %v5127, %v5450
        %s5457 = sld [smem:[#allocation2 + $0x93]]
        %v5458 = vstv %s5457
        %v5459 = vmul.f32 %v5363, %v5458
        %v5460 = vmul.f32 %v5364, %v5458
        %v5461 = vmul.f32 %v5365, %v5458
        %v5462 = vmul.f32 %v5366, %v5458
        %v5463 = vmul.f32 %v5367, %v5458
        %v5464 = vmul.f32 %v5368, %v5458
        %v5471 = vrot.slane %v5459, 2
        %v5472 = vrot.slane %v5462, 2
        %v5473 = vsel %vm5383, %v5471, %v5472
        %v5474 = vrot.slane %v5460, 2
        %v5475 = vrot.slane %v5463, 2
        %v5476 = vsel %vm5383, %v5474, %v5475
        %v5477 = vrot.slane %v5461, 2
        %v5478 = vrot.slane %v5464, 2
        %v5479 = vsel %vm5383, %v5477, %v5478
        %v5483 = vadd.f32 %v5172, %v5473
        %v5484 = vadd.f32 %v5173, %v5476
        %v5485 = vadd.f32 %v5174, %v5479
        %s5486 = sld [smem:[#allocation2 + $0x94]]
        %v5487 = vstv %s5486
        %v5488 = vmul.f32 %v5363, %v5487
        %v5489 = vmul.f32 %v5364, %v5487
        %v5490 = vmul.f32 %v5365, %v5487
        %v5491 = vmul.f32 %v5366, %v5487
        %v5492 = vmul.f32 %v5367, %v5487
        %v5493 = vmul.f32 %v5368, %v5487
        %v5500 = vrot.slane %v5488, 2
        %v5501 = vrot.slane %v5491, 2
        %v5502 = vsel %vm5383, %v5500, %v5501
        %v5503 = vrot.slane %v5489, 2
        %v5504 = vrot.slane %v5492, 2
        %v5505 = vsel %vm5383, %v5503, %v5504
        %v5506 = vrot.slane %v5490, 2
        %v5507 = vrot.slane %v5493, 2
        %v5508 = vsel %vm5383, %v5506, %v5507
        %v5512 = vadd.f32 %v5219, %v5502
        %v5513 = vadd.f32 %v5220, %v5505
        %v5514 = vadd.f32 %v5221, %v5508
        %s5515 = sld [smem:[#allocation2 + $0x95]]
        %v5516 = vstv %s5515
        %v5517 = vmul.f32 %v5363, %v5516
        %v5518 = vmul.f32 %v5364, %v5516
        %v5519 = vmul.f32 %v5365, %v5516
        %v5520 = vmul.f32 %v5366, %v5516
        %v5521 = vmul.f32 %v5367, %v5516
        %v5522 = vmul.f32 %v5368, %v5516
        %v5529 = vrot.slane %v5517, 2
        %v5530 = vrot.slane %v5520, 2
        %v5531 = vsel %vm5383, %v5529, %v5530
        %v5532 = vrot.slane %v5518, 2
        %v5533 = vrot.slane %v5521, 2
        %v5534 = vsel %vm5383, %v5532, %v5533
        %v5535 = vrot.slane %v5519, 2
        %v5536 = vrot.slane %v5522, 2
        %v5537 = vsel %vm5383, %v5535, %v5536
        %v5541 = vadd.f32 %v5266, %v5531
        %v5542 = vadd.f32 %v5267, %v5534
        %v5543 = vadd.f32 %v5268, %v5537
        %s5544 = sld [smem:[#allocation2 + $0x96]]
        %v5545 = vstv %s5544
        %v5546 = vmul.f32 %v5363, %v5545
        %v5547 = vmul.f32 %v5364, %v5545
        %v5548 = vmul.f32 %v5365, %v5545
        %v5549 = vmul.f32 %v5366, %v5545
        %v5550 = vmul.f32 %v5367, %v5545
        %v5551 = vmul.f32 %v5368, %v5545
        %v5558 = vrot.slane %v5546, 2
        %v5559 = vrot.slane %v5549, 2
        %v5560 = vsel %vm5383, %v5558, %v5559
        %v5561 = vrot.slane %v5547, 2
        %v5562 = vrot.slane %v5550, 2
        %v5563 = vsel %vm5383, %v5561, %v5562
        %v5564 = vrot.slane %v5548, 2
        %v5565 = vrot.slane %v5551, 2
        %v5566 = vsel %vm5383, %v5564, %v5565
        %v5570 = vadd.f32 %v5313, %v5560
        %v5571 = vadd.f32 %v5314, %v5563
        %v5572 = vadd.f32 %v5315, %v5566
        %s5573 = sld [smem:[#allocation2 + $0x97]]
        %v5574 = vstv %s5573
        %v5575 = vmul.f32 %v5363, %v5574
        %v5576 = vmul.f32 %v5364, %v5574
        %v5577 = vmul.f32 %v5365, %v5574
        %v5578 = vmul.f32 %v5366, %v5574
        %v5579 = vmul.f32 %v5367, %v5574
        %v5580 = vmul.f32 %v5368, %v5574
        %v5587 = vrot.slane %v5575, 2
        %v5588 = vrot.slane %v5578, 2
        %v5589 = vsel %vm5383, %v5587, %v5588
        %v5590 = vrot.slane %v5576, 2
        %v5591 = vrot.slane %v5579, 2
        %v5592 = vsel %vm5383, %v5590, %v5591
        %v5593 = vrot.slane %v5577, 2
        %v5594 = vrot.slane %v5580, 2
        %v5595 = vsel %vm5383, %v5593, %v5594
        %v5599 = vadd.f32 %v5360, %v5589
        %v5600 = vadd.f32 %v5361, %v5592
        %v5601 = vadd.f32 %v5362, %v5595
        %v5602 = vld [vmem:[%s271] sm:$0xfc]
        %v5603 = vld [vmem:[%s271 + $0x8] sm:$0xfc]
        %v5604 = vld [vmem:[%s271 + $0x10] sm:$0xfc]
        %v5605 = vld [vmem:[%s271 + $0x18] sm:$0xfc]
        %v5606 = vld [vmem:[%s271 + $0x20] sm:$0x3]
        %v5607 = vld [vmem:[%s271 + $0x28] sm:$0x3]
        %v5608 = vld [vmem:[%s271 + $0x30] sm:$0x3]
        %v5609 = vld [vmem:[%s271 + $0x38] sm:$0x3]
        %s5610 = sld [smem:[#allocation2 + $0x98]]
        %v5611 = vstv %s5610
        %v5612 = vmul.f32 %v5602, %v5611
        %v5613 = vmul.f32 %v5603, %v5611
        %v5614 = vmul.f32 %v5604, %v5611
        %v5615 = vmul.f32 %v5605, %v5611
        %v5616 = vmul.f32 %v5606, %v5611
        %v5617 = vmul.f32 %v5607, %v5611
        %v5618 = vmul.f32 %v5608, %v5611
        %v5619 = vmul.f32 %v5609, %v5611
        %v5628 = vrot.slane %v5612, 2
        %v5629 = vrot.slane %v5616, 2
        %v5630 = vsel %vm5383, %v5628, %v5629
        %v5631 = vrot.slane %v5613, 2
        %v5632 = vrot.slane %v5617, 2
        %v5633 = vsel %vm5383, %v5631, %v5632
        %v5634 = vrot.slane %v5614, 2
        %v5635 = vrot.slane %v5618, 2
        %v5636 = vsel %vm5383, %v5634, %v5635
        %v5637 = vrot.slane %v5615, 2
        %v5638 = vrot.slane %v5619, 2
        %v5639 = vsel %vm5383, %v5637, %v5638
        %5640 = vrot.lane.b32.xlu0 %v5630, 127
        %v5641 = vpop.permute.xlu0 %5640
        %5642 = vrot.lane.b32.xlu0 %v5633, 127
        %v5643 = vpop.permute.xlu0 %5642
        %5644 = vrot.lane.b32.xlu0 %v5636, 127
        %v5645 = vpop.permute.xlu0 %5644
        %5646 = vrot.lane.b32.xlu0 %v5639, 127
        %v5647 = vpop.permute.xlu0 %5646
        %v5648 = vsel %vm390, %v5641, %v5643
        %v5649 = vsel %vm390, %v5643, %v5645
        %v5650 = vsel %vm390, %v5645, %v5647
        %v5654 = vadd.f32 %v5396, %v5648
        %v5655 = vadd.f32 %v5397, %v5649
        %v5656 = vadd.f32 %v5398, %v5650
        %s5657 = sld [smem:[#allocation2 + $0x99]]
        %v5658 = vstv %s5657
        %v5659 = vmul.f32 %v5602, %v5658
        %v5660 = vmul.f32 %v5603, %v5658
        %v5661 = vmul.f32 %v5604, %v5658
        %v5662 = vmul.f32 %v5605, %v5658
        %v5663 = vmul.f32 %v5606, %v5658
        %v5664 = vmul.f32 %v5607, %v5658
        %v5665 = vmul.f32 %v5608, %v5658
        %v5666 = vmul.f32 %v5609, %v5658
        %v5675 = vrot.slane %v5659, 2
        %v5676 = vrot.slane %v5663, 2
        %v5677 = vsel %vm5383, %v5675, %v5676
        %v5678 = vrot.slane %v5660, 2
        %v5679 = vrot.slane %v5664, 2
        %v5680 = vsel %vm5383, %v5678, %v5679
        %v5681 = vrot.slane %v5661, 2
        %v5682 = vrot.slane %v5665, 2
        %v5683 = vsel %vm5383, %v5681, %v5682
        %v5684 = vrot.slane %v5662, 2
        %v5685 = vrot.slane %v5666, 2
        %v5686 = vsel %vm5383, %v5684, %v5685
        %5687 = vrot.lane.b32.xlu0 %v5677, 127
        %v5688 = vpop.permute.xlu0 %5687
        %5689 = vrot.lane.b32.xlu0 %v5680, 127
        %v5690 = vpop.permute.xlu0 %5689
        %5691 = vrot.lane.b32.xlu0 %v5683, 127
        %v5692 = vpop.permute.xlu0 %5691
        %5693 = vrot.lane.b32.xlu0 %v5686, 127
        %v5694 = vpop.permute.xlu0 %5693
        %v5695 = vsel %vm390, %v5688, %v5690
        %v5696 = vsel %vm390, %v5690, %v5692
        %v5697 = vsel %vm390, %v5692, %v5694
        %v5701 = vadd.f32 %v5425, %v5695
        %v5702 = vadd.f32 %v5426, %v5696
        %v5703 = vadd.f32 %v5427, %v5697
        %s5704 = sld [smem:[#allocation2 + $0x9a]]
        %v5705 = vstv %s5704
        %v5706 = vmul.f32 %v5602, %v5705
        %v5707 = vmul.f32 %v5603, %v5705
        %v5708 = vmul.f32 %v5604, %v5705
        %v5709 = vmul.f32 %v5605, %v5705
        %v5710 = vmul.f32 %v5606, %v5705
        %v5711 = vmul.f32 %v5607, %v5705
        %v5712 = vmul.f32 %v5608, %v5705
        %v5713 = vmul.f32 %v5609, %v5705
        %v5722 = vrot.slane %v5706, 2
        %v5723 = vrot.slane %v5710, 2
        %v5724 = vsel %vm5383, %v5722, %v5723
        %v5725 = vrot.slane %v5707, 2
        %v5726 = vrot.slane %v5711, 2
        %v5727 = vsel %vm5383, %v5725, %v5726
        %v5728 = vrot.slane %v5708, 2
        %v5729 = vrot.slane %v5712, 2
        %v5730 = vsel %vm5383, %v5728, %v5729
        %v5731 = vrot.slane %v5709, 2
        %v5732 = vrot.slane %v5713, 2
        %v5733 = vsel %vm5383, %v5731, %v5732
        %5734 = vrot.lane.b32.xlu0 %v5724, 127
        %v5735 = vpop.permute.xlu0 %5734
        %5736 = vrot.lane.b32.xlu0 %v5727, 127
        %v5737 = vpop.permute.xlu0 %5736
        %5738 = vrot.lane.b32.xlu0 %v5730, 127
        %v5739 = vpop.permute.xlu0 %5738
        %5740 = vrot.lane.b32.xlu0 %v5733, 127
        %v5741 = vpop.permute.xlu0 %5740
        %v5742 = vsel %vm390, %v5735, %v5737
        %v5743 = vsel %vm390, %v5737, %v5739
        %v5744 = vsel %vm390, %v5739, %v5741
        %v5748 = vadd.f32 %v5454, %v5742
        %v5749 = vadd.f32 %v5455, %v5743
        %v5750 = vadd.f32 %v5456, %v5744
        %s5751 = sld [smem:[#allocation2 + $0x9b]]
        %v5752 = vstv %s5751
        %v5753 = vmul.f32 %v5602, %v5752
        %v5754 = vmul.f32 %v5603, %v5752
        %v5755 = vmul.f32 %v5604, %v5752
        %v5756 = vmul.f32 %v5605, %v5752
        %v5757 = vmul.f32 %v5606, %v5752
        %v5758 = vmul.f32 %v5607, %v5752
        %v5759 = vmul.f32 %v5608, %v5752
        %v5760 = vmul.f32 %v5609, %v5752
        %v5769 = vrot.slane %v5753, 2
        %v5770 = vrot.slane %v5757, 2
        %v5771 = vsel %vm5383, %v5769, %v5770
        %v5772 = vrot.slane %v5754, 2
        %v5773 = vrot.slane %v5758, 2
        %v5774 = vsel %vm5383, %v5772, %v5773
        %v5775 = vrot.slane %v5755, 2
        %v5776 = vrot.slane %v5759, 2
        %v5777 = vsel %vm5383, %v5775, %v5776
        %v5778 = vrot.slane %v5756, 2
        %v5779 = vrot.slane %v5760, 2
        %v5780 = vsel %vm5383, %v5778, %v5779
        %5781 = vrot.lane.b32.xlu0 %v5771, 127
        %v5782 = vpop.permute.xlu0 %5781
        %5783 = vrot.lane.b32.xlu0 %v5774, 127
        %v5784 = vpop.permute.xlu0 %5783
        %5785 = vrot.lane.b32.xlu0 %v5777, 127
        %v5786 = vpop.permute.xlu0 %5785
        %5787 = vrot.lane.b32.xlu0 %v5780, 127
        %v5788 = vpop.permute.xlu0 %5787
        %v5789 = vsel %vm390, %v5782, %v5784
        %v5790 = vsel %vm390, %v5784, %v5786
        %v5791 = vsel %vm390, %v5786, %v5788
        %v5795 = vadd.f32 %v5483, %v5789
        %v5796 = vadd.f32 %v5484, %v5790
        %v5797 = vadd.f32 %v5485, %v5791
        %s5798 = sld [smem:[#allocation2 + $0x9c]]
        %v5799 = vstv %s5798
        %v5800 = vmul.f32 %v5602, %v5799
        %v5801 = vmul.f32 %v5603, %v5799
        %v5802 = vmul.f32 %v5604, %v5799
        %v5803 = vmul.f32 %v5605, %v5799
        %v5804 = vmul.f32 %v5606, %v5799
        %v5805 = vmul.f32 %v5607, %v5799
        %v5806 = vmul.f32 %v5608, %v5799
        %v5807 = vmul.f32 %v5609, %v5799
        %v5816 = vrot.slane %v5800, 2
        %v5817 = vrot.slane %v5804, 2
        %v5818 = vsel %vm5383, %v5816, %v5817
        %v5819 = vrot.slane %v5801, 2
        %v5820 = vrot.slane %v5805, 2
        %v5821 = vsel %vm5383, %v5819, %v5820
        %v5822 = vrot.slane %v5802, 2
        %v5823 = vrot.slane %v5806, 2
        %v5824 = vsel %vm5383, %v5822, %v5823
        %v5825 = vrot.slane %v5803, 2
        %v5826 = vrot.slane %v5807, 2
        %v5827 = vsel %vm5383, %v5825, %v5826
        %5828 = vrot.lane.b32.xlu0 %v5818, 127
        %v5829 = vpop.permute.xlu0 %5828
        %5830 = vrot.lane.b32.xlu0 %v5821, 127
        %v5831 = vpop.permute.xlu0 %5830
        %5832 = vrot.lane.b32.xlu0 %v5824, 127
        %v5833 = vpop.permute.xlu0 %5832
        %5834 = vrot.lane.b32.xlu0 %v5827, 127
        %v5835 = vpop.permute.xlu0 %5834
        %v5836 = vsel %vm390, %v5829, %v5831
        %v5837 = vsel %vm390, %v5831, %v5833
        %v5838 = vsel %vm390, %v5833, %v5835
        %v5842 = vadd.f32 %v5512, %v5836
        %v5843 = vadd.f32 %v5513, %v5837
        %v5844 = vadd.f32 %v5514, %v5838
        %s5845 = sld [smem:[#allocation2 + $0x9d]]
        %v5846 = vstv %s5845
        %v5847 = vmul.f32 %v5602, %v5846
        %v5848 = vmul.f32 %v5603, %v5846
        %v5849 = vmul.f32 %v5604, %v5846
        %v5850 = vmul.f32 %v5605, %v5846
        %v5851 = vmul.f32 %v5606, %v5846
        %v5852 = vmul.f32 %v5607, %v5846
        %v5853 = vmul.f32 %v5608, %v5846
        %v5854 = vmul.f32 %v5609, %v5846
        %v5863 = vrot.slane %v5847, 2
        %v5864 = vrot.slane %v5851, 2
        %v5865 = vsel %vm5383, %v5863, %v5864
        %v5866 = vrot.slane %v5848, 2
        %v5867 = vrot.slane %v5852, 2
        %v5868 = vsel %vm5383, %v5866, %v5867
        %v5869 = vrot.slane %v5849, 2
        %v5870 = vrot.slane %v5853, 2
        %v5871 = vsel %vm5383, %v5869, %v5870
        %v5872 = vrot.slane %v5850, 2
        %v5873 = vrot.slane %v5854, 2
        %v5874 = vsel %vm5383, %v5872, %v5873
        %5875 = vrot.lane.b32.xlu0 %v5865, 127
        %v5876 = vpop.permute.xlu0 %5875
        %5877 = vrot.lane.b32.xlu0 %v5868, 127
        %v5878 = vpop.permute.xlu0 %5877
        %5879 = vrot.lane.b32.xlu0 %v5871, 127
        %v5880 = vpop.permute.xlu0 %5879
        %5881 = vrot.lane.b32.xlu0 %v5874, 127
        %v5882 = vpop.permute.xlu0 %5881
        %v5883 = vsel %vm390, %v5876, %v5878
        %v5884 = vsel %vm390, %v5878, %v5880
        %v5885 = vsel %vm390, %v5880, %v5882
        %v5889 = vadd.f32 %v5541, %v5883
        %v5890 = vadd.f32 %v5542, %v5884
        %v5891 = vadd.f32 %v5543, %v5885
        %s5892 = sld [smem:[#allocation2 + $0x9e]]
        %v5893 = vstv %s5892
        %v5894 = vmul.f32 %v5602, %v5893
        %v5895 = vmul.f32 %v5603, %v5893
        %v5896 = vmul.f32 %v5604, %v5893
        %v5897 = vmul.f32 %v5605, %v5893
        %v5898 = vmul.f32 %v5606, %v5893
        %v5899 = vmul.f32 %v5607, %v5893
        %v5900 = vmul.f32 %v5608, %v5893
        %v5901 = vmul.f32 %v5609, %v5893
        %v5910 = vrot.slane %v5894, 2
        %v5911 = vrot.slane %v5898, 2
        %v5912 = vsel %vm5383, %v5910, %v5911
        %v5913 = vrot.slane %v5895, 2
        %v5914 = vrot.slane %v5899, 2
        %v5915 = vsel %vm5383, %v5913, %v5914
        %v5916 = vrot.slane %v5896, 2
        %v5917 = vrot.slane %v5900, 2
        %v5918 = vsel %vm5383, %v5916, %v5917
        %v5919 = vrot.slane %v5897, 2
        %v5920 = vrot.slane %v5901, 2
        %v5921 = vsel %vm5383, %v5919, %v5920
        %5922 = vrot.lane.b32.xlu0 %v5912, 127
        %v5923 = vpop.permute.xlu0 %5922
        %5924 = vrot.lane.b32.xlu0 %v5915, 127
        %v5925 = vpop.permute.xlu0 %5924
        %5926 = vrot.lane.b32.xlu0 %v5918, 127
        %v5927 = vpop.permute.xlu0 %5926
        %5928 = vrot.lane.b32.xlu0 %v5921, 127
        %v5929 = vpop.permute.xlu0 %5928
        %v5930 = vsel %vm390, %v5923, %v5925
        %v5931 = vsel %vm390, %v5925, %v5927
        %v5932 = vsel %vm390, %v5927, %v5929
        %v5936 = vadd.f32 %v5570, %v5930
        %v5937 = vadd.f32 %v5571, %v5931
        %v5938 = vadd.f32 %v5572, %v5932
        %s5939 = sld [smem:[#allocation2 + $0x9f]]
        %v5940 = vstv %s5939
        %v5941 = vmul.f32 %v5602, %v5940
        %v5942 = vmul.f32 %v5603, %v5940
        %v5943 = vmul.f32 %v5604, %v5940
        %v5944 = vmul.f32 %v5605, %v5940
        %v5945 = vmul.f32 %v5606, %v5940
        %v5946 = vmul.f32 %v5607, %v5940
        %v5947 = vmul.f32 %v5608, %v5940
        %v5948 = vmul.f32 %v5609, %v5940
        %v5957 = vrot.slane %v5941, 2
        %v5958 = vrot.slane %v5945, 2
        %v5959 = vsel %vm5383, %v5957, %v5958
        %v5960 = vrot.slane %v5942, 2
        %v5961 = vrot.slane %v5946, 2
        %v5962 = vsel %vm5383, %v5960, %v5961
        %v5963 = vrot.slane %v5943, 2
        %v5964 = vrot.slane %v5947, 2
        %v5965 = vsel %vm5383, %v5963, %v5964
        %v5966 = vrot.slane %v5944, 2
        %v5967 = vrot.slane %v5948, 2
        %v5968 = vsel %vm5383, %v5966, %v5967
        %5969 = vrot.lane.b32.xlu0 %v5959, 127
        %v5970 = vpop.permute.xlu0 %5969
        %5971 = vrot.lane.b32.xlu0 %v5962, 127
        %v5972 = vpop.permute.xlu0 %5971
        %5973 = vrot.lane.b32.xlu0 %v5965, 127
        %v5974 = vpop.permute.xlu0 %5973
        %5975 = vrot.lane.b32.xlu0 %v5968, 127
        %v5976 = vpop.permute.xlu0 %5975
        %v5977 = vsel %vm390, %v5970, %v5972
        %v5978 = vsel %vm390, %v5972, %v5974
        %v5979 = vsel %vm390, %v5974, %v5976
        %v5983 = vadd.f32 %v5599, %v5977
        %v5984 = vadd.f32 %v5600, %v5978
        %v5985 = vadd.f32 %v5601, %v5979
        %s5986 = sld [smem:[#allocation2 + $0xa0]]
        %v5987 = vstv %s5986
        %v5988 = vmul.f32 %v5602, %v5987
        %v5989 = vmul.f32 %v5603, %v5987
        %v5990 = vmul.f32 %v5604, %v5987
        %v5991 = vmul.f32 %v5605, %v5987
        %v5992 = vmul.f32 %v5606, %v5987
        %v5993 = vmul.f32 %v5607, %v5987
        %v5994 = vmul.f32 %v5608, %v5987
        %v5995 = vmul.f32 %v5609, %v5987
        %v6004 = vrot.slane %v5988, 2
        %v6005 = vrot.slane %v5992, 2
        %v6006 = vsel %vm5383, %v6004, %v6005
        %v6007 = vrot.slane %v5989, 2
        %v6008 = vrot.slane %v5993, 2
        %v6009 = vsel %vm5383, %v6007, %v6008
        %v6010 = vrot.slane %v5990, 2
        %v6011 = vrot.slane %v5994, 2
        %v6012 = vsel %vm5383, %v6010, %v6011
        %v6013 = vrot.slane %v5991, 2
        %v6014 = vrot.slane %v5995, 2
        %v6015 = vsel %vm5383, %v6013, %v6014
        %6016 = vrot.lane.b32.xlu0 %v6006, 126
        %v6017 = vpop.permute.xlu0 %6016
        %6018 = vrot.lane.b32.xlu0 %v6009, 126
        %v6019 = vpop.permute.xlu0 %6018
        %6020 = vrot.lane.b32.xlu0 %v6012, 126
        %v6021 = vpop.permute.xlu0 %6020
        %6022 = vrot.lane.b32.xlu0 %v6015, 126
        %v6023 = vpop.permute.xlu0 %6022
        %v6024 = vsel %vm607, %v6017, %v6019
        %v6025 = vsel %vm607, %v6019, %v6021
        %v6026 = vsel %vm607, %v6021, %v6023
        %v6030 = vadd.f32 %v5654, %v6024
        %v6031 = vadd.f32 %v5655, %v6025
        %v6032 = vadd.f32 %v5656, %v6026
        %s6033 = sld [smem:[#allocation2 + $0xa1]]
        %v6034 = vstv %s6033
        %v6035 = vmul.f32 %v5602, %v6034
        %v6036 = vmul.f32 %v5603, %v6034
        %v6037 = vmul.f32 %v5604, %v6034
        %v6038 = vmul.f32 %v5605, %v6034
        %v6039 = vmul.f32 %v5606, %v6034
        %v6040 = vmul.f32 %v5607, %v6034
        %v6041 = vmul.f32 %v5608, %v6034
        %v6042 = vmul.f32 %v5609, %v6034
        %v6051 = vrot.slane %v6035, 2
        %v6052 = vrot.slane %v6039, 2
        %v6053 = vsel %vm5383, %v6051, %v6052
        %v6054 = vrot.slane %v6036, 2
        %v6055 = vrot.slane %v6040, 2
        %v6056 = vsel %vm5383, %v6054, %v6055
        %v6057 = vrot.slane %v6037, 2
        %v6058 = vrot.slane %v6041, 2
        %v6059 = vsel %vm5383, %v6057, %v6058
        %v6060 = vrot.slane %v6038, 2
        %v6061 = vrot.slane %v6042, 2
        %v6062 = vsel %vm5383, %v6060, %v6061
        %6063 = vrot.lane.b32.xlu0 %v6053, 126
        %v6064 = vpop.permute.xlu0 %6063
        %6065 = vrot.lane.b32.xlu0 %v6056, 126
        %v6066 = vpop.permute.xlu0 %6065
        %6067 = vrot.lane.b32.xlu0 %v6059, 126
        %v6068 = vpop.permute.xlu0 %6067
        %6069 = vrot.lane.b32.xlu0 %v6062, 126
        %v6070 = vpop.permute.xlu0 %6069
        %v6071 = vsel %vm607, %v6064, %v6066
        %v6072 = vsel %vm607, %v6066, %v6068
        %v6073 = vsel %vm607, %v6068, %v6070
        %v6077 = vadd.f32 %v5701, %v6071
        %v6078 = vadd.f32 %v5702, %v6072
        %v6079 = vadd.f32 %v5703, %v6073
        %s6080 = sld [smem:[#allocation2 + $0xa2]]
        %v6081 = vstv %s6080
        %v6082 = vmul.f32 %v5602, %v6081
        %v6083 = vmul.f32 %v5603, %v6081
        %v6084 = vmul.f32 %v5604, %v6081
        %v6085 = vmul.f32 %v5605, %v6081
        %v6086 = vmul.f32 %v5606, %v6081
        %v6087 = vmul.f32 %v5607, %v6081
        %v6088 = vmul.f32 %v5608, %v6081
        %v6089 = vmul.f32 %v5609, %v6081
        %v6098 = vrot.slane %v6082, 2
        %v6099 = vrot.slane %v6086, 2
        %v6100 = vsel %vm5383, %v6098, %v6099
        %v6101 = vrot.slane %v6083, 2
        %v6102 = vrot.slane %v6087, 2
        %v6103 = vsel %vm5383, %v6101, %v6102
        %v6104 = vrot.slane %v6084, 2
        %v6105 = vrot.slane %v6088, 2
        %v6106 = vsel %vm5383, %v6104, %v6105
        %v6107 = vrot.slane %v6085, 2
        %v6108 = vrot.slane %v6089, 2
        %v6109 = vsel %vm5383, %v6107, %v6108
        %6110 = vrot.lane.b32.xlu0 %v6100, 126
        %v6111 = vpop.permute.xlu0 %6110
        %6112 = vrot.lane.b32.xlu0 %v6103, 126
        %v6113 = vpop.permute.xlu0 %6112
        %6114 = vrot.lane.b32.xlu0 %v6106, 126
        %v6115 = vpop.permute.xlu0 %6114
        %6116 = vrot.lane.b32.xlu0 %v6109, 126
        %v6117 = vpop.permute.xlu0 %6116
        %v6118 = vsel %vm607, %v6111, %v6113
        %v6119 = vsel %vm607, %v6113, %v6115
        %v6120 = vsel %vm607, %v6115, %v6117
        %v6124 = vadd.f32 %v5748, %v6118
        %v6125 = vadd.f32 %v5749, %v6119
        %v6126 = vadd.f32 %v5750, %v6120
        %s6127 = sld [smem:[#allocation2 + $0xa3]]
        %v6128 = vstv %s6127
        %v6129 = vmul.f32 %v5602, %v6128
        %v6130 = vmul.f32 %v5603, %v6128
        %v6131 = vmul.f32 %v5604, %v6128
        %v6132 = vmul.f32 %v5605, %v6128
        %v6133 = vmul.f32 %v5606, %v6128
        %v6134 = vmul.f32 %v5607, %v6128
        %v6135 = vmul.f32 %v5608, %v6128
        %v6136 = vmul.f32 %v5609, %v6128
        %v6145 = vrot.slane %v6129, 2
        %v6146 = vrot.slane %v6133, 2
        %v6147 = vsel %vm5383, %v6145, %v6146
        %v6148 = vrot.slane %v6130, 2
        %v6149 = vrot.slane %v6134, 2
        %v6150 = vsel %vm5383, %v6148, %v6149
        %v6151 = vrot.slane %v6131, 2
        %v6152 = vrot.slane %v6135, 2
        %v6153 = vsel %vm5383, %v6151, %v6152
        %v6154 = vrot.slane %v6132, 2
        %v6155 = vrot.slane %v6136, 2
        %v6156 = vsel %vm5383, %v6154, %v6155
        %6157 = vrot.lane.b32.xlu0 %v6147, 126
        %v6158 = vpop.permute.xlu0 %6157
        %6159 = vrot.lane.b32.xlu0 %v6150, 126
        %v6160 = vpop.permute.xlu0 %6159
        %6161 = vrot.lane.b32.xlu0 %v6153, 126
        %v6162 = vpop.permute.xlu0 %6161
        %6163 = vrot.lane.b32.xlu0 %v6156, 126
        %v6164 = vpop.permute.xlu0 %6163
        %v6165 = vsel %vm607, %v6158, %v6160
        %v6166 = vsel %vm607, %v6160, %v6162
        %v6167 = vsel %vm607, %v6162, %v6164
        %v6171 = vadd.f32 %v5795, %v6165
        %v6172 = vadd.f32 %v5796, %v6166
        %v6173 = vadd.f32 %v5797, %v6167
        %s6174 = sld [smem:[#allocation2 + $0xa4]]
        %v6175 = vstv %s6174
        %v6176 = vmul.f32 %v5602, %v6175
        %v6177 = vmul.f32 %v5603, %v6175
        %v6178 = vmul.f32 %v5604, %v6175
        %v6179 = vmul.f32 %v5605, %v6175
        %v6180 = vmul.f32 %v5606, %v6175
        %v6181 = vmul.f32 %v5607, %v6175
        %v6182 = vmul.f32 %v5608, %v6175
        %v6183 = vmul.f32 %v5609, %v6175
        %v6192 = vrot.slane %v6176, 2
        %v6193 = vrot.slane %v6180, 2
        %v6194 = vsel %vm5383, %v6192, %v6193
        %v6195 = vrot.slane %v6177, 2
        %v6196 = vrot.slane %v6181, 2
        %v6197 = vsel %vm5383, %v6195, %v6196
        %v6198 = vrot.slane %v6178, 2
        %v6199 = vrot.slane %v6182, 2
        %v6200 = vsel %vm5383, %v6198, %v6199
        %v6201 = vrot.slane %v6179, 2
        %v6202 = vrot.slane %v6183, 2
        %v6203 = vsel %vm5383, %v6201, %v6202
        %6204 = vrot.lane.b32.xlu0 %v6194, 126
        %v6205 = vpop.permute.xlu0 %6204
        %6206 = vrot.lane.b32.xlu0 %v6197, 126
        %v6207 = vpop.permute.xlu0 %6206
        %6208 = vrot.lane.b32.xlu0 %v6200, 126
        %v6209 = vpop.permute.xlu0 %6208
        %6210 = vrot.lane.b32.xlu0 %v6203, 126
        %v6211 = vpop.permute.xlu0 %6210
        %v6212 = vsel %vm607, %v6205, %v6207
        %v6213 = vsel %vm607, %v6207, %v6209
        %v6214 = vsel %vm607, %v6209, %v6211
        %v6218 = vadd.f32 %v5842, %v6212
        %v6219 = vadd.f32 %v5843, %v6213
        %v6220 = vadd.f32 %v5844, %v6214
        %s6221 = sld [smem:[#allocation2 + $0xa5]]
        %v6222 = vstv %s6221
        %v6223 = vmul.f32 %v5602, %v6222
        %v6224 = vmul.f32 %v5603, %v6222
        %v6225 = vmul.f32 %v5604, %v6222
        %v6226 = vmul.f32 %v5605, %v6222
        %v6227 = vmul.f32 %v5606, %v6222
        %v6228 = vmul.f32 %v5607, %v6222
        %v6229 = vmul.f32 %v5608, %v6222
        %v6230 = vmul.f32 %v5609, %v6222
        %v6239 = vrot.slane %v6223, 2
        %v6240 = vrot.slane %v6227, 2
        %v6241 = vsel %vm5383, %v6239, %v6240
        %v6242 = vrot.slane %v6224, 2
        %v6243 = vrot.slane %v6228, 2
        %v6244 = vsel %vm5383, %v6242, %v6243
        %v6245 = vrot.slane %v6225, 2
        %v6246 = vrot.slane %v6229, 2
        %v6247 = vsel %vm5383, %v6245, %v6246
        %v6248 = vrot.slane %v6226, 2
        %v6249 = vrot.slane %v6230, 2
        %v6250 = vsel %vm5383, %v6248, %v6249
        %6251 = vrot.lane.b32.xlu0 %v6241, 126
        %v6252 = vpop.permute.xlu0 %6251
        %6253 = vrot.lane.b32.xlu0 %v6244, 126
        %v6254 = vpop.permute.xlu0 %6253
        %6255 = vrot.lane.b32.xlu0 %v6247, 126
        %v6256 = vpop.permute.xlu0 %6255
        %6257 = vrot.lane.b32.xlu0 %v6250, 126
        %v6258 = vpop.permute.xlu0 %6257
        %v6259 = vsel %vm607, %v6252, %v6254
        %v6260 = vsel %vm607, %v6254, %v6256
        %v6261 = vsel %vm607, %v6256, %v6258
        %v6265 = vadd.f32 %v5889, %v6259
        %v6266 = vadd.f32 %v5890, %v6260
        %v6267 = vadd.f32 %v5891, %v6261
        %s6268 = sld [smem:[#allocation2 + $0xa6]]
        %v6269 = vstv %s6268
        %v6270 = vmul.f32 %v5602, %v6269
        %v6271 = vmul.f32 %v5603, %v6269
        %v6272 = vmul.f32 %v5604, %v6269
        %v6273 = vmul.f32 %v5605, %v6269
        %v6274 = vmul.f32 %v5606, %v6269
        %v6275 = vmul.f32 %v5607, %v6269
        %v6276 = vmul.f32 %v5608, %v6269
        %v6277 = vmul.f32 %v5609, %v6269
        %v6286 = vrot.slane %v6270, 2
        %v6287 = vrot.slane %v6274, 2
        %v6288 = vsel %vm5383, %v6286, %v6287
        %v6289 = vrot.slane %v6271, 2
        %v6290 = vrot.slane %v6275, 2
        %v6291 = vsel %vm5383, %v6289, %v6290
        %v6292 = vrot.slane %v6272, 2
        %v6293 = vrot.slane %v6276, 2
        %v6294 = vsel %vm5383, %v6292, %v6293
        %v6295 = vrot.slane %v6273, 2
        %v6296 = vrot.slane %v6277, 2
        %v6297 = vsel %vm5383, %v6295, %v6296
        %6298 = vrot.lane.b32.xlu0 %v6288, 126
        %v6299 = vpop.permute.xlu0 %6298
        %6300 = vrot.lane.b32.xlu0 %v6291, 126
        %v6301 = vpop.permute.xlu0 %6300
        %6302 = vrot.lane.b32.xlu0 %v6294, 126
        %v6303 = vpop.permute.xlu0 %6302
        %6304 = vrot.lane.b32.xlu0 %v6297, 126
        %v6305 = vpop.permute.xlu0 %6304
        %v6306 = vsel %vm607, %v6299, %v6301
        %v6307 = vsel %vm607, %v6301, %v6303
        %v6308 = vsel %vm607, %v6303, %v6305
        %v6312 = vadd.f32 %v5936, %v6306
        %v6313 = vadd.f32 %v5937, %v6307
        %v6314 = vadd.f32 %v5938, %v6308
        %s6315 = sld [smem:[#allocation2 + $0xa7]]
        %v6316 = vstv %s6315
        %v6317 = vmul.f32 %v5602, %v6316
        %v6318 = vmul.f32 %v5603, %v6316
        %v6319 = vmul.f32 %v5604, %v6316
        %v6320 = vmul.f32 %v5605, %v6316
        %v6321 = vmul.f32 %v5606, %v6316
        %v6322 = vmul.f32 %v5607, %v6316
        %v6323 = vmul.f32 %v5608, %v6316
        %v6324 = vmul.f32 %v5609, %v6316
        %v6333 = vrot.slane %v6317, 2
        %v6334 = vrot.slane %v6321, 2
        %v6335 = vsel %vm5383, %v6333, %v6334
        %v6336 = vrot.slane %v6318, 2
        %v6337 = vrot.slane %v6322, 2
        %v6338 = vsel %vm5383, %v6336, %v6337
        %v6339 = vrot.slane %v6319, 2
        %v6340 = vrot.slane %v6323, 2
        %v6341 = vsel %vm5383, %v6339, %v6340
        %v6342 = vrot.slane %v6320, 2
        %v6343 = vrot.slane %v6324, 2
        %v6344 = vsel %vm5383, %v6342, %v6343
        %6345 = vrot.lane.b32.xlu0 %v6335, 126
        %v6346 = vpop.permute.xlu0 %6345
        %6347 = vrot.lane.b32.xlu0 %v6338, 126
        %v6348 = vpop.permute.xlu0 %6347
        %6349 = vrot.lane.b32.xlu0 %v6341, 126
        %v6350 = vpop.permute.xlu0 %6349
        %6351 = vrot.lane.b32.xlu0 %v6344, 126
        %v6352 = vpop.permute.xlu0 %6351
        %v6353 = vsel %vm607, %v6346, %v6348
        %v6354 = vsel %vm607, %v6348, %v6350
        %v6355 = vsel %vm607, %v6350, %v6352
        %v6359 = vadd.f32 %v5983, %v6353
        %v6360 = vadd.f32 %v5984, %v6354
        %v6361 = vadd.f32 %v5985, %v6355
        %s6362 = sld [smem:[#allocation2 + $0xa8]]
        %v6363 = vstv %s6362
        %v6364 = vmul.f32 %v5602, %v6363
        %v6365 = vmul.f32 %v5603, %v6363
        %v6366 = vmul.f32 %v5604, %v6363
        %v6367 = vmul.f32 %v5605, %v6363
        %v6368 = vmul.f32 %v5606, %v6363
        %v6369 = vmul.f32 %v5607, %v6363
        %v6370 = vmul.f32 %v5608, %v6363
        %v6371 = vmul.f32 %v5609, %v6363
        %v6380 = vrot.slane %v6364, 2
        %v6381 = vrot.slane %v6368, 2
        %v6382 = vsel %vm5383, %v6380, %v6381
        %v6383 = vrot.slane %v6365, 2
        %v6384 = vrot.slane %v6369, 2
        %v6385 = vsel %vm5383, %v6383, %v6384
        %v6386 = vrot.slane %v6366, 2
        %v6387 = vrot.slane %v6370, 2
        %v6388 = vsel %vm5383, %v6386, %v6387
        %v6389 = vrot.slane %v6367, 2
        %v6390 = vrot.slane %v6371, 2
        %v6391 = vsel %vm5383, %v6389, %v6390
        %6392 = vrot.lane.b32.xlu0 %v6382, 110
        %v6393 = vpop.permute.xlu0 %6392
        %6394 = vrot.lane.b32.xlu0 %v6385, 110
        %v6395 = vpop.permute.xlu0 %6394
        %6396 = vrot.lane.b32.xlu0 %v6388, 110
        %v6397 = vpop.permute.xlu0 %6396
        %6398 = vrot.lane.b32.xlu0 %v6391, 110
        %v6399 = vpop.permute.xlu0 %6398
        %v6400 = vsel %vm824, %v6393, %v6395
        %v6401 = vsel %vm824, %v6395, %v6397
        %v6402 = vsel %vm824, %v6397, %v6399
        %v6406 = vadd.f32 %v6030, %v6400
        %v6407 = vadd.f32 %v6031, %v6401
        %v6408 = vadd.f32 %v6032, %v6402
        %s6409 = sld [smem:[#allocation2 + $0xa9]]
        %v6410 = vstv %s6409
        %v6411 = vmul.f32 %v5602, %v6410
        %v6412 = vmul.f32 %v5603, %v6410
        %v6413 = vmul.f32 %v5604, %v6410
        %v6414 = vmul.f32 %v5605, %v6410
        %v6415 = vmul.f32 %v5606, %v6410
        %v6416 = vmul.f32 %v5607, %v6410
        %v6417 = vmul.f32 %v5608, %v6410
        %v6418 = vmul.f32 %v5609, %v6410
        %v6427 = vrot.slane %v6411, 2
        %v6428 = vrot.slane %v6415, 2
        %v6429 = vsel %vm5383, %v6427, %v6428
        %v6430 = vrot.slane %v6412, 2
        %v6431 = vrot.slane %v6416, 2
        %v6432 = vsel %vm5383, %v6430, %v6431
        %v6433 = vrot.slane %v6413, 2
        %v6434 = vrot.slane %v6417, 2
        %v6435 = vsel %vm5383, %v6433, %v6434
        %v6436 = vrot.slane %v6414, 2
        %v6437 = vrot.slane %v6418, 2
        %v6438 = vsel %vm5383, %v6436, %v6437
        %6439 = vrot.lane.b32.xlu0 %v6429, 110
        %v6440 = vpop.permute.xlu0 %6439
        %6441 = vrot.lane.b32.xlu0 %v6432, 110
        %v6442 = vpop.permute.xlu0 %6441
        %6443 = vrot.lane.b32.xlu0 %v6435, 110
        %v6444 = vpop.permute.xlu0 %6443
        %6445 = vrot.lane.b32.xlu0 %v6438, 110
        %v6446 = vpop.permute.xlu0 %6445
        %v6447 = vsel %vm824, %v6440, %v6442
        %v6448 = vsel %vm824, %v6442, %v6444
        %v6449 = vsel %vm824, %v6444, %v6446
        %v6453 = vadd.f32 %v6077, %v6447
        %v6454 = vadd.f32 %v6078, %v6448
        %v6455 = vadd.f32 %v6079, %v6449
        %s6456 = sld [smem:[#allocation2 + $0xaa]]
        %v6457 = vstv %s6456
        %v6458 = vmul.f32 %v5602, %v6457
        %v6459 = vmul.f32 %v5603, %v6457
        %v6460 = vmul.f32 %v5604, %v6457
        %v6461 = vmul.f32 %v5605, %v6457
        %v6462 = vmul.f32 %v5606, %v6457
        %v6463 = vmul.f32 %v5607, %v6457
        %v6464 = vmul.f32 %v5608, %v6457
        %v6465 = vmul.f32 %v5609, %v6457
        %v6474 = vrot.slane %v6458, 2
        %v6475 = vrot.slane %v6462, 2
        %v6476 = vsel %vm5383, %v6474, %v6475
        %v6477 = vrot.slane %v6459, 2
        %v6478 = vrot.slane %v6463, 2
        %v6479 = vsel %vm5383, %v6477, %v6478
        %v6480 = vrot.slane %v6460, 2
        %v6481 = vrot.slane %v6464, 2
        %v6482 = vsel %vm5383, %v6480, %v6481
        %v6483 = vrot.slane %v6461, 2
        %v6484 = vrot.slane %v6465, 2
        %v6485 = vsel %vm5383, %v6483, %v6484
        %6486 = vrot.lane.b32.xlu0 %v6476, 110
        %v6487 = vpop.permute.xlu0 %6486
        %6488 = vrot.lane.b32.xlu0 %v6479, 110
        %v6489 = vpop.permute.xlu0 %6488
        %6490 = vrot.lane.b32.xlu0 %v6482, 110
        %v6491 = vpop.permute.xlu0 %6490
        %6492 = vrot.lane.b32.xlu0 %v6485, 110
        %v6493 = vpop.permute.xlu0 %6492
        %v6494 = vsel %vm824, %v6487, %v6489
        %v6495 = vsel %vm824, %v6489, %v6491
        %v6496 = vsel %vm824, %v6491, %v6493
        %v6500 = vadd.f32 %v6124, %v6494
        %v6501 = vadd.f32 %v6125, %v6495
        %v6502 = vadd.f32 %v6126, %v6496
        %s6503 = sld [smem:[#allocation2 + $0xab]]
        %v6504 = vstv %s6503
        %v6505 = vmul.f32 %v5602, %v6504
        %v6506 = vmul.f32 %v5603, %v6504
        %v6507 = vmul.f32 %v5604, %v6504
        %v6508 = vmul.f32 %v5605, %v6504
        %v6509 = vmul.f32 %v5606, %v6504
        %v6510 = vmul.f32 %v5607, %v6504
        %v6511 = vmul.f32 %v5608, %v6504
        %v6512 = vmul.f32 %v5609, %v6504
        %v6521 = vrot.slane %v6505, 2
        %v6522 = vrot.slane %v6509, 2
        %v6523 = vsel %vm5383, %v6521, %v6522
        %v6524 = vrot.slane %v6506, 2
        %v6525 = vrot.slane %v6510, 2
        %v6526 = vsel %vm5383, %v6524, %v6525
        %v6527 = vrot.slane %v6507, 2
        %v6528 = vrot.slane %v6511, 2
        %v6529 = vsel %vm5383, %v6527, %v6528
        %v6530 = vrot.slane %v6508, 2
        %v6531 = vrot.slane %v6512, 2
        %v6532 = vsel %vm5383, %v6530, %v6531
        %6533 = vrot.lane.b32.xlu0 %v6523, 110
        %v6534 = vpop.permute.xlu0 %6533
        %6535 = vrot.lane.b32.xlu0 %v6526, 110
        %v6536 = vpop.permute.xlu0 %6535
        %6537 = vrot.lane.b32.xlu0 %v6529, 110
        %v6538 = vpop.permute.xlu0 %6537
        %6539 = vrot.lane.b32.xlu0 %v6532, 110
        %v6540 = vpop.permute.xlu0 %6539
        %v6541 = vsel %vm824, %v6534, %v6536
        %v6542 = vsel %vm824, %v6536, %v6538
        %v6543 = vsel %vm824, %v6538, %v6540
        %v6547 = vadd.f32 %v6171, %v6541
        %v6548 = vadd.f32 %v6172, %v6542
        %v6549 = vadd.f32 %v6173, %v6543
        %s6550 = sld [smem:[#allocation2 + $0xac]]
        %v6551 = vstv %s6550
        %v6552 = vmul.f32 %v5602, %v6551
        %v6553 = vmul.f32 %v5603, %v6551
        %v6554 = vmul.f32 %v5604, %v6551
        %v6555 = vmul.f32 %v5605, %v6551
        %v6556 = vmul.f32 %v5606, %v6551
        %v6557 = vmul.f32 %v5607, %v6551
        %v6558 = vmul.f32 %v5608, %v6551
        %v6559 = vmul.f32 %v5609, %v6551
        %v6568 = vrot.slane %v6552, 2
        %v6569 = vrot.slane %v6556, 2
        %v6570 = vsel %vm5383, %v6568, %v6569
        %v6571 = vrot.slane %v6553, 2
        %v6572 = vrot.slane %v6557, 2
        %v6573 = vsel %vm5383, %v6571, %v6572
        %v6574 = vrot.slane %v6554, 2
        %v6575 = vrot.slane %v6558, 2
        %v6576 = vsel %vm5383, %v6574, %v6575
        %v6577 = vrot.slane %v6555, 2
        %v6578 = vrot.slane %v6559, 2
        %v6579 = vsel %vm5383, %v6577, %v6578
        %6580 = vrot.lane.b32.xlu0 %v6570, 110
        %v6581 = vpop.permute.xlu0 %6580
        %6582 = vrot.lane.b32.xlu0 %v6573, 110
        %v6583 = vpop.permute.xlu0 %6582
        %6584 = vrot.lane.b32.xlu0 %v6576, 110
        %v6585 = vpop.permute.xlu0 %6584
        %6586 = vrot.lane.b32.xlu0 %v6579, 110
        %v6587 = vpop.permute.xlu0 %6586
        %v6588 = vsel %vm824, %v6581, %v6583
        %v6589 = vsel %vm824, %v6583, %v6585
        %v6590 = vsel %vm824, %v6585, %v6587
        %v6594 = vadd.f32 %v6218, %v6588
        %v6595 = vadd.f32 %v6219, %v6589
        %v6596 = vadd.f32 %v6220, %v6590
        %s6597 = sld [smem:[#allocation2 + $0xad]]
        %v6598 = vstv %s6597
        %v6599 = vmul.f32 %v5602, %v6598
        %v6600 = vmul.f32 %v5603, %v6598
        %v6601 = vmul.f32 %v5604, %v6598
        %v6602 = vmul.f32 %v5605, %v6598
        %v6603 = vmul.f32 %v5606, %v6598
        %v6604 = vmul.f32 %v5607, %v6598
        %v6605 = vmul.f32 %v5608, %v6598
        %v6606 = vmul.f32 %v5609, %v6598
        %v6615 = vrot.slane %v6599, 2
        %v6616 = vrot.slane %v6603, 2
        %v6617 = vsel %vm5383, %v6615, %v6616
        %v6618 = vrot.slane %v6600, 2
        %v6619 = vrot.slane %v6604, 2
        %v6620 = vsel %vm5383, %v6618, %v6619
        %v6621 = vrot.slane %v6601, 2
        %v6622 = vrot.slane %v6605, 2
        %v6623 = vsel %vm5383, %v6621, %v6622
        %v6624 = vrot.slane %v6602, 2
        %v6625 = vrot.slane %v6606, 2
        %v6626 = vsel %vm5383, %v6624, %v6625
        %6627 = vrot.lane.b32.xlu0 %v6617, 110
        %v6628 = vpop.permute.xlu0 %6627
        %6629 = vrot.lane.b32.xlu0 %v6620, 110
        %v6630 = vpop.permute.xlu0 %6629
        %6631 = vrot.lane.b32.xlu0 %v6623, 110
        %v6632 = vpop.permute.xlu0 %6631
        %6633 = vrot.lane.b32.xlu0 %v6626, 110
        %v6634 = vpop.permute.xlu0 %6633
        %v6635 = vsel %vm824, %v6628, %v6630
        %v6636 = vsel %vm824, %v6630, %v6632
        %v6637 = vsel %vm824, %v6632, %v6634
        %v6641 = vadd.f32 %v6265, %v6635
        %v6642 = vadd.f32 %v6266, %v6636
        %v6643 = vadd.f32 %v6267, %v6637
        %s6644 = sld [smem:[#allocation2 + $0xae]]
        %v6645 = vstv %s6644
        %v6646 = vmul.f32 %v5602, %v6645
        %v6647 = vmul.f32 %v5603, %v6645
        %v6648 = vmul.f32 %v5604, %v6645
        %v6649 = vmul.f32 %v5605, %v6645
        %v6650 = vmul.f32 %v5606, %v6645
        %v6651 = vmul.f32 %v5607, %v6645
        %v6652 = vmul.f32 %v5608, %v6645
        %v6653 = vmul.f32 %v5609, %v6645
        %v6662 = vrot.slane %v6646, 2
        %v6663 = vrot.slane %v6650, 2
        %v6664 = vsel %vm5383, %v6662, %v6663
        %v6665 = vrot.slane %v6647, 2
        %v6666 = vrot.slane %v6651, 2
        %v6667 = vsel %vm5383, %v6665, %v6666
        %v6668 = vrot.slane %v6648, 2
        %v6669 = vrot.slane %v6652, 2
        %v6670 = vsel %vm5383, %v6668, %v6669
        %v6671 = vrot.slane %v6649, 2
        %v6672 = vrot.slane %v6653, 2
        %v6673 = vsel %vm5383, %v6671, %v6672
        %6674 = vrot.lane.b32.xlu0 %v6664, 110
        %v6675 = vpop.permute.xlu0 %6674
        %6676 = vrot.lane.b32.xlu0 %v6667, 110
        %v6677 = vpop.permute.xlu0 %6676
        %6678 = vrot.lane.b32.xlu0 %v6670, 110
        %v6679 = vpop.permute.xlu0 %6678
        %6680 = vrot.lane.b32.xlu0 %v6673, 110
        %v6681 = vpop.permute.xlu0 %6680
        %v6682 = vsel %vm824, %v6675, %v6677
        %v6683 = vsel %vm824, %v6677, %v6679
        %v6684 = vsel %vm824, %v6679, %v6681
        %v6688 = vadd.f32 %v6312, %v6682
        %v6689 = vadd.f32 %v6313, %v6683
        %v6690 = vadd.f32 %v6314, %v6684
        %s6691 = sld [smem:[#allocation2 + $0xaf]]
        %v6692 = vstv %s6691
        %v6693 = vmul.f32 %v5602, %v6692
        %v6694 = vmul.f32 %v5603, %v6692
        %v6695 = vmul.f32 %v5604, %v6692
        %v6696 = vmul.f32 %v5605, %v6692
        %v6697 = vmul.f32 %v5606, %v6692
        %v6698 = vmul.f32 %v5607, %v6692
        %v6699 = vmul.f32 %v5608, %v6692
        %v6700 = vmul.f32 %v5609, %v6692
        %v6709 = vrot.slane %v6693, 2
        %v6710 = vrot.slane %v6697, 2
        %v6711 = vsel %vm5383, %v6709, %v6710
        %v6712 = vrot.slane %v6694, 2
        %v6713 = vrot.slane %v6698, 2
        %v6714 = vsel %vm5383, %v6712, %v6713
        %v6715 = vrot.slane %v6695, 2
        %v6716 = vrot.slane %v6699, 2
        %v6717 = vsel %vm5383, %v6715, %v6716
        %v6718 = vrot.slane %v6696, 2
        %v6719 = vrot.slane %v6700, 2
        %v6720 = vsel %vm5383, %v6718, %v6719
        %6721 = vrot.lane.b32.xlu0 %v6711, 110
        %v6722 = vpop.permute.xlu0 %6721
        %6723 = vrot.lane.b32.xlu0 %v6714, 110
        %v6724 = vpop.permute.xlu0 %6723
        %6725 = vrot.lane.b32.xlu0 %v6717, 110
        %v6726 = vpop.permute.xlu0 %6725
        %6727 = vrot.lane.b32.xlu0 %v6720, 110
        %v6728 = vpop.permute.xlu0 %6727
        %v6729 = vsel %vm824, %v6722, %v6724
        %v6730 = vsel %vm824, %v6724, %v6726
        %v6731 = vsel %vm824, %v6726, %v6728
        %v6735 = vadd.f32 %v6359, %v6729
        %v6736 = vadd.f32 %v6360, %v6730
        %v6737 = vadd.f32 %v6361, %v6731
        %s6738 = sld [smem:[#allocation2 + $0xb0]]
        %v6739 = vstv %s6738
        %v6740 = vmul.f32 %v5602, %v6739
        %v6741 = vmul.f32 %v5603, %v6739
        %v6742 = vmul.f32 %v5604, %v6739
        %v6743 = vmul.f32 %v5605, %v6739
        %v6744 = vmul.f32 %v5606, %v6739
        %v6745 = vmul.f32 %v5607, %v6739
        %v6746 = vmul.f32 %v5608, %v6739
        %v6747 = vmul.f32 %v5609, %v6739
        %v6756 = vrot.slane %v6740, 2
        %v6757 = vrot.slane %v6744, 2
        %v6758 = vsel %vm5383, %v6756, %v6757
        %v6759 = vrot.slane %v6741, 2
        %v6760 = vrot.slane %v6745, 2
        %v6761 = vsel %vm5383, %v6759, %v6760
        %v6762 = vrot.slane %v6742, 2
        %v6763 = vrot.slane %v6746, 2
        %v6764 = vsel %vm5383, %v6762, %v6763
        %v6765 = vrot.slane %v6743, 2
        %v6766 = vrot.slane %v6747, 2
        %v6767 = vsel %vm5383, %v6765, %v6766
        %6768 = vrot.lane.b32.xlu0 %v6758, 109
        %v6769 = vpop.permute.xlu0 %6768
        %6770 = vrot.lane.b32.xlu0 %v6761, 109
        %v6771 = vpop.permute.xlu0 %6770
        %6772 = vrot.lane.b32.xlu0 %v6764, 109
        %v6773 = vpop.permute.xlu0 %6772
        %6774 = vrot.lane.b32.xlu0 %v6767, 109
        %v6775 = vpop.permute.xlu0 %6774
        %v6776 = vsel %vm1041, %v6769, %v6771
        %v6777 = vsel %vm1041, %v6771, %v6773
        %v6778 = vsel %vm1041, %v6773, %v6775
        %v6782 = vadd.f32 %v6406, %v6776
        %v6783 = vadd.f32 %v6407, %v6777
        %v6784 = vadd.f32 %v6408, %v6778
        %s6785 = sld [smem:[#allocation2 + $0xb1]]
        %v6786 = vstv %s6785
        %v6787 = vmul.f32 %v5602, %v6786
        %v6788 = vmul.f32 %v5603, %v6786
        %v6789 = vmul.f32 %v5604, %v6786
        %v6790 = vmul.f32 %v5605, %v6786
        %v6791 = vmul.f32 %v5606, %v6786
        %v6792 = vmul.f32 %v5607, %v6786
        %v6793 = vmul.f32 %v5608, %v6786
        %v6794 = vmul.f32 %v5609, %v6786
        %v6803 = vrot.slane %v6787, 2
        %v6804 = vrot.slane %v6791, 2
        %v6805 = vsel %vm5383, %v6803, %v6804
        %v6806 = vrot.slane %v6788, 2
        %v6807 = vrot.slane %v6792, 2
        %v6808 = vsel %vm5383, %v6806, %v6807
        %v6809 = vrot.slane %v6789, 2
        %v6810 = vrot.slane %v6793, 2
        %v6811 = vsel %vm5383, %v6809, %v6810
        %v6812 = vrot.slane %v6790, 2
        %v6813 = vrot.slane %v6794, 2
        %v6814 = vsel %vm5383, %v6812, %v6813
        %6815 = vrot.lane.b32.xlu0 %v6805, 109
        %v6816 = vpop.permute.xlu0 %6815
        %6817 = vrot.lane.b32.xlu0 %v6808, 109
        %v6818 = vpop.permute.xlu0 %6817
        %6819 = vrot.lane.b32.xlu0 %v6811, 109
        %v6820 = vpop.permute.xlu0 %6819
        %6821 = vrot.lane.b32.xlu0 %v6814, 109
        %v6822 = vpop.permute.xlu0 %6821
        %v6823 = vsel %vm1041, %v6816, %v6818
        %v6824 = vsel %vm1041, %v6818, %v6820
        %v6825 = vsel %vm1041, %v6820, %v6822
        %v6829 = vadd.f32 %v6453, %v6823
        %v6830 = vadd.f32 %v6454, %v6824
        %v6831 = vadd.f32 %v6455, %v6825
        %s6832 = sld [smem:[#allocation2 + $0xb2]]
        %v6833 = vstv %s6832
        %v6834 = vmul.f32 %v5602, %v6833
        %v6835 = vmul.f32 %v5603, %v6833
        %v6836 = vmul.f32 %v5604, %v6833
        %v6837 = vmul.f32 %v5605, %v6833
        %v6838 = vmul.f32 %v5606, %v6833
        %v6839 = vmul.f32 %v5607, %v6833
        %v6840 = vmul.f32 %v5608, %v6833
        %v6841 = vmul.f32 %v5609, %v6833
        %v6850 = vrot.slane %v6834, 2
        %v6851 = vrot.slane %v6838, 2
        %v6852 = vsel %vm5383, %v6850, %v6851
        %v6853 = vrot.slane %v6835, 2
        %v6854 = vrot.slane %v6839, 2
        %v6855 = vsel %vm5383, %v6853, %v6854
        %v6856 = vrot.slane %v6836, 2
        %v6857 = vrot.slane %v6840, 2
        %v6858 = vsel %vm5383, %v6856, %v6857
        %v6859 = vrot.slane %v6837, 2
        %v6860 = vrot.slane %v6841, 2
        %v6861 = vsel %vm5383, %v6859, %v6860
        %6862 = vrot.lane.b32.xlu0 %v6852, 109
        %v6863 = vpop.permute.xlu0 %6862
        %6864 = vrot.lane.b32.xlu0 %v6855, 109
        %v6865 = vpop.permute.xlu0 %6864
        %6866 = vrot.lane.b32.xlu0 %v6858, 109
        %v6867 = vpop.permute.xlu0 %6866
        %6868 = vrot.lane.b32.xlu0 %v6861, 109
        %v6869 = vpop.permute.xlu0 %6868
        %v6870 = vsel %vm1041, %v6863, %v6865
        %v6871 = vsel %vm1041, %v6865, %v6867
        %v6872 = vsel %vm1041, %v6867, %v6869
        %v6876 = vadd.f32 %v6500, %v6870
        %v6877 = vadd.f32 %v6501, %v6871
        %v6878 = vadd.f32 %v6502, %v6872
        %s6879 = sld [smem:[#allocation2 + $0xb3]]
        %v6880 = vstv %s6879
        %v6881 = vmul.f32 %v5602, %v6880
        %v6882 = vmul.f32 %v5603, %v6880
        %v6883 = vmul.f32 %v5604, %v6880
        %v6884 = vmul.f32 %v5605, %v6880
        %v6885 = vmul.f32 %v5606, %v6880
        %v6886 = vmul.f32 %v5607, %v6880
        %v6887 = vmul.f32 %v5608, %v6880
        %v6888 = vmul.f32 %v5609, %v6880
        %v6897 = vrot.slane %v6881, 2
        %v6898 = vrot.slane %v6885, 2
        %v6899 = vsel %vm5383, %v6897, %v6898
        %v6900 = vrot.slane %v6882, 2
        %v6901 = vrot.slane %v6886, 2
        %v6902 = vsel %vm5383, %v6900, %v6901
        %v6903 = vrot.slane %v6883, 2
        %v6904 = vrot.slane %v6887, 2
        %v6905 = vsel %vm5383, %v6903, %v6904
        %v6906 = vrot.slane %v6884, 2
        %v6907 = vrot.slane %v6888, 2
        %v6908 = vsel %vm5383, %v6906, %v6907
        %6909 = vrot.lane.b32.xlu0 %v6899, 109
        %v6910 = vpop.permute.xlu0 %6909
        %6911 = vrot.lane.b32.xlu0 %v6902, 109
        %v6912 = vpop.permute.xlu0 %6911
        %6913 = vrot.lane.b32.xlu0 %v6905, 109
        %v6914 = vpop.permute.xlu0 %6913
        %6915 = vrot.lane.b32.xlu0 %v6908, 109
        %v6916 = vpop.permute.xlu0 %6915
        %v6917 = vsel %vm1041, %v6910, %v6912
        %v6918 = vsel %vm1041, %v6912, %v6914
        %v6919 = vsel %vm1041, %v6914, %v6916
        %v6923 = vadd.f32 %v6547, %v6917
        %v6924 = vadd.f32 %v6548, %v6918
        %v6925 = vadd.f32 %v6549, %v6919
        %s6926 = sld [smem:[#allocation2 + $0xb4]]
        %v6927 = vstv %s6926
        %v6928 = vmul.f32 %v5602, %v6927
        %v6929 = vmul.f32 %v5603, %v6927
        %v6930 = vmul.f32 %v5604, %v6927
        %v6931 = vmul.f32 %v5605, %v6927
        %v6932 = vmul.f32 %v5606, %v6927
        %v6933 = vmul.f32 %v5607, %v6927
        %v6934 = vmul.f32 %v5608, %v6927
        %v6935 = vmul.f32 %v5609, %v6927
        %v6944 = vrot.slane %v6928, 2
        %v6945 = vrot.slane %v6932, 2
        %v6946 = vsel %vm5383, %v6944, %v6945
        %v6947 = vrot.slane %v6929, 2
        %v6948 = vrot.slane %v6933, 2
        %v6949 = vsel %vm5383, %v6947, %v6948
        %v6950 = vrot.slane %v6930, 2
        %v6951 = vrot.slane %v6934, 2
        %v6952 = vsel %vm5383, %v6950, %v6951
        %v6953 = vrot.slane %v6931, 2
        %v6954 = vrot.slane %v6935, 2
        %v6955 = vsel %vm5383, %v6953, %v6954
        %6956 = vrot.lane.b32.xlu0 %v6946, 109
        %v6957 = vpop.permute.xlu0 %6956
        %6958 = vrot.lane.b32.xlu0 %v6949, 109
        %v6959 = vpop.permute.xlu0 %6958
        %6960 = vrot.lane.b32.xlu0 %v6952, 109
        %v6961 = vpop.permute.xlu0 %6960
        %6962 = vrot.lane.b32.xlu0 %v6955, 109
        %v6963 = vpop.permute.xlu0 %6962
        %v6964 = vsel %vm1041, %v6957, %v6959
        %v6965 = vsel %vm1041, %v6959, %v6961
        %v6966 = vsel %vm1041, %v6961, %v6963
        %v6970 = vadd.f32 %v6594, %v6964
        %v6971 = vadd.f32 %v6595, %v6965
        %v6972 = vadd.f32 %v6596, %v6966
        %s6973 = sld [smem:[#allocation2 + $0xb5]]
        %v6974 = vstv %s6973
        %v6975 = vmul.f32 %v5602, %v6974
        %v6976 = vmul.f32 %v5603, %v6974
        %v6977 = vmul.f32 %v5604, %v6974
        %v6978 = vmul.f32 %v5605, %v6974
        %v6979 = vmul.f32 %v5606, %v6974
        %v6980 = vmul.f32 %v5607, %v6974
        %v6981 = vmul.f32 %v5608, %v6974
        %v6982 = vmul.f32 %v5609, %v6974
        %v6991 = vrot.slane %v6975, 2
        %v6992 = vrot.slane %v6979, 2
        %v6993 = vsel %vm5383, %v6991, %v6992
        %v6994 = vrot.slane %v6976, 2
        %v6995 = vrot.slane %v6980, 2
        %v6996 = vsel %vm5383, %v6994, %v6995
        %v6997 = vrot.slane %v6977, 2
        %v6998 = vrot.slane %v6981, 2
        %v6999 = vsel %vm5383, %v6997, %v6998
        %v7000 = vrot.slane %v6978, 2
        %v7001 = vrot.slane %v6982, 2
        %v7002 = vsel %vm5383, %v7000, %v7001
        %7003 = vrot.lane.b32.xlu0 %v6993, 109
        %v7004 = vpop.permute.xlu0 %7003
        %7005 = vrot.lane.b32.xlu0 %v6996, 109
        %v7006 = vpop.permute.xlu0 %7005
        %7007 = vrot.lane.b32.xlu0 %v6999, 109
        %v7008 = vpop.permute.xlu0 %7007
        %7009 = vrot.lane.b32.xlu0 %v7002, 109
        %v7010 = vpop.permute.xlu0 %7009
        %v7011 = vsel %vm1041, %v7004, %v7006
        %v7012 = vsel %vm1041, %v7006, %v7008
        %v7013 = vsel %vm1041, %v7008, %v7010
        %v7017 = vadd.f32 %v6641, %v7011
        %v7018 = vadd.f32 %v6642, %v7012
        %v7019 = vadd.f32 %v6643, %v7013
        %s7020 = sld [smem:[#allocation2 + $0xb6]]
        %v7021 = vstv %s7020
        %v7022 = vmul.f32 %v5602, %v7021
        %v7023 = vmul.f32 %v5603, %v7021
        %v7024 = vmul.f32 %v5604, %v7021
        %v7025 = vmul.f32 %v5605, %v7021
        %v7026 = vmul.f32 %v5606, %v7021
        %v7027 = vmul.f32 %v5607, %v7021
        %v7028 = vmul.f32 %v5608, %v7021
        %v7029 = vmul.f32 %v5609, %v7021
        %v7038 = vrot.slane %v7022, 2
        %v7039 = vrot.slane %v7026, 2
        %v7040 = vsel %vm5383, %v7038, %v7039
        %v7041 = vrot.slane %v7023, 2
        %v7042 = vrot.slane %v7027, 2
        %v7043 = vsel %vm5383, %v7041, %v7042
        %v7044 = vrot.slane %v7024, 2
        %v7045 = vrot.slane %v7028, 2
        %v7046 = vsel %vm5383, %v7044, %v7045
        %v7047 = vrot.slane %v7025, 2
        %v7048 = vrot.slane %v7029, 2
        %v7049 = vsel %vm5383, %v7047, %v7048
        %7050 = vrot.lane.b32.xlu0 %v7040, 109
        %v7051 = vpop.permute.xlu0 %7050
        %7052 = vrot.lane.b32.xlu0 %v7043, 109
        %v7053 = vpop.permute.xlu0 %7052
        %7054 = vrot.lane.b32.xlu0 %v7046, 109
        %v7055 = vpop.permute.xlu0 %7054
        %7056 = vrot.lane.b32.xlu0 %v7049, 109
        %v7057 = vpop.permute.xlu0 %7056
        %v7058 = vsel %vm1041, %v7051, %v7053
        %v7059 = vsel %vm1041, %v7053, %v7055
        %v7060 = vsel %vm1041, %v7055, %v7057
        %v7064 = vadd.f32 %v6688, %v7058
        %v7065 = vadd.f32 %v6689, %v7059
        %v7066 = vadd.f32 %v6690, %v7060
        %s7067 = sld [smem:[#allocation2 + $0xb7]]
        %v7068 = vstv %s7067
        %v7069 = vmul.f32 %v5602, %v7068
        %v7070 = vmul.f32 %v5603, %v7068
        %v7071 = vmul.f32 %v5604, %v7068
        %v7072 = vmul.f32 %v5605, %v7068
        %v7073 = vmul.f32 %v5606, %v7068
        %v7074 = vmul.f32 %v5607, %v7068
        %v7075 = vmul.f32 %v5608, %v7068
        %v7076 = vmul.f32 %v5609, %v7068
        %v7085 = vrot.slane %v7069, 2
        %v7086 = vrot.slane %v7073, 2
        %v7087 = vsel %vm5383, %v7085, %v7086
        %v7088 = vrot.slane %v7070, 2
        %v7089 = vrot.slane %v7074, 2
        %v7090 = vsel %vm5383, %v7088, %v7089
        %v7091 = vrot.slane %v7071, 2
        %v7092 = vrot.slane %v7075, 2
        %v7093 = vsel %vm5383, %v7091, %v7092
        %v7094 = vrot.slane %v7072, 2
        %v7095 = vrot.slane %v7076, 2
        %v7096 = vsel %vm5383, %v7094, %v7095
        %7097 = vrot.lane.b32.xlu0 %v7087, 109
        %v7098 = vpop.permute.xlu0 %7097
        %7099 = vrot.lane.b32.xlu0 %v7090, 109
        %v7100 = vpop.permute.xlu0 %7099
        %7101 = vrot.lane.b32.xlu0 %v7093, 109
        %v7102 = vpop.permute.xlu0 %7101
        %7103 = vrot.lane.b32.xlu0 %v7096, 109
        %v7104 = vpop.permute.xlu0 %7103
        %v7105 = vsel %vm1041, %v7098, %v7100
        %v7106 = vsel %vm1041, %v7100, %v7102
        %v7107 = vsel %vm1041, %v7102, %v7104
        %v7111 = vadd.f32 %v6735, %v7105
        %v7112 = vadd.f32 %v6736, %v7106
        %v7113 = vadd.f32 %v6737, %v7107
        %s7114 = sld [smem:[#allocation2 + $0xb8]]
        %v7115 = vstv %s7114
        %v7116 = vmul.f32 %v5602, %v7115
        %v7117 = vmul.f32 %v5603, %v7115
        %v7118 = vmul.f32 %v5604, %v7115
        %v7119 = vmul.f32 %v5605, %v7115
        %v7120 = vmul.f32 %v5606, %v7115
        %v7121 = vmul.f32 %v5607, %v7115
        %v7122 = vmul.f32 %v5608, %v7115
        %v7123 = vmul.f32 %v5609, %v7115
        %v7132 = vrot.slane %v7116, 2
        %v7133 = vrot.slane %v7120, 2
        %v7134 = vsel %vm5383, %v7132, %v7133
        %v7135 = vrot.slane %v7117, 2
        %v7136 = vrot.slane %v7121, 2
        %v7137 = vsel %vm5383, %v7135, %v7136
        %v7138 = vrot.slane %v7118, 2
        %v7139 = vrot.slane %v7122, 2
        %v7140 = vsel %vm5383, %v7138, %v7139
        %v7141 = vrot.slane %v7119, 2
        %v7142 = vrot.slane %v7123, 2
        %v7143 = vsel %vm5383, %v7141, %v7142
        %7144 = vrot.lane.b32.xlu0 %v7134, 108
        %v7145 = vpop.permute.xlu0 %7144
        %7146 = vrot.lane.b32.xlu0 %v7137, 108
        %v7147 = vpop.permute.xlu0 %7146
        %7148 = vrot.lane.b32.xlu0 %v7140, 108
        %v7149 = vpop.permute.xlu0 %7148
        %7150 = vrot.lane.b32.xlu0 %v7143, 108
        %v7151 = vpop.permute.xlu0 %7150
        %v7152 = vsel %vm1258, %v7145, %v7147
        %v7153 = vsel %vm1258, %v7147, %v7149
        %v7154 = vsel %vm1258, %v7149, %v7151
        %v7158 = vadd.f32 %v6782, %v7152
        %v7159 = vadd.f32 %v6783, %v7153
        %v7160 = vadd.f32 %v6784, %v7154
        %s7161 = sld [smem:[#allocation2 + $0xb9]]
        %v7162 = vstv %s7161
        %v7163 = vmul.f32 %v5602, %v7162
        %v7164 = vmul.f32 %v5603, %v7162
        %v7165 = vmul.f32 %v5604, %v7162
        %v7166 = vmul.f32 %v5605, %v7162
        %v7167 = vmul.f32 %v5606, %v7162
        %v7168 = vmul.f32 %v5607, %v7162
        %v7169 = vmul.f32 %v5608, %v7162
        %v7170 = vmul.f32 %v5609, %v7162
        %v7179 = vrot.slane %v7163, 2
        %v7180 = vrot.slane %v7167, 2
        %v7181 = vsel %vm5383, %v7179, %v7180
        %v7182 = vrot.slane %v7164, 2
        %v7183 = vrot.slane %v7168, 2
        %v7184 = vsel %vm5383, %v7182, %v7183
        %v7185 = vrot.slane %v7165, 2
        %v7186 = vrot.slane %v7169, 2
        %v7187 = vsel %vm5383, %v7185, %v7186
        %v7188 = vrot.slane %v7166, 2
        %v7189 = vrot.slane %v7170, 2
        %v7190 = vsel %vm5383, %v7188, %v7189
        %7191 = vrot.lane.b32.xlu0 %v7181, 108
        %v7192 = vpop.permute.xlu0 %7191
        %7193 = vrot.lane.b32.xlu0 %v7184, 108
        %v7194 = vpop.permute.xlu0 %7193
        %7195 = vrot.lane.b32.xlu0 %v7187, 108
        %v7196 = vpop.permute.xlu0 %7195
        %7197 = vrot.lane.b32.xlu0 %v7190, 108
        %v7198 = vpop.permute.xlu0 %7197
        %v7199 = vsel %vm1258, %v7192, %v7194
        %v7200 = vsel %vm1258, %v7194, %v7196
        %v7201 = vsel %vm1258, %v7196, %v7198
        %v7205 = vadd.f32 %v6829, %v7199
        %v7206 = vadd.f32 %v6830, %v7200
        %v7207 = vadd.f32 %v6831, %v7201
        %s7208 = sld [smem:[#allocation2 + $0xba]]
        %v7209 = vstv %s7208
        %v7210 = vmul.f32 %v5602, %v7209
        %v7211 = vmul.f32 %v5603, %v7209
        %v7212 = vmul.f32 %v5604, %v7209
        %v7213 = vmul.f32 %v5605, %v7209
        %v7214 = vmul.f32 %v5606, %v7209
        %v7215 = vmul.f32 %v5607, %v7209
        %v7216 = vmul.f32 %v5608, %v7209
        %v7217 = vmul.f32 %v5609, %v7209
        %v7226 = vrot.slane %v7210, 2
        %v7227 = vrot.slane %v7214, 2
        %v7228 = vsel %vm5383, %v7226, %v7227
        %v7229 = vrot.slane %v7211, 2
        %v7230 = vrot.slane %v7215, 2
        %v7231 = vsel %vm5383, %v7229, %v7230
        %v7232 = vrot.slane %v7212, 2
        %v7233 = vrot.slane %v7216, 2
        %v7234 = vsel %vm5383, %v7232, %v7233
        %v7235 = vrot.slane %v7213, 2
        %v7236 = vrot.slane %v7217, 2
        %v7237 = vsel %vm5383, %v7235, %v7236
        %7238 = vrot.lane.b32.xlu0 %v7228, 108
        %v7239 = vpop.permute.xlu0 %7238
        %7240 = vrot.lane.b32.xlu0 %v7231, 108
        %v7241 = vpop.permute.xlu0 %7240
        %7242 = vrot.lane.b32.xlu0 %v7234, 108
        %v7243 = vpop.permute.xlu0 %7242
        %7244 = vrot.lane.b32.xlu0 %v7237, 108
        %v7245 = vpop.permute.xlu0 %7244
        %v7246 = vsel %vm1258, %v7239, %v7241
        %v7247 = vsel %vm1258, %v7241, %v7243
        %v7248 = vsel %vm1258, %v7243, %v7245
        %v7252 = vadd.f32 %v6876, %v7246
        %v7253 = vadd.f32 %v6877, %v7247
        %v7254 = vadd.f32 %v6878, %v7248
        %s7255 = sld [smem:[#allocation2 + $0xbb]]
        %v7256 = vstv %s7255
        %v7257 = vmul.f32 %v5602, %v7256
        %v7258 = vmul.f32 %v5603, %v7256
        %v7259 = vmul.f32 %v5604, %v7256
        %v7260 = vmul.f32 %v5605, %v7256
        %v7261 = vmul.f32 %v5606, %v7256
        %v7262 = vmul.f32 %v5607, %v7256
        %v7263 = vmul.f32 %v5608, %v7256
        %v7264 = vmul.f32 %v5609, %v7256
        %v7273 = vrot.slane %v7257, 2
        %v7274 = vrot.slane %v7261, 2
        %v7275 = vsel %vm5383, %v7273, %v7274
        %v7276 = vrot.slane %v7258, 2
        %v7277 = vrot.slane %v7262, 2
        %v7278 = vsel %vm5383, %v7276, %v7277
        %v7279 = vrot.slane %v7259, 2
        %v7280 = vrot.slane %v7263, 2
        %v7281 = vsel %vm5383, %v7279, %v7280
        %v7282 = vrot.slane %v7260, 2
        %v7283 = vrot.slane %v7264, 2
        %v7284 = vsel %vm5383, %v7282, %v7283
        %7285 = vrot.lane.b32.xlu0 %v7275, 108
        %v7286 = vpop.permute.xlu0 %7285
        %7287 = vrot.lane.b32.xlu0 %v7278, 108
        %v7288 = vpop.permute.xlu0 %7287
        %7289 = vrot.lane.b32.xlu0 %v7281, 108
        %v7290 = vpop.permute.xlu0 %7289
        %7291 = vrot.lane.b32.xlu0 %v7284, 108
        %v7292 = vpop.permute.xlu0 %7291
        %v7293 = vsel %vm1258, %v7286, %v7288
        %v7294 = vsel %vm1258, %v7288, %v7290
        %v7295 = vsel %vm1258, %v7290, %v7292
        %v7299 = vadd.f32 %v6923, %v7293
        %v7300 = vadd.f32 %v6924, %v7294
        %v7301 = vadd.f32 %v6925, %v7295
        %s7302 = sld [smem:[#allocation2 + $0xbc]]
        %v7303 = vstv %s7302
        %v7304 = vmul.f32 %v5602, %v7303
        %v7305 = vmul.f32 %v5603, %v7303
        %v7306 = vmul.f32 %v5604, %v7303
        %v7307 = vmul.f32 %v5605, %v7303
        %v7308 = vmul.f32 %v5606, %v7303
        %v7309 = vmul.f32 %v5607, %v7303
        %v7310 = vmul.f32 %v5608, %v7303
        %v7311 = vmul.f32 %v5609, %v7303
        %v7320 = vrot.slane %v7304, 2
        %v7321 = vrot.slane %v7308, 2
        %v7322 = vsel %vm5383, %v7320, %v7321
        %v7323 = vrot.slane %v7305, 2
        %v7324 = vrot.slane %v7309, 2
        %v7325 = vsel %vm5383, %v7323, %v7324
        %v7326 = vrot.slane %v7306, 2
        %v7327 = vrot.slane %v7310, 2
        %v7328 = vsel %vm5383, %v7326, %v7327
        %v7329 = vrot.slane %v7307, 2
        %v7330 = vrot.slane %v7311, 2
        %v7331 = vsel %vm5383, %v7329, %v7330
        %7332 = vrot.lane.b32.xlu0 %v7322, 108
        %v7333 = vpop.permute.xlu0 %7332
        %7334 = vrot.lane.b32.xlu0 %v7325, 108
        %v7335 = vpop.permute.xlu0 %7334
        %7336 = vrot.lane.b32.xlu0 %v7328, 108
        %v7337 = vpop.permute.xlu0 %7336
        %7338 = vrot.lane.b32.xlu0 %v7331, 108
        %v7339 = vpop.permute.xlu0 %7338
        %v7340 = vsel %vm1258, %v7333, %v7335
        %v7341 = vsel %vm1258, %v7335, %v7337
        %v7342 = vsel %vm1258, %v7337, %v7339
        %v7346 = vadd.f32 %v6970, %v7340
        %v7347 = vadd.f32 %v6971, %v7341
        %v7348 = vadd.f32 %v6972, %v7342
        %s7349 = sld [smem:[#allocation2 + $0xbd]]
        %v7350 = vstv %s7349
        %v7351 = vmul.f32 %v5602, %v7350
        %v7352 = vmul.f32 %v5603, %v7350
        %v7353 = vmul.f32 %v5604, %v7350
        %v7354 = vmul.f32 %v5605, %v7350
        %v7355 = vmul.f32 %v5606, %v7350
        %v7356 = vmul.f32 %v5607, %v7350
        %v7357 = vmul.f32 %v5608, %v7350
        %v7358 = vmul.f32 %v5609, %v7350
        %v7367 = vrot.slane %v7351, 2
        %v7368 = vrot.slane %v7355, 2
        %v7369 = vsel %vm5383, %v7367, %v7368
        %v7370 = vrot.slane %v7352, 2
        %v7371 = vrot.slane %v7356, 2
        %v7372 = vsel %vm5383, %v7370, %v7371
        %v7373 = vrot.slane %v7353, 2
        %v7374 = vrot.slane %v7357, 2
        %v7375 = vsel %vm5383, %v7373, %v7374
        %v7376 = vrot.slane %v7354, 2
        %v7377 = vrot.slane %v7358, 2
        %v7378 = vsel %vm5383, %v7376, %v7377
        %7379 = vrot.lane.b32.xlu0 %v7369, 108
        %v7380 = vpop.permute.xlu0 %7379
        %7381 = vrot.lane.b32.xlu0 %v7372, 108
        %v7382 = vpop.permute.xlu0 %7381
        %7383 = vrot.lane.b32.xlu0 %v7375, 108
        %v7384 = vpop.permute.xlu0 %7383
        %7385 = vrot.lane.b32.xlu0 %v7378, 108
        %v7386 = vpop.permute.xlu0 %7385
        %v7387 = vsel %vm1258, %v7380, %v7382
        %v7388 = vsel %vm1258, %v7382, %v7384
        %v7389 = vsel %vm1258, %v7384, %v7386
        %v7393 = vadd.f32 %v7017, %v7387
        %v7394 = vadd.f32 %v7018, %v7388
        %v7395 = vadd.f32 %v7019, %v7389
        %s7396 = sld [smem:[#allocation2 + $0xbe]]
        %v7397 = vstv %s7396
        %v7398 = vmul.f32 %v5602, %v7397
        %v7399 = vmul.f32 %v5603, %v7397
        %v7400 = vmul.f32 %v5604, %v7397
        %v7401 = vmul.f32 %v5605, %v7397
        %v7402 = vmul.f32 %v5606, %v7397
        %v7403 = vmul.f32 %v5607, %v7397
        %v7404 = vmul.f32 %v5608, %v7397
        %v7405 = vmul.f32 %v5609, %v7397
        %v7414 = vrot.slane %v7398, 2
        %v7415 = vrot.slane %v7402, 2
        %v7416 = vsel %vm5383, %v7414, %v7415
        %v7417 = vrot.slane %v7399, 2
        %v7418 = vrot.slane %v7403, 2
        %v7419 = vsel %vm5383, %v7417, %v7418
        %v7420 = vrot.slane %v7400, 2
        %v7421 = vrot.slane %v7404, 2
        %v7422 = vsel %vm5383, %v7420, %v7421
        %v7423 = vrot.slane %v7401, 2
        %v7424 = vrot.slane %v7405, 2
        %v7425 = vsel %vm5383, %v7423, %v7424
        %7426 = vrot.lane.b32.xlu0 %v7416, 108
        %v7427 = vpop.permute.xlu0 %7426
        %7428 = vrot.lane.b32.xlu0 %v7419, 108
        %v7429 = vpop.permute.xlu0 %7428
        %7430 = vrot.lane.b32.xlu0 %v7422, 108
        %v7431 = vpop.permute.xlu0 %7430
        %7432 = vrot.lane.b32.xlu0 %v7425, 108
        %v7433 = vpop.permute.xlu0 %7432
        %v7434 = vsel %vm1258, %v7427, %v7429
        %v7435 = vsel %vm1258, %v7429, %v7431
        %v7436 = vsel %vm1258, %v7431, %v7433
        %v7440 = vadd.f32 %v7064, %v7434
        %v7441 = vadd.f32 %v7065, %v7435
        %v7442 = vadd.f32 %v7066, %v7436
        %s7443 = sld [smem:[#allocation2 + $0xbf]]
        %v7444 = vstv %s7443
        %v7445 = vmul.f32 %v5602, %v7444
        %v7446 = vmul.f32 %v5603, %v7444
        %v7447 = vmul.f32 %v5604, %v7444
        %v7448 = vmul.f32 %v5605, %v7444
        %v7449 = vmul.f32 %v5606, %v7444
        %v7450 = vmul.f32 %v5607, %v7444
        %v7451 = vmul.f32 %v5608, %v7444
        %v7452 = vmul.f32 %v5609, %v7444
        %v7461 = vrot.slane %v7445, 2
        %v7462 = vrot.slane %v7449, 2
        %v7463 = vsel %vm5383, %v7461, %v7462
        %v7464 = vrot.slane %v7446, 2
        %v7465 = vrot.slane %v7450, 2
        %v7466 = vsel %vm5383, %v7464, %v7465
        %v7467 = vrot.slane %v7447, 2
        %v7468 = vrot.slane %v7451, 2
        %v7469 = vsel %vm5383, %v7467, %v7468
        %v7470 = vrot.slane %v7448, 2
        %v7471 = vrot.slane %v7452, 2
        %v7472 = vsel %vm5383, %v7470, %v7471
        %7473 = vrot.lane.b32.xlu0 %v7463, 108
        %v7474 = vpop.permute.xlu0 %7473
        %7475 = vrot.lane.b32.xlu0 %v7466, 108
        %v7476 = vpop.permute.xlu0 %7475
        %7477 = vrot.lane.b32.xlu0 %v7469, 108
        %v7478 = vpop.permute.xlu0 %7477
        %7479 = vrot.lane.b32.xlu0 %v7472, 108
        %v7480 = vpop.permute.xlu0 %7479
        %v7481 = vsel %vm1258, %v7474, %v7476
        %v7482 = vsel %vm1258, %v7476, %v7478
        %v7483 = vsel %vm1258, %v7478, %v7480
        %v7487 = vadd.f32 %v7111, %v7481
        %v7488 = vadd.f32 %v7112, %v7482
        %v7489 = vadd.f32 %v7113, %v7483
        %s7490 = sld [smem:[#allocation2 + $0xc0]]
        %v7491 = vstv %s7490
        %v7492 = vmul.f32 %v5602, %v7491
        %v7493 = vmul.f32 %v5603, %v7491
        %v7494 = vmul.f32 %v5604, %v7491
        %v7495 = vmul.f32 %v5605, %v7491
        %v7496 = vmul.f32 %v5606, %v7491
        %v7497 = vmul.f32 %v5607, %v7491
        %v7498 = vmul.f32 %v5608, %v7491
        %v7499 = vmul.f32 %v5609, %v7491
        %v7508 = vrot.slane %v7492, 2
        %v7509 = vrot.slane %v7496, 2
        %v7510 = vsel %vm5383, %v7508, %v7509
        %v7511 = vrot.slane %v7493, 2
        %v7512 = vrot.slane %v7497, 2
        %v7513 = vsel %vm5383, %v7511, %v7512
        %v7514 = vrot.slane %v7494, 2
        %v7515 = vrot.slane %v7498, 2
        %v7516 = vsel %vm5383, %v7514, %v7515
        %v7517 = vrot.slane %v7495, 2
        %v7518 = vrot.slane %v7499, 2
        %v7519 = vsel %vm5383, %v7517, %v7518
        %7520 = vrot.lane.b32.xlu0 %v7510, 92
        %v7521 = vpop.permute.xlu0 %7520
        %7522 = vrot.lane.b32.xlu0 %v7513, 92
        %v7523 = vpop.permute.xlu0 %7522
        %7524 = vrot.lane.b32.xlu0 %v7516, 92
        %v7525 = vpop.permute.xlu0 %7524
        %7526 = vrot.lane.b32.xlu0 %v7519, 92
        %v7527 = vpop.permute.xlu0 %7526
        %v7528 = vsel %vm1475, %v7521, %v7523
        %v7529 = vsel %vm1475, %v7523, %v7525
        %v7530 = vsel %vm1475, %v7525, %v7527
        %v7534 = vadd.f32 %v7158, %v7528
        %v7535 = vadd.f32 %v7159, %v7529
        %v7536 = vadd.f32 %v7160, %v7530
        %s7537 = sld [smem:[#allocation2 + $0xc1]]
        %v7538 = vstv %s7537
        %v7539 = vmul.f32 %v5602, %v7538
        %v7540 = vmul.f32 %v5603, %v7538
        %v7541 = vmul.f32 %v5604, %v7538
        %v7542 = vmul.f32 %v5605, %v7538
        %v7543 = vmul.f32 %v5606, %v7538
        %v7544 = vmul.f32 %v5607, %v7538
        %v7545 = vmul.f32 %v5608, %v7538
        %v7546 = vmul.f32 %v5609, %v7538
        %v7555 = vrot.slane %v7539, 2
        %v7556 = vrot.slane %v7543, 2
        %v7557 = vsel %vm5383, %v7555, %v7556
        %v7558 = vrot.slane %v7540, 2
        %v7559 = vrot.slane %v7544, 2
        %v7560 = vsel %vm5383, %v7558, %v7559
        %v7561 = vrot.slane %v7541, 2
        %v7562 = vrot.slane %v7545, 2
        %v7563 = vsel %vm5383, %v7561, %v7562
        %v7564 = vrot.slane %v7542, 2
        %v7565 = vrot.slane %v7546, 2
        %v7566 = vsel %vm5383, %v7564, %v7565
        %7567 = vrot.lane.b32.xlu0 %v7557, 92
        %v7568 = vpop.permute.xlu0 %7567
        %7569 = vrot.lane.b32.xlu0 %v7560, 92
        %v7570 = vpop.permute.xlu0 %7569
        %7571 = vrot.lane.b32.xlu0 %v7563, 92
        %v7572 = vpop.permute.xlu0 %7571
        %7573 = vrot.lane.b32.xlu0 %v7566, 92
        %v7574 = vpop.permute.xlu0 %7573
        %v7575 = vsel %vm1475, %v7568, %v7570
        %v7576 = vsel %vm1475, %v7570, %v7572
        %v7577 = vsel %vm1475, %v7572, %v7574
        %v7581 = vadd.f32 %v7205, %v7575
        %v7582 = vadd.f32 %v7206, %v7576
        %v7583 = vadd.f32 %v7207, %v7577
        %s7584 = sld [smem:[#allocation2 + $0xc2]]
        %v7585 = vstv %s7584
        %v7586 = vmul.f32 %v5602, %v7585
        %v7587 = vmul.f32 %v5603, %v7585
        %v7588 = vmul.f32 %v5604, %v7585
        %v7589 = vmul.f32 %v5605, %v7585
        %v7590 = vmul.f32 %v5606, %v7585
        %v7591 = vmul.f32 %v5607, %v7585
        %v7592 = vmul.f32 %v5608, %v7585
        %v7593 = vmul.f32 %v5609, %v7585
        %v7602 = vrot.slane %v7586, 2
        %v7603 = vrot.slane %v7590, 2
        %v7604 = vsel %vm5383, %v7602, %v7603
        %v7605 = vrot.slane %v7587, 2
        %v7606 = vrot.slane %v7591, 2
        %v7607 = vsel %vm5383, %v7605, %v7606
        %v7608 = vrot.slane %v7588, 2
        %v7609 = vrot.slane %v7592, 2
        %v7610 = vsel %vm5383, %v7608, %v7609
        %v7611 = vrot.slane %v7589, 2
        %v7612 = vrot.slane %v7593, 2
        %v7613 = vsel %vm5383, %v7611, %v7612
        %7614 = vrot.lane.b32.xlu0 %v7604, 92
        %v7615 = vpop.permute.xlu0 %7614
        %7616 = vrot.lane.b32.xlu0 %v7607, 92
        %v7617 = vpop.permute.xlu0 %7616
        %7618 = vrot.lane.b32.xlu0 %v7610, 92
        %v7619 = vpop.permute.xlu0 %7618
        %7620 = vrot.lane.b32.xlu0 %v7613, 92
        %v7621 = vpop.permute.xlu0 %7620
        %v7622 = vsel %vm1475, %v7615, %v7617
        %v7623 = vsel %vm1475, %v7617, %v7619
        %v7624 = vsel %vm1475, %v7619, %v7621
        %v7628 = vadd.f32 %v7252, %v7622
        %v7629 = vadd.f32 %v7253, %v7623
        %v7630 = vadd.f32 %v7254, %v7624
        %s7631 = sld [smem:[#allocation2 + $0xc3]]
        %v7632 = vstv %s7631
        %v7633 = vmul.f32 %v5602, %v7632
        %v7634 = vmul.f32 %v5603, %v7632
        %v7635 = vmul.f32 %v5604, %v7632
        %v7636 = vmul.f32 %v5605, %v7632
        %v7637 = vmul.f32 %v5606, %v7632
        %v7638 = vmul.f32 %v5607, %v7632
        %v7639 = vmul.f32 %v5608, %v7632
        %v7640 = vmul.f32 %v5609, %v7632
        %v7649 = vrot.slane %v7633, 2
        %v7650 = vrot.slane %v7637, 2
        %v7651 = vsel %vm5383, %v7649, %v7650
        %v7652 = vrot.slane %v7634, 2
        %v7653 = vrot.slane %v7638, 2
        %v7654 = vsel %vm5383, %v7652, %v7653
        %v7655 = vrot.slane %v7635, 2
        %v7656 = vrot.slane %v7639, 2
        %v7657 = vsel %vm5383, %v7655, %v7656
        %v7658 = vrot.slane %v7636, 2
        %v7659 = vrot.slane %v7640, 2
        %v7660 = vsel %vm5383, %v7658, %v7659
        %7661 = vrot.lane.b32.xlu0 %v7651, 92
        %v7662 = vpop.permute.xlu0 %7661
        %7663 = vrot.lane.b32.xlu0 %v7654, 92
        %v7664 = vpop.permute.xlu0 %7663
        %7665 = vrot.lane.b32.xlu0 %v7657, 92
        %v7666 = vpop.permute.xlu0 %7665
        %7667 = vrot.lane.b32.xlu0 %v7660, 92
        %v7668 = vpop.permute.xlu0 %7667
        %v7669 = vsel %vm1475, %v7662, %v7664
        %v7670 = vsel %vm1475, %v7664, %v7666
        %v7671 = vsel %vm1475, %v7666, %v7668
        %v7675 = vadd.f32 %v7299, %v7669
        %v7676 = vadd.f32 %v7300, %v7670
        %v7677 = vadd.f32 %v7301, %v7671
        %s7678 = sld [smem:[#allocation2 + $0xc4]]
        %v7679 = vstv %s7678
        %v7680 = vmul.f32 %v5602, %v7679
        %v7681 = vmul.f32 %v5603, %v7679
        %v7682 = vmul.f32 %v5604, %v7679
        %v7683 = vmul.f32 %v5605, %v7679
        %v7684 = vmul.f32 %v5606, %v7679
        %v7685 = vmul.f32 %v5607, %v7679
        %v7686 = vmul.f32 %v5608, %v7679
        %v7687 = vmul.f32 %v5609, %v7679
        %v7696 = vrot.slane %v7680, 2
        %v7697 = vrot.slane %v7684, 2
        %v7698 = vsel %vm5383, %v7696, %v7697
        %v7699 = vrot.slane %v7681, 2
        %v7700 = vrot.slane %v7685, 2
        %v7701 = vsel %vm5383, %v7699, %v7700
        %v7702 = vrot.slane %v7682, 2
        %v7703 = vrot.slane %v7686, 2
        %v7704 = vsel %vm5383, %v7702, %v7703
        %v7705 = vrot.slane %v7683, 2
        %v7706 = vrot.slane %v7687, 2
        %v7707 = vsel %vm5383, %v7705, %v7706
        %7708 = vrot.lane.b32.xlu0 %v7698, 92
        %v7709 = vpop.permute.xlu0 %7708
        %7710 = vrot.lane.b32.xlu0 %v7701, 92
        %v7711 = vpop.permute.xlu0 %7710
        %7712 = vrot.lane.b32.xlu0 %v7704, 92
        %v7713 = vpop.permute.xlu0 %7712
        %7714 = vrot.lane.b32.xlu0 %v7707, 92
        %v7715 = vpop.permute.xlu0 %7714
        %v7716 = vsel %vm1475, %v7709, %v7711
        %v7717 = vsel %vm1475, %v7711, %v7713
        %v7718 = vsel %vm1475, %v7713, %v7715
        %v7722 = vadd.f32 %v7346, %v7716
        %v7723 = vadd.f32 %v7347, %v7717
        %v7724 = vadd.f32 %v7348, %v7718
        %s7725 = sld [smem:[#allocation2 + $0xc5]]
        %v7726 = vstv %s7725
        %v7727 = vmul.f32 %v5602, %v7726
        %v7728 = vmul.f32 %v5603, %v7726
        %v7729 = vmul.f32 %v5604, %v7726
        %v7730 = vmul.f32 %v5605, %v7726
        %v7731 = vmul.f32 %v5606, %v7726
        %v7732 = vmul.f32 %v5607, %v7726
        %v7733 = vmul.f32 %v5608, %v7726
        %v7734 = vmul.f32 %v5609, %v7726
        %v7743 = vrot.slane %v7727, 2
        %v7744 = vrot.slane %v7731, 2
        %v7745 = vsel %vm5383, %v7743, %v7744
        %v7746 = vrot.slane %v7728, 2
        %v7747 = vrot.slane %v7732, 2
        %v7748 = vsel %vm5383, %v7746, %v7747
        %v7749 = vrot.slane %v7729, 2
        %v7750 = vrot.slane %v7733, 2
        %v7751 = vsel %vm5383, %v7749, %v7750
        %v7752 = vrot.slane %v7730, 2
        %v7753 = vrot.slane %v7734, 2
        %v7754 = vsel %vm5383, %v7752, %v7753
        %7755 = vrot.lane.b32.xlu0 %v7745, 92
        %v7756 = vpop.permute.xlu0 %7755
        %7757 = vrot.lane.b32.xlu0 %v7748, 92
        %v7758 = vpop.permute.xlu0 %7757
        %7759 = vrot.lane.b32.xlu0 %v7751, 92
        %v7760 = vpop.permute.xlu0 %7759
        %7761 = vrot.lane.b32.xlu0 %v7754, 92
        %v7762 = vpop.permute.xlu0 %7761
        %v7763 = vsel %vm1475, %v7756, %v7758
        %v7764 = vsel %vm1475, %v7758, %v7760
        %v7765 = vsel %vm1475, %v7760, %v7762
        %v7769 = vadd.f32 %v7393, %v7763
        %v7770 = vadd.f32 %v7394, %v7764
        %v7771 = vadd.f32 %v7395, %v7765
        %s7772 = sld [smem:[#allocation2 + $0xc6]]
        %v7773 = vstv %s7772
        %v7774 = vmul.f32 %v5602, %v7773
        %v7775 = vmul.f32 %v5603, %v7773
        %v7776 = vmul.f32 %v5604, %v7773
        %v7777 = vmul.f32 %v5605, %v7773
        %v7778 = vmul.f32 %v5606, %v7773
        %v7779 = vmul.f32 %v5607, %v7773
        %v7780 = vmul.f32 %v5608, %v7773
        %v7781 = vmul.f32 %v5609, %v7773
        %v7790 = vrot.slane %v7774, 2
        %v7791 = vrot.slane %v7778, 2
        %v7792 = vsel %vm5383, %v7790, %v7791
        %v7793 = vrot.slane %v7775, 2
        %v7794 = vrot.slane %v7779, 2
        %v7795 = vsel %vm5383, %v7793, %v7794
        %v7796 = vrot.slane %v7776, 2
        %v7797 = vrot.slane %v7780, 2
        %v7798 = vsel %vm5383, %v7796, %v7797
        %v7799 = vrot.slane %v7777, 2
        %v7800 = vrot.slane %v7781, 2
        %v7801 = vsel %vm5383, %v7799, %v7800
        %7802 = vrot.lane.b32.xlu0 %v7792, 92
        %v7803 = vpop.permute.xlu0 %7802
        %7804 = vrot.lane.b32.xlu0 %v7795, 92
        %v7805 = vpop.permute.xlu0 %7804
        %7806 = vrot.lane.b32.xlu0 %v7798, 92
        %v7807 = vpop.permute.xlu0 %7806
        %7808 = vrot.lane.b32.xlu0 %v7801, 92
        %v7809 = vpop.permute.xlu0 %7808
        %v7810 = vsel %vm1475, %v7803, %v7805
        %v7811 = vsel %vm1475, %v7805, %v7807
        %v7812 = vsel %vm1475, %v7807, %v7809
        %v7816 = vadd.f32 %v7440, %v7810
        %v7817 = vadd.f32 %v7441, %v7811
        %v7818 = vadd.f32 %v7442, %v7812
        %s7819 = sld [smem:[#allocation2 + $0xc7]]
        %v7820 = vstv %s7819
        %v7821 = vmul.f32 %v5602, %v7820
        %v7822 = vmul.f32 %v5603, %v7820
        %v7823 = vmul.f32 %v5604, %v7820
        %v7824 = vmul.f32 %v5605, %v7820
        %v7825 = vmul.f32 %v5606, %v7820
        %v7826 = vmul.f32 %v5607, %v7820
        %v7827 = vmul.f32 %v5608, %v7820
        %v7828 = vmul.f32 %v5609, %v7820
        %v7837 = vrot.slane %v7821, 2
        %v7838 = vrot.slane %v7825, 2
        %v7839 = vsel %vm5383, %v7837, %v7838
        %v7840 = vrot.slane %v7822, 2
        %v7841 = vrot.slane %v7826, 2
        %v7842 = vsel %vm5383, %v7840, %v7841
        %v7843 = vrot.slane %v7823, 2
        %v7844 = vrot.slane %v7827, 2
        %v7845 = vsel %vm5383, %v7843, %v7844
        %v7846 = vrot.slane %v7824, 2
        %v7847 = vrot.slane %v7828, 2
        %v7848 = vsel %vm5383, %v7846, %v7847
        %7849 = vrot.lane.b32.xlu0 %v7839, 92
        %v7850 = vpop.permute.xlu0 %7849
        %7851 = vrot.lane.b32.xlu0 %v7842, 92
        %v7852 = vpop.permute.xlu0 %7851
        %7853 = vrot.lane.b32.xlu0 %v7845, 92
        %v7854 = vpop.permute.xlu0 %7853
        %7855 = vrot.lane.b32.xlu0 %v7848, 92
        %v7856 = vpop.permute.xlu0 %7855
        %v7857 = vsel %vm1475, %v7850, %v7852
        %v7858 = vsel %vm1475, %v7852, %v7854
        %v7859 = vsel %vm1475, %v7854, %v7856
        %v7863 = vadd.f32 %v7487, %v7857
        %v7864 = vadd.f32 %v7488, %v7858
        %v7865 = vadd.f32 %v7489, %v7859
        %s7866 = sld [smem:[#allocation2 + $0xc8]]
        %v7867 = vstv %s7866
        %v7868 = vmul.f32 %v5602, %v7867
        %v7869 = vmul.f32 %v5603, %v7867
        %v7870 = vmul.f32 %v5604, %v7867
        %v7871 = vmul.f32 %v5605, %v7867
        %v7872 = vmul.f32 %v5606, %v7867
        %v7873 = vmul.f32 %v5607, %v7867
        %v7874 = vmul.f32 %v5608, %v7867
        %v7875 = vmul.f32 %v5609, %v7867
        %v7884 = vrot.slane %v7868, 2
        %v7885 = vrot.slane %v7872, 2
        %v7886 = vsel %vm5383, %v7884, %v7885
        %v7887 = vrot.slane %v7869, 2
        %v7888 = vrot.slane %v7873, 2
        %v7889 = vsel %vm5383, %v7887, %v7888
        %v7890 = vrot.slane %v7870, 2
        %v7891 = vrot.slane %v7874, 2
        %v7892 = vsel %vm5383, %v7890, %v7891
        %v7893 = vrot.slane %v7871, 2
        %v7894 = vrot.slane %v7875, 2
        %v7895 = vsel %vm5383, %v7893, %v7894
        %7896 = vrot.lane.b32.xlu0 %v7886, 91
        %v7897 = vpop.permute.xlu0 %7896
        %7898 = vrot.lane.b32.xlu0 %v7889, 91
        %v7899 = vpop.permute.xlu0 %7898
        %7900 = vrot.lane.b32.xlu0 %v7892, 91
        %v7901 = vpop.permute.xlu0 %7900
        %7902 = vrot.lane.b32.xlu0 %v7895, 91
        %v7903 = vpop.permute.xlu0 %7902
        %v7904 = vsel %vm1692, %v7897, %v7899
        %v7905 = vsel %vm1692, %v7899, %v7901
        %v7906 = vsel %vm1692, %v7901, %v7903
        %v7910 = vadd.f32 %v7534, %v7904
        %v7911 = vadd.f32 %v7535, %v7905
        %v7912 = vadd.f32 %v7536, %v7906
        %s7913 = sld [smem:[#allocation2 + $0xc9]]
        %v7914 = vstv %s7913
        %v7915 = vmul.f32 %v5602, %v7914
        %v7916 = vmul.f32 %v5603, %v7914
        %v7917 = vmul.f32 %v5604, %v7914
        %v7918 = vmul.f32 %v5605, %v7914
        %v7919 = vmul.f32 %v5606, %v7914
        %v7920 = vmul.f32 %v5607, %v7914
        %v7921 = vmul.f32 %v5608, %v7914
        %v7922 = vmul.f32 %v5609, %v7914
        %v7931 = vrot.slane %v7915, 2
        %v7932 = vrot.slane %v7919, 2
        %v7933 = vsel %vm5383, %v7931, %v7932
        %v7934 = vrot.slane %v7916, 2
        %v7935 = vrot.slane %v7920, 2
        %v7936 = vsel %vm5383, %v7934, %v7935
        %v7937 = vrot.slane %v7917, 2
        %v7938 = vrot.slane %v7921, 2
        %v7939 = vsel %vm5383, %v7937, %v7938
        %v7940 = vrot.slane %v7918, 2
        %v7941 = vrot.slane %v7922, 2
        %v7942 = vsel %vm5383, %v7940, %v7941
        %7943 = vrot.lane.b32.xlu0 %v7933, 91
        %v7944 = vpop.permute.xlu0 %7943
        %7945 = vrot.lane.b32.xlu0 %v7936, 91
        %v7946 = vpop.permute.xlu0 %7945
        %7947 = vrot.lane.b32.xlu0 %v7939, 91
        %v7948 = vpop.permute.xlu0 %7947
        %7949 = vrot.lane.b32.xlu0 %v7942, 91
        %v7950 = vpop.permute.xlu0 %7949
        %v7951 = vsel %vm1692, %v7944, %v7946
        %v7952 = vsel %vm1692, %v7946, %v7948
        %v7953 = vsel %vm1692, %v7948, %v7950
        %v7957 = vadd.f32 %v7581, %v7951
        %v7958 = vadd.f32 %v7582, %v7952
        %v7959 = vadd.f32 %v7583, %v7953
        %s7960 = sld [smem:[#allocation2 + $0xca]]
        %v7961 = vstv %s7960
        %v7962 = vmul.f32 %v5602, %v7961
        %v7963 = vmul.f32 %v5603, %v7961
        %v7964 = vmul.f32 %v5604, %v7961
        %v7965 = vmul.f32 %v5605, %v7961
        %v7966 = vmul.f32 %v5606, %v7961
        %v7967 = vmul.f32 %v5607, %v7961
        %v7968 = vmul.f32 %v5608, %v7961
        %v7969 = vmul.f32 %v5609, %v7961
        %v7978 = vrot.slane %v7962, 2
        %v7979 = vrot.slane %v7966, 2
        %v7980 = vsel %vm5383, %v7978, %v7979
        %v7981 = vrot.slane %v7963, 2
        %v7982 = vrot.slane %v7967, 2
        %v7983 = vsel %vm5383, %v7981, %v7982
        %v7984 = vrot.slane %v7964, 2
        %v7985 = vrot.slane %v7968, 2
        %v7986 = vsel %vm5383, %v7984, %v7985
        %v7987 = vrot.slane %v7965, 2
        %v7988 = vrot.slane %v7969, 2
        %v7989 = vsel %vm5383, %v7987, %v7988
        %7990 = vrot.lane.b32.xlu0 %v7980, 91
        %v7991 = vpop.permute.xlu0 %7990
        %7992 = vrot.lane.b32.xlu0 %v7983, 91
        %v7993 = vpop.permute.xlu0 %7992
        %7994 = vrot.lane.b32.xlu0 %v7986, 91
        %v7995 = vpop.permute.xlu0 %7994
        %7996 = vrot.lane.b32.xlu0 %v7989, 91
        %v7997 = vpop.permute.xlu0 %7996
        %v7998 = vsel %vm1692, %v7991, %v7993
        %v7999 = vsel %vm1692, %v7993, %v7995
        %v8000 = vsel %vm1692, %v7995, %v7997
        %v8004 = vadd.f32 %v7628, %v7998
        %v8005 = vadd.f32 %v7629, %v7999
        %v8006 = vadd.f32 %v7630, %v8000
        %s8007 = sld [smem:[#allocation2 + $0xcb]]
        %v8008 = vstv %s8007
        %v8009 = vmul.f32 %v5602, %v8008
        %v8010 = vmul.f32 %v5603, %v8008
        %v8011 = vmul.f32 %v5604, %v8008
        %v8012 = vmul.f32 %v5605, %v8008
        %v8013 = vmul.f32 %v5606, %v8008
        %v8014 = vmul.f32 %v5607, %v8008
        %v8015 = vmul.f32 %v5608, %v8008
        %v8016 = vmul.f32 %v5609, %v8008
        %v8025 = vrot.slane %v8009, 2
        %v8026 = vrot.slane %v8013, 2
        %v8027 = vsel %vm5383, %v8025, %v8026
        %v8028 = vrot.slane %v8010, 2
        %v8029 = vrot.slane %v8014, 2
        %v8030 = vsel %vm5383, %v8028, %v8029
        %v8031 = vrot.slane %v8011, 2
        %v8032 = vrot.slane %v8015, 2
        %v8033 = vsel %vm5383, %v8031, %v8032
        %v8034 = vrot.slane %v8012, 2
        %v8035 = vrot.slane %v8016, 2
        %v8036 = vsel %vm5383, %v8034, %v8035
        %8037 = vrot.lane.b32.xlu0 %v8027, 91
        %v8038 = vpop.permute.xlu0 %8037
        %8039 = vrot.lane.b32.xlu0 %v8030, 91
        %v8040 = vpop.permute.xlu0 %8039
        %8041 = vrot.lane.b32.xlu0 %v8033, 91
        %v8042 = vpop.permute.xlu0 %8041
        %8043 = vrot.lane.b32.xlu0 %v8036, 91
        %v8044 = vpop.permute.xlu0 %8043
        %v8045 = vsel %vm1692, %v8038, %v8040
        %v8046 = vsel %vm1692, %v8040, %v8042
        %v8047 = vsel %vm1692, %v8042, %v8044
        %v8051 = vadd.f32 %v7675, %v8045
        %v8052 = vadd.f32 %v7676, %v8046
        %v8053 = vadd.f32 %v7677, %v8047
        %s8054 = sld [smem:[#allocation2 + $0xcc]]
        %v8055 = vstv %s8054
        %v8056 = vmul.f32 %v5602, %v8055
        %v8057 = vmul.f32 %v5603, %v8055
        %v8058 = vmul.f32 %v5604, %v8055
        %v8059 = vmul.f32 %v5605, %v8055
        %v8060 = vmul.f32 %v5606, %v8055
        %v8061 = vmul.f32 %v5607, %v8055
        %v8062 = vmul.f32 %v5608, %v8055
        %v8063 = vmul.f32 %v5609, %v8055
        %v8072 = vrot.slane %v8056, 2
        %v8073 = vrot.slane %v8060, 2
        %v8074 = vsel %vm5383, %v8072, %v8073
        %v8075 = vrot.slane %v8057, 2
        %v8076 = vrot.slane %v8061, 2
        %v8077 = vsel %vm5383, %v8075, %v8076
        %v8078 = vrot.slane %v8058, 2
        %v8079 = vrot.slane %v8062, 2
        %v8080 = vsel %vm5383, %v8078, %v8079
        %v8081 = vrot.slane %v8059, 2
        %v8082 = vrot.slane %v8063, 2
        %v8083 = vsel %vm5383, %v8081, %v8082
        %8084 = vrot.lane.b32.xlu0 %v8074, 91
        %v8085 = vpop.permute.xlu0 %8084
        %8086 = vrot.lane.b32.xlu0 %v8077, 91
        %v8087 = vpop.permute.xlu0 %8086
        %8088 = vrot.lane.b32.xlu0 %v8080, 91
        %v8089 = vpop.permute.xlu0 %8088
        %8090 = vrot.lane.b32.xlu0 %v8083, 91
        %v8091 = vpop.permute.xlu0 %8090
        %v8092 = vsel %vm1692, %v8085, %v8087
        %v8093 = vsel %vm1692, %v8087, %v8089
        %v8094 = vsel %vm1692, %v8089, %v8091
        %v8098 = vadd.f32 %v7722, %v8092
        %v8099 = vadd.f32 %v7723, %v8093
        %v8100 = vadd.f32 %v7724, %v8094
        %s8101 = sld [smem:[#allocation2 + $0xcd]]
        %v8102 = vstv %s8101
        %v8103 = vmul.f32 %v5602, %v8102
        %v8104 = vmul.f32 %v5603, %v8102
        %v8105 = vmul.f32 %v5604, %v8102
        %v8106 = vmul.f32 %v5605, %v8102
        %v8107 = vmul.f32 %v5606, %v8102
        %v8108 = vmul.f32 %v5607, %v8102
        %v8109 = vmul.f32 %v5608, %v8102
        %v8110 = vmul.f32 %v5609, %v8102
        %v8119 = vrot.slane %v8103, 2
        %v8120 = vrot.slane %v8107, 2
        %v8121 = vsel %vm5383, %v8119, %v8120
        %v8122 = vrot.slane %v8104, 2
        %v8123 = vrot.slane %v8108, 2
        %v8124 = vsel %vm5383, %v8122, %v8123
        %v8125 = vrot.slane %v8105, 2
        %v8126 = vrot.slane %v8109, 2
        %v8127 = vsel %vm5383, %v8125, %v8126
        %v8128 = vrot.slane %v8106, 2
        %v8129 = vrot.slane %v8110, 2
        %v8130 = vsel %vm5383, %v8128, %v8129
        %8131 = vrot.lane.b32.xlu0 %v8121, 91
        %v8132 = vpop.permute.xlu0 %8131
        %8133 = vrot.lane.b32.xlu0 %v8124, 91
        %v8134 = vpop.permute.xlu0 %8133
        %8135 = vrot.lane.b32.xlu0 %v8127, 91
        %v8136 = vpop.permute.xlu0 %8135
        %8137 = vrot.lane.b32.xlu0 %v8130, 91
        %v8138 = vpop.permute.xlu0 %8137
        %v8139 = vsel %vm1692, %v8132, %v8134
        %v8140 = vsel %vm1692, %v8134, %v8136
        %v8141 = vsel %vm1692, %v8136, %v8138
        %v8145 = vadd.f32 %v7769, %v8139
        %v8146 = vadd.f32 %v7770, %v8140
        %v8147 = vadd.f32 %v7771, %v8141
        %s8148 = sld [smem:[#allocation2 + $0xce]]
        %v8149 = vstv %s8148
        %v8150 = vmul.f32 %v5602, %v8149
        %v8151 = vmul.f32 %v5603, %v8149
        %v8152 = vmul.f32 %v5604, %v8149
        %v8153 = vmul.f32 %v5605, %v8149
        %v8154 = vmul.f32 %v5606, %v8149
        %v8155 = vmul.f32 %v5607, %v8149
        %v8156 = vmul.f32 %v5608, %v8149
        %v8157 = vmul.f32 %v5609, %v8149
        %v8166 = vrot.slane %v8150, 2
        %v8167 = vrot.slane %v8154, 2
        %v8168 = vsel %vm5383, %v8166, %v8167
        %v8169 = vrot.slane %v8151, 2
        %v8170 = vrot.slane %v8155, 2
        %v8171 = vsel %vm5383, %v8169, %v8170
        %v8172 = vrot.slane %v8152, 2
        %v8173 = vrot.slane %v8156, 2
        %v8174 = vsel %vm5383, %v8172, %v8173
        %v8175 = vrot.slane %v8153, 2
        %v8176 = vrot.slane %v8157, 2
        %v8177 = vsel %vm5383, %v8175, %v8176
        %8178 = vrot.lane.b32.xlu0 %v8168, 91
        %v8179 = vpop.permute.xlu0 %8178
        %8180 = vrot.lane.b32.xlu0 %v8171, 91
        %v8181 = vpop.permute.xlu0 %8180
        %8182 = vrot.lane.b32.xlu0 %v8174, 91
        %v8183 = vpop.permute.xlu0 %8182
        %8184 = vrot.lane.b32.xlu0 %v8177, 91
        %v8185 = vpop.permute.xlu0 %8184
        %v8186 = vsel %vm1692, %v8179, %v8181
        %v8187 = vsel %vm1692, %v8181, %v8183
        %v8188 = vsel %vm1692, %v8183, %v8185
        %v8192 = vadd.f32 %v7816, %v8186
        %v8193 = vadd.f32 %v7817, %v8187
        %v8194 = vadd.f32 %v7818, %v8188
        %s8195 = sld [smem:[#allocation2 + $0xcf]]
        %v8196 = vstv %s8195
        %v8197 = vmul.f32 %v5602, %v8196
        %v8198 = vmul.f32 %v5603, %v8196
        %v8199 = vmul.f32 %v5604, %v8196
        %v8200 = vmul.f32 %v5605, %v8196
        %v8201 = vmul.f32 %v5606, %v8196
        %v8202 = vmul.f32 %v5607, %v8196
        %v8203 = vmul.f32 %v5608, %v8196
        %v8204 = vmul.f32 %v5609, %v8196
        %v8213 = vrot.slane %v8197, 2
        %v8214 = vrot.slane %v8201, 2
        %v8215 = vsel %vm5383, %v8213, %v8214
        %v8216 = vrot.slane %v8198, 2
        %v8217 = vrot.slane %v8202, 2
        %v8218 = vsel %vm5383, %v8216, %v8217
        %v8219 = vrot.slane %v8199, 2
        %v8220 = vrot.slane %v8203, 2
        %v8221 = vsel %vm5383, %v8219, %v8220
        %v8222 = vrot.slane %v8200, 2
        %v8223 = vrot.slane %v8204, 2
        %v8224 = vsel %vm5383, %v8222, %v8223
        %8225 = vrot.lane.b32.xlu0 %v8215, 91
        %v8226 = vpop.permute.xlu0 %8225
        %8227 = vrot.lane.b32.xlu0 %v8218, 91
        %v8228 = vpop.permute.xlu0 %8227
        %8229 = vrot.lane.b32.xlu0 %v8221, 91
        %v8230 = vpop.permute.xlu0 %8229
        %8231 = vrot.lane.b32.xlu0 %v8224, 91
        %v8232 = vpop.permute.xlu0 %8231
        %v8233 = vsel %vm1692, %v8226, %v8228
        %v8234 = vsel %vm1692, %v8228, %v8230
        %v8235 = vsel %vm1692, %v8230, %v8232
        %v8239 = vadd.f32 %v7863, %v8233
        %v8240 = vadd.f32 %v7864, %v8234
        %v8241 = vadd.f32 %v7865, %v8235
        %s8242 = sld [smem:[#allocation2 + $0xd0]]
        %v8243 = vstv %s8242
        %v8244 = vmul.f32 %v5602, %v8243
        %v8245 = vmul.f32 %v5603, %v8243
        %v8246 = vmul.f32 %v5604, %v8243
        %v8247 = vmul.f32 %v5605, %v8243
        %v8248 = vmul.f32 %v5606, %v8243
        %v8249 = vmul.f32 %v5607, %v8243
        %v8250 = vmul.f32 %v5608, %v8243
        %v8251 = vmul.f32 %v5609, %v8243
        %v8260 = vrot.slane %v8244, 2
        %v8261 = vrot.slane %v8248, 2
        %v8262 = vsel %vm5383, %v8260, %v8261
        %v8263 = vrot.slane %v8245, 2
        %v8264 = vrot.slane %v8249, 2
        %v8265 = vsel %vm5383, %v8263, %v8264
        %v8266 = vrot.slane %v8246, 2
        %v8267 = vrot.slane %v8250, 2
        %v8268 = vsel %vm5383, %v8266, %v8267
        %v8269 = vrot.slane %v8247, 2
        %v8270 = vrot.slane %v8251, 2
        %v8271 = vsel %vm5383, %v8269, %v8270
        %8272 = vrot.lane.b32.xlu0 %v8262, 90
        %v8273 = vpop.permute.xlu0 %8272
        %8274 = vrot.lane.b32.xlu0 %v8265, 90
        %v8275 = vpop.permute.xlu0 %8274
        %8276 = vrot.lane.b32.xlu0 %v8268, 90
        %v8277 = vpop.permute.xlu0 %8276
        %8278 = vrot.lane.b32.xlu0 %v8271, 90
        %v8279 = vpop.permute.xlu0 %8278
        %v8280 = vsel %vm1909, %v8273, %v8275
        %v8281 = vsel %vm1909, %v8275, %v8277
        %v8282 = vsel %vm1909, %v8277, %v8279
        %v8286 = vadd.f32 %v7910, %v8280
        %v8287 = vadd.f32 %v7911, %v8281
        %v8288 = vadd.f32 %v7912, %v8282
        %s8289 = sld [smem:[#allocation2 + $0xd1]]
        %v8290 = vstv %s8289
        %v8291 = vmul.f32 %v5602, %v8290
        %v8292 = vmul.f32 %v5603, %v8290
        %v8293 = vmul.f32 %v5604, %v8290
        %v8294 = vmul.f32 %v5605, %v8290
        %v8295 = vmul.f32 %v5606, %v8290
        %v8296 = vmul.f32 %v5607, %v8290
        %v8297 = vmul.f32 %v5608, %v8290
        %v8298 = vmul.f32 %v5609, %v8290
        %v8307 = vrot.slane %v8291, 2
        %v8308 = vrot.slane %v8295, 2
        %v8309 = vsel %vm5383, %v8307, %v8308
        %v8310 = vrot.slane %v8292, 2
        %v8311 = vrot.slane %v8296, 2
        %v8312 = vsel %vm5383, %v8310, %v8311
        %v8313 = vrot.slane %v8293, 2
        %v8314 = vrot.slane %v8297, 2
        %v8315 = vsel %vm5383, %v8313, %v8314
        %v8316 = vrot.slane %v8294, 2
        %v8317 = vrot.slane %v8298, 2
        %v8318 = vsel %vm5383, %v8316, %v8317
        %8319 = vrot.lane.b32.xlu0 %v8309, 90
        %v8320 = vpop.permute.xlu0 %8319
        %8321 = vrot.lane.b32.xlu0 %v8312, 90
        %v8322 = vpop.permute.xlu0 %8321
        %8323 = vrot.lane.b32.xlu0 %v8315, 90
        %v8324 = vpop.permute.xlu0 %8323
        %8325 = vrot.lane.b32.xlu0 %v8318, 90
        %v8326 = vpop.permute.xlu0 %8325
        %v8327 = vsel %vm1909, %v8320, %v8322
        %v8328 = vsel %vm1909, %v8322, %v8324
        %v8329 = vsel %vm1909, %v8324, %v8326
        %v8333 = vadd.f32 %v7957, %v8327
        %v8334 = vadd.f32 %v7958, %v8328
        %v8335 = vadd.f32 %v7959, %v8329
        %s8336 = sld [smem:[#allocation2 + $0xd2]]
        %v8337 = vstv %s8336
        %v8338 = vmul.f32 %v5602, %v8337
        %v8339 = vmul.f32 %v5603, %v8337
        %v8340 = vmul.f32 %v5604, %v8337
        %v8341 = vmul.f32 %v5605, %v8337
        %v8342 = vmul.f32 %v5606, %v8337
        %v8343 = vmul.f32 %v5607, %v8337
        %v8344 = vmul.f32 %v5608, %v8337
        %v8345 = vmul.f32 %v5609, %v8337
        %v8354 = vrot.slane %v8338, 2
        %v8355 = vrot.slane %v8342, 2
        %v8356 = vsel %vm5383, %v8354, %v8355
        %v8357 = vrot.slane %v8339, 2
        %v8358 = vrot.slane %v8343, 2
        %v8359 = vsel %vm5383, %v8357, %v8358
        %v8360 = vrot.slane %v8340, 2
        %v8361 = vrot.slane %v8344, 2
        %v8362 = vsel %vm5383, %v8360, %v8361
        %v8363 = vrot.slane %v8341, 2
        %v8364 = vrot.slane %v8345, 2
        %v8365 = vsel %vm5383, %v8363, %v8364
        %8366 = vrot.lane.b32.xlu0 %v8356, 90
        %v8367 = vpop.permute.xlu0 %8366
        %8368 = vrot.lane.b32.xlu0 %v8359, 90
        %v8369 = vpop.permute.xlu0 %8368
        %8370 = vrot.lane.b32.xlu0 %v8362, 90
        %v8371 = vpop.permute.xlu0 %8370
        %8372 = vrot.lane.b32.xlu0 %v8365, 90
        %v8373 = vpop.permute.xlu0 %8372
        %v8374 = vsel %vm1909, %v8367, %v8369
        %v8375 = vsel %vm1909, %v8369, %v8371
        %v8376 = vsel %vm1909, %v8371, %v8373
        %v8380 = vadd.f32 %v8004, %v8374
        %v8381 = vadd.f32 %v8005, %v8375
        %v8382 = vadd.f32 %v8006, %v8376
        %s8383 = sld [smem:[#allocation2 + $0xd3]]
        %v8384 = vstv %s8383
        %v8385 = vmul.f32 %v5602, %v8384
        %v8386 = vmul.f32 %v5603, %v8384
        %v8387 = vmul.f32 %v5604, %v8384
        %v8388 = vmul.f32 %v5605, %v8384
        %v8389 = vmul.f32 %v5606, %v8384
        %v8390 = vmul.f32 %v5607, %v8384
        %v8391 = vmul.f32 %v5608, %v8384
        %v8392 = vmul.f32 %v5609, %v8384
        %v8401 = vrot.slane %v8385, 2
        %v8402 = vrot.slane %v8389, 2
        %v8403 = vsel %vm5383, %v8401, %v8402
        %v8404 = vrot.slane %v8386, 2
        %v8405 = vrot.slane %v8390, 2
        %v8406 = vsel %vm5383, %v8404, %v8405
        %v8407 = vrot.slane %v8387, 2
        %v8408 = vrot.slane %v8391, 2
        %v8409 = vsel %vm5383, %v8407, %v8408
        %v8410 = vrot.slane %v8388, 2
        %v8411 = vrot.slane %v8392, 2
        %v8412 = vsel %vm5383, %v8410, %v8411
        %8413 = vrot.lane.b32.xlu0 %v8403, 90
        %v8414 = vpop.permute.xlu0 %8413
        %8415 = vrot.lane.b32.xlu0 %v8406, 90
        %v8416 = vpop.permute.xlu0 %8415
        %8417 = vrot.lane.b32.xlu0 %v8409, 90
        %v8418 = vpop.permute.xlu0 %8417
        %8419 = vrot.lane.b32.xlu0 %v8412, 90
        %v8420 = vpop.permute.xlu0 %8419
        %v8421 = vsel %vm1909, %v8414, %v8416
        %v8422 = vsel %vm1909, %v8416, %v8418
        %v8423 = vsel %vm1909, %v8418, %v8420
        %v8427 = vadd.f32 %v8051, %v8421
        %v8428 = vadd.f32 %v8052, %v8422
        %v8429 = vadd.f32 %v8053, %v8423
        %s8430 = sld [smem:[#allocation2 + $0xd4]]
        %v8431 = vstv %s8430
        %v8432 = vmul.f32 %v5602, %v8431
        %v8433 = vmul.f32 %v5603, %v8431
        %v8434 = vmul.f32 %v5604, %v8431
        %v8435 = vmul.f32 %v5605, %v8431
        %v8436 = vmul.f32 %v5606, %v8431
        %v8437 = vmul.f32 %v5607, %v8431
        %v8438 = vmul.f32 %v5608, %v8431
        %v8439 = vmul.f32 %v5609, %v8431
        %v8448 = vrot.slane %v8432, 2
        %v8449 = vrot.slane %v8436, 2
        %v8450 = vsel %vm5383, %v8448, %v8449
        %v8451 = vrot.slane %v8433, 2
        %v8452 = vrot.slane %v8437, 2
        %v8453 = vsel %vm5383, %v8451, %v8452
        %v8454 = vrot.slane %v8434, 2
        %v8455 = vrot.slane %v8438, 2
        %v8456 = vsel %vm5383, %v8454, %v8455
        %v8457 = vrot.slane %v8435, 2
        %v8458 = vrot.slane %v8439, 2
        %v8459 = vsel %vm5383, %v8457, %v8458
        %8460 = vrot.lane.b32.xlu0 %v8450, 90
        %v8461 = vpop.permute.xlu0 %8460
        %8462 = vrot.lane.b32.xlu0 %v8453, 90
        %v8463 = vpop.permute.xlu0 %8462
        %8464 = vrot.lane.b32.xlu0 %v8456, 90
        %v8465 = vpop.permute.xlu0 %8464
        %8466 = vrot.lane.b32.xlu0 %v8459, 90
        %v8467 = vpop.permute.xlu0 %8466
        %v8468 = vsel %vm1909, %v8461, %v8463
        %v8469 = vsel %vm1909, %v8463, %v8465
        %v8470 = vsel %vm1909, %v8465, %v8467
        %v8474 = vadd.f32 %v8098, %v8468
        %v8475 = vadd.f32 %v8099, %v8469
        %v8476 = vadd.f32 %v8100, %v8470
        %s8477 = sld [smem:[#allocation2 + $0xd5]]
        %v8478 = vstv %s8477
        %v8479 = vmul.f32 %v5602, %v8478
        %v8480 = vmul.f32 %v5603, %v8478
        %v8481 = vmul.f32 %v5604, %v8478
        %v8482 = vmul.f32 %v5605, %v8478
        %v8483 = vmul.f32 %v5606, %v8478
        %v8484 = vmul.f32 %v5607, %v8478
        %v8485 = vmul.f32 %v5608, %v8478
        %v8486 = vmul.f32 %v5609, %v8478
        %v8495 = vrot.slane %v8479, 2
        %v8496 = vrot.slane %v8483, 2
        %v8497 = vsel %vm5383, %v8495, %v8496
        %v8498 = vrot.slane %v8480, 2
        %v8499 = vrot.slane %v8484, 2
        %v8500 = vsel %vm5383, %v8498, %v8499
        %v8501 = vrot.slane %v8481, 2
        %v8502 = vrot.slane %v8485, 2
        %v8503 = vsel %vm5383, %v8501, %v8502
        %v8504 = vrot.slane %v8482, 2
        %v8505 = vrot.slane %v8486, 2
        %v8506 = vsel %vm5383, %v8504, %v8505
        %8507 = vrot.lane.b32.xlu0 %v8497, 90
        %v8508 = vpop.permute.xlu0 %8507
        %8509 = vrot.lane.b32.xlu0 %v8500, 90
        %v8510 = vpop.permute.xlu0 %8509
        %8511 = vrot.lane.b32.xlu0 %v8503, 90
        %v8512 = vpop.permute.xlu0 %8511
        %8513 = vrot.lane.b32.xlu0 %v8506, 90
        %v8514 = vpop.permute.xlu0 %8513
        %v8515 = vsel %vm1909, %v8508, %v8510
        %v8516 = vsel %vm1909, %v8510, %v8512
        %v8517 = vsel %vm1909, %v8512, %v8514
        %v8521 = vadd.f32 %v8145, %v8515
        %v8522 = vadd.f32 %v8146, %v8516
        %v8523 = vadd.f32 %v8147, %v8517
        %s8524 = sld [smem:[#allocation2 + $0xd6]]
        %v8525 = vstv %s8524
        %v8526 = vmul.f32 %v5602, %v8525
        %v8527 = vmul.f32 %v5603, %v8525
        %v8528 = vmul.f32 %v5604, %v8525
        %v8529 = vmul.f32 %v5605, %v8525
        %v8530 = vmul.f32 %v5606, %v8525
        %v8531 = vmul.f32 %v5607, %v8525
        %v8532 = vmul.f32 %v5608, %v8525
        %v8533 = vmul.f32 %v5609, %v8525
        %v8542 = vrot.slane %v8526, 2
        %v8543 = vrot.slane %v8530, 2
        %v8544 = vsel %vm5383, %v8542, %v8543
        %v8545 = vrot.slane %v8527, 2
        %v8546 = vrot.slane %v8531, 2
        %v8547 = vsel %vm5383, %v8545, %v8546
        %v8548 = vrot.slane %v8528, 2
        %v8549 = vrot.slane %v8532, 2
        %v8550 = vsel %vm5383, %v8548, %v8549
        %v8551 = vrot.slane %v8529, 2
        %v8552 = vrot.slane %v8533, 2
        %v8553 = vsel %vm5383, %v8551, %v8552
        %8554 = vrot.lane.b32.xlu0 %v8544, 90
        %v8555 = vpop.permute.xlu0 %8554
        %8556 = vrot.lane.b32.xlu0 %v8547, 90
        %v8557 = vpop.permute.xlu0 %8556
        %8558 = vrot.lane.b32.xlu0 %v8550, 90
        %v8559 = vpop.permute.xlu0 %8558
        %8560 = vrot.lane.b32.xlu0 %v8553, 90
        %v8561 = vpop.permute.xlu0 %8560
        %v8562 = vsel %vm1909, %v8555, %v8557
        %v8563 = vsel %vm1909, %v8557, %v8559
        %v8564 = vsel %vm1909, %v8559, %v8561
        %v8568 = vadd.f32 %v8192, %v8562
        %v8569 = vadd.f32 %v8193, %v8563
        %v8570 = vadd.f32 %v8194, %v8564
        %s8571 = sld [smem:[#allocation2 + $0xd7]]
        %v8572 = vstv %s8571
        %v8573 = vmul.f32 %v5602, %v8572
        %v8574 = vmul.f32 %v5603, %v8572
        %v8575 = vmul.f32 %v5604, %v8572
        %v8576 = vmul.f32 %v5605, %v8572
        %v8577 = vmul.f32 %v5606, %v8572
        %v8578 = vmul.f32 %v5607, %v8572
        %v8579 = vmul.f32 %v5608, %v8572
        %v8580 = vmul.f32 %v5609, %v8572
        %v8589 = vrot.slane %v8573, 2
        %v8590 = vrot.slane %v8577, 2
        %v8591 = vsel %vm5383, %v8589, %v8590
        %v8592 = vrot.slane %v8574, 2
        %v8593 = vrot.slane %v8578, 2
        %v8594 = vsel %vm5383, %v8592, %v8593
        %v8595 = vrot.slane %v8575, 2
        %v8596 = vrot.slane %v8579, 2
        %v8597 = vsel %vm5383, %v8595, %v8596
        %v8598 = vrot.slane %v8576, 2
        %v8599 = vrot.slane %v8580, 2
        %v8600 = vsel %vm5383, %v8598, %v8599
        %8601 = vrot.lane.b32.xlu0 %v8591, 90
        %v8602 = vpop.permute.xlu0 %8601
        %8603 = vrot.lane.b32.xlu0 %v8594, 90
        %v8604 = vpop.permute.xlu0 %8603
        %8605 = vrot.lane.b32.xlu0 %v8597, 90
        %v8606 = vpop.permute.xlu0 %8605
        %8607 = vrot.lane.b32.xlu0 %v8600, 90
        %v8608 = vpop.permute.xlu0 %8607
        %v8609 = vsel %vm1909, %v8602, %v8604
        %v8610 = vsel %vm1909, %v8604, %v8606
        %v8611 = vsel %vm1909, %v8606, %v8608
        %v8615 = vadd.f32 %v8239, %v8609
        %v8616 = vadd.f32 %v8240, %v8610
        %v8617 = vadd.f32 %v8241, %v8611
        %v8618 = vmax.f32 %v8286, 0.0
        %v8619 = vmax.f32 %v8287, 0.0
        %v8620 = vmax.f32 %v8288, 0.0
        %v8621 = vmax.f32 %v8333, 0.0
        %v8622 = vmax.f32 %v8334, 0.0
        %v8623 = vmax.f32 %v8335, 0.0
        %v8624 = vmax.f32 %v8380, 0.0
        %v8625 = vmax.f32 %v8381, 0.0
        %v8626 = vmax.f32 %v8382, 0.0
        %v8627 = vmax.f32 %v8427, 0.0
        %v8628 = vmax.f32 %v8428, 0.0
        %v8629 = vmax.f32 %v8429, 0.0
        %v8630 = vmax.f32 %v8474, 0.0
        %v8631 = vmax.f32 %v8475, 0.0
        %v8632 = vmax.f32 %v8476, 0.0
        %v8633 = vmax.f32 %v8521, 0.0
        %v8634 = vmax.f32 %v8522, 0.0
        %v8635 = vmax.f32 %v8523, 0.0
        %v8636 = vmax.f32 %v8568, 0.0
        %v8637 = vmax.f32 %v8569, 0.0
        %v8638 = vmax.f32 %v8570, 0.0
        %v8639 = vmax.f32 %v8615, 0.0
        %v8640 = vmax.f32 %v8616, 0.0
        %v8641 = vmax.f32 %v8617, 0.0
        %s8642 = sld [smem:[#allocation7]]
        %v8643 = vstv %s8642
        %v8644 = vadd.f32 %v8643, 0.0
        %s8645 = sld [smem:[#allocation6]]
        %v8646 = vstv %s8645
        %v8647 = vmul.f32 %v8618, %v8646
        %v8648 = vmul.f32 %v8619, %v8646
        %v8649 = vmul.f32 %v8620, %v8646
        %v8650 = vadd.f32 %v8644, %v8647
        %v8651 = vadd.f32 %v8644, %v8648
        %v8652 = vadd.f32 %v8644, %v8649
        %s8653 = sld [smem:[#allocation6 + $0x2]]
        %v8654 = vstv %s8653
        %v8655 = vmul.f32 %v8621, %v8654
        %v8656 = vmul.f32 %v8622, %v8654
        %v8657 = vmul.f32 %v8623, %v8654
        %v8658 = vadd.f32 %v8650, %v8655
        %v8659 = vadd.f32 %v8651, %v8656
        %v8660 = vadd.f32 %v8652, %v8657
        %s8661 = sld [smem:[#allocation6 + $0x4]]
        %v8662 = vstv %s8661
        %v8663 = vmul.f32 %v8624, %v8662
        %v8664 = vmul.f32 %v8625, %v8662
        %v8665 = vmul.f32 %v8626, %v8662
        %v8666 = vadd.f32 %v8658, %v8663
        %v8667 = vadd.f32 %v8659, %v8664
        %v8668 = vadd.f32 %v8660, %v8665
        %s8669 = sld [smem:[#allocation6 + $0x6]]
        %v8670 = vstv %s8669
        %v8671 = vmul.f32 %v8627, %v8670
        %v8672 = vmul.f32 %v8628, %v8670
        %v8673 = vmul.f32 %v8629, %v8670
        %v8674 = vadd.f32 %v8666, %v8671
        %v8675 = vadd.f32 %v8667, %v8672
        %v8676 = vadd.f32 %v8668, %v8673
        %s8677 = sld [smem:[#allocation6 + $0x8]]
        %v8678 = vstv %s8677
        %v8679 = vmul.f32 %v8630, %v8678
        %v8680 = vmul.f32 %v8631, %v8678
        %v8681 = vmul.f32 %v8632, %v8678
        %v8682 = vadd.f32 %v8674, %v8679
        %v8683 = vadd.f32 %v8675, %v8680
        %v8684 = vadd.f32 %v8676, %v8681
        %s8685 = sld [smem:[#allocation6 + $0xa]]
        %v8686 = vstv %s8685
        %v8687 = vmul.f32 %v8633, %v8686
        %v8688 = vmul.f32 %v8634, %v8686
        %v8689 = vmul.f32 %v8635, %v8686
        %v8690 = vadd.f32 %v8682, %v8687
        %v8691 = vadd.f32 %v8683, %v8688
        %v8692 = vadd.f32 %v8684, %v8689
        %s8693 = sld [smem:[#allocation6 + $0xc]]
        %v8694 = vstv %s8693
        %v8695 = vmul.f32 %v8636, %v8694
        %v8696 = vmul.f32 %v8637, %v8694
        %v8697 = vmul.f32 %v8638, %v8694
        %v8698 = vadd.f32 %v8690, %v8695
        %v8699 = vadd.f32 %v8691, %v8696
        %v8700 = vadd.f32 %v8692, %v8697
        %s8701 = sld [smem:[#allocation6 + $0xe]]
        %v8702 = vstv %s8701
        %v8703 = vmul.f32 %v8639, %v8702
        %v8704 = vmul.f32 %v8640, %v8702
        %v8705 = vmul.f32 %v8641, %v8702
        %v8706 = vadd.f32 %v8698, %v8703
        %v8707 = vadd.f32 %v8699, %v8704
        %v8708 = vadd.f32 %v8700, %v8705
        %8709 = vst [vmem:[%s276] sm:$0xff] %v8706
        %8710 = vst [vmem:[%s276 + $0x8] sm:$0xff] %v8707
        %8711 = vst [vmem:[%s276 + $0x10] sm:$0xff] %v8708
        %s8712 = sld [smem:[#allocation7 + $0x1]]
        %v8713 = vstv %s8712
        %v8714 = vadd.f32 %v8713, 0.0
        %s8715 = sld [smem:[#allocation6 + $0x1]]
        %v8716 = vstv %s8715
        %v8717 = vmul.f32 %v8618, %v8716
        %v8718 = vmul.f32 %v8619, %v8716
        %v8719 = vmul.f32 %v8620, %v8716
        %v8720 = vadd.f32 %v8714, %v8717
        %v8721 = vadd.f32 %v8714, %v8718
        %v8722 = vadd.f32 %v8714, %v8719
        %s8723 = sld [smem:[#allocation6 + $0x3]]
        %v8724 = vstv %s8723
        %v8725 = vmul.f32 %v8621, %v8724
        %v8726 = vmul.f32 %v8622, %v8724
        %v8727 = vmul.f32 %v8623, %v8724
        %v8728 = vadd.f32 %v8720, %v8725
        %v8729 = vadd.f32 %v8721, %v8726
        %v8730 = vadd.f32 %v8722, %v8727
        %s8731 = sld [smem:[#allocation6 + $0x5]]
        %v8732 = vstv %s8731
        %v8733 = vmul.f32 %v8624, %v8732
        %v8734 = vmul.f32 %v8625, %v8732
        %v8735 = vmul.f32 %v8626, %v8732
        %v8736 = vadd.f32 %v8728, %v8733
        %v8737 = vadd.f32 %v8729, %v8734
        %v8738 = vadd.f32 %v8730, %v8735
        %s8739 = sld [smem:[#allocation6 + $0x7]]
        %v8740 = vstv %s8739
        %v8741 = vmul.f32 %v8627, %v8740
        %v8742 = vmul.f32 %v8628, %v8740
        %v8743 = vmul.f32 %v8629, %v8740
        %v8744 = vadd.f32 %v8736, %v8741
        %v8745 = vadd.f32 %v8737, %v8742
        %v8746 = vadd.f32 %v8738, %v8743
        %s8747 = sld [smem:[#allocation6 + $0x9]]
        %v8748 = vstv %s8747
        %v8749 = vmul.f32 %v8630, %v8748
        %v8750 = vmul.f32 %v8631, %v8748
        %v8751 = vmul.f32 %v8632, %v8748
        %v8752 = vadd.f32 %v8744, %v8749
        %v8753 = vadd.f32 %v8745, %v8750
        %v8754 = vadd.f32 %v8746, %v8751
        %s8755 = sld [smem:[#allocation6 + $0xb]]
        %v8756 = vstv %s8755
        %v8757 = vmul.f32 %v8633, %v8756
        %v8758 = vmul.f32 %v8634, %v8756
        %v8759 = vmul.f32 %v8635, %v8756
        %v8760 = vadd.f32 %v8752, %v8757
        %v8761 = vadd.f32 %v8753, %v8758
        %v8762 = vadd.f32 %v8754, %v8759
        %s8763 = sld [smem:[#allocation6 + $0xd]]
        %v8764 = vstv %s8763
        %v8765 = vmul.f32 %v8636, %v8764
        %v8766 = vmul.f32 %v8637, %v8764
        %v8767 = vmul.f32 %v8638, %v8764
        %v8768 = vadd.f32 %v8760, %v8765
        %v8769 = vadd.f32 %v8761, %v8766
        %v8770 = vadd.f32 %v8762, %v8767
        %s8771 = sld [smem:[#allocation6 + $0xf]]
        %v8772 = vstv %s8771
        %v8773 = vmul.f32 %v8639, %v8772
        %v8774 = vmul.f32 %v8640, %v8772
        %v8775 = vmul.f32 %v8641, %v8772
        %v8776 = vadd.f32 %v8768, %v8773
        %v8777 = vadd.f32 %v8769, %v8774
        %v8778 = vadd.f32 %v8770, %v8775
        %s8779 = scalar_lea.vmem %s276, 24
        %8780 = vst [vmem:[%s8779] sm:$0xff] %v8776
        %8781 = vst [vmem:[%s8779 + $0x8] sm:$0xff] %v8777
        %8782 = vst [vmem:[%s8779 + $0x10] sm:$0xff] %v8778
        %p8783 = scmp.lt.s32.totalorder %s19, 1
        %s8784 = scalar_select %p8783, %s19, 1
        %s8785 = smul.addr %s8784, 6
        %s8786 = smul.addr %s8785, 8
        %s8787 = scalar_lea.vmem %s5, %s8786
        // Predicated region
        $region57: #{_fused_seg_forward.1} parent=39 // pred_check
          %p8788 = pneg %p147
        $region58: #{_fused_seg_forward.1} parent=39 // pred_check_branch
          %8790 = sbr.rel (%p8788) target = $region60
        $region59: #{_fused_seg_forward.1} parent=39 // pred_region
          _
        $region60: #{_fused_seg_forward.1} parent=39 // pred_fallthru
          _
      $region40: #{_fused_seg_forward.1} parent=5 // pred_fallthru
        _
      %p8791 = scmp.le.s32.totalorder 2, %s14
      // Predicated region
      $region61: #{_fused_seg_forward.1} parent=5 // pred_check
        %p8792 = pneg %p8791
      $region62: #{_fused_seg_forward.1} parent=5 // pred_check_branch
        %8794 = sbr.rel (%p8792) target = $region64
      $region63: #{_fused_seg_forward.1} parent=5 // pred_region
        %s8795 = ssub.s32 %s14, 2
        // Predicated region
        $region65: #{_fused_seg_forward.1} parent=63 // pred_check
          %p8796 = pneg %p153
        $region66: #{_fused_seg_forward.1} parent=63 // pred_check_branch
          %8798 = sbr.rel (%p8796) target = $region68
        $region67: #{_fused_seg_forward.1} parent=63 // pred_region
          %p8799 = scmp.lt.s32.totalorder %s20, 1
          %s8800 = scalar_select %p8799, %s20, 1
          %s8801 = smul.addr %s8800, 6
          %s8802 = smul.addr %s8801, 8
          %s8803 = scalar_lea.vmem %s5, %s8802
        $region68: #{_fused_seg_forward.1} parent=63 // pred_fallthru
          _
      $region64: #{_fused_seg_forward.1} parent=5 // pred_fallthru
        _
    $region6: #{_fused_seg_forward.1} parent=1 // loop_footer
      %s18 = sadd.s32 1, %s14
    $region7: #{_fused_seg_forward.1} parent=1 // loop_footer_branch
      %13 = sbr.rel target = $region3
    $region8: #{_fused_seg_forward.1} parent=1 // loop_exit
      _
    %8804 = vsyncpa [#allocation3], 1
    %s8805 = scalar_lea.sflag [#allocation3], 1
    %8806 = vsyncpa %s8805, 1
    %8807 = vsyncpa [#allocation5], 1
    %8808 = vsyncpa [#allocation8], 1

</llo_original>
